<compile_context>
chip_gen: v7x
topology: tpu7x:2x2x1
jax: 0.10.0
libtpu: 0.0.40
codegen_flags: <defaults>
</compile_context>

<pallas_src>
import jax
import jax.numpy as jnp
from jax import lax
from jax.experimental import pallas as pl
from jax.experimental.pallas import tpu as pltpu  # noqa: F401  (not needed at this size)

# ----------------------------- configuration ------------------------------
# Small BaselineUNet instance (faithful to the module's constructor logic):
#   BaselineUNet(in_channels=4, out_channels=10, base_filters=8,
#                encoder_depths=[2, 2], decoder_depths=[2], activation='relu',
#                use_batch_norm=True, dropout=0.0, upsample_mode='transpose')
N = 2
IN_CHANNELS = 4
OUT_CHANNELS = 10
H = W = 16
BASE_FILTERS = 8
ENCODER_DEPTHS = [2, 2]
DECODER_DEPTHS = [2]
K = 3
PAD = 1
BN_EPS = 1e-5                       # PyTorch BatchNorm2d default
_PREC = lax.Precision.HIGHEST       # f32-accurate MXU passes
# TODO(synk): training-mode Dropout2d (p>0) is not implemented (stochastic);
# this instance uses dropout=0.0 so the forward pass is exact.


# ------------------------------- kernels -----------------------------------
def _conv_bn_relu_kernel(w_ref, p_ref, gamma_ref, beta_ref, o_ref):
    """Fused ConvBlock: single im2col matmul + folded BatchNorm + ReLU.

    w_ref:     (Cout, K*K*Cin)  weight slab
    p_ref:     (K*K*Cin, M)     im2col patches, M = N*H*W on the lane axis
    gamma_ref: (Cout, 1)        BN weight
    beta_ref:  (Cout, 1)        BN bias
    o_ref:     (Cout, M)        channels-major output (lane-dense stores)
    """
    acc = jnp.dot(w_ref[...], p_ref[...],
                  preferred_element_type=jnp.float32, precision=_PREC)
    m = acc.shape[1]
    inv_m = 1.0 / m
    s = jnp.sum(acc, axis=1, keepdims=True)            # single pass stats
    ssq = jnp.sum(acc * acc, axis=1, keepdims=True)
    mean = s * inv_m
    var = ssq * inv_m - mean * mean                    # biased batch variance
    scale = gamma_ref[...] * lax.rsqrt(var + BN_EPS)
    shift = beta_ref[...] - mean * scale
    o_ref[...] = jnp.maximum(acc * scale + shift, 0.0)  # BN as one FMA + ReLU


def _matmul_bias_kernel(w_ref, x_ref, b_ref, o_ref):
    """o = w @ x + b   (ConvTranspose2d taps and the final 1x1 conv)."""
    o_ref[...] = jnp.dot(w_ref[...], x_ref[...],
                         preferred_element_type=jnp.float32,
                         precision=_PREC) + b_ref[...]


def _max4_kernel(a_ref, b_ref, c_ref, d_ref, o_ref):
    """MaxPool2d(2,2): elementwise max of the four 2x2-corner views."""
    o_ref[...] = jnp.maximum(jnp.maximum(a_ref[...], b_ref[...]),
                             jnp.maximum(c_ref[...], d_ref[...]))


# --------------------------- pallas_call helpers ----------------------------
def _full_spec(shape):
    return pl.BlockSpec(shape, lambda: (0,) * len(shape))


def _call(kernel, out_shape, *args):
    # Grid-less call; everything fits VMEM.  No oversized vmem_limit request.
    return pl.pallas_call(
        kernel,
        out_shape=jax.ShapeDtypeStruct(out_shape, jnp.float32),
        in_specs=[_full_spec(a.shape) for a in args],
        out_specs=_full_spec(out_shape),
    )(*args)


# ------------------------------- wrappers -----------------------------------
def conv_block_pallas(x_cm, w_oihw, gamma, beta):
    """ConvBlock on channels-major x_cm: (Cin, N, H, W) -> (Cout, N, H, W)."""
    cin, n, h, w = x_cm.shape
    cout = w_oihw.shape[0]
    m = n * h * w
    # im2col in the wrapper (pure layout): (K*K*Cin, M) patch slab.
    xp = jnp.pad(x_cm, ((0, 0), (0, 0), (PAD, PAD), (PAD, PAD)))
    taps = [xp[:, :, kh:kh + h, kw:kw + w] for kh in range(K) for kw in range(K)]
    patches = jnp.stack(taps, axis=0).reshape(K * K * cin, m)
    # (Cout, Cin, K, K) -> (Cout, K*K*Cin) matching the (kh, kw, cin) patch order.
    wslab = jnp.transpose(w_oihw, (0, 2, 3, 1)).reshape(cout, K * K * cin)
    out = _call(_conv_bn_relu_kernel, (cout, m),
                wslab, patches, gamma.reshape(cout, 1), beta.reshape(cout, 1))
    return out.reshape(cout, n, h, w)


def maxpool2x2_pallas(x_cm):
    """MaxPool2d(kernel=2, stride=2) on channels-major (C, N, H, W)."""
    c, n, h, w = x_cm.shape
    h2, w2 = h // 2, w // 2
    views = [x_cm[:, :, di::2, dj::2].reshape(c, n * h2 * w2)
             for di in range(2) for dj in range(2)]
    out = _call(_max4_kernel, (c, n * h2 * w2), *views)
    return out.reshape(c, n, h2, w2)


def conv_transpose2x2_pallas(x_cm, w_iohw, bias):
    """ConvTranspose2d(kernel=2, stride=2) on channels-major (Cin, N, H, W)."""
    cin, n, h, w = x_cm.shape
    cout = w_iohw.shape[1]
    m = n * h * w
    # One matmul produces all four (di, dj) taps at once: (4*Cout, M).
    w4 = jnp.transpose(w_iohw, (2, 3, 1, 0)).reshape(4 * cout, cin)
    b4 = jnp.tile(bias, 4).reshape(4 * cout, 1)
    y4 = _call(_matmul_bias_kernel, (4 * cout, m), w4, x_cm.reshape(cin, m), b4)
    # Spatial interleave (pure layout, done once in the wrapper).
    y6 = y4.reshape(2, 2, cout, n, h, w)                  # (di, dj, co, n, i, j)
    out = jnp.transpose(y6, (2, 3, 4, 0, 5, 1)).reshape(cout, n, 2 * h, 2 * w)
    return out


def conv1x1_pallas(x_cm, w_oihw, bias):
    cin, n, h, w = x_cm.shape
    cout = w_oihw.shape[0]
    m = n * h * w
    out = _call(_matmul_bias_kernel, (cout, m),
                w_oihw.reshape(cout, cin), x_cm.reshape(cin, m),
                bias.reshape(cout, 1))
    return out.reshape(cout, n, h, w)


# ------------------------------ full forward --------------------------------
def baseline_unet_pallas(x_nchw, params):
    """BaselineUNet forward.  NCHW -> channels-major conversion happens exactly
    once here (and back once at the end); every block in between stays in the
    lane-dense channels-major layout (no per-block transposes)."""
    cur = jnp.transpose(x_nchw.astype(jnp.float32), (1, 0, 2, 3))  # (C, N, H, W)
    skips = []
    for enc in params["encoders"]:
        for blk in enc["convs"]:
            cur = conv_block_pallas(cur, blk["w"], blk["gamma"], blk["beta"])
        skips.append(cur)
        cur = maxpool2x2_pallas(cur)
    bott = params["bottleneck"]
    cur = conv_block_pallas(cur, bott["w"], bott["gamma"], bott["beta"])
    for i, dec in enumerate(params["decoders"]):
        up = conv_transpose2x2_pallas(cur, dec["up_w"], dec["up_b"])
        # TODO(synk): DecoderBlock's F.interpolate size-fixup branch is omitted;
        # with power-of-two spatial sizes it never triggers.
        cur = jnp.concatenate([up, skips[-(i + 1)]], axis=0)   # channel concat
        for blk in dec["convs"]:
            cur = conv_block_pallas(cur, blk["w"], blk["gamma"], blk["beta"])
    out = conv1x1_pallas(cur, params["final_w"], params["final_b"])
    return jnp.transpose(out, (1, 0, 2, 3))                    # back to NCHW


# --------------------------- pure-JAX reference ------------------------------
def _conv_block_ref(x, w, gamma, beta):
    y = lax.conv_general_dilated(
        x, w, (1, 1), ((PAD, PAD), (PAD, PAD)),
        dimension_numbers=("NCHW", "OIHW", "NCHW"), precision=_PREC)
    mean = jnp.mean(y, axis=(0, 2, 3), keepdims=True)
    var = jnp.mean((y - mean) ** 2, axis=(0, 2, 3), keepdims=True)
    y = (y - mean) * lax.rsqrt(var + BN_EPS)
    y = y * gamma.reshape(1, -1, 1, 1) + beta.reshape(1, -1, 1, 1)
    return jnp.maximum(y, 0.0)


def _maxpool_ref(x):
    n, c, h, w = x.shape
    return x.reshape(n, c, h // 2, 2, w // 2, 2).max(axis=(3, 5))


def _tconv_ref(x, w_iohw, b):
    w_t = jnp.transpose(jnp.flip(w_iohw, axis=(2, 3)), (1, 0, 2, 3))
    y = lax.conv_general_dilated(
        x, w_t, (1, 1), ((1, 1), (1, 1)), lhs_dilation=(2, 2),
        dimension_numbers=("NCHW", "OIHW", "NCHW"), precision=_PREC)
    return y + b.reshape(1, -1, 1, 1)


def _conv1x1_ref(x, w, b):
    y = lax.conv_general_dilated(
        x, w, (1, 1), ((0, 0), (0, 0)),
        dimension_numbers=("NCHW", "OIHW", "NCHW"), precision=_PREC)
    return y + b.reshape(1, -1, 1, 1)


def baseline_unet_reference(x, params):
    cur = x.astype(jnp.float32)
    skips = []
    for enc in params["encoders"]:
        for blk in enc["convs"]:
            cur = _conv_block_ref(cur, blk["w"], blk["gamma"], blk["beta"])
        skips.append(cur)
        cur = _maxpool_ref(cur)
    bott = params["bottleneck"]
    cur = _conv_block_ref(cur, bott["w"], bott["gamma"], bott["beta"])
    for i, dec in enumerate(params["decoders"]):
        up = _tconv_ref(cur, dec["up_w"], dec["up_b"])
        cur = jnp.concatenate([up, skips[-(i + 1)]], axis=1)
        for blk in dec["convs"]:
            cur = _conv_block_ref(cur, blk["w"], blk["gamma"], blk["beta"])
    return _conv1x1_ref(cur, params["final_w"], params["final_b"])


# ------------------------------ parameters -----------------------------------
def init_params(key):
    keys = iter(jax.random.split(key, 64))

    def conv_w(cout, cin, k):
        fan_in = cin * k * k
        return (jax.random.normal(next(keys), (cout, cin, k, k), jnp.float32)
                * jnp.sqrt(2.0 / fan_in))

    def bn_params(c):
        gamma = 1.0 + 0.1 * jax.random.normal(next(keys), (c,), jnp.float32)
        beta = 0.1 * jax.random.normal(next(keys), (c,), jnp.float32)
        return gamma, beta

    enc_filters = [BASE_FILTERS * 2 ** i for i in range(len(ENCODER_DEPTHS))]
    dec_filters = enc_filters[::-1][1:]

    params = {"encoders": [], "decoders": []}
    ch = IN_CHANNELS
    for lvl, depth in enumerate(ENCODER_DEPTHS):
        convs = []
        for _ in range(depth):
            g, b = bn_params(enc_filters[lvl])
            convs.append({"w": conv_w(enc_filters[lvl], ch, K),
                          "gamma": g, "beta": b})
            ch = enc_filters[lvl]
        params["encoders"].append({"convs": convs})

    bott_ch = enc_filters[-1] * 2
    g, b = bn_params(bott_ch)
    params["bottleneck"] = {"w": conv_w(bott_ch, ch, K), "gamma": g, "beta": b}
    ch = bott_ch

    for lvl, depth in enumerate(DECODER_DEPTHS):
        skip_ch = enc_filters[-(lvl + 1)]
        # PyTorch ConvTranspose2d weight layout: (in_channels, out_channels, kH, kW)
        up_w = (jax.random.normal(next(keys), (ch, ch, 2, 2), jnp.float32)
                * jnp.sqrt(2.0 / (ch * 4)))
        up_b = 0.1 * jax.random.normal(next(keys), (ch,), jnp.float32)
        convs = []
        cc = ch + skip_ch
        for _ in range(depth):
            g, b = bn_params(dec_filters[lvl])
            convs.append({"w": conv_w(dec_filters[lvl], cc, K),
                          "gamma": g, "beta": b})
            cc = dec_filters[lvl]
        params["decoders"].append({"up_w": up_w, "up_b": up_b, "convs": convs})
        ch = dec_filters[lvl]

    params["final_w"] = conv_w(OUT_CHANNELS, ch, 1)
    params["final_b"] = 0.1 * jax.random.normal(next(keys), (OUT_CHANNELS,),
                                                jnp.float32)
    return params


# --------------------------------- main --------------------------------------
if __name__ == "__main__":
    key = jax.random.PRNGKey(0)
    kp, kx = jax.random.split(key)
    params = init_params(kp)
    x = jax.random.normal(kx, (N, IN_CHANNELS, H, W), dtype=jnp.float32)

    out = jax.block_until_ready(jax.jit(baseline_unet_pallas)(x, params))
    ref = jax.block_until_ready(jax.jit(baseline_unet_reference)(x, params))

    # With 2 encoder levels and 1 decoder level the module's output spatial
    # size is H/2 x W/2 (as written in the PyTorch code).
    assert out.shape == (N, OUT_CHANNELS, H // 2, W // 2), out.shape
    err = float(jnp.max(jnp.abs(out - ref)))
    assert jnp.allclose(out, ref, atol=5e-4, rtol=5e-4), f"max abs diff {err}"
    print("KERNEL_OK")
</pallas_src>

<mosaic_0001>
module attributes {stable_mosaic.version = 11 : i64} {
  func.func @_conv_bn_relu_kernel(%arg0: memref<8x36xf32, #tpu.memory_space<vmem>>, %arg1: memref<36x512xf32, #tpu.memory_space<vmem>>, %arg2: memref<8x1xf32, #tpu.memory_space<vmem>>, %arg3: memref<8x1xf32, #tpu.memory_space<vmem>>, %arg4: memref<8x512xf32, #tpu.memory_space<vmem>>) attributes {dimension_semantics = [], scalar_prefetch = 0 : i64, scratch_operands = 0 : i64, tpu.core_type = #tpu.core_type<tc>} {
    %c0 = arith.constant 0 : index
    %c0_0 = arith.constant 0 : index
    %0 = vector.load %arg0[%c0, %c0_0] : memref<8x36xf32, #tpu.memory_space<vmem>>, vector<8x36xf32>
    %c0_1 = arith.constant 0 : index
    %c0_2 = arith.constant 0 : index
    %1 = vector.load %arg1[%c0_1, %c0_2] : memref<36x512xf32, #tpu.memory_space<vmem>>, vector<36x512xf32>
    %cst = arith.constant dense<0.000000e+00> : vector<8x512xf32>
    %2 = tpu.matmul %0, %1, %cst {dimension_numbers = #tpu.dot_dimension_numbers<[1], [0], [0], [1], [0, 0, 1, 1], [], []>, precision = #tpu.contract_precision<fp32>} : vector<8x36xf32>, vector<36x512xf32>, vector<8x512xf32> -> vector<8x512xf32>
    %cst_3 = arith.constant dense<0.000000e+00> : vector<8xf32>
    %3 = vector.multi_reduction <add>, %2, %cst_3 [1] : vector<8x512xf32> to vector<8xf32>
    %4 = vector.shape_cast %3 : vector<8xf32> to vector<8x1xf32>
    %5 = arith.mulf %2, %2 : vector<8x512xf32>
    %cst_4 = arith.constant dense<0.000000e+00> : vector<8xf32>
    %6 = vector.multi_reduction <add>, %5, %cst_4 [1] : vector<8x512xf32> to vector<8xf32>
    %7 = vector.shape_cast %6 : vector<8xf32> to vector<8x1xf32>
    %cst_5 = arith.constant 0.001953125 : f32
    %8 = vector.broadcast %cst_5 : f32 to vector<8x1xf32>
    %9 = arith.mulf %4, %8 : vector<8x1xf32>
    %cst_6 = arith.constant 0.001953125 : f32
    %10 = vector.broadcast %cst_6 : f32 to vector<8x1xf32>
    %11 = arith.mulf %7, %10 : vector<8x1xf32>
    %12 = arith.mulf %9, %9 : vector<8x1xf32>
    %13 = arith.subf %11, %12 : vector<8x1xf32>
    %c0_7 = arith.constant 0 : index
    %c0_8 = arith.constant 0 : index
    %14 = vector.load %arg2[%c0_7, %c0_8] : memref<8x1xf32, #tpu.memory_space<vmem>>, vector<8x1xf32>
    %cst_9 = arith.constant 9.99999974E-6 : f32
    %15 = vector.broadcast %cst_9 : f32 to vector<8x1xf32>
    %16 = arith.addf %13, %15 : vector<8x1xf32>
    %17 = math.rsqrt %16 : vector<8x1xf32>
    %18 = arith.mulf %14, %17 : vector<8x1xf32>
    %c0_10 = arith.constant 0 : index
    %c0_11 = arith.constant 0 : index
    %19 = vector.load %arg3[%c0_10, %c0_11] : memref<8x1xf32, #tpu.memory_space<vmem>>, vector<8x1xf32>
    %20 = arith.mulf %9, %18 : vector<8x1xf32>
    %21 = arith.subf %19, %20 : vector<8x1xf32>
    %22 = vector.broadcast %18 : vector<8x1xf32> to vector<8x512xf32>
    %23 = arith.mulf %2, %22 : vector<8x512xf32>
    %24 = vector.broadcast %21 : vector<8x1xf32> to vector<8x512xf32>
    %25 = arith.addf %23, %24 : vector<8x512xf32>
    %cst_12 = arith.constant 0.000000e+00 : f32
    %26 = vector.broadcast %cst_12 : f32 to vector<8x512xf32>
    %27 = arith.maximumf %25, %26 : vector<8x512xf32>
    %c0_13 = arith.constant 0 : index
    %c0_14 = arith.constant 0 : index
    %28 = vector.load %arg4[%c0_13, %c0_14] : memref<8x512xf32, #tpu.memory_space<vmem>>, vector<8x512xf32>
    tpu.vector_store %arg4[%c0_13, %c0_14], %27 {strides = array<i32>} : memref<8x512xf32, #tpu.memory_space<vmem>>, vector<8x512xf32>,
    return
  }
}

module attributes {stable_mosaic.version = 11 : i64} {
  func.func @_conv_bn_relu_kernel(%arg0: memref<8x72xf32, #tpu.memory_space<vmem>>, %arg1: memref<72x512xf32, #tpu.memory_space<vmem>>, %arg2: memref<8x1xf32, #tpu.memory_space<vmem>>, %arg3: memref<8x1xf32, #tpu.memory_space<vmem>>, %arg4: memref<8x512xf32, #tpu.memory_space<vmem>>) attributes {dimension_semantics = [], scalar_prefetch = 0 : i64, scratch_operands = 0 : i64, tpu.core_type = #tpu.core_type<tc>} {
    %c0 = arith.constant 0 : index
    %c0_0 = arith.constant 0 : index
    %0 = vector.load %arg0[%c0, %c0_0] : memref<8x72xf32, #tpu.memory_space<vmem>>, vector<8x72xf32>
    %c0_1 = arith.constant 0 : index
    %c0_2 = arith.constant 0 : index
    %1 = vector.load %arg1[%c0_1, %c0_2] : memref<72x512xf32, #tpu.memory_space<vmem>>, vector<72x512xf32>
    %cst = arith.constant dense<0.000000e+00> : vector<8x512xf32>
    %2 = tpu.matmul %0, %1, %cst {dimension_numbers = #tpu.dot_dimension_numbers<[1], [0], [0], [1], [0, 0, 1, 1], [], []>, precision = #tpu.contract_precision<fp32>} : vector<8x72xf32>, vector<72x512xf32>, vector<8x512xf32> -> vector<8x512xf32>
    %cst_3 = arith.constant dense<0.000000e+00> : vector<8xf32>
    %3 = vector.multi_reduction <add>, %2, %cst_3 [1] : vector<8x512xf32> to vector<8xf32>
    %4 = vector.shape_cast %3 : vector<8xf32> to vector<8x1xf32>
    %5 = arith.mulf %2, %2 : vector<8x512xf32>
    %cst_4 = arith.constant dense<0.000000e+00> : vector<8xf32>
    %6 = vector.multi_reduction <add>, %5, %cst_4 [1] : vector<8x512xf32> to vector<8xf32>
    %7 = vector.shape_cast %6 : vector<8xf32> to vector<8x1xf32>
    %cst_5 = arith.constant 0.001953125 : f32
    %8 = vector.broadcast %cst_5 : f32 to vector<8x1xf32>
    %9 = arith.mulf %4, %8 : vector<8x1xf32>
    %cst_6 = arith.constant 0.001953125 : f32
    %10 = vector.broadcast %cst_6 : f32 to vector<8x1xf32>
    %11 = arith.mulf %7, %10 : vector<8x1xf32>
    %12 = arith.mulf %9, %9 : vector<8x1xf32>
    %13 = arith.subf %11, %12 : vector<8x1xf32>
    %c0_7 = arith.constant 0 : index
    %c0_8 = arith.constant 0 : index
    %14 = vector.load %arg2[%c0_7, %c0_8] : memref<8x1xf32, #tpu.memory_space<vmem>>, vector<8x1xf32>
    %cst_9 = arith.constant 9.99999974E-6 : f32
    %15 = vector.broadcast %cst_9 : f32 to vector<8x1xf32>
    %16 = arith.addf %13, %15 : vector<8x1xf32>
    %17 = math.rsqrt %16 : vector<8x1xf32>
    %18 = arith.mulf %14, %17 : vector<8x1xf32>
    %c0_10 = arith.constant 0 : index
    %c0_11 = arith.constant 0 : index
    %19 = vector.load %arg3[%c0_10, %c0_11] : memref<8x1xf32, #tpu.memory_space<vmem>>, vector<8x1xf32>
    %20 = arith.mulf %9, %18 : vector<8x1xf32>
    %21 = arith.subf %19, %20 : vector<8x1xf32>
    %22 = vector.broadcast %18 : vector<8x1xf32> to vector<8x512xf32>
    %23 = arith.mulf %2, %22 : vector<8x512xf32>
    %24 = vector.broadcast %21 : vector<8x1xf32> to vector<8x512xf32>
    %25 = arith.addf %23, %24 : vector<8x512xf32>
    %cst_12 = arith.constant 0.000000e+00 : f32
    %26 = vector.broadcast %cst_12 : f32 to vector<8x512xf32>
    %27 = arith.maximumf %25, %26 : vector<8x512xf32>
    %c0_13 = arith.constant 0 : index
    %c0_14 = arith.constant 0 : index
    %28 = vector.load %arg4[%c0_13, %c0_14] : memref<8x512xf32, #tpu.memory_space<vmem>>, vector<8x512xf32>
    tpu.vector_store %arg4[%c0_13, %c0_14], %27 {strides = array<i32>} : memref<8x512xf32, #tpu.memory_space<vmem>>, vector<8x512xf32>,
    return
  }
}

module attributes {stable_mosaic.version = 11 : i64} {
  func.func @_max4_kernel(%arg0: memref<8x128xf32, #tpu.memory_space<vmem>>, %arg1: memref<8x128xf32, #tpu.memory_space<vmem>>, %arg2: memref<8x128xf32, #tpu.memory_space<vmem>>, %arg3: memref<8x128xf32, #tpu.memory_space<vmem>>, %arg4: memref<8x128xf32, #tpu.memory_space<vmem>>) attributes {dimension_semantics = [], scalar_prefetch = 0 : i64, scratch_operands = 0 : i64, tpu.core_type = #tpu.core_type<tc>} {
    %c0 = arith.constant 0 : index
    %c0_0 = arith.constant 0 : index
    %0 = vector.load %arg0[%c0, %c0_0] : memref<8x128xf32, #tpu.memory_space<vmem>>, vector<8x128xf32>
    %c0_1 = arith.constant 0 : index
    %c0_2 = arith.constant 0 : index
    %1 = vector.load %arg1[%c0_1, %c0_2] : memref<8x128xf32, #tpu.memory_space<vmem>>, vector<8x128xf32>
    %2 = arith.maximumf %0, %1 : vector<8x128xf32>
    %c0_3 = arith.constant 0 : index
    %c0_4 = arith.constant 0 : index
    %3 = vector.load %arg2[%c0_3, %c0_4] : memref<8x128xf32, #tpu.memory_space<vmem>>, vector<8x128xf32>
    %c0_5 = arith.constant 0 : index
    %c0_6 = arith.constant 0 : index
    %4 = vector.load %arg3[%c0_5, %c0_6] : memref<8x128xf32, #tpu.memory_space<vmem>>, vector<8x128xf32>
    %5 = arith.maximumf %3, %4 : vector<8x128xf32>
    %6 = arith.maximumf %2, %5 : vector<8x128xf32>
    %c0_7 = arith.constant 0 : index
    %c0_8 = arith.constant 0 : index
    %7 = vector.load %arg4[%c0_7, %c0_8] : memref<8x128xf32, #tpu.memory_space<vmem>>, vector<8x128xf32>
    tpu.vector_store %arg4[%c0_7, %c0_8], %6 {strides = array<i32>} : memref<8x128xf32, #tpu.memory_space<vmem>>, vector<8x128xf32>,
    return
  }
}

module attributes {stable_mosaic.version = 11 : i64} {
  func.func @_conv_bn_relu_kernel(%arg0: memref<16x72xf32, #tpu.memory_space<vmem>>, %arg1: memref<72x128xf32, #tpu.memory_space<vmem>>, %arg2: memref<16x1xf32, #tpu.memory_space<vmem>>, %arg3: memref<16x1xf32, #tpu.memory_space<vmem>>, %arg4: memref<16x128xf32, #tpu.memory_space<vmem>>) attributes {dimension_semantics = [], scalar_prefetch = 0 : i64, scratch_operands = 0 : i64, tpu.core_type = #tpu.core_type<tc>} {
    %c0 = arith.constant 0 : index
    %c0_0 = arith.constant 0 : index
    %0 = vector.load %arg0[%c0, %c0_0] : memref<16x72xf32, #tpu.memory_space<vmem>>, vector<16x72xf32>
    %c0_1 = arith.constant 0 : index
    %c0_2 = arith.constant 0 : index
    %1 = vector.load %arg1[%c0_1, %c0_2] : memref<72x128xf32, #tpu.memory_space<vmem>>, vector<72x128xf32>
    %cst = arith.constant dense<0.000000e+00> : vector<16x128xf32>
    %2 = tpu.matmul %0, %1, %cst {dimension_numbers = #tpu.dot_dimension_numbers<[1], [0], [0], [1], [0, 0, 1, 1], [], []>, precision = #tpu.contract_precision<fp32>} : vector<16x72xf32>, vector<72x128xf32>, vector<16x128xf32> -> vector<16x128xf32>
    %cst_3 = arith.constant dense<0.000000e+00> : vector<16xf32>
    %3 = vector.multi_reduction <add>, %2, %cst_3 [1] : vector<16x128xf32> to vector<16xf32>
    %4 = vector.shape_cast %3 : vector<16xf32> to vector<16x1xf32>
    %5 = arith.mulf %2, %2 : vector<16x128xf32>
    %cst_4 = arith.constant dense<0.000000e+00> : vector<16xf32>
    %6 = vector.multi_reduction <add>, %5, %cst_4 [1] : vector<16x128xf32> to vector<16xf32>
    %7 = vector.shape_cast %6 : vector<16xf32> to vector<16x1xf32>
    %cst_5 = arith.constant 7.812500e-03 : f32
    %8 = vector.broadcast %cst_5 : f32 to vector<16x1xf32>
    %9 = arith.mulf %4, %8 : vector<16x1xf32>
    %cst_6 = arith.constant 7.812500e-03 : f32
    %10 = vector.broadcast %cst_6 : f32 to vector<16x1xf32>
    %11 = arith.mulf %7, %10 : vector<16x1xf32>
    %12 = arith.mulf %9, %9 : vector<16x1xf32>
    %13 = arith.subf %11, %12 : vector<16x1xf32>
    %c0_7 = arith.constant 0 : index
    %c0_8 = arith.constant 0 : index
    %14 = vector.load %arg2[%c0_7, %c0_8] : memref<16x1xf32, #tpu.memory_space<vmem>>, vector<16x1xf32>
    %cst_9 = arith.constant 9.99999974E-6 : f32
    %15 = vector.broadcast %cst_9 : f32 to vector<16x1xf32>
    %16 = arith.addf %13, %15 : vector<16x1xf32>
    %17 = math.rsqrt %16 : vector<16x1xf32>
    %18 = arith.mulf %14, %17 : vector<16x1xf32>
    %c0_10 = arith.constant 0 : index
    %c0_11 = arith.constant 0 : index
    %19 = vector.load %arg3[%c0_10, %c0_11] : memref<16x1xf32, #tpu.memory_space<vmem>>, vector<16x1xf32>
    %20 = arith.mulf %9, %18 : vector<16x1xf32>
    %21 = arith.subf %19, %20 : vector<16x1xf32>
    %22 = vector.broadcast %18 : vector<16x1xf32> to vector<16x128xf32>
    %23 = arith.mulf %2, %22 : vector<16x128xf32>
    %24 = vector.broadcast %21 : vector<16x1xf32> to vector<16x128xf32>
    %25 = arith.addf %23, %24 : vector<16x128xf32>
    %cst_12 = arith.constant 0.000000e+00 : f32
    %26 = vector.broadcast %cst_12 : f32 to vector<16x128xf32>
    %27 = arith.maximumf %25, %26 : vector<16x128xf32>
    %c0_13 = arith.constant 0 : index
    %c0_14 = arith.constant 0 : index
    %28 = vector.load %arg4[%c0_13, %c0_14] : memref<16x128xf32, #tpu.memory_space<vmem>>, vector<16x128xf32>
    tpu.vector_store %arg4[%c0_13, %c0_14], %27 {strides = array<i32>} : memref<16x128xf32, #tpu.memory_space<vmem>>, vector<16x128xf32>,
    return
  }
}

module attributes {stable_mosaic.version = 11 : i64} {
  func.func @_conv_bn_relu_kernel(%arg0: memref<16x144xf32, #tpu.memory_space<vmem>>, %arg1: memref<144x128xf32, #tpu.memory_space<vmem>>, %arg2: memref<16x1xf32, #tpu.memory_space<vmem>>, %arg3: memref<16x1xf32, #tpu.memory_space<vmem>>, %arg4: memref<16x128xf32, #tpu.memory_space<vmem>>) attributes {dimension_semantics = [], scalar_prefetch = 0 : i64, scratch_operands = 0 : i64, tpu.core_type = #tpu.core_type<tc>} {
    %c0 = arith.constant 0 : index
    %c0_0 = arith.constant 0 : index
    %0 = vector.load %arg0[%c0, %c0_0] : memref<16x144xf32, #tpu.memory_space<vmem>>, vector<16x144xf32>
    %c0_1 = arith.constant 0 : index
    %c0_2 = arith.constant 0 : index
    %1 = vector.load %arg1[%c0_1, %c0_2] : memref<144x128xf32, #tpu.memory_space<vmem>>, vector<144x128xf32>
    %cst = arith.constant dense<0.000000e+00> : vector<16x128xf32>
    %2 = tpu.matmul %0, %1, %cst {dimension_numbers = #tpu.dot_dimension_numbers<[1], [0], [0], [1], [0, 0, 1, 1], [], []>, precision = #tpu.contract_precision<fp32>} : vector<16x144xf32>, vector<144x128xf32>, vector<16x128xf32> -> vector<16x128xf32>
    %cst_3 = arith.constant dense<0.000000e+00> : vector<16xf32>
    %3 = vector.multi_reduction <add>, %2, %cst_3 [1] : vector<16x128xf32> to vector<16xf32>
    %4 = vector.shape_cast %3 : vector<16xf32> to vector<16x1xf32>
    %5 = arith.mulf %2, %2 : vector<16x128xf32>
    %cst_4 = arith.constant dense<0.000000e+00> : vector<16xf32>
    %6 = vector.multi_reduction <add>, %5, %cst_4 [1] : vector<16x128xf32> to vector<16xf32>
    %7 = vector.shape_cast %6 : vector<16xf32> to vector<16x1xf32>
    %cst_5 = arith.constant 7.812500e-03 : f32
    %8 = vector.broadcast %cst_5 : f32 to vector<16x1xf32>
    %9 = arith.mulf %4, %8 : vector<16x1xf32>
    %cst_6 = arith.constant 7.812500e-03 : f32
    %10 = vector.broadcast %cst_6 : f32 to vector<16x1xf32>
    %11 = arith.mulf %7, %10 : vector<16x1xf32>
    %12 = arith.mulf %9, %9 : vector<16x1xf32>
    %13 = arith.subf %11, %12 : vector<16x1xf32>
    %c0_7 = arith.constant 0 : index
    %c0_8 = arith.constant 0 : index
    %14 = vector.load %arg2[%c0_7, %c0_8] : memref<16x1xf32, #tpu.memory_space<vmem>>, vector<16x1xf32>
    %cst_9 = arith.constant 9.99999974E-6 : f32
    %15 = vector.broadcast %cst_9 : f32 to vector<16x1xf32>
    %16 = arith.addf %13, %15 : vector<16x1xf32>
    %17 = math.rsqrt %16 : vector<16x1xf32>
    %18 = arith.mulf %14, %17 : vector<16x1xf32>
    %c0_10 = arith.constant 0 : index
    %c0_11 = arith.constant 0 : index
    %19 = vector.load %arg3[%c0_10, %c0_11] : memref<16x1xf32, #tpu.memory_space<vmem>>, vector<16x1xf32>
    %20 = arith.mulf %9, %18 : vector<16x1xf32>
    %21 = arith.subf %19, %20 : vector<16x1xf32>
    %22 = vector.broadcast %18 : vector<16x1xf32> to vector<16x128xf32>
    %23 = arith.mulf %2, %22 : vector<16x128xf32>
    %24 = vector.broadcast %21 : vector<16x1xf32> to vector<16x128xf32>
    %25 = arith.addf %23, %24 : vector<16x128xf32>
    %cst_12 = arith.constant 0.000000e+00 : f32
    %26 = vector.broadcast %cst_12 : f32 to vector<16x128xf32>
    %27 = arith.maximumf %25, %26 : vector<16x128xf32>
    %c0_13 = arith.constant 0 : index
    %c0_14 = arith.constant 0 : index
    %28 = vector.load %arg4[%c0_13, %c0_14] : memref<16x128xf32, #tpu.memory_space<vmem>>, vector<16x128xf32>
    tpu.vector_store %arg4[%c0_13, %c0_14], %27 {strides = array<i32>} : memref<16x128xf32, #tpu.memory_space<vmem>>, vector<16x128xf32>,
    return
  }
}

module attributes {stable_mosaic.version = 11 : i64} {
  func.func @_max4_kernel(%arg0: memref<16x32xf32, #tpu.memory_space<vmem>>, %arg1: memref<16x32xf32, #tpu.memory_space<vmem>>, %arg2: memref<16x32xf32, #tpu.memory_space<vmem>>, %arg3: memref<16x32xf32, #tpu.memory_space<vmem>>, %arg4: memref<16x32xf32, #tpu.memory_space<vmem>>) attributes {dimension_semantics = [], scalar_prefetch = 0 : i64, scratch_operands = 0 : i64, tpu.core_type = #tpu.core_type<tc>} {
    %c0 = arith.constant 0 : index
    %c0_0 = arith.constant 0 : index
    %0 = vector.load %arg0[%c0, %c0_0] : memref<16x32xf32, #tpu.memory_space<vmem>>, vector<16x32xf32>
    %c0_1 = arith.constant 0 : index
    %c0_2 = arith.constant 0 : index
    %1 = vector.load %arg1[%c0_1, %c0_2] : memref<16x32xf32, #tpu.memory_space<vmem>>, vector<16x32xf32>
    %2 = arith.maximumf %0, %1 : vector<16x32xf32>
    %c0_3 = arith.constant 0 : index
    %c0_4 = arith.constant 0 : index
    %3 = vector.load %arg2[%c0_3, %c0_4] : memref<16x32xf32, #tpu.memory_space<vmem>>, vector<16x32xf32>
    %c0_5 = arith.constant 0 : index
    %c0_6 = arith.constant 0 : index
    %4 = vector.load %arg3[%c0_5, %c0_6] : memref<16x32xf32, #tpu.memory_space<vmem>>, vector<16x32xf32>
    %5 = arith.maximumf %3, %4 : vector<16x32xf32>
    %6 = arith.maximumf %2, %5 : vector<16x32xf32>
    %c0_7 = arith.constant 0 : index
    %c0_8 = arith.constant 0 : index
    %7 = vector.load %arg4[%c0_7, %c0_8] : memref<16x32xf32, #tpu.memory_space<vmem>>, vector<16x32xf32>
    tpu.vector_store %arg4[%c0_7, %c0_8], %6 {strides = array<i32>} : memref<16x32xf32, #tpu.memory_space<vmem>>, vector<16x32xf32>,
    return
  }
}

module attributes {stable_mosaic.version = 11 : i64} {
  func.func @_conv_bn_relu_kernel(%arg0: memref<32x144xf32, #tpu.memory_space<vmem>>, %arg1: memref<144x32xf32, #tpu.memory_space<vmem>>, %arg2: memref<32x1xf32, #tpu.memory_space<vmem>>, %arg3: memref<32x1xf32, #tpu.memory_space<vmem>>, %arg4: memref<32x32xf32, #tpu.memory_space<vmem>>) attributes {dimension_semantics = [], scalar_prefetch = 0 : i64, scratch_operands = 0 : i64, tpu.core_type = #tpu.core_type<tc>} {
    %c0 = arith.constant 0 : index
    %c0_0 = arith.constant 0 : index
    %0 = vector.load %arg0[%c0, %c0_0] : memref<32x144xf32, #tpu.memory_space<vmem>>, vector<32x144xf32>
    %c0_1 = arith.constant 0 : index
    %c0_2 = arith.constant 0 : index
    %1 = vector.load %arg1[%c0_1, %c0_2] : memref<144x32xf32, #tpu.memory_space<vmem>>, vector<144x32xf32>
    %cst = arith.constant dense<0.000000e+00> : vector<32x32xf32>
    %2 = tpu.matmul %0, %1, %cst {dimension_numbers = #tpu.dot_dimension_numbers<[1], [0], [0], [1], [0, 0, 1, 1], [], []>, precision = #tpu.contract_precision<fp32>} : vector<32x144xf32>, vector<144x32xf32>, vector<32x32xf32> -> vector<32x32xf32>
    %cst_3 = arith.constant dense<0.000000e+00> : vector<32xf32>
    %3 = vector.multi_reduction <add>, %2, %cst_3 [1] : vector<32x32xf32> to vector<32xf32>
    %4 = vector.shape_cast %3 : vector<32xf32> to vector<32x1xf32>
    %5 = arith.mulf %2, %2 : vector<32x32xf32>
    %cst_4 = arith.constant dense<0.000000e+00> : vector<32xf32>
    %6 = vector.multi_reduction <add>, %5, %cst_4 [1] : vector<32x32xf32> to vector<32xf32>
    %7 = vector.shape_cast %6 : vector<32xf32> to vector<32x1xf32>
    %cst_5 = arith.constant 3.125000e-02 : f32
    %8 = vector.broadcast %cst_5 : f32 to vector<32x1xf32>
    %9 = arith.mulf %4, %8 : vector<32x1xf32>
    %cst_6 = arith.constant 3.125000e-02 : f32
    %10 = vector.broadcast %cst_6 : f32 to vector<32x1xf32>
    %11 = arith.mulf %7, %10 : vector<32x1xf32>
    %12 = arith.mulf %9, %9 : vector<32x1xf32>
    %13 = arith.subf %11, %12 : vector<32x1xf32>
    %c0_7 = arith.constant 0 : index
    %c0_8 = arith.constant 0 : index
    %14 = vector.load %arg2[%c0_7, %c0_8] : memref<32x1xf32, #tpu.memory_space<vmem>>, vector<32x1xf32>
    %cst_9 = arith.constant 9.99999974E-6 : f32
    %15 = vector.broadcast %cst_9 : f32 to vector<32x1xf32>
    %16 = arith.addf %13, %15 : vector<32x1xf32>
    %17 = math.rsqrt %16 : vector<32x1xf32>
    %18 = arith.mulf %14, %17 : vector<32x1xf32>
    %c0_10 = arith.constant 0 : index
    %c0_11 = arith.constant 0 : index
    %19 = vector.load %arg3[%c0_10, %c0_11] : memref<32x1xf32, #tpu.memory_space<vmem>>, vector<32x1xf32>
    %20 = arith.mulf %9, %18 : vector<32x1xf32>
    %21 = arith.subf %19, %20 : vector<32x1xf32>
    %22 = vector.broadcast %18 : vector<32x1xf32> to vector<32x32xf32>
    %23 = arith.mulf %2, %22 : vector<32x32xf32>
    %24 = vector.broadcast %21 : vector<32x1xf32> to vector<32x32xf32>
    %25 = arith.addf %23, %24 : vector<32x32xf32>
    %cst_12 = arith.constant 0.000000e+00 : f32
    %26 = vector.broadcast %cst_12 : f32 to vector<32x32xf32>
    %27 = arith.maximumf %25, %26 : vector<32x32xf32>
    %c0_13 = arith.constant 0 : index
    %c0_14 = arith.constant 0 : index
    %28 = vector.load %arg4[%c0_13, %c0_14] : memref<32x32xf32, #tpu.memory_space<vmem>>, vector<32x32xf32>
    tpu.vector_store %arg4[%c0_13, %c0_14], %27 {strides = array<i32>} : memref<32x32xf32, #tpu.memory_space<vmem>>, vector<32x32xf32>,
    return
  }
}

module attributes {stable_mosaic.version = 11 : i64} {
  func.func @_matmul_bias_kernel(%arg0: memref<128x32xf32, #tpu.memory_space<vmem>>, %arg1: memref<32x32xf32, #tpu.memory_space<vmem>>, %arg2: memref<128x1xf32, #tpu.memory_space<vmem>>, %arg3: memref<128x32xf32, #tpu.memory_space<vmem>>) attributes {dimension_semantics = [], scalar_prefetch = 0 : i64, scratch_operands = 0 : i64, tpu.core_type = #tpu.core_type<tc>} {
    %c0 = arith.constant 0 : index
    %c0_0 = arith.constant 0 : index
    %0 = vector.load %arg0[%c0, %c0_0] : memref<128x32xf32, #tpu.memory_space<vmem>>, vector<128x32xf32>
    %c0_1 = arith.constant 0 : index
    %c0_2 = arith.constant 0 : index
    %1 = vector.load %arg1[%c0_1, %c0_2] : memref<32x32xf32, #tpu.memory_space<vmem>>, vector<32x32xf32>
    %cst = arith.constant dense<0.000000e+00> : vector<128x32xf32>
    %2 = tpu.matmul %0, %1, %cst {dimension_numbers = #tpu.dot_dimension_numbers<[1], [0], [0], [1], [0, 0, 1, 1], [], []>, precision = #tpu.contract_precision<fp32>} : vector<128x32xf32>, vector<32x32xf32>, vector<128x32xf32> -> vector<128x32xf32>
    %c0_3 = arith.constant 0 : index
    %c0_4 = arith.constant 0 : index
    %3 = vector.load %arg2[%c0_3, %c0_4] : memref<128x1xf32, #tpu.memory_space<vmem>>, vector<128x1xf32>
    %4 = vector.broadcast %3 : vector<128x1xf32> to vector<128x32xf32>
    %5 = arith.addf %2, %4 : vector<128x32xf32>
    %c0_5 = arith.constant 0 : index
    %c0_6 = arith.constant 0 : index
    %6 = vector.load %arg3[%c0_5, %c0_6] : memref<128x32xf32, #tpu.memory_space<vmem>>, vector<128x32xf32>
    tpu.vector_store %arg3[%c0_5, %c0_6], %5 {strides = array<i32>} : memref<128x32xf32, #tpu.memory_space<vmem>>, vector<128x32xf32>,
    return
  }
}

module attributes {stable_mosaic.version = 11 : i64} {
  func.func @_conv_bn_relu_kernel(%arg0: memref<8x432xf32, #tpu.memory_space<vmem>>, %arg1: memref<432x128xf32, #tpu.memory_space<vmem>>, %arg2: memref<8x1xf32, #tpu.memory_space<vmem>>, %arg3: memref<8x1xf32, #tpu.memory_space<vmem>>, %arg4: memref<8x128xf32, #tpu.memory_space<vmem>>) attributes {dimension_semantics = [], scalar_prefetch = 0 : i64, scratch_operands = 0 : i64, tpu.core_type = #tpu.core_type<tc>} {
    %c0 = arith.constant 0 : index
    %c0_0 = arith.constant 0 : index
    %0 = vector.load %arg0[%c0, %c0_0] : memref<8x432xf32, #tpu.memory_space<vmem>>, vector<8x432xf32>
    %c0_1 = arith.constant 0 : index
    %c0_2 = arith.constant 0 : index
    %1 = vector.load %arg1[%c0_1, %c0_2] : memref<432x128xf32, #tpu.memory_space<vmem>>, vector<432x128xf32>
    %cst = arith.constant dense<0.000000e+00> : vector<8x128xf32>
    %2 = tpu.matmul %0, %1, %cst {dimension_numbers = #tpu.dot_dimension_numbers<[1], [0], [0], [1], [0, 0, 1, 1], [], []>, precision = #tpu.contract_precision<fp32>} : vector<8x432xf32>, vector<432x128xf32>, vector<8x128xf32> -> vector<8x128xf32>
    %cst_3 = arith.constant dense<0.000000e+00> : vector<8xf32>
    %3 = vector.multi_reduction <add>, %2, %cst_3 [1] : vector<8x128xf32> to vector<8xf32>
    %4 = vector.shape_cast %3 : vector<8xf32> to vector<8x1xf32>
    %5 = arith.mulf %2, %2 : vector<8x128xf32>
    %cst_4 = arith.constant dense<0.000000e+00> : vector<8xf32>
    %6 = vector.multi_reduction <add>, %5, %cst_4 [1] : vector<8x128xf32> to vector<8xf32>
    %7 = vector.shape_cast %6 : vector<8xf32> to vector<8x1xf32>
    %cst_5 = arith.constant 7.812500e-03 : f32
    %8 = vector.broadcast %cst_5 : f32 to vector<8x1xf32>
    %9 = arith.mulf %4, %8 : vector<8x1xf32>
    %cst_6 = arith.constant 7.812500e-03 : f32
    %10 = vector.broadcast %cst_6 : f32 to vector<8x1xf32>
    %11 = arith.mulf %7, %10 : vector<8x1xf32>
    %12 = arith.mulf %9, %9 : vector<8x1xf32>
    %13 = arith.subf %11, %12 : vector<8x1xf32>
    %c0_7 = arith.constant 0 : index
    %c0_8 = arith.constant 0 : index
    %14 = vector.load %arg2[%c0_7, %c0_8] : memref<8x1xf32, #tpu.memory_space<vmem>>, vector<8x1xf32>
    %cst_9 = arith.constant 9.99999974E-6 : f32
    %15 = vector.broadcast %cst_9 : f32 to vector<8x1xf32>
    %16 = arith.addf %13, %15 : vector<8x1xf32>
    %17 = math.rsqrt %16 : vector<8x1xf32>
    %18 = arith.mulf %14, %17 : vector<8x1xf32>
    %c0_10 = arith.constant 0 : index
    %c0_11 = arith.constant 0 : index
    %19 = vector.load %arg3[%c0_10, %c0_11] : memref<8x1xf32, #tpu.memory_space<vmem>>, vector<8x1xf32>
    %20 = arith.mulf %9, %18 : vector<8x1xf32>
    %21 = arith.subf %19, %20 : vector<8x1xf32>
    %22 = vector.broadcast %18 : vector<8x1xf32> to vector<8x128xf32>
    %23 = arith.mulf %2, %22 : vector<8x128xf32>
    %24 = vector.broadcast %21 : vector<8x1xf32> to vector<8x128xf32>
    %25 = arith.addf %23, %24 : vector<8x128xf32>
    %cst_12 = arith.constant 0.000000e+00 : f32
    %26 = vector.broadcast %cst_12 : f32 to vector<8x128xf32>
    %27 = arith.maximumf %25, %26 : vector<8x128xf32>
    %c0_13 = arith.constant 0 : index
    %c0_14 = arith.constant 0 : index
    %28 = vector.load %arg4[%c0_13, %c0_14] : memref<8x128xf32, #tpu.memory_space<vmem>>, vector<8x128xf32>
    tpu.vector_store %arg4[%c0_13, %c0_14], %27 {strides = array<i32>} : memref<8x128xf32, #tpu.memory_space<vmem>>, vector<8x128xf32>,
    return
  }
}

module attributes {stable_mosaic.version = 11 : i64} {
  func.func @_conv_bn_relu_kernel(%arg0: memref<8x72xf32, #tpu.memory_space<vmem>>, %arg1: memref<72x128xf32, #tpu.memory_space<vmem>>, %arg2: memref<8x1xf32, #tpu.memory_space<vmem>>, %arg3: memref<8x1xf32, #tpu.memory_space<vmem>>, %arg4: memref<8x128xf32, #tpu.memory_space<vmem>>) attributes {dimension_semantics = [], scalar_prefetch = 0 : i64, scratch_operands = 0 : i64, tpu.core_type = #tpu.core_type<tc>} {
    %c0 = arith.constant 0 : index
    %c0_0 = arith.constant 0 : index
    %0 = vector.load %arg0[%c0, %c0_0] : memref<8x72xf32, #tpu.memory_space<vmem>>, vector<8x72xf32>
    %c0_1 = arith.constant 0 : index
    %c0_2 = arith.constant 0 : index
    %1 = vector.load %arg1[%c0_1, %c0_2] : memref<72x128xf32, #tpu.memory_space<vmem>>, vector<72x128xf32>
    %cst = arith.constant dense<0.000000e+00> : vector<8x128xf32>
    %2 = tpu.matmul %0, %1, %cst {dimension_numbers = #tpu.dot_dimension_numbers<[1], [0], [0], [1], [0, 0, 1, 1], [], []>, precision = #tpu.contract_precision<fp32>} : vector<8x72xf32>, vector<72x128xf32>, vector<8x128xf32> -> vector<8x128xf32>
    %cst_3 = arith.constant dense<0.000000e+00> : vector<8xf32>
    %3 = vector.multi_reduction <add>, %2, %cst_3 [1] : vector<8x128xf32> to vector<8xf32>
    %4 = vector.shape_cast %3 : vector<8xf32> to vector<8x1xf32>
    %5 = arith.mulf %2, %2 : vector<8x128xf32>
    %cst_4 = arith.constant dense<0.000000e+00> : vector<8xf32>
    %6 = vector.multi_reduction <add>, %5, %cst_4 [1] : vector<8x128xf32> to vector<8xf32>
    %7 = vector.shape_cast %6 : vector<8xf32> to vector<8x1xf32>
    %cst_5 = arith.constant 7.812500e-03 : f32
    %8 = vector.broadcast %cst_5 : f32 to vector<8x1xf32>
    %9 = arith.mulf %4, %8 : vector<8x1xf32>
    %cst_6 = arith.constant 7.812500e-03 : f32
    %10 = vector.broadcast %cst_6 : f32 to vector<8x1xf32>
    %11 = arith.mulf %7, %10 : vector<8x1xf32>
    %12 = arith.mulf %9, %9 : vector<8x1xf32>
    %13 = arith.subf %11, %12 : vector<8x1xf32>
    %c0_7 = arith.constant 0 : index
    %c0_8 = arith.constant 0 : index
    %14 = vector.load %arg2[%c0_7, %c0_8] : memref<8x1xf32, #tpu.memory_space<vmem>>, vector<8x1xf32>
    %cst_9 = arith.constant 9.99999974E-6 : f32
    %15 = vector.broadcast %cst_9 : f32 to vector<8x1xf32>
    %16 = arith.addf %13, %15 : vector<8x1xf32>
    %17 = math.rsqrt %16 : vector<8x1xf32>
    %18 = arith.mulf %14, %17 : vector<8x1xf32>
    %c0_10 = arith.constant 0 : index
    %c0_11 = arith.constant 0 : index
    %19 = vector.load %arg3[%c0_10, %c0_11] : memref<8x1xf32, #tpu.memory_space<vmem>>, vector<8x1xf32>
    %20 = arith.mulf %9, %18 : vector<8x1xf32>
    %21 = arith.subf %19, %20 : vector<8x1xf32>
    %22 = vector.broadcast %18 : vector<8x1xf32> to vector<8x128xf32>
    %23 = arith.mulf %2, %22 : vector<8x128xf32>
    %24 = vector.broadcast %21 : vector<8x1xf32> to vector<8x128xf32>
    %25 = arith.addf %23, %24 : vector<8x128xf32>
    %cst_12 = arith.constant 0.000000e+00 : f32
    %26 = vector.broadcast %cst_12 : f32 to vector<8x128xf32>
    %27 = arith.maximumf %25, %26 : vector<8x128xf32>
    %c0_13 = arith.constant 0 : index
    %c0_14 = arith.constant 0 : index
    %28 = vector.load %arg4[%c0_13, %c0_14] : memref<8x128xf32, #tpu.memory_space<vmem>>, vector<8x128xf32>
    tpu.vector_store %arg4[%c0_13, %c0_14], %27 {strides = array<i32>} : memref<8x128xf32, #tpu.memory_space<vmem>>, vector<8x128xf32>,
    return
  }
}

module attributes {stable_mosaic.version = 11 : i64} {
  func.func @_matmul_bias_kernel(%arg0: memref<10x8xf32, #tpu.memory_space<vmem>>, %arg1: memref<8x128xf32, #tpu.memory_space<vmem>>, %arg2: memref<10x1xf32, #tpu.memory_space<vmem>>, %arg3: memref<10x128xf32, #tpu.memory_space<vmem>>) attributes {dimension_semantics = [], scalar_prefetch = 0 : i64, scratch_operands = 0 : i64, tpu.core_type = #tpu.core_type<tc>} {
    %c0 = arith.constant 0 : index
    %c0_0 = arith.constant 0 : index
    %0 = vector.load %arg0[%c0, %c0_0] : memref<10x8xf32, #tpu.memory_space<vmem>>, vector<10x8xf32>
    %c0_1 = arith.constant 0 : index
    %c0_2 = arith.constant 0 : index
    %1 = vector.load %arg1[%c0_1, %c0_2] : memref<8x128xf32, #tpu.memory_space<vmem>>, vector<8x128xf32>
    %cst = arith.constant dense<0.000000e+00> : vector<10x128xf32>
    %2 = tpu.matmul %0, %1, %cst {dimension_numbers = #tpu.dot_dimension_numbers<[1], [0], [0], [1], [0, 0, 1, 1], [], []>, precision = #tpu.contract_precision<fp32>} : vector<10x8xf32>, vector<8x128xf32>, vector<10x128xf32> -> vector<10x128xf32>
    %c0_3 = arith.constant 0 : index
    %c0_4 = arith.constant 0 : index
    %3 = vector.load %arg2[%c0_3, %c0_4] : memref<10x1xf32, #tpu.memory_space<vmem>>, vector<10x1xf32>
    %4 = vector.broadcast %3 : vector<10x1xf32> to vector<10x128xf32>
    %5 = arith.addf %2, %4 : vector<10x128xf32>
    %c0_5 = arith.constant 0 : index
    %c0_6 = arith.constant 0 : index
    %6 = vector.load %arg3[%c0_5, %c0_6] : memref<10x128xf32, #tpu.memory_space<vmem>>, vector<10x128xf32>
    tpu.vector_store %arg3[%c0_5, %c0_6], %5 {strides = array<i32>} : memref<10x128xf32, #tpu.memory_space<vmem>>, vector<10x128xf32>,
    return
  }
}

</mosaic_0001>

<llo_original>
// kernel: baseline_unet_pallas.11
$region0: #{baseline_unet_pallas.11}
  #allocation0 [shape = 'u32[]', space=smem, size = 0x4, offset = 0x4, fixed_abs, tag = 'smem constant byte address 0x4 - core index']
  #allocation1 [shape = 'u32[144,128]{1,0:T(1,128)}', space=vmem, size = 0x12000, scoped, tag = 'internal scratch']
  %s0 = inlined_call_operand.vmem [shape: f32[8,36], index: 0, kind: input, shape index: {}]
  %s1 = inlined_call_operand.vmem [shape: f32[36,512], index: 1, kind: input, shape index: {}]
  %s2 = inlined_call_operand.vmem [shape: f32[8,1], index: 2, kind: input, shape index: {}]
  %s3 = inlined_call_operand.vmem [shape: f32[8,1], index: 3, kind: input, shape index: {}]
  %s4 = inlined_call_operand.vmem [shape: f32[8,512], index: 4, kind: output, shape index: {}]
  %s5 = sld [smem:[#allocation0]]
  $region26: #{baseline_unet_pallas.11} parent=0
    _
  %s7 = ssub.s32 1, %s5
  %s8 = scalar_select 0, %s7, %s5
  // Predicated region
  $region2: #{baseline_unet_pallas.11} parent=0 // pred_check
    _
  $region3: #{baseline_unet_pallas.11} parent=0 // pred_check_branch
    %10 = sbr.rel (0) target = $region5
  $region4: #{baseline_unet_pallas.11} parent=0 // pred_region
    _
  $region5: #{baseline_unet_pallas.11} parent=0 // pred_fallthru
    _
  // Predicated region
  $region6: #{baseline_unet_pallas.11} parent=0 // pred_check
    _
  $region7: #{baseline_unet_pallas.11} parent=0 // pred_check_branch
    %12 = sbr.rel (0) target = $region9
  $region8: #{baseline_unet_pallas.11} parent=0 // pred_region
    _
  $region9: #{baseline_unet_pallas.11} parent=0 // pred_fallthru
    _
  // Predicated region
  $region10: #{baseline_unet_pallas.11} parent=0 // pred_check
    _
  $region11: #{baseline_unet_pallas.11} parent=0 // pred_check_branch
    %14 = sbr.rel (0) target = $region13
  $region12: #{baseline_unet_pallas.11} parent=0 // pred_region
    _
  $region13: #{baseline_unet_pallas.11} parent=0 // pred_fallthru
    _
  // Predicated region
  $region14: #{baseline_unet_pallas.11} parent=0 // pred_check
    _
  $region15: #{baseline_unet_pallas.11} parent=0 // pred_check_branch
    %16 = sbr.rel (0) target = $region17
  $region16: #{baseline_unet_pallas.11} parent=0 // pred_region
    _
  $region17: #{baseline_unet_pallas.11} parent=0 // pred_fallthru
    _
  %v17 = vld [vmem:[%s0] sm:$0xff]
  %v18 = vld [vmem:[%s1] sm:$0xff]
  %v19 = vld [vmem:[%s1 + $0x8] sm:$0xff]
  %v20 = vld [vmem:[%s1 + $0x10] sm:$0xff]
  %v21 = vld [vmem:[%s1 + $0x18] sm:$0xff]
  %v22 = vld [vmem:[%s1 + $0x20] sm:$0xff]
  %v23 = vld [vmem:[%s1 + $0x28] sm:$0xff]
  %v24 = vld [vmem:[%s1 + $0x30] sm:$0xff]
  %v25 = vld [vmem:[%s1 + $0x38] sm:$0xff]
  %v26 = vld [vmem:[%s1 + $0x40] sm:$0xff]
  %v27 = vld [vmem:[%s1 + $0x48] sm:$0xff]
  %v28 = vld [vmem:[%s1 + $0x50] sm:$0xff]
  %v29 = vld [vmem:[%s1 + $0x58] sm:$0xff]
  %v30 = vld [vmem:[%s1 + $0x60] sm:$0xff]
  %v31 = vld [vmem:[%s1 + $0x68] sm:$0xff]
  %v32 = vld [vmem:[%s1 + $0x70] sm:$0xff]
  %v33 = vld [vmem:[%s1 + $0x78] sm:$0xff]
  %v34 = vld [vmem:[%s1 + $0x80] sm:$0xf]
  %v35 = vld [vmem:[%s1 + $0x88] sm:$0xf]
  %v36 = vld [vmem:[%s1 + $0x90] sm:$0xf]
  %v37 = vld [vmem:[%s1 + $0x98] sm:$0xf]
  %vm38 = vcmask 293888
  %v40 = vsel %vm38, %v17, 0
  %vm42 = vcmask 1043456
  %v44 = vsel %vm42, %v34, 0
  %v47 = vsel %vm42, %v35, 0
  %v50 = vsel %vm42, %v36, 0
  %v53 = vsel %vm42, %v37, 0
  %v55 = vand.u32 %v19, 4294901760
  %56 = vmatprep.subr.mxu0 %v55
  %v57 = vand.u32 %v18, 4294901760
  %58 = vmatpush1.msra.mxu0 %v57
  %v59 = vand.u32 %v23, 4294901760
  %60 = vmatprep.subr.mxu0 %v59
  %v61 = vand.u32 %v22, 4294901760
  %62 = vmatpush1.msra.mxu0 %v61
  %v63 = vand.u32 %v27, 4294901760
  %64 = vmatprep.subr.mxu0 %v63
  %v65 = vand.u32 %v26, 4294901760
  %66 = vmatpush1.msra.mxu0 %v65
  %v67 = vand.u32 %v31, 4294901760
  %68 = vmatprep.subr.mxu0 %v67
  %v69 = vand.u32 %v30, 4294901760
  %70 = vmatpush1.msra.mxu0 %v69
  %v71 = vand.u32 %v47, 4294901760
  %72 = vmatprep.subr.mxu0 %v71
  %v73 = vand.u32 %v44, 4294901760
  %74 = vmatpush1.msra.mxu0 %v73
  %75 = vmatprep.subr.mxu0 0.0
  %76 = vmatpush1.msra.mxu0 0.0
  %77 = vmatprep.subr.mxu0 0.0
  %78 = vmatpush1.msra.mxu0 0.0
  %79 = vmatprep.subr.mxu0 0.0
  %80 = vmatpush1.msra.mxu0 0.0
  %81 = vmatprep.subr.mxu0 0.0
  %82 = vmatpush1.msra.mxu0 0.0
  %83 = vmatprep.subr.mxu0 0.0
  %84 = vmatpush1.msra.mxu0 0.0
  %85 = vmatprep.subr.mxu0 0.0
  %86 = vmatpush1.msra.mxu0 0.0
  %87 = vmatprep.subr.mxu0 0.0
  %88 = vmatpush1.msra.mxu0 0.0
  %89 = vmatprep.subr.mxu0 0.0
  %90 = vmatpush1.msra.mxu0 0.0
  %91 = vmatprep.subr.mxu0 0.0
  %92 = vmatpush1.msra.mxu0 0.0
  %93 = vmatprep.subr.mxu0 0.0
  %94 = vmatpush1.msra.mxu0 0.0
  %95 = vmatprep.subr.mxu0 0.0
  %96 = vmatpush1.msra.mxu0 0.0
  %97 = vmatprep.subr.mxu0 0.0
  %98 = vmatpush1.msra.mxu0 0.0
  %99 = vmatprep.subr.mxu0 0.0
  %100 = vmatpush1.msra.mxu0 0.0
  %101 = vmatprep.subr.mxu0 0.0
  %102 = vmatpush1.msra.mxu0 0.0
  %103 = vmatprep.subr.mxu0 0.0
  %104 = vmatpush1.msra.mxu0 0.0
  %105 = vmatprep.subr.mxu0 0.0
  %106 = vmatpush1.msra.mxu0 0.0
  %107 = vmatprep.subr.mxu0 0.0
  %108 = vmatpush1.msra.mxu0 0.0
  %109 = vmatprep.subr.mxu0 0.0
  %110 = vmatpush1.msra.mxu0 0.0
  %111 = vmatprep.subr.mxu0 0.0
  %112 = vmatpush1.msra.mxu0 0.0
  %113 = vmatprep.subr.mxu0 0.0
  %114 = vmatpush1.msra.mxu0 0.0
  %115 = vmatprep.subr.mxu0 0.0
  %116 = vmatpush1.msra.mxu0 0.0
  %117 = vmatprep.subr.mxu0 0.0
  %118 = vmatpush1.msra.mxu0 0.0
  %119 = vmatprep.subr.mxu0 0.0
  %120 = vmatpush1.msra.mxu0 0.0
  %121 = vmatprep.subr.mxu0 0.0
  %122 = vmatpush1.msra.mxu0 0.0
  %123 = vmatprep.subr.mxu0 0.0
  %124 = vmatpush1.msra.mxu0 0.0
  %125 = vmatprep.subr.mxu0 0.0
  %126 = vmatpush1.msra.mxu0 0.0
  %127 = vmatprep.subr.mxu0 0.0
  %128 = vmatpush1.msra.mxu0 0.0
  %129 = vmatprep.mubr.f32.mxu0 0.0
  %v130 = vand.u32 %v40, 4294901760
  %v131 = vsub.f32 %v40, %v130
  %v132 = vand.u32 %v131, 4294901760
  %v133 = vsub.f32 %v131, %v132
  %v134 = vand.u32 %v133, 4294901760
  %135 = vmatmul.mubr.f32.gmra.mrb[0].mxu0 %v134
  %v136 = vpop.f32.mrb[0].mxu0
  %v137 = vadd.f32 0.0, %v136
  %v138 = vpop.f32.mrb[0].mxu0
  %v139 = vadd.f32 0.0, %v138
  %140 = vdwg.mxu0
  %v141 = vand.u32 %v19, 4294901760
  %v142 = vsub.f32 %v19, %v141
  %v143 = vand.u32 %v142, 4294901760
  %v144 = vsub.f32 %v142, %v143
  %v145 = vand.u32 %v144, 4294901760
  %146 = vmatprep.subr.mxu0 %v145
  %v147 = vand.u32 %v18, 4294901760
  %v148 = vsub.f32 %v18, %v147
  %v149 = vand.u32 %v148, 4294901760
  %v150 = vsub.f32 %v148, %v149
  %v151 = vand.u32 %v150, 4294901760
  %152 = vmatpush1.msra.mxu0 %v151
  %v153 = vand.u32 %v23, 4294901760
  %v154 = vsub.f32 %v23, %v153
  %v155 = vand.u32 %v154, 4294901760
  %v156 = vsub.f32 %v154, %v155
  %v157 = vand.u32 %v156, 4294901760
  %158 = vmatprep.subr.mxu0 %v157
  %v159 = vand.u32 %v22, 4294901760
  %v160 = vsub.f32 %v22, %v159
  %v161 = vand.u32 %v160, 4294901760
  %v162 = vsub.f32 %v160, %v161
  %v163 = vand.u32 %v162, 4294901760
  %164 = vmatpush1.msra.mxu0 %v163
  %v165 = vand.u32 %v27, 4294901760
  %v166 = vsub.f32 %v27, %v165
  %v167 = vand.u32 %v166, 4294901760
  %v168 = vsub.f32 %v166, %v167
  %v169 = vand.u32 %v168, 4294901760
  %170 = vmatprep.subr.mxu0 %v169
  %v171 = vand.u32 %v26, 4294901760
  %v172 = vsub.f32 %v26, %v171
  %v173 = vand.u32 %v172, 4294901760
  %v174 = vsub.f32 %v172, %v173
  %v175 = vand.u32 %v174, 4294901760
  %176 = vmatpush1.msra.mxu0 %v175
  %v177 = vand.u32 %v31, 4294901760
  %v178 = vsub.f32 %v31, %v177
  %v179 = vand.u32 %v178, 4294901760
  %v180 = vsub.f32 %v178, %v179
  %v181 = vand.u32 %v180, 4294901760
  %182 = vmatprep.subr.mxu0 %v181
  %v183 = vand.u32 %v30, 4294901760
  %v184 = vsub.f32 %v30, %v183
  %v185 = vand.u32 %v184, 4294901760
  %v186 = vsub.f32 %v184, %v185
  %v187 = vand.u32 %v186, 4294901760
  %188 = vmatpush1.msra.mxu0 %v187
  %v189 = vand.u32 %v47, 4294901760
  %v190 = vsub.f32 %v47, %v189
  %v191 = vand.u32 %v190, 4294901760
  %v192 = vsub.f32 %v190, %v191
  %v193 = vand.u32 %v192, 4294901760
  %194 = vmatprep.subr.mxu0 %v193
  %v195 = vand.u32 %v44, 4294901760
  %v196 = vsub.f32 %v44, %v195
  %v197 = vand.u32 %v196, 4294901760
  %v198 = vsub.f32 %v196, %v197
  %v199 = vand.u32 %v198, 4294901760
  %200 = vmatpush1.msra.mxu0 %v199
  %201 = vmatprep.subr.mxu0 0.0
  %202 = vmatpush1.msra.mxu0 0.0
  %203 = vmatprep.subr.mxu0 0.0
  %204 = vmatpush1.msra.mxu0 0.0
  %205 = vmatprep.subr.mxu0 0.0
  %206 = vmatpush1.msra.mxu0 0.0
  %207 = vmatprep.subr.mxu0 0.0
  %208 = vmatpush1.msra.mxu0 0.0
  %209 = vmatprep.subr.mxu0 0.0
  %210 = vmatpush1.msra.mxu0 0.0
  %211 = vmatprep.subr.mxu0 0.0
  %212 = vmatpush1.msra.mxu0 0.0
  %213 = vmatprep.subr.mxu0 0.0
  %214 = vmatpush1.msra.mxu0 0.0
  %215 = vmatprep.subr.mxu0 0.0
  %216 = vmatpush1.msra.mxu0 0.0
  %217 = vmatprep.subr.mxu0 0.0
  %218 = vmatpush1.msra.mxu0 0.0
  %219 = vmatprep.subr.mxu0 0.0
  %220 = vmatpush1.msra.mxu0 0.0
  %221 = vmatprep.subr.mxu0 0.0
  %222 = vmatpush1.msra.mxu0 0.0
  %223 = vmatprep.subr.mxu0 0.0
  %224 = vmatpush1.msra.mxu0 0.0
  %225 = vmatprep.subr.mxu0 0.0
  %226 = vmatpush1.msra.mxu0 0.0
  %227 = vmatprep.subr.mxu0 0.0
  %228 = vmatpush1.msra.mxu0 0.0
  %229 = vmatprep.subr.mxu0 0.0
  %230 = vmatpush1.msra.mxu0 0.0
  %231 = vmatprep.subr.mxu0 0.0
  %232 = vmatpush1.msra.mxu0 0.0
  %233 = vmatprep.subr.mxu0 0.0
  %234 = vmatpush1.msra.mxu0 0.0
  %235 = vmatprep.subr.mxu0 0.0
  %236 = vmatpush1.msra.mxu0 0.0
  %237 = vmatprep.subr.mxu0 0.0
  %238 = vmatpush1.msra.mxu0 0.0
  %239 = vmatprep.subr.mxu0 0.0
  %240 = vmatpush1.msra.mxu0 0.0
  %241 = vmatprep.subr.mxu0 0.0
  %242 = vmatpush1.msra.mxu0 0.0
  %243 = vmatprep.subr.mxu0 0.0
  %244 = vmatpush1.msra.mxu0 0.0
  %245 = vmatprep.subr.mxu0 0.0
  %246 = vmatpush1.msra.mxu0 0.0
  %247 = vmatprep.subr.mxu0 0.0
  %248 = vmatpush1.msra.mxu0 0.0
  %249 = vmatprep.subr.mxu0 0.0
  %250 = vmatpush1.msra.mxu0 0.0
  %251 = vmatprep.subr.mxu0 0.0
  %252 = vmatpush1.msra.mxu0 0.0
  %253 = vmatprep.subr.mxu0 0.0
  %254 = vmatpush1.msra.mxu0 0.0
  %255 = vmatprep.mubr.f32.mxu0 0.0
  %v256 = vand.u32 %v40, 4294901760
  %257 = vmatmul.mubr.f32.gmra.mrb[0].mxu0 %v256
  %v258 = vpop.f32.mrb[0].mxu0
  %v259 = vadd.f32 %v137, %v258
  %v260 = vpop.f32.mrb[0].mxu0
  %v261 = vadd.f32 %v139, %v260
  %262 = vdwg.mxu0
  %v263 = vand.u32 %v19, 4294901760
  %v264 = vsub.f32 %v19, %v263
  %265 = vmatprep.subr.mxu0 %v264
  %v266 = vand.u32 %v18, 4294901760
  %v267 = vsub.f32 %v18, %v266
  %268 = vmatpush1.msra.mxu0 %v267
  %v269 = vand.u32 %v23, 4294901760
  %v270 = vsub.f32 %v23, %v269
  %271 = vmatprep.subr.mxu0 %v270
  %v272 = vand.u32 %v22, 4294901760
  %v273 = vsub.f32 %v22, %v272
  %274 = vmatpush1.msra.mxu0 %v273
  %v275 = vand.u32 %v27, 4294901760
  %v276 = vsub.f32 %v27, %v275
  %277 = vmatprep.subr.mxu0 %v276
  %v278 = vand.u32 %v26, 4294901760
  %v279 = vsub.f32 %v26, %v278
  %280 = vmatpush1.msra.mxu0 %v279
  %v281 = vand.u32 %v31, 4294901760
  %v282 = vsub.f32 %v31, %v281
  %283 = vmatprep.subr.mxu0 %v282
  %v284 = vand.u32 %v30, 4294901760
  %v285 = vsub.f32 %v30, %v284
  %286 = vmatpush1.msra.mxu0 %v285
  %v287 = vand.u32 %v47, 4294901760
  %v288 = vsub.f32 %v47, %v287
  %289 = vmatprep.subr.mxu0 %v288
  %v290 = vand.u32 %v44, 4294901760
  %v291 = vsub.f32 %v44, %v290
  %292 = vmatpush1.msra.mxu0 %v291
  %293 = vmatprep.subr.mxu0 0.0
  %294 = vmatpush1.msra.mxu0 0.0
  %295 = vmatprep.subr.mxu0 0.0
  %296 = vmatpush1.msra.mxu0 0.0
  %297 = vmatprep.subr.mxu0 0.0
  %298 = vmatpush1.msra.mxu0 0.0
  %299 = vmatprep.subr.mxu0 0.0
  %300 = vmatpush1.msra.mxu0 0.0
  %301 = vmatprep.subr.mxu0 0.0
  %302 = vmatpush1.msra.mxu0 0.0
  %303 = vmatprep.subr.mxu0 0.0
  %304 = vmatpush1.msra.mxu0 0.0
  %305 = vmatprep.subr.mxu0 0.0
  %306 = vmatpush1.msra.mxu0 0.0
  %307 = vmatprep.subr.mxu0 0.0
  %308 = vmatpush1.msra.mxu0 0.0
  %309 = vmatprep.subr.mxu0 0.0
  %310 = vmatpush1.msra.mxu0 0.0
  %311 = vmatprep.subr.mxu0 0.0
  %312 = vmatpush1.msra.mxu0 0.0
  %313 = vmatprep.subr.mxu0 0.0
  %314 = vmatpush1.msra.mxu0 0.0
  %315 = vmatprep.subr.mxu0 0.0
  %316 = vmatpush1.msra.mxu0 0.0
  %317 = vmatprep.subr.mxu0 0.0
  %318 = vmatpush1.msra.mxu0 0.0
  %319 = vmatprep.subr.mxu0 0.0
  %320 = vmatpush1.msra.mxu0 0.0
  %321 = vmatprep.subr.mxu0 0.0
  %322 = vmatpush1.msra.mxu0 0.0
  %323 = vmatprep.subr.mxu0 0.0
  %324 = vmatpush1.msra.mxu0 0.0
  %325 = vmatprep.subr.mxu0 0.0
  %326 = vmatpush1.msra.mxu0 0.0
  %327 = vmatprep.subr.mxu0 0.0
  %328 = vmatpush1.msra.mxu0 0.0
  %329 = vmatprep.subr.mxu0 0.0
  %330 = vmatpush1.msra.mxu0 0.0
  %331 = vmatprep.subr.mxu0 0.0
  %332 = vmatpush1.msra.mxu0 0.0
  %333 = vmatprep.subr.mxu0 0.0
  %334 = vmatpush1.msra.mxu0 0.0
  %335 = vmatprep.subr.mxu0 0.0
  %336 = vmatpush1.msra.mxu0 0.0
  %337 = vmatprep.subr.mxu0 0.0
  %338 = vmatpush1.msra.mxu0 0.0
  %339 = vmatprep.subr.mxu0 0.0
  %340 = vmatpush1.msra.mxu0 0.0
  %341 = vmatprep.subr.mxu0 0.0
  %342 = vmatpush1.msra.mxu0 0.0
  %343 = vmatprep.subr.mxu0 0.0
  %344 = vmatpush1.msra.mxu0 0.0
  %345 = vmatprep.subr.mxu0 0.0
  %346 = vmatpush1.msra.mxu0 0.0
  %347 = vmatprep.mubr.f32.mxu0 0.0
  %v348 = vand.u32 %v40, 4294901760
  %v349 = vsub.f32 %v40, %v348
  %350 = vmatmul.mubr.f32.gmra.mrb[0].mxu0 %v349
  %v351 = vpop.f32.mrb[0].mxu0
  %v352 = vadd.f32 %v259, %v351
  %v353 = vpop.f32.mrb[0].mxu0
  %v354 = vadd.f32 %v261, %v353
  %355 = vdwg.mxu0
  %v356 = vand.u32 %v19, 4294901760
  %357 = vmatprep.subr.mxu0 %v356
  %v358 = vand.u32 %v18, 4294901760
  %359 = vmatpush1.msra.mxu0 %v358
  %v360 = vand.u32 %v23, 4294901760
  %361 = vmatprep.subr.mxu0 %v360
  %v362 = vand.u32 %v22, 4294901760
  %363 = vmatpush1.msra.mxu0 %v362
  %v364 = vand.u32 %v27, 4294901760
  %365 = vmatprep.subr.mxu0 %v364
  %v366 = vand.u32 %v26, 4294901760
  %367 = vmatpush1.msra.mxu0 %v366
  %v368 = vand.u32 %v31, 4294901760
  %369 = vmatprep.subr.mxu0 %v368
  %v370 = vand.u32 %v30, 4294901760
  %371 = vmatpush1.msra.mxu0 %v370
  %v372 = vand.u32 %v47, 4294901760
  %373 = vmatprep.subr.mxu0 %v372
  %v374 = vand.u32 %v44, 4294901760
  %375 = vmatpush1.msra.mxu0 %v374
  %376 = vmatprep.subr.mxu0 0.0
  %377 = vmatpush1.msra.mxu0 0.0
  %378 = vmatprep.subr.mxu0 0.0
  %379 = vmatpush1.msra.mxu0 0.0
  %380 = vmatprep.subr.mxu0 0.0
  %381 = vmatpush1.msra.mxu0 0.0
  %382 = vmatprep.subr.mxu0 0.0
  %383 = vmatpush1.msra.mxu0 0.0
  %384 = vmatprep.subr.mxu0 0.0
  %385 = vmatpush1.msra.mxu0 0.0
  %386 = vmatprep.subr.mxu0 0.0
  %387 = vmatpush1.msra.mxu0 0.0
  %388 = vmatprep.subr.mxu0 0.0
  %389 = vmatpush1.msra.mxu0 0.0
  %390 = vmatprep.subr.mxu0 0.0
  %391 = vmatpush1.msra.mxu0 0.0
  %392 = vmatprep.subr.mxu0 0.0
  %393 = vmatpush1.msra.mxu0 0.0
  %394 = vmatprep.subr.mxu0 0.0
  %395 = vmatpush1.msra.mxu0 0.0
  %396 = vmatprep.subr.mxu0 0.0
  %397 = vmatpush1.msra.mxu0 0.0
  %398 = vmatprep.subr.mxu0 0.0
  %399 = vmatpush1.msra.mxu0 0.0
  %400 = vmatprep.subr.mxu0 0.0
  %401 = vmatpush1.msra.mxu0 0.0
  %402 = vmatprep.subr.mxu0 0.0
  %403 = vmatpush1.msra.mxu0 0.0
  %404 = vmatprep.subr.mxu0 0.0
  %405 = vmatpush1.msra.mxu0 0.0
  %406 = vmatprep.subr.mxu0 0.0
  %407 = vmatpush1.msra.mxu0 0.0
  %408 = vmatprep.subr.mxu0 0.0
  %409 = vmatpush1.msra.mxu0 0.0
  %410 = vmatprep.subr.mxu0 0.0
  %411 = vmatpush1.msra.mxu0 0.0
  %412 = vmatprep.subr.mxu0 0.0
  %413 = vmatpush1.msra.mxu0 0.0
  %414 = vmatprep.subr.mxu0 0.0
  %415 = vmatpush1.msra.mxu0 0.0
  %416 = vmatprep.subr.mxu0 0.0
  %417 = vmatpush1.msra.mxu0 0.0
  %418 = vmatprep.subr.mxu0 0.0
  %419 = vmatpush1.msra.mxu0 0.0
  %420 = vmatprep.subr.mxu0 0.0
  %421 = vmatpush1.msra.mxu0 0.0
  %422 = vmatprep.subr.mxu0 0.0
  %423 = vmatpush1.msra.mxu0 0.0
  %424 = vmatprep.subr.mxu0 0.0
  %425 = vmatpush1.msra.mxu0 0.0
  %426 = vmatprep.subr.mxu0 0.0
  %427 = vmatpush1.msra.mxu0 0.0
  %428 = vmatprep.subr.mxu0 0.0
  %429 = vmatpush1.msra.mxu0 0.0
  %430 = vmatprep.mubr.f32.mxu0 0.0
  %v431 = vand.u32 %v40, 4294901760
  %v432 = vsub.f32 %v40, %v431
  %v433 = vand.u32 %v432, 4294901760
  %434 = vmatmul.mubr.f32.gmra.mrb[0].mxu0 %v433
  %v435 = vpop.f32.mrb[0].mxu0
  %v436 = vadd.f32 %v352, %v435
  %v437 = vpop.f32.mrb[0].mxu0
  %v438 = vadd.f32 %v354, %v437
  %439 = vdwg.mxu0
  %v440 = vand.u32 %v19, 4294901760
  %v441 = vsub.f32 %v19, %v440
  %v442 = vand.u32 %v441, 4294901760
  %443 = vmatprep.subr.mxu0 %v442
  %v444 = vand.u32 %v18, 4294901760
  %v445 = vsub.f32 %v18, %v444
  %v446 = vand.u32 %v445, 4294901760
  %447 = vmatpush1.msra.mxu0 %v446
  %v448 = vand.u32 %v23, 4294901760
  %v449 = vsub.f32 %v23, %v448
  %v450 = vand.u32 %v449, 4294901760
  %451 = vmatprep.subr.mxu0 %v450
  %v452 = vand.u32 %v22, 4294901760
  %v453 = vsub.f32 %v22, %v452
  %v454 = vand.u32 %v453, 4294901760
  %455 = vmatpush1.msra.mxu0 %v454
  %v456 = vand.u32 %v27, 4294901760
  %v457 = vsub.f32 %v27, %v456
  %v458 = vand.u32 %v457, 4294901760
  %459 = vmatprep.subr.mxu0 %v458
  %v460 = vand.u32 %v26, 4294901760
  %v461 = vsub.f32 %v26, %v460
  %v462 = vand.u32 %v461, 4294901760
  %463 = vmatpush1.msra.mxu0 %v462
  %v464 = vand.u32 %v31, 4294901760
  %v465 = vsub.f32 %v31, %v464
  %v466 = vand.u32 %v465, 4294901760
  %467 = vmatprep.subr.mxu0 %v466
  %v468 = vand.u32 %v30, 4294901760
  %v469 = vsub.f32 %v30, %v468
  %v470 = vand.u32 %v469, 4294901760
  %471 = vmatpush1.msra.mxu0 %v470
  %v472 = vand.u32 %v47, 4294901760
  %v473 = vsub.f32 %v47, %v472
  %v474 = vand.u32 %v473, 4294901760
  %475 = vmatprep.subr.mxu0 %v474
  %v476 = vand.u32 %v44, 4294901760
  %v477 = vsub.f32 %v44, %v476
  %v478 = vand.u32 %v477, 4294901760
  %479 = vmatpush1.msra.mxu0 %v478
  %480 = vmatprep.subr.mxu0 0.0
  %481 = vmatpush1.msra.mxu0 0.0
  %482 = vmatprep.subr.mxu0 0.0
  %483 = vmatpush1.msra.mxu0 0.0
  %484 = vmatprep.subr.mxu0 0.0
  %485 = vmatpush1.msra.mxu0 0.0
  %486 = vmatprep.subr.mxu0 0.0
  %487 = vmatpush1.msra.mxu0 0.0
  %488 = vmatprep.subr.mxu0 0.0
  %489 = vmatpush1.msra.mxu0 0.0
  %490 = vmatprep.subr.mxu0 0.0
  %491 = vmatpush1.msra.mxu0 0.0
  %492 = vmatprep.subr.mxu0 0.0
  %493 = vmatpush1.msra.mxu0 0.0
  %494 = vmatprep.subr.mxu0 0.0
  %495 = vmatpush1.msra.mxu0 0.0
  %496 = vmatprep.subr.mxu0 0.0
  %497 = vmatpush1.msra.mxu0 0.0
  %498 = vmatprep.subr.mxu0 0.0
  %499 = vmatpush1.msra.mxu0 0.0
  %500 = vmatprep.subr.mxu0 0.0
  %501 = vmatpush1.msra.mxu0 0.0
  %502 = vmatprep.subr.mxu0 0.0
  %503 = vmatpush1.msra.mxu0 0.0
  %504 = vmatprep.subr.mxu0 0.0
  %505 = vmatpush1.msra.mxu0 0.0
  %506 = vmatprep.subr.mxu0 0.0
  %507 = vmatpush1.msra.mxu0 0.0
  %508 = vmatprep.subr.mxu0 0.0
  %509 = vmatpush1.msra.mxu0 0.0
  %510 = vmatprep.subr.mxu0 0.0
  %511 = vmatpush1.msra.mxu0 0.0
  %512 = vmatprep.subr.mxu0 0.0
  %513 = vmatpush1.msra.mxu0 0.0
  %514 = vmatprep.subr.mxu0 0.0
  %515 = vmatpush1.msra.mxu0 0.0
  %516 = vmatprep.subr.mxu0 0.0
  %517 = vmatpush1.msra.mxu0 0.0
  %518 = vmatprep.subr.mxu0 0.0
  %519 = vmatpush1.msra.mxu0 0.0
  %520 = vmatprep.subr.mxu0 0.0
  %521 = vmatpush1.msra.mxu0 0.0
  %522 = vmatprep.subr.mxu0 0.0
  %523 = vmatpush1.msra.mxu0 0.0
  %524 = vmatprep.subr.mxu0 0.0
  %525 = vmatpush1.msra.mxu0 0.0
  %526 = vmatprep.subr.mxu0 0.0
  %527 = vmatpush1.msra.mxu0 0.0
  %528 = vmatprep.subr.mxu0 0.0
  %529 = vmatpush1.msra.mxu0 0.0
  %530 = vmatprep.subr.mxu0 0.0
  %531 = vmatpush1.msra.mxu0 0.0
  %532 = vmatprep.subr.mxu0 0.0
  %533 = vmatpush1.msra.mxu0 0.0
  %534 = vmatprep.mubr.f32.mxu0 0.0
  %v535 = vand.u32 %v40, 4294901760
  %536 = vmatmul.mubr.f32.gmra.mrb[0].mxu0 %v535
  %v537 = vpop.f32.mrb[0].mxu0
  %v538 = vadd.f32 %v436, %v537
  %v539 = vpop.f32.mrb[0].mxu0
  %v540 = vadd.f32 %v438, %v539
  %541 = vdwg.mxu0
  %v542 = vand.u32 %v19, 4294901760
  %543 = vmatprep.subr.mxu0 %v542
  %v544 = vand.u32 %v18, 4294901760
  %545 = vmatpush1.msra.mxu0 %v544
  %v546 = vand.u32 %v23, 4294901760
  %547 = vmatprep.subr.mxu0 %v546
  %v548 = vand.u32 %v22, 4294901760
  %549 = vmatpush1.msra.mxu0 %v548
  %v550 = vand.u32 %v27, 4294901760
  %551 = vmatprep.subr.mxu0 %v550
  %v552 = vand.u32 %v26, 4294901760
  %553 = vmatpush1.msra.mxu0 %v552
  %v554 = vand.u32 %v31, 4294901760
  %555 = vmatprep.subr.mxu0 %v554
  %v556 = vand.u32 %v30, 4294901760
  %557 = vmatpush1.msra.mxu0 %v556
  %v558 = vand.u32 %v47, 4294901760
  %559 = vmatprep.subr.mxu0 %v558
  %v560 = vand.u32 %v44, 4294901760
  %561 = vmatpush1.msra.mxu0 %v560
  %562 = vmatprep.subr.mxu0 0.0
  %563 = vmatpush1.msra.mxu0 0.0
  %564 = vmatprep.subr.mxu0 0.0
  %565 = vmatpush1.msra.mxu0 0.0
  %566 = vmatprep.subr.mxu0 0.0
  %567 = vmatpush1.msra.mxu0 0.0
  %568 = vmatprep.subr.mxu0 0.0
  %569 = vmatpush1.msra.mxu0 0.0
  %570 = vmatprep.subr.mxu0 0.0
  %571 = vmatpush1.msra.mxu0 0.0
  %572 = vmatprep.subr.mxu0 0.0
  %573 = vmatpush1.msra.mxu0 0.0
  %574 = vmatprep.subr.mxu0 0.0
  %575 = vmatpush1.msra.mxu0 0.0
  %576 = vmatprep.subr.mxu0 0.0
  %577 = vmatpush1.msra.mxu0 0.0
  %578 = vmatprep.subr.mxu0 0.0
  %579 = vmatpush1.msra.mxu0 0.0
  %580 = vmatprep.subr.mxu0 0.0
  %581 = vmatpush1.msra.mxu0 0.0
  %582 = vmatprep.subr.mxu0 0.0
  %583 = vmatpush1.msra.mxu0 0.0
  %584 = vmatprep.subr.mxu0 0.0
  %585 = vmatpush1.msra.mxu0 0.0
  %586 = vmatprep.subr.mxu0 0.0
  %587 = vmatpush1.msra.mxu0 0.0
  %588 = vmatprep.subr.mxu0 0.0
  %589 = vmatpush1.msra.mxu0 0.0
  %590 = vmatprep.subr.mxu0 0.0
  %591 = vmatpush1.msra.mxu0 0.0
  %592 = vmatprep.subr.mxu0 0.0
  %593 = vmatpush1.msra.mxu0 0.0
  %594 = vmatprep.subr.mxu0 0.0
  %595 = vmatpush1.msra.mxu0 0.0
  %596 = vmatprep.subr.mxu0 0.0
  %597 = vmatpush1.msra.mxu0 0.0
  %598 = vmatprep.subr.mxu0 0.0
  %599 = vmatpush1.msra.mxu0 0.0
  %600 = vmatprep.subr.mxu0 0.0
  %601 = vmatpush1.msra.mxu0 0.0
  %602 = vmatprep.subr.mxu0 0.0
  %603 = vmatpush1.msra.mxu0 0.0
  %604 = vmatprep.subr.mxu0 0.0
  %605 = vmatpush1.msra.mxu0 0.0
  %606 = vmatprep.subr.mxu0 0.0
  %607 = vmatpush1.msra.mxu0 0.0
  %608 = vmatprep.subr.mxu0 0.0
  %609 = vmatpush1.msra.mxu0 0.0
  %610 = vmatprep.subr.mxu0 0.0
  %611 = vmatpush1.msra.mxu0 0.0
  %612 = vmatprep.subr.mxu0 0.0
  %613 = vmatpush1.msra.mxu0 0.0
  %614 = vmatprep.subr.mxu0 0.0
  %615 = vmatpush1.msra.mxu0 0.0
  %616 = vmatprep.mubr.f32.mxu0 0.0
  %v617 = vand.u32 %v40, 4294901760
  %618 = vmatmul.mubr.f32.gmra.mrb[0].mxu0 %v617
  %v619 = vpop.f32.mrb[0].mxu0
  %v620 = vadd.f32 %v538, %v619
  %v621 = vpop.f32.mrb[0].mxu0
  %v622 = vadd.f32 %v540, %v621
  %623 = vdwg.mxu0
  %v624 = vand.u32 %v21, 4294901760
  %625 = vmatprep.subr.mxu0 %v624
  %v626 = vand.u32 %v20, 4294901760
  %627 = vmatpush1.msra.mxu0 %v626
  %v628 = vand.u32 %v25, 4294901760
  %629 = vmatprep.subr.mxu0 %v628
  %v630 = vand.u32 %v24, 4294901760
  %631 = vmatpush1.msra.mxu0 %v630
  %v632 = vand.u32 %v29, 4294901760
  %633 = vmatprep.subr.mxu0 %v632
  %v634 = vand.u32 %v28, 4294901760
  %635 = vmatpush1.msra.mxu0 %v634
  %v636 = vand.u32 %v33, 4294901760
  %637 = vmatprep.subr.mxu0 %v636
  %v638 = vand.u32 %v32, 4294901760
  %639 = vmatpush1.msra.mxu0 %v638
  %v640 = vand.u32 %v53, 4294901760
  %641 = vmatprep.subr.mxu0 %v640
  %v642 = vand.u32 %v50, 4294901760
  %643 = vmatpush1.msra.mxu0 %v642
  %644 = vmatprep.subr.mxu0 0.0
  %645 = vmatpush1.msra.mxu0 0.0
  %646 = vmatprep.subr.mxu0 0.0
  %647 = vmatpush1.msra.mxu0 0.0
  %648 = vmatprep.subr.mxu0 0.0
  %649 = vmatpush1.msra.mxu0 0.0
  %650 = vmatprep.subr.mxu0 0.0
  %651 = vmatpush1.msra.mxu0 0.0
  %652 = vmatprep.subr.mxu0 0.0
  %653 = vmatpush1.msra.mxu0 0.0
  %654 = vmatprep.subr.mxu0 0.0
  %655 = vmatpush1.msra.mxu0 0.0
  %656 = vmatprep.subr.mxu0 0.0
  %657 = vmatpush1.msra.mxu0 0.0
  %658 = vmatprep.subr.mxu0 0.0
  %659 = vmatpush1.msra.mxu0 0.0
  %660 = vmatprep.subr.mxu0 0.0
  %661 = vmatpush1.msra.mxu0 0.0
  %662 = vmatprep.subr.mxu0 0.0
  %663 = vmatpush1.msra.mxu0 0.0
  %664 = vmatprep.subr.mxu0 0.0
  %665 = vmatpush1.msra.mxu0 0.0
  %666 = vmatprep.subr.mxu0 0.0
  %667 = vmatpush1.msra.mxu0 0.0
  %668 = vmatprep.subr.mxu0 0.0
  %669 = vmatpush1.msra.mxu0 0.0
  %670 = vmatprep.subr.mxu0 0.0
  %671 = vmatpush1.msra.mxu0 0.0
  %672 = vmatprep.subr.mxu0 0.0
  %673 = vmatpush1.msra.mxu0 0.0
  %674 = vmatprep.subr.mxu0 0.0
  %675 = vmatpush1.msra.mxu0 0.0
  %676 = vmatprep.subr.mxu0 0.0
  %677 = vmatpush1.msra.mxu0 0.0
  %678 = vmatprep.subr.mxu0 0.0
  %679 = vmatpush1.msra.mxu0 0.0
  %680 = vmatprep.subr.mxu0 0.0
  %681 = vmatpush1.msra.mxu0 0.0
  %682 = vmatprep.subr.mxu0 0.0
  %683 = vmatpush1.msra.mxu0 0.0
  %684 = vmatprep.subr.mxu0 0.0
  %685 = vmatpush1.msra.mxu0 0.0
  %686 = vmatprep.subr.mxu0 0.0
  %687 = vmatpush1.msra.mxu0 0.0
  %688 = vmatprep.subr.mxu0 0.0
  %689 = vmatpush1.msra.mxu0 0.0
  %690 = vmatprep.subr.mxu0 0.0
  %691 = vmatpush1.msra.mxu0 0.0
  %692 = vmatprep.subr.mxu0 0.0
  %693 = vmatpush1.msra.mxu0 0.0
  %694 = vmatprep.subr.mxu0 0.0
  %695 = vmatpush1.msra.mxu0 0.0
  %696 = vmatprep.subr.mxu0 0.0
  %697 = vmatpush1.msra.mxu0 0.0
  %698 = vmatprep.mubr.f32.mxu0 0.0
  %v699 = vand.u32 %v40, 4294901760
  %v700 = vsub.f32 %v40, %v699
  %v701 = vand.u32 %v700, 4294901760
  %v702 = vsub.f32 %v700, %v701
  %v703 = vand.u32 %v702, 4294901760
  %704 = vmatmul.mubr.f32.gmra.mrb[0].mxu0 %v703
  %v705 = vpop.f32.mrb[0].mxu0
  %v706 = vadd.f32 0.0, %v705
  %v707 = vpop.f32.mrb[0].mxu0
  %v708 = vadd.f32 0.0, %v707
  %709 = vdwg.mxu0
  %v710 = vand.u32 %v21, 4294901760
  %v711 = vsub.f32 %v21, %v710
  %v712 = vand.u32 %v711, 4294901760
  %v713 = vsub.f32 %v711, %v712
  %v714 = vand.u32 %v713, 4294901760
  %715 = vmatprep.subr.mxu0 %v714
  %v716 = vand.u32 %v20, 4294901760
  %v717 = vsub.f32 %v20, %v716
  %v718 = vand.u32 %v717, 4294901760
  %v719 = vsub.f32 %v717, %v718
  %v720 = vand.u32 %v719, 4294901760
  %721 = vmatpush1.msra.mxu0 %v720
  %v722 = vand.u32 %v25, 4294901760
  %v723 = vsub.f32 %v25, %v722
  %v724 = vand.u32 %v723, 4294901760
  %v725 = vsub.f32 %v723, %v724
  %v726 = vand.u32 %v725, 4294901760
  %727 = vmatprep.subr.mxu0 %v726
  %v728 = vand.u32 %v24, 4294901760
  %v729 = vsub.f32 %v24, %v728
  %v730 = vand.u32 %v729, 4294901760
  %v731 = vsub.f32 %v729, %v730
  %v732 = vand.u32 %v731, 4294901760
  %733 = vmatpush1.msra.mxu0 %v732
  %v734 = vand.u32 %v29, 4294901760
  %v735 = vsub.f32 %v29, %v734
  %v736 = vand.u32 %v735, 4294901760
  %v737 = vsub.f32 %v735, %v736
  %v738 = vand.u32 %v737, 4294901760
  %739 = vmatprep.subr.mxu0 %v738
  %v740 = vand.u32 %v28, 4294901760
  %v741 = vsub.f32 %v28, %v740
  %v742 = vand.u32 %v741, 4294901760
  %v743 = vsub.f32 %v741, %v742
  %v744 = vand.u32 %v743, 4294901760
  %745 = vmatpush1.msra.mxu0 %v744
  %v746 = vand.u32 %v33, 4294901760
  %v747 = vsub.f32 %v33, %v746
  %v748 = vand.u32 %v747, 4294901760
  %v749 = vsub.f32 %v747, %v748
  %v750 = vand.u32 %v749, 4294901760
  %751 = vmatprep.subr.mxu0 %v750
  %v752 = vand.u32 %v32, 4294901760
  %v753 = vsub.f32 %v32, %v752
  %v754 = vand.u32 %v753, 4294901760
  %v755 = vsub.f32 %v753, %v754
  %v756 = vand.u32 %v755, 4294901760
  %757 = vmatpush1.msra.mxu0 %v756
  %v758 = vand.u32 %v53, 4294901760
  %v759 = vsub.f32 %v53, %v758
  %v760 = vand.u32 %v759, 4294901760
  %v761 = vsub.f32 %v759, %v760
  %v762 = vand.u32 %v761, 4294901760
  %763 = vmatprep.subr.mxu0 %v762
  %v764 = vand.u32 %v50, 4294901760
  %v765 = vsub.f32 %v50, %v764
  %v766 = vand.u32 %v765, 4294901760
  %v767 = vsub.f32 %v765, %v766
  %v768 = vand.u32 %v767, 4294901760
  %769 = vmatpush1.msra.mxu0 %v768
  %770 = vmatprep.subr.mxu0 0.0
  %771 = vmatpush1.msra.mxu0 0.0
  %772 = vmatprep.subr.mxu0 0.0
  %773 = vmatpush1.msra.mxu0 0.0
  %774 = vmatprep.subr.mxu0 0.0
  %775 = vmatpush1.msra.mxu0 0.0
  %776 = vmatprep.subr.mxu0 0.0
  %777 = vmatpush1.msra.mxu0 0.0
  %778 = vmatprep.subr.mxu0 0.0
  %779 = vmatpush1.msra.mxu0 0.0
  %780 = vmatprep.subr.mxu0 0.0
  %781 = vmatpush1.msra.mxu0 0.0
  %782 = vmatprep.subr.mxu0 0.0
  %783 = vmatpush1.msra.mxu0 0.0
  %784 = vmatprep.subr.mxu0 0.0
  %785 = vmatpush1.msra.mxu0 0.0
  %786 = vmatprep.subr.mxu0 0.0
  %787 = vmatpush1.msra.mxu0 0.0
  %788 = vmatprep.subr.mxu0 0.0
  %789 = vmatpush1.msra.mxu0 0.0
  %790 = vmatprep.subr.mxu0 0.0
  %791 = vmatpush1.msra.mxu0 0.0
  %792 = vmatprep.subr.mxu0 0.0
  %793 = vmatpush1.msra.mxu0 0.0
  %794 = vmatprep.subr.mxu0 0.0
  %795 = vmatpush1.msra.mxu0 0.0
  %796 = vmatprep.subr.mxu0 0.0
  %797 = vmatpush1.msra.mxu0 0.0
  %798 = vmatprep.subr.mxu0 0.0
  %799 = vmatpush1.msra.mxu0 0.0
  %800 = vmatprep.subr.mxu0 0.0
  %801 = vmatpush1.msra.mxu0 0.0
  %802 = vmatprep.subr.mxu0 0.0
  %803 = vmatpush1.msra.mxu0 0.0
  %804 = vmatprep.subr.mxu0 0.0
  %805 = vmatpush1.msra.mxu0 0.0
  %806 = vmatprep.subr.mxu0 0.0
  %807 = vmatpush1.msra.mxu0 0.0
  %808 = vmatprep.subr.mxu0 0.0
  %809 = vmatpush1.msra.mxu0 0.0
  %810 = vmatprep.subr.mxu0 0.0
  %811 = vmatpush1.msra.mxu0 0.0
  %812 = vmatprep.subr.mxu0 0.0
  %813 = vmatpush1.msra.mxu0 0.0
  %814 = vmatprep.subr.mxu0 0.0
  %815 = vmatpush1.msra.mxu0 0.0
  %816 = vmatprep.subr.mxu0 0.0
  %817 = vmatpush1.msra.mxu0 0.0
  %818 = vmatprep.subr.mxu0 0.0
  %819 = vmatpush1.msra.mxu0 0.0
  %820 = vmatprep.subr.mxu0 0.0
  %821 = vmatpush1.msra.mxu0 0.0
  %822 = vmatprep.subr.mxu0 0.0
  %823 = vmatpush1.msra.mxu0 0.0
  %824 = vmatprep.mubr.f32.mxu0 0.0
  %v825 = vand.u32 %v40, 4294901760
  %826 = vmatmul.mubr.f32.gmra.mrb[0].mxu0 %v825
  %v827 = vpop.f32.mrb[0].mxu0
  %v828 = vadd.f32 %v706, %v827
  %v829 = vpop.f32.mrb[0].mxu0
  %v830 = vadd.f32 %v708, %v829
  %831 = vdwg.mxu0
  %v832 = vand.u32 %v21, 4294901760
  %v833 = vsub.f32 %v21, %v832
  %834 = vmatprep.subr.mxu0 %v833
  %v835 = vand.u32 %v20, 4294901760
  %v836 = vsub.f32 %v20, %v835
  %837 = vmatpush1.msra.mxu0 %v836
  %v838 = vand.u32 %v25, 4294901760
  %v839 = vsub.f32 %v25, %v838
  %840 = vmatprep.subr.mxu0 %v839
  %v841 = vand.u32 %v24, 4294901760
  %v842 = vsub.f32 %v24, %v841
  %843 = vmatpush1.msra.mxu0 %v842
  %v844 = vand.u32 %v29, 4294901760
  %v845 = vsub.f32 %v29, %v844
  %846 = vmatprep.subr.mxu0 %v845
  %v847 = vand.u32 %v28, 4294901760
  %v848 = vsub.f32 %v28, %v847
  %849 = vmatpush1.msra.mxu0 %v848
  %v850 = vand.u32 %v33, 4294901760
  %v851 = vsub.f32 %v33, %v850
  %852 = vmatprep.subr.mxu0 %v851
  %v853 = vand.u32 %v32, 4294901760
  %v854 = vsub.f32 %v32, %v853
  %855 = vmatpush1.msra.mxu0 %v854
  %v856 = vand.u32 %v53, 4294901760
  %v857 = vsub.f32 %v53, %v856
  %858 = vmatprep.subr.mxu0 %v857
  %v859 = vand.u32 %v50, 4294901760
  %v860 = vsub.f32 %v50, %v859
  %861 = vmatpush1.msra.mxu0 %v860
  %862 = vmatprep.subr.mxu0 0.0
  %863 = vmatpush1.msra.mxu0 0.0
  %864 = vmatprep.subr.mxu0 0.0
  %865 = vmatpush1.msra.mxu0 0.0
  %866 = vmatprep.subr.mxu0 0.0
  %867 = vmatpush1.msra.mxu0 0.0
  %868 = vmatprep.subr.mxu0 0.0
  %869 = vmatpush1.msra.mxu0 0.0
  %870 = vmatprep.subr.mxu0 0.0
  %871 = vmatpush1.msra.mxu0 0.0
  %872 = vmatprep.subr.mxu0 0.0
  %873 = vmatpush1.msra.mxu0 0.0
  %874 = vmatprep.subr.mxu0 0.0
  %875 = vmatpush1.msra.mxu0 0.0
  %876 = vmatprep.subr.mxu0 0.0
  %877 = vmatpush1.msra.mxu0 0.0
  %878 = vmatprep.subr.mxu0 0.0
  %879 = vmatpush1.msra.mxu0 0.0
  %880 = vmatprep.subr.mxu0 0.0
  %881 = vmatpush1.msra.mxu0 0.0
  %882 = vmatprep.subr.mxu0 0.0
  %883 = vmatpush1.msra.mxu0 0.0
  %884 = vmatprep.subr.mxu0 0.0
  %885 = vmatpush1.msra.mxu0 0.0
  %886 = vmatprep.subr.mxu0 0.0
  %887 = vmatpush1.msra.mxu0 0.0
  %888 = vmatprep.subr.mxu0 0.0
  %889 = vmatpush1.msra.mxu0 0.0
  %890 = vmatprep.subr.mxu0 0.0
  %891 = vmatpush1.msra.mxu0 0.0
  %892 = vmatprep.subr.mxu0 0.0
  %893 = vmatpush1.msra.mxu0 0.0
  %894 = vmatprep.subr.mxu0 0.0
  %895 = vmatpush1.msra.mxu0 0.0
  %896 = vmatprep.subr.mxu0 0.0
  %897 = vmatpush1.msra.mxu0 0.0
  %898 = vmatprep.subr.mxu0 0.0
  %899 = vmatpush1.msra.mxu0 0.0
  %900 = vmatprep.subr.mxu0 0.0
  %901 = vmatpush1.msra.mxu0 0.0
  %902 = vmatprep.subr.mxu0 0.0
  %903 = vmatpush1.msra.mxu0 0.0
  %904 = vmatprep.subr.mxu0 0.0
  %905 = vmatpush1.msra.mxu0 0.0
  %906 = vmatprep.subr.mxu0 0.0
  %907 = vmatpush1.msra.mxu0 0.0
  %908 = vmatprep.subr.mxu0 0.0
  %909 = vmatpush1.msra.mxu0 0.0
  %910 = vmatprep.subr.mxu0 0.0
  %911 = vmatpush1.msra.mxu0 0.0
  %912 = vmatprep.subr.mxu0 0.0
  %913 = vmatpush1.msra.mxu0 0.0
  %914 = vmatprep.subr.mxu0 0.0
  %915 = vmatpush1.msra.mxu0 0.0
  %916 = vmatprep.mubr.f32.mxu0 0.0
  %v917 = vand.u32 %v40, 4294901760
  %v918 = vsub.f32 %v40, %v917
  %919 = vmatmul.mubr.f32.gmra.mrb[0].mxu0 %v918
  %v920 = vpop.f32.mrb[0].mxu0
  %v921 = vadd.f32 %v828, %v920
  %v922 = vpop.f32.mrb[0].mxu0
  %v923 = vadd.f32 %v830, %v922
  %924 = vdwg.mxu0
  %v925 = vand.u32 %v21, 4294901760
  %926 = vmatprep.subr.mxu0 %v925
  %v927 = vand.u32 %v20, 4294901760
  %928 = vmatpush1.msra.mxu0 %v927
  %v929 = vand.u32 %v25, 4294901760
  %930 = vmatprep.subr.mxu0 %v929
  %v931 = vand.u32 %v24, 4294901760
  %932 = vmatpush1.msra.mxu0 %v931
  %v933 = vand.u32 %v29, 4294901760
  %934 = vmatprep.subr.mxu0 %v933
  %v935 = vand.u32 %v28, 4294901760
  %936 = vmatpush1.msra.mxu0 %v935
  %v937 = vand.u32 %v33, 4294901760
  %938 = vmatprep.subr.mxu0 %v937
  %v939 = vand.u32 %v32, 4294901760
  %940 = vmatpush1.msra.mxu0 %v939
  %v941 = vand.u32 %v53, 4294901760
  %942 = vmatprep.subr.mxu0 %v941
  %v943 = vand.u32 %v50, 4294901760
  %944 = vmatpush1.msra.mxu0 %v943
  %945 = vmatprep.subr.mxu0 0.0
  %946 = vmatpush1.msra.mxu0 0.0
  %947 = vmatprep.subr.mxu0 0.0
  %948 = vmatpush1.msra.mxu0 0.0
  %949 = vmatprep.subr.mxu0 0.0
  %950 = vmatpush1.msra.mxu0 0.0
  %951 = vmatprep.subr.mxu0 0.0
  %952 = vmatpush1.msra.mxu0 0.0
  %953 = vmatprep.subr.mxu0 0.0
  %954 = vmatpush1.msra.mxu0 0.0
  %955 = vmatprep.subr.mxu0 0.0
  %956 = vmatpush1.msra.mxu0 0.0
  %957 = vmatprep.subr.mxu0 0.0
  %958 = vmatpush1.msra.mxu0 0.0
  %959 = vmatprep.subr.mxu0 0.0
  %960 = vmatpush1.msra.mxu0 0.0
  %961 = vmatprep.subr.mxu0 0.0
  %962 = vmatpush1.msra.mxu0 0.0
  %963 = vmatprep.subr.mxu0 0.0
  %964 = vmatpush1.msra.mxu0 0.0
  %965 = vmatprep.subr.mxu0 0.0
  %966 = vmatpush1.msra.mxu0 0.0
  %967 = vmatprep.subr.mxu0 0.0
  %968 = vmatpush1.msra.mxu0 0.0
  %969 = vmatprep.subr.mxu0 0.0
  %970 = vmatpush1.msra.mxu0 0.0
  %971 = vmatprep.subr.mxu0 0.0
  %972 = vmatpush1.msra.mxu0 0.0
  %973 = vmatprep.subr.mxu0 0.0
  %974 = vmatpush1.msra.mxu0 0.0
  %975 = vmatprep.subr.mxu0 0.0
  %976 = vmatpush1.msra.mxu0 0.0
  %977 = vmatprep.subr.mxu0 0.0
  %978 = vmatpush1.msra.mxu0 0.0
  %979 = vmatprep.subr.mxu0 0.0
  %980 = vmatpush1.msra.mxu0 0.0
  %981 = vmatprep.subr.mxu0 0.0
  %982 = vmatpush1.msra.mxu0 0.0
  %983 = vmatprep.subr.mxu0 0.0
  %984 = vmatpush1.msra.mxu0 0.0
  %985 = vmatprep.subr.mxu0 0.0
  %986 = vmatpush1.msra.mxu0 0.0
  %987 = vmatprep.subr.mxu0 0.0
  %988 = vmatpush1.msra.mxu0 0.0
  %989 = vmatprep.subr.mxu0 0.0
  %990 = vmatpush1.msra.mxu0 0.0
  %991 = vmatprep.subr.mxu0 0.0
  %992 = vmatpush1.msra.mxu0 0.0
  %993 = vmatprep.subr.mxu0 0.0
  %994 = vmatpush1.msra.mxu0 0.0
  %995 = vmatprep.subr.mxu0 0.0
  %996 = vmatpush1.msra.mxu0 0.0
  %997 = vmatprep.subr.mxu0 0.0
  %998 = vmatpush1.msra.mxu0 0.0
  %999 = vmatprep.mubr.f32.mxu0 0.0
  %v1000 = vand.u32 %v40, 4294901760
  %v1001 = vsub.f32 %v40, %v1000
  %v1002 = vand.u32 %v1001, 4294901760
  %1003 = vmatmul.mubr.f32.gmra.mrb[0].mxu0 %v1002
  %v1004 = vpop.f32.mrb[0].mxu0
  %v1005 = vadd.f32 %v921, %v1004
  %v1006 = vpop.f32.mrb[0].mxu0
  %v1007 = vadd.f32 %v923, %v1006
  %1008 = vdwg.mxu0
  %v1009 = vand.u32 %v21, 4294901760
  %v1010 = vsub.f32 %v21, %v1009
  %v1011 = vand.u32 %v1010, 4294901760
  %1012 = vmatprep.subr.mxu0 %v1011
  %v1013 = vand.u32 %v20, 4294901760
  %v1014 = vsub.f32 %v20, %v1013
  %v1015 = vand.u32 %v1014, 4294901760
  %1016 = vmatpush1.msra.mxu0 %v1015
  %v1017 = vand.u32 %v25, 4294901760
  %v1018 = vsub.f32 %v25, %v1017
  %v1019 = vand.u32 %v1018, 4294901760
  %1020 = vmatprep.subr.mxu0 %v1019
  %v1021 = vand.u32 %v24, 4294901760
  %v1022 = vsub.f32 %v24, %v1021
  %v1023 = vand.u32 %v1022, 4294901760
  %1024 = vmatpush1.msra.mxu0 %v1023
  %v1025 = vand.u32 %v29, 4294901760
  %v1026 = vsub.f32 %v29, %v1025
  %v1027 = vand.u32 %v1026, 4294901760
  %1028 = vmatprep.subr.mxu0 %v1027
  %v1029 = vand.u32 %v28, 4294901760
  %v1030 = vsub.f32 %v28, %v1029
  %v1031 = vand.u32 %v1030, 4294901760
  %1032 = vmatpush1.msra.mxu0 %v1031
  %v1033 = vand.u32 %v33, 4294901760
  %v1034 = vsub.f32 %v33, %v1033
  %v1035 = vand.u32 %v1034, 4294901760
  %1036 = vmatprep.subr.mxu0 %v1035
  %v1037 = vand.u32 %v32, 4294901760
  %v1038 = vsub.f32 %v32, %v1037
  %v1039 = vand.u32 %v1038, 4294901760
  %1040 = vmatpush1.msra.mxu0 %v1039
  %v1041 = vand.u32 %v53, 4294901760
  %v1042 = vsub.f32 %v53, %v1041
  %v1043 = vand.u32 %v1042, 4294901760
  %1044 = vmatprep.subr.mxu0 %v1043
  %v1045 = vand.u32 %v50, 4294901760
  %v1046 = vsub.f32 %v50, %v1045
  %v1047 = vand.u32 %v1046, 4294901760
  %1048 = vmatpush1.msra.mxu0 %v1047
  %1049 = vmatprep.subr.mxu0 0.0
  %1050 = vmatpush1.msra.mxu0 0.0
  %1051 = vmatprep.subr.mxu0 0.0
  %1052 = vmatpush1.msra.mxu0 0.0
  %1053 = vmatprep.subr.mxu0 0.0
  %1054 = vmatpush1.msra.mxu0 0.0
  %1055 = vmatprep.subr.mxu0 0.0
  %1056 = vmatpush1.msra.mxu0 0.0
  %1057 = vmatprep.subr.mxu0 0.0
  %1058 = vmatpush1.msra.mxu0 0.0
  %1059 = vmatprep.subr.mxu0 0.0
  %1060 = vmatpush1.msra.mxu0 0.0
  %1061 = vmatprep.subr.mxu0 0.0
  %1062 = vmatpush1.msra.mxu0 0.0
  %1063 = vmatprep.subr.mxu0 0.0
  %1064 = vmatpush1.msra.mxu0 0.0
  %1065 = vmatprep.subr.mxu0 0.0
  %1066 = vmatpush1.msra.mxu0 0.0
  %1067 = vmatprep.subr.mxu0 0.0
  %1068 = vmatpush1.msra.mxu0 0.0
  %1069 = vmatprep.subr.mxu0 0.0
  %1070 = vmatpush1.msra.mxu0 0.0
  %1071 = vmatprep.subr.mxu0 0.0
  %1072 = vmatpush1.msra.mxu0 0.0
  %1073 = vmatprep.subr.mxu0 0.0
  %1074 = vmatpush1.msra.mxu0 0.0
  %1075 = vmatprep.subr.mxu0 0.0
  %1076 = vmatpush1.msra.mxu0 0.0
  %1077 = vmatprep.subr.mxu0 0.0
  %1078 = vmatpush1.msra.mxu0 0.0
  %1079 = vmatprep.subr.mxu0 0.0
  %1080 = vmatpush1.msra.mxu0 0.0
  %1081 = vmatprep.subr.mxu0 0.0
  %1082 = vmatpush1.msra.mxu0 0.0
  %1083 = vmatprep.subr.mxu0 0.0
  %1084 = vmatpush1.msra.mxu0 0.0
  %1085 = vmatprep.subr.mxu0 0.0
  %1086 = vmatpush1.msra.mxu0 0.0
  %1087 = vmatprep.subr.mxu0 0.0
  %1088 = vmatpush1.msra.mxu0 0.0
  %1089 = vmatprep.subr.mxu0 0.0
  %1090 = vmatpush1.msra.mxu0 0.0
  %1091 = vmatprep.subr.mxu0 0.0
  %1092 = vmatpush1.msra.mxu0 0.0
  %1093 = vmatprep.subr.mxu0 0.0
  %1094 = vmatpush1.msra.mxu0 0.0
  %1095 = vmatprep.subr.mxu0 0.0
  %1096 = vmatpush1.msra.mxu0 0.0
  %1097 = vmatprep.subr.mxu0 0.0
  %1098 = vmatpush1.msra.mxu0 0.0
  %1099 = vmatprep.subr.mxu0 0.0
  %1100 = vmatpush1.msra.mxu0 0.0
  %1101 = vmatprep.subr.mxu0 0.0
  %1102 = vmatpush1.msra.mxu0 0.0
  %1103 = vmatprep.mubr.f32.mxu0 0.0
  %v1104 = vand.u32 %v40, 4294901760
  %1105 = vmatmul.mubr.f32.gmra.mrb[0].mxu0 %v1104
  %v1106 = vpop.f32.mrb[0].mxu0
  %v1107 = vadd.f32 %v1005, %v1106
  %v1108 = vpop.f32.mrb[0].mxu0
  %v1109 = vadd.f32 %v1007, %v1108
  %1110 = vdwg.mxu0
  %v1111 = vand.u32 %v21, 4294901760
  %1112 = vmatprep.subr.mxu0 %v1111
  %v1113 = vand.u32 %v20, 4294901760
  %1114 = vmatpush1.msra.mxu0 %v1113
  %v1115 = vand.u32 %v25, 4294901760
  %1116 = vmatprep.subr.mxu0 %v1115
  %v1117 = vand.u32 %v24, 4294901760
  %1118 = vmatpush1.msra.mxu0 %v1117
  %v1119 = vand.u32 %v29, 4294901760
  %1120 = vmatprep.subr.mxu0 %v1119
  %v1121 = vand.u32 %v28, 4294901760
  %1122 = vmatpush1.msra.mxu0 %v1121
  %v1123 = vand.u32 %v33, 4294901760
  %1124 = vmatprep.subr.mxu0 %v1123
  %v1125 = vand.u32 %v32, 4294901760
  %1126 = vmatpush1.msra.mxu0 %v1125
  %v1127 = vand.u32 %v53, 4294901760
  %1128 = vmatprep.subr.mxu0 %v1127
  %v1129 = vand.u32 %v50, 4294901760
  %1130 = vmatpush1.msra.mxu0 %v1129
  %1131 = vmatprep.subr.mxu0 0.0
  %1132 = vmatpush1.msra.mxu0 0.0
  %1133 = vmatprep.subr.mxu0 0.0
  %1134 = vmatpush1.msra.mxu0 0.0
  %1135 = vmatprep.subr.mxu0 0.0
  %1136 = vmatpush1.msra.mxu0 0.0
  %1137 = vmatprep.subr.mxu0 0.0
  %1138 = vmatpush1.msra.mxu0 0.0
  %1139 = vmatprep.subr.mxu0 0.0
  %1140 = vmatpush1.msra.mxu0 0.0
  %1141 = vmatprep.subr.mxu0 0.0
  %1142 = vmatpush1.msra.mxu0 0.0
  %1143 = vmatprep.subr.mxu0 0.0
  %1144 = vmatpush1.msra.mxu0 0.0
  %1145 = vmatprep.subr.mxu0 0.0
  %1146 = vmatpush1.msra.mxu0 0.0
  %1147 = vmatprep.subr.mxu0 0.0
  %1148 = vmatpush1.msra.mxu0 0.0
  %1149 = vmatprep.subr.mxu0 0.0
  %1150 = vmatpush1.msra.mxu0 0.0
  %1151 = vmatprep.subr.mxu0 0.0
  %1152 = vmatpush1.msra.mxu0 0.0
  %1153 = vmatprep.subr.mxu0 0.0
  %1154 = vmatpush1.msra.mxu0 0.0
  %1155 = vmatprep.subr.mxu0 0.0
  %1156 = vmatpush1.msra.mxu0 0.0
  %1157 = vmatprep.subr.mxu0 0.0
  %1158 = vmatpush1.msra.mxu0 0.0
  %1159 = vmatprep.subr.mxu0 0.0
  %1160 = vmatpush1.msra.mxu0 0.0
  %1161 = vmatprep.subr.mxu0 0.0
  %1162 = vmatpush1.msra.mxu0 0.0
  %1163 = vmatprep.subr.mxu0 0.0
  %1164 = vmatpush1.msra.mxu0 0.0
  %1165 = vmatprep.subr.mxu0 0.0
  %1166 = vmatpush1.msra.mxu0 0.0
  %1167 = vmatprep.subr.mxu0 0.0
  %1168 = vmatpush1.msra.mxu0 0.0
  %1169 = vmatprep.subr.mxu0 0.0
  %1170 = vmatpush1.msra.mxu0 0.0
  %1171 = vmatprep.subr.mxu0 0.0
  %1172 = vmatpush1.msra.mxu0 0.0
  %1173 = vmatprep.subr.mxu0 0.0
  %1174 = vmatpush1.msra.mxu0 0.0
  %1175 = vmatprep.subr.mxu0 0.0
  %1176 = vmatpush1.msra.mxu0 0.0
  %1177 = vmatprep.subr.mxu0 0.0
  %1178 = vmatpush1.msra.mxu0 0.0
  %1179 = vmatprep.subr.mxu0 0.0
  %1180 = vmatpush1.msra.mxu0 0.0
  %1181 = vmatprep.subr.mxu0 0.0
  %1182 = vmatpush1.msra.mxu0 0.0
  %1183 = vmatprep.subr.mxu0 0.0
  %1184 = vmatpush1.msra.mxu0 0.0
  %1185 = vmatprep.mubr.f32.mxu0 0.0
  %v1186 = vand.u32 %v40, 4294901760
  %1187 = vmatmul.mubr.f32.gmra.mrb[0].mxu0 %v1186
  %v1188 = vpop.f32.mrb[0].mxu0
  %v1189 = vadd.f32 %v1107, %v1188
  %v1190 = vpop.f32.mrb[0].mxu0
  %v1191 = vadd.f32 %v1109, %v1190
  %1192 = vdwg.mxu0
  %v1193 = vadd.f32 %v620, %v622
  %v1194 = vadd.f32 %v1193, %v1189
  %v1195 = vadd.f32 %v1194, %v1191
  %1196 = vadd.xlane.f32.xlu0 %v1195
  %v1197 = vpop.xlane.xlu0 %1196
  %v1198 = vmul.f32 %v620, %v620
  %v1199 = vmul.f32 %v622, %v622
  %v1200 = vmul.f32 %v1189, %v1189
  %v1201 = vmul.f32 %v1191, %v1191
  %v1202 = vadd.f32 %v1198, %v1199
  %v1203 = vadd.f32 %v1202, %v1200
  %v1204 = vadd.f32 %v1203, %v1201
  %1205 = vadd.xlane.f32.xlu0 %v1204
  %v1206 = vpop.xlane.xlu0 %1205
  %v1207 = vmul.f32 %v1197, 0.001953125
  %v1208 = vmul.f32 %v1206, 0.001953125
  %v1209 = vmul.f32 %v1207, %v1207
  %v1210 = vsub.f32 %v1208, %v1209
  %v1211 = vld [vmem:[%s2] sm:$0xff]
  %v1212 = vadd.f32 %v1210, 1e-05
  %v1213 = vrsqrt.pop %v1212
  %v1214 = vmul.f32 %v1211, %v1213
  %v1215 = vld [vmem:[%s3] sm:$0xff]
  %v1216 = vmul.f32 %v1207, %v1214
  %v1217 = vsub.f32 %v1215, %v1216
  %1219 = vset.pattern.permute.xlu0 0
  %1220 = vperm.xlu0 %1219, %v1214
  %v1221 = vpop.permute.xlu0 %1220
  %v1223 = vmul.f32 %v620, %v1221
  %v1224 = vmul.f32 %v622, %v1221
  %v1225 = vmul.f32 %v1189, %v1221
  %v1226 = vmul.f32 %v1191, %v1221
  %1228 = vset.pattern.permute.xlu0 0
  %1229 = vperm.xlu0 %1228, %v1217
  %v1230 = vpop.permute.xlu0 %1229
  %v1232 = vadd.f32 %v1223, %v1230
  %v1233 = vadd.f32 %v1224, %v1230
  %v1234 = vadd.f32 %v1225, %v1230
  %v1235 = vadd.f32 %v1226, %v1230
  %v1236 = vmax.f32 %v1232, 0.0
  %v1237 = vmax.f32 %v1233, 0.0
  %v1238 = vmax.f32 %v1234, 0.0
  %v1239 = vmax.f32 %v1235, 0.0
  %1240 = vst [vmem:[%s4] sm:$0xff] %v1236
  %1241 = vst [vmem:[%s4 + $0x8] sm:$0xff] %v1237
  %1242 = vst [vmem:[%s4 + $0x10] sm:$0xff] %v1238
  %1243 = vst [vmem:[%s4 + $0x18] sm:$0xff] %v1239
  // Predicated region
  $region18: #{baseline_unet_pallas.11} parent=0 // pred_check
    _
  $region19: #{baseline_unet_pallas.11} parent=0 // pred_check_branch
    %1245 = sbr.rel (0) target = $region21
  $region20: #{baseline_unet_pallas.11} parent=0 // pred_region
    _
  $region21: #{baseline_unet_pallas.11} parent=0 // pred_fallthru
    _
  // Predicated region
  $region22: #{baseline_unet_pallas.11} parent=0 // pred_check
    _
  $region23: #{baseline_unet_pallas.11} parent=0 // pred_check_branch
    %1247 = sbr.rel (0) target = $region25
  $region24: #{baseline_unet_pallas.11} parent=0 // pred_region
    _
  $region25: #{baseline_unet_pallas.11} parent=0 // pred_fallthru
    _

// kernel: baseline_unet_pallas.12
$region0: #{baseline_unet_pallas.12}
  #allocation0 [shape = 'u32[]', space=smem, size = 0x4, offset = 0x4, fixed_abs, tag = 'smem constant byte address 0x4 - core index']
  #allocation1 [shape = 'u32[144,128]{1,0:T(1,128)}', space=vmem, size = 0x12000, scoped, tag = 'internal scratch']
  %s0 = inlined_call_operand.vmem [shape: f32[8,72], index: 0, kind: input, shape index: {}]
  %s1 = inlined_call_operand.vmem [shape: f32[72,512], index: 1, kind: input, shape index: {}]
  %s2 = inlined_call_operand.vmem [shape: f32[8,1], index: 2, kind: input, shape index: {}]
  %s3 = inlined_call_operand.vmem [shape: f32[8,1], index: 3, kind: input, shape index: {}]
  %s4 = inlined_call_operand.vmem [shape: f32[8,512], index: 4, kind: output, shape index: {}]
  %s5 = sld [smem:[#allocation0]]
  $region26: #{baseline_unet_pallas.12} parent=0
    _
  %s7 = ssub.s32 1, %s5
  %s8 = scalar_select 0, %s7, %s5
  // Predicated region
  $region2: #{baseline_unet_pallas.12} parent=0 // pred_check
    _
  $region3: #{baseline_unet_pallas.12} parent=0 // pred_check_branch
    %10 = sbr.rel (0) target = $region5
  $region4: #{baseline_unet_pallas.12} parent=0 // pred_region
    _
  $region5: #{baseline_unet_pallas.12} parent=0 // pred_fallthru
    _
  // Predicated region
  $region6: #{baseline_unet_pallas.12} parent=0 // pred_check
    _
  $region7: #{baseline_unet_pallas.12} parent=0 // pred_check_branch
    %12 = sbr.rel (0) target = $region9
  $region8: #{baseline_unet_pallas.12} parent=0 // pred_region
    _
  $region9: #{baseline_unet_pallas.12} parent=0 // pred_fallthru
    _
  // Predicated region
  $region10: #{baseline_unet_pallas.12} parent=0 // pred_check
    _
  $region11: #{baseline_unet_pallas.12} parent=0 // pred_check_branch
    %14 = sbr.rel (0) target = $region13
  $region12: #{baseline_unet_pallas.12} parent=0 // pred_region
    _
  $region13: #{baseline_unet_pallas.12} parent=0 // pred_fallthru
    _
  // Predicated region
  $region14: #{baseline_unet_pallas.12} parent=0 // pred_check
    _
  $region15: #{baseline_unet_pallas.12} parent=0 // pred_check_branch
    %16 = sbr.rel (0) target = $region17
  $region16: #{baseline_unet_pallas.12} parent=0 // pred_region
    _
  $region17: #{baseline_unet_pallas.12} parent=0 // pred_fallthru
    _
  %v17 = vld [vmem:[%s0] sm:$0xff]
  %v18 = vld [vmem:[%s1] sm:$0xff]
  %v19 = vld [vmem:[%s1 + $0x8] sm:$0xff]
  %v20 = vld [vmem:[%s1 + $0x10] sm:$0xff]
  %v21 = vld [vmem:[%s1 + $0x18] sm:$0xff]
  %v22 = vld [vmem:[%s1 + $0x20] sm:$0xff]
  %v23 = vld [vmem:[%s1 + $0x28] sm:$0xff]
  %v24 = vld [vmem:[%s1 + $0x30] sm:$0xff]
  %v25 = vld [vmem:[%s1 + $0x38] sm:$0xff]
  %v26 = vld [vmem:[%s1 + $0x40] sm:$0xff]
  %v27 = vld [vmem:[%s1 + $0x48] sm:$0xff]
  %v28 = vld [vmem:[%s1 + $0x50] sm:$0xff]
  %v29 = vld [vmem:[%s1 + $0x58] sm:$0xff]
  %v30 = vld [vmem:[%s1 + $0x60] sm:$0xff]
  %v31 = vld [vmem:[%s1 + $0x68] sm:$0xff]
  %v32 = vld [vmem:[%s1 + $0x70] sm:$0xff]
  %v33 = vld [vmem:[%s1 + $0x78] sm:$0xff]
  %v34 = vld [vmem:[%s1 + $0x80] sm:$0xff]
  %v35 = vld [vmem:[%s1 + $0x88] sm:$0xff]
  %v36 = vld [vmem:[%s1 + $0x90] sm:$0xff]
  %v37 = vld [vmem:[%s1 + $0x98] sm:$0xff]
  %v38 = vld [vmem:[%s1 + $0xa0] sm:$0xff]
  %v39 = vld [vmem:[%s1 + $0xa8] sm:$0xff]
  %v40 = vld [vmem:[%s1 + $0xb0] sm:$0xff]
  %v41 = vld [vmem:[%s1 + $0xb8] sm:$0xff]
  %v42 = vld [vmem:[%s1 + $0xc0] sm:$0xff]
  %v43 = vld [vmem:[%s1 + $0xc8] sm:$0xff]
  %v44 = vld [vmem:[%s1 + $0xd0] sm:$0xff]
  %v45 = vld [vmem:[%s1 + $0xd8] sm:$0xff]
  %v46 = vld [vmem:[%s1 + $0xe0] sm:$0xff]
  %v47 = vld [vmem:[%s1 + $0xe8] sm:$0xff]
  %v48 = vld [vmem:[%s1 + $0xf0] sm:$0xff]
  %v49 = vld [vmem:[%s1 + $0xf8] sm:$0xff]
  %v50 = vld [vmem:[%s1 + $0x100] sm:$0xff]
  %v51 = vld [vmem:[%s1 + $0x108] sm:$0xff]
  %v52 = vld [vmem:[%s1 + $0x110] sm:$0xff]
  %v53 = vld [vmem:[%s1 + $0x118] sm:$0xff]
  %vm54 = vcmask 588800
  %v56 = vsel %vm54, %v17, 0
  %v58 = vand.u32 %v19, 4294901760
  %59 = vmatprep.subr.mxu0 %v58
  %v60 = vand.u32 %v18, 4294901760
  %61 = vmatpush1.msra.mxu0 %v60
  %v62 = vand.u32 %v23, 4294901760
  %63 = vmatprep.subr.mxu0 %v62
  %v64 = vand.u32 %v22, 4294901760
  %65 = vmatpush1.msra.mxu0 %v64
  %v66 = vand.u32 %v27, 4294901760
  %67 = vmatprep.subr.mxu0 %v66
  %v68 = vand.u32 %v26, 4294901760
  %69 = vmatpush1.msra.mxu0 %v68
  %v70 = vand.u32 %v31, 4294901760
  %71 = vmatprep.subr.mxu0 %v70
  %v72 = vand.u32 %v30, 4294901760
  %73 = vmatpush1.msra.mxu0 %v72
  %v74 = vand.u32 %v35, 4294901760
  %75 = vmatprep.subr.mxu0 %v74
  %v76 = vand.u32 %v34, 4294901760
  %77 = vmatpush1.msra.mxu0 %v76
  %v78 = vand.u32 %v39, 4294901760
  %79 = vmatprep.subr.mxu0 %v78
  %v80 = vand.u32 %v38, 4294901760
  %81 = vmatpush1.msra.mxu0 %v80
  %v82 = vand.u32 %v43, 4294901760
  %83 = vmatprep.subr.mxu0 %v82
  %v84 = vand.u32 %v42, 4294901760
  %85 = vmatpush1.msra.mxu0 %v84
  %v86 = vand.u32 %v47, 4294901760
  %87 = vmatprep.subr.mxu0 %v86
  %v88 = vand.u32 %v46, 4294901760
  %89 = vmatpush1.msra.mxu0 %v88
  %v90 = vand.u32 %v51, 4294901760
  %91 = vmatprep.subr.mxu0 %v90
  %v92 = vand.u32 %v50, 4294901760
  %93 = vmatpush1.msra.mxu0 %v92
  %94 = vmatprep.subr.mxu0 0.0
  %95 = vmatpush1.msra.mxu0 0.0
  %96 = vmatprep.subr.mxu0 0.0
  %97 = vmatpush1.msra.mxu0 0.0
  %98 = vmatprep.subr.mxu0 0.0
  %99 = vmatpush1.msra.mxu0 0.0
  %100 = vmatprep.subr.mxu0 0.0
  %101 = vmatpush1.msra.mxu0 0.0
  %102 = vmatprep.subr.mxu0 0.0
  %103 = vmatpush1.msra.mxu0 0.0
  %104 = vmatprep.subr.mxu0 0.0
  %105 = vmatpush1.msra.mxu0 0.0
  %106 = vmatprep.subr.mxu0 0.0
  %107 = vmatpush1.msra.mxu0 0.0
  %108 = vmatprep.subr.mxu0 0.0
  %109 = vmatpush1.msra.mxu0 0.0
  %110 = vmatprep.subr.mxu0 0.0
  %111 = vmatpush1.msra.mxu0 0.0
  %112 = vmatprep.subr.mxu0 0.0
  %113 = vmatpush1.msra.mxu0 0.0
  %114 = vmatprep.subr.mxu0 0.0
  %115 = vmatpush1.msra.mxu0 0.0
  %116 = vmatprep.subr.mxu0 0.0
  %117 = vmatpush1.msra.mxu0 0.0
  %118 = vmatprep.subr.mxu0 0.0
  %119 = vmatpush1.msra.mxu0 0.0
  %120 = vmatprep.subr.mxu0 0.0
  %121 = vmatpush1.msra.mxu0 0.0
  %122 = vmatprep.subr.mxu0 0.0
  %123 = vmatpush1.msra.mxu0 0.0
  %124 = vmatprep.subr.mxu0 0.0
  %125 = vmatpush1.msra.mxu0 0.0
  %126 = vmatprep.subr.mxu0 0.0
  %127 = vmatpush1.msra.mxu0 0.0
  %128 = vmatprep.subr.mxu0 0.0
  %129 = vmatpush1.msra.mxu0 0.0
  %130 = vmatprep.subr.mxu0 0.0
  %131 = vmatpush1.msra.mxu0 0.0
  %132 = vmatprep.subr.mxu0 0.0
  %133 = vmatpush1.msra.mxu0 0.0
  %134 = vmatprep.subr.mxu0 0.0
  %135 = vmatpush1.msra.mxu0 0.0
  %136 = vmatprep.subr.mxu0 0.0
  %137 = vmatpush1.msra.mxu0 0.0
  %138 = vmatprep.subr.mxu0 0.0
  %139 = vmatpush1.msra.mxu0 0.0
  %140 = vmatprep.mubr.f32.mxu0 0.0
  %v141 = vand.u32 %v56, 4294901760
  %v142 = vsub.f32 %v56, %v141
  %v143 = vand.u32 %v142, 4294901760
  %v144 = vsub.f32 %v142, %v143
  %v145 = vand.u32 %v144, 4294901760
  %146 = vmatmul.mubr.f32.gmra.mrb[0].mxu0 %v145
  %v147 = vpop.f32.mrb[0].mxu0
  %v148 = vadd.f32 0.0, %v147
  %v149 = vpop.f32.mrb[0].mxu0
  %v150 = vadd.f32 0.0, %v149
  %151 = vdwg.mxu0
  %v152 = vand.u32 %v19, 4294901760
  %v153 = vsub.f32 %v19, %v152
  %v154 = vand.u32 %v153, 4294901760
  %v155 = vsub.f32 %v153, %v154
  %v156 = vand.u32 %v155, 4294901760
  %157 = vmatprep.subr.mxu0 %v156
  %v158 = vand.u32 %v18, 4294901760
  %v159 = vsub.f32 %v18, %v158
  %v160 = vand.u32 %v159, 4294901760
  %v161 = vsub.f32 %v159, %v160
  %v162 = vand.u32 %v161, 4294901760
  %163 = vmatpush1.msra.mxu0 %v162
  %v164 = vand.u32 %v23, 4294901760
  %v165 = vsub.f32 %v23, %v164
  %v166 = vand.u32 %v165, 4294901760
  %v167 = vsub.f32 %v165, %v166
  %v168 = vand.u32 %v167, 4294901760
  %169 = vmatprep.subr.mxu0 %v168
  %v170 = vand.u32 %v22, 4294901760
  %v171 = vsub.f32 %v22, %v170
  %v172 = vand.u32 %v171, 4294901760
  %v173 = vsub.f32 %v171, %v172
  %v174 = vand.u32 %v173, 4294901760
  %175 = vmatpush1.msra.mxu0 %v174
  %v176 = vand.u32 %v27, 4294901760
  %v177 = vsub.f32 %v27, %v176
  %v178 = vand.u32 %v177, 4294901760
  %v179 = vsub.f32 %v177, %v178
  %v180 = vand.u32 %v179, 4294901760
  %181 = vmatprep.subr.mxu0 %v180
  %v182 = vand.u32 %v26, 4294901760
  %v183 = vsub.f32 %v26, %v182
  %v184 = vand.u32 %v183, 4294901760
  %v185 = vsub.f32 %v183, %v184
  %v186 = vand.u32 %v185, 4294901760
  %187 = vmatpush1.msra.mxu0 %v186
  %v188 = vand.u32 %v31, 4294901760
  %v189 = vsub.f32 %v31, %v188
  %v190 = vand.u32 %v189, 4294901760
  %v191 = vsub.f32 %v189, %v190
  %v192 = vand.u32 %v191, 4294901760
  %193 = vmatprep.subr.mxu0 %v192
  %v194 = vand.u32 %v30, 4294901760
  %v195 = vsub.f32 %v30, %v194
  %v196 = vand.u32 %v195, 4294901760
  %v197 = vsub.f32 %v195, %v196
  %v198 = vand.u32 %v197, 4294901760
  %199 = vmatpush1.msra.mxu0 %v198
  %v200 = vand.u32 %v35, 4294901760
  %v201 = vsub.f32 %v35, %v200
  %v202 = vand.u32 %v201, 4294901760
  %v203 = vsub.f32 %v201, %v202
  %v204 = vand.u32 %v203, 4294901760
  %205 = vmatprep.subr.mxu0 %v204
  %v206 = vand.u32 %v34, 4294901760
  %v207 = vsub.f32 %v34, %v206
  %v208 = vand.u32 %v207, 4294901760
  %v209 = vsub.f32 %v207, %v208
  %v210 = vand.u32 %v209, 4294901760
  %211 = vmatpush1.msra.mxu0 %v210
  %v212 = vand.u32 %v39, 4294901760
  %v213 = vsub.f32 %v39, %v212
  %v214 = vand.u32 %v213, 4294901760
  %v215 = vsub.f32 %v213, %v214
  %v216 = vand.u32 %v215, 4294901760
  %217 = vmatprep.subr.mxu0 %v216
  %v218 = vand.u32 %v38, 4294901760
  %v219 = vsub.f32 %v38, %v218
  %v220 = vand.u32 %v219, 4294901760
  %v221 = vsub.f32 %v219, %v220
  %v222 = vand.u32 %v221, 4294901760
  %223 = vmatpush1.msra.mxu0 %v222
  %v224 = vand.u32 %v43, 4294901760
  %v225 = vsub.f32 %v43, %v224
  %v226 = vand.u32 %v225, 4294901760
  %v227 = vsub.f32 %v225, %v226
  %v228 = vand.u32 %v227, 4294901760
  %229 = vmatprep.subr.mxu0 %v228
  %v230 = vand.u32 %v42, 4294901760
  %v231 = vsub.f32 %v42, %v230
  %v232 = vand.u32 %v231, 4294901760
  %v233 = vsub.f32 %v231, %v232
  %v234 = vand.u32 %v233, 4294901760
  %235 = vmatpush1.msra.mxu0 %v234
  %v236 = vand.u32 %v47, 4294901760
  %v237 = vsub.f32 %v47, %v236
  %v238 = vand.u32 %v237, 4294901760
  %v239 = vsub.f32 %v237, %v238
  %v240 = vand.u32 %v239, 4294901760
  %241 = vmatprep.subr.mxu0 %v240
  %v242 = vand.u32 %v46, 4294901760
  %v243 = vsub.f32 %v46, %v242
  %v244 = vand.u32 %v243, 4294901760
  %v245 = vsub.f32 %v243, %v244
  %v246 = vand.u32 %v245, 4294901760
  %247 = vmatpush1.msra.mxu0 %v246
  %v248 = vand.u32 %v51, 4294901760
  %v249 = vsub.f32 %v51, %v248
  %v250 = vand.u32 %v249, 4294901760
  %v251 = vsub.f32 %v249, %v250
  %v252 = vand.u32 %v251, 4294901760
  %253 = vmatprep.subr.mxu0 %v252
  %v254 = vand.u32 %v50, 4294901760
  %v255 = vsub.f32 %v50, %v254
  %v256 = vand.u32 %v255, 4294901760
  %v257 = vsub.f32 %v255, %v256
  %v258 = vand.u32 %v257, 4294901760
  %259 = vmatpush1.msra.mxu0 %v258
  %260 = vmatprep.subr.mxu0 0.0
  %261 = vmatpush1.msra.mxu0 0.0
  %262 = vmatprep.subr.mxu0 0.0
  %263 = vmatpush1.msra.mxu0 0.0
  %264 = vmatprep.subr.mxu0 0.0
  %265 = vmatpush1.msra.mxu0 0.0
  %266 = vmatprep.subr.mxu0 0.0
  %267 = vmatpush1.msra.mxu0 0.0
  %268 = vmatprep.subr.mxu0 0.0
  %269 = vmatpush1.msra.mxu0 0.0
  %270 = vmatprep.subr.mxu0 0.0
  %271 = vmatpush1.msra.mxu0 0.0
  %272 = vmatprep.subr.mxu0 0.0
  %273 = vmatpush1.msra.mxu0 0.0
  %274 = vmatprep.subr.mxu0 0.0
  %275 = vmatpush1.msra.mxu0 0.0
  %276 = vmatprep.subr.mxu0 0.0
  %277 = vmatpush1.msra.mxu0 0.0
  %278 = vmatprep.subr.mxu0 0.0
  %279 = vmatpush1.msra.mxu0 0.0
  %280 = vmatprep.subr.mxu0 0.0
  %281 = vmatpush1.msra.mxu0 0.0
  %282 = vmatprep.subr.mxu0 0.0
  %283 = vmatpush1.msra.mxu0 0.0
  %284 = vmatprep.subr.mxu0 0.0
  %285 = vmatpush1.msra.mxu0 0.0
  %286 = vmatprep.subr.mxu0 0.0
  %287 = vmatpush1.msra.mxu0 0.0
  %288 = vmatprep.subr.mxu0 0.0
  %289 = vmatpush1.msra.mxu0 0.0
  %290 = vmatprep.subr.mxu0 0.0
  %291 = vmatpush1.msra.mxu0 0.0
  %292 = vmatprep.subr.mxu0 0.0
  %293 = vmatpush1.msra.mxu0 0.0
  %294 = vmatprep.subr.mxu0 0.0
  %295 = vmatpush1.msra.mxu0 0.0
  %296 = vmatprep.subr.mxu0 0.0
  %297 = vmatpush1.msra.mxu0 0.0
  %298 = vmatprep.subr.mxu0 0.0
  %299 = vmatpush1.msra.mxu0 0.0
  %300 = vmatprep.subr.mxu0 0.0
  %301 = vmatpush1.msra.mxu0 0.0
  %302 = vmatprep.subr.mxu0 0.0
  %303 = vmatpush1.msra.mxu0 0.0
  %304 = vmatprep.subr.mxu0 0.0
  %305 = vmatpush1.msra.mxu0 0.0
  %306 = vmatprep.mubr.f32.mxu0 0.0
  %v307 = vand.u32 %v56, 4294901760
  %308 = vmatmul.mubr.f32.gmra.mrb[0].mxu0 %v307
  %v309 = vpop.f32.mrb[0].mxu0
  %v310 = vadd.f32 %v148, %v309
  %v311 = vpop.f32.mrb[0].mxu0
  %v312 = vadd.f32 %v150, %v311
  %313 = vdwg.mxu0
  %v314 = vand.u32 %v19, 4294901760
  %v315 = vsub.f32 %v19, %v314
  %316 = vmatprep.subr.mxu0 %v315
  %v317 = vand.u32 %v18, 4294901760
  %v318 = vsub.f32 %v18, %v317
  %319 = vmatpush1.msra.mxu0 %v318
  %v320 = vand.u32 %v23, 4294901760
  %v321 = vsub.f32 %v23, %v320
  %322 = vmatprep.subr.mxu0 %v321
  %v323 = vand.u32 %v22, 4294901760
  %v324 = vsub.f32 %v22, %v323
  %325 = vmatpush1.msra.mxu0 %v324
  %v326 = vand.u32 %v27, 4294901760
  %v327 = vsub.f32 %v27, %v326
  %328 = vmatprep.subr.mxu0 %v327
  %v329 = vand.u32 %v26, 4294901760
  %v330 = vsub.f32 %v26, %v329
  %331 = vmatpush1.msra.mxu0 %v330
  %v332 = vand.u32 %v31, 4294901760
  %v333 = vsub.f32 %v31, %v332
  %334 = vmatprep.subr.mxu0 %v333
  %v335 = vand.u32 %v30, 4294901760
  %v336 = vsub.f32 %v30, %v335
  %337 = vmatpush1.msra.mxu0 %v336
  %v338 = vand.u32 %v35, 4294901760
  %v339 = vsub.f32 %v35, %v338
  %340 = vmatprep.subr.mxu0 %v339
  %v341 = vand.u32 %v34, 4294901760
  %v342 = vsub.f32 %v34, %v341
  %343 = vmatpush1.msra.mxu0 %v342
  %v344 = vand.u32 %v39, 4294901760
  %v345 = vsub.f32 %v39, %v344
  %346 = vmatprep.subr.mxu0 %v345
  %v347 = vand.u32 %v38, 4294901760
  %v348 = vsub.f32 %v38, %v347
  %349 = vmatpush1.msra.mxu0 %v348
  %v350 = vand.u32 %v43, 4294901760
  %v351 = vsub.f32 %v43, %v350
  %352 = vmatprep.subr.mxu0 %v351
  %v353 = vand.u32 %v42, 4294901760
  %v354 = vsub.f32 %v42, %v353
  %355 = vmatpush1.msra.mxu0 %v354
  %v356 = vand.u32 %v47, 4294901760
  %v357 = vsub.f32 %v47, %v356
  %358 = vmatprep.subr.mxu0 %v357
  %v359 = vand.u32 %v46, 4294901760
  %v360 = vsub.f32 %v46, %v359
  %361 = vmatpush1.msra.mxu0 %v360
  %v362 = vand.u32 %v51, 4294901760
  %v363 = vsub.f32 %v51, %v362
  %364 = vmatprep.subr.mxu0 %v363
  %v365 = vand.u32 %v50, 4294901760
  %v366 = vsub.f32 %v50, %v365
  %367 = vmatpush1.msra.mxu0 %v366
  %368 = vmatprep.subr.mxu0 0.0
  %369 = vmatpush1.msra.mxu0 0.0
  %370 = vmatprep.subr.mxu0 0.0
  %371 = vmatpush1.msra.mxu0 0.0
  %372 = vmatprep.subr.mxu0 0.0
  %373 = vmatpush1.msra.mxu0 0.0
  %374 = vmatprep.subr.mxu0 0.0
  %375 = vmatpush1.msra.mxu0 0.0
  %376 = vmatprep.subr.mxu0 0.0
  %377 = vmatpush1.msra.mxu0 0.0
  %378 = vmatprep.subr.mxu0 0.0
  %379 = vmatpush1.msra.mxu0 0.0
  %380 = vmatprep.subr.mxu0 0.0
  %381 = vmatpush1.msra.mxu0 0.0
  %382 = vmatprep.subr.mxu0 0.0
  %383 = vmatpush1.msra.mxu0 0.0
  %384 = vmatprep.subr.mxu0 0.0
  %385 = vmatpush1.msra.mxu0 0.0
  %386 = vmatprep.subr.mxu0 0.0
  %387 = vmatpush1.msra.mxu0 0.0
  %388 = vmatprep.subr.mxu0 0.0
  %389 = vmatpush1.msra.mxu0 0.0
  %390 = vmatprep.subr.mxu0 0.0
  %391 = vmatpush1.msra.mxu0 0.0
  %392 = vmatprep.subr.mxu0 0.0
  %393 = vmatpush1.msra.mxu0 0.0
  %394 = vmatprep.subr.mxu0 0.0
  %395 = vmatpush1.msra.mxu0 0.0
  %396 = vmatprep.subr.mxu0 0.0
  %397 = vmatpush1.msra.mxu0 0.0
  %398 = vmatprep.subr.mxu0 0.0
  %399 = vmatpush1.msra.mxu0 0.0
  %400 = vmatprep.subr.mxu0 0.0
  %401 = vmatpush1.msra.mxu0 0.0
  %402 = vmatprep.subr.mxu0 0.0
  %403 = vmatpush1.msra.mxu0 0.0
  %404 = vmatprep.subr.mxu0 0.0
  %405 = vmatpush1.msra.mxu0 0.0
  %406 = vmatprep.subr.mxu0 0.0
  %407 = vmatpush1.msra.mxu0 0.0
  %408 = vmatprep.subr.mxu0 0.0
  %409 = vmatpush1.msra.mxu0 0.0
  %410 = vmatprep.subr.mxu0 0.0
  %411 = vmatpush1.msra.mxu0 0.0
  %412 = vmatprep.subr.mxu0 0.0
  %413 = vmatpush1.msra.mxu0 0.0
  %414 = vmatprep.mubr.f32.mxu0 0.0
  %v415 = vand.u32 %v56, 4294901760
  %v416 = vsub.f32 %v56, %v415
  %417 = vmatmul.mubr.f32.gmra.mrb[0].mxu0 %v416
  %v418 = vpop.f32.mrb[0].mxu0
  %v419 = vadd.f32 %v310, %v418
  %v420 = vpop.f32.mrb[0].mxu0
  %v421 = vadd.f32 %v312, %v420
  %422 = vdwg.mxu0
  %v423 = vand.u32 %v19, 4294901760
  %424 = vmatprep.subr.mxu0 %v423
  %v425 = vand.u32 %v18, 4294901760
  %426 = vmatpush1.msra.mxu0 %v425
  %v427 = vand.u32 %v23, 4294901760
  %428 = vmatprep.subr.mxu0 %v427
  %v429 = vand.u32 %v22, 4294901760
  %430 = vmatpush1.msra.mxu0 %v429
  %v431 = vand.u32 %v27, 4294901760
  %432 = vmatprep.subr.mxu0 %v431
  %v433 = vand.u32 %v26, 4294901760
  %434 = vmatpush1.msra.mxu0 %v433
  %v435 = vand.u32 %v31, 4294901760
  %436 = vmatprep.subr.mxu0 %v435
  %v437 = vand.u32 %v30, 4294901760
  %438 = vmatpush1.msra.mxu0 %v437
  %v439 = vand.u32 %v35, 4294901760
  %440 = vmatprep.subr.mxu0 %v439
  %v441 = vand.u32 %v34, 4294901760
  %442 = vmatpush1.msra.mxu0 %v441
  %v443 = vand.u32 %v39, 4294901760
  %444 = vmatprep.subr.mxu0 %v443
  %v445 = vand.u32 %v38, 4294901760
  %446 = vmatpush1.msra.mxu0 %v445
  %v447 = vand.u32 %v43, 4294901760
  %448 = vmatprep.subr.mxu0 %v447
  %v449 = vand.u32 %v42, 4294901760
  %450 = vmatpush1.msra.mxu0 %v449
  %v451 = vand.u32 %v47, 4294901760
  %452 = vmatprep.subr.mxu0 %v451
  %v453 = vand.u32 %v46, 4294901760
  %454 = vmatpush1.msra.mxu0 %v453
  %v455 = vand.u32 %v51, 4294901760
  %456 = vmatprep.subr.mxu0 %v455
  %v457 = vand.u32 %v50, 4294901760
  %458 = vmatpush1.msra.mxu0 %v457
  %459 = vmatprep.subr.mxu0 0.0
  %460 = vmatpush1.msra.mxu0 0.0
  %461 = vmatprep.subr.mxu0 0.0
  %462 = vmatpush1.msra.mxu0 0.0
  %463 = vmatprep.subr.mxu0 0.0
  %464 = vmatpush1.msra.mxu0 0.0
  %465 = vmatprep.subr.mxu0 0.0
  %466 = vmatpush1.msra.mxu0 0.0
  %467 = vmatprep.subr.mxu0 0.0
  %468 = vmatpush1.msra.mxu0 0.0
  %469 = vmatprep.subr.mxu0 0.0
  %470 = vmatpush1.msra.mxu0 0.0
  %471 = vmatprep.subr.mxu0 0.0
  %472 = vmatpush1.msra.mxu0 0.0
  %473 = vmatprep.subr.mxu0 0.0
  %474 = vmatpush1.msra.mxu0 0.0
  %475 = vmatprep.subr.mxu0 0.0
  %476 = vmatpush1.msra.mxu0 0.0
  %477 = vmatprep.subr.mxu0 0.0
  %478 = vmatpush1.msra.mxu0 0.0
  %479 = vmatprep.subr.mxu0 0.0
  %480 = vmatpush1.msra.mxu0 0.0
  %481 = vmatprep.subr.mxu0 0.0
  %482 = vmatpush1.msra.mxu0 0.0
  %483 = vmatprep.subr.mxu0 0.0
  %484 = vmatpush1.msra.mxu0 0.0
  %485 = vmatprep.subr.mxu0 0.0
  %486 = vmatpush1.msra.mxu0 0.0
  %487 = vmatprep.subr.mxu0 0.0
  %488 = vmatpush1.msra.mxu0 0.0
  %489 = vmatprep.subr.mxu0 0.0
  %490 = vmatpush1.msra.mxu0 0.0
  %491 = vmatprep.subr.mxu0 0.0
  %492 = vmatpush1.msra.mxu0 0.0
  %493 = vmatprep.subr.mxu0 0.0
  %494 = vmatpush1.msra.mxu0 0.0
  %495 = vmatprep.subr.mxu0 0.0
  %496 = vmatpush1.msra.mxu0 0.0
  %497 = vmatprep.subr.mxu0 0.0
  %498 = vmatpush1.msra.mxu0 0.0
  %499 = vmatprep.subr.mxu0 0.0
  %500 = vmatpush1.msra.mxu0 0.0
  %501 = vmatprep.subr.mxu0 0.0
  %502 = vmatpush1.msra.mxu0 0.0
  %503 = vmatprep.subr.mxu0 0.0
  %504 = vmatpush1.msra.mxu0 0.0
  %505 = vmatprep.mubr.f32.mxu0 0.0
  %v506 = vand.u32 %v56, 4294901760
  %v507 = vsub.f32 %v56, %v506
  %v508 = vand.u32 %v507, 4294901760
  %509 = vmatmul.mubr.f32.gmra.mrb[0].mxu0 %v508
  %v510 = vpop.f32.mrb[0].mxu0
  %v511 = vadd.f32 %v419, %v510
  %v512 = vpop.f32.mrb[0].mxu0
  %v513 = vadd.f32 %v421, %v512
  %514 = vdwg.mxu0
  %v515 = vand.u32 %v19, 4294901760
  %v516 = vsub.f32 %v19, %v515
  %v517 = vand.u32 %v516, 4294901760
  %518 = vmatprep.subr.mxu0 %v517
  %v519 = vand.u32 %v18, 4294901760
  %v520 = vsub.f32 %v18, %v519
  %v521 = vand.u32 %v520, 4294901760
  %522 = vmatpush1.msra.mxu0 %v521
  %v523 = vand.u32 %v23, 4294901760
  %v524 = vsub.f32 %v23, %v523
  %v525 = vand.u32 %v524, 4294901760
  %526 = vmatprep.subr.mxu0 %v525
  %v527 = vand.u32 %v22, 4294901760
  %v528 = vsub.f32 %v22, %v527
  %v529 = vand.u32 %v528, 4294901760
  %530 = vmatpush1.msra.mxu0 %v529
  %v531 = vand.u32 %v27, 4294901760
  %v532 = vsub.f32 %v27, %v531
  %v533 = vand.u32 %v532, 4294901760
  %534 = vmatprep.subr.mxu0 %v533
  %v535 = vand.u32 %v26, 4294901760
  %v536 = vsub.f32 %v26, %v535
  %v537 = vand.u32 %v536, 4294901760
  %538 = vmatpush1.msra.mxu0 %v537
  %v539 = vand.u32 %v31, 4294901760
  %v540 = vsub.f32 %v31, %v539
  %v541 = vand.u32 %v540, 4294901760
  %542 = vmatprep.subr.mxu0 %v541
  %v543 = vand.u32 %v30, 4294901760
  %v544 = vsub.f32 %v30, %v543
  %v545 = vand.u32 %v544, 4294901760
  %546 = vmatpush1.msra.mxu0 %v545
  %v547 = vand.u32 %v35, 4294901760
  %v548 = vsub.f32 %v35, %v547
  %v549 = vand.u32 %v548, 4294901760
  %550 = vmatprep.subr.mxu0 %v549
  %v551 = vand.u32 %v34, 4294901760
  %v552 = vsub.f32 %v34, %v551
  %v553 = vand.u32 %v552, 4294901760
  %554 = vmatpush1.msra.mxu0 %v553
  %v555 = vand.u32 %v39, 4294901760
  %v556 = vsub.f32 %v39, %v555
  %v557 = vand.u32 %v556, 4294901760
  %558 = vmatprep.subr.mxu0 %v557
  %v559 = vand.u32 %v38, 4294901760
  %v560 = vsub.f32 %v38, %v559
  %v561 = vand.u32 %v560, 4294901760
  %562 = vmatpush1.msra.mxu0 %v561
  %v563 = vand.u32 %v43, 4294901760
  %v564 = vsub.f32 %v43, %v563
  %v565 = vand.u32 %v564, 4294901760
  %566 = vmatprep.subr.mxu0 %v565
  %v567 = vand.u32 %v42, 4294901760
  %v568 = vsub.f32 %v42, %v567
  %v569 = vand.u32 %v568, 4294901760
  %570 = vmatpush1.msra.mxu0 %v569
  %v571 = vand.u32 %v47, 4294901760
  %v572 = vsub.f32 %v47, %v571
  %v573 = vand.u32 %v572, 4294901760
  %574 = vmatprep.subr.mxu0 %v573
  %v575 = vand.u32 %v46, 4294901760
  %v576 = vsub.f32 %v46, %v575
  %v577 = vand.u32 %v576, 4294901760
  %578 = vmatpush1.msra.mxu0 %v577
  %v579 = vand.u32 %v51, 4294901760
  %v580 = vsub.f32 %v51, %v579
  %v581 = vand.u32 %v580, 4294901760
  %582 = vmatprep.subr.mxu0 %v581
  %v583 = vand.u32 %v50, 4294901760
  %v584 = vsub.f32 %v50, %v583
  %v585 = vand.u32 %v584, 4294901760
  %586 = vmatpush1.msra.mxu0 %v585
  %587 = vmatprep.subr.mxu0 0.0
  %588 = vmatpush1.msra.mxu0 0.0
  %589 = vmatprep.subr.mxu0 0.0
  %590 = vmatpush1.msra.mxu0 0.0
  %591 = vmatprep.subr.mxu0 0.0
  %592 = vmatpush1.msra.mxu0 0.0
  %593 = vmatprep.subr.mxu0 0.0
  %594 = vmatpush1.msra.mxu0 0.0
  %595 = vmatprep.subr.mxu0 0.0
  %596 = vmatpush1.msra.mxu0 0.0
  %597 = vmatprep.subr.mxu0 0.0
  %598 = vmatpush1.msra.mxu0 0.0
  %599 = vmatprep.subr.mxu0 0.0
  %600 = vmatpush1.msra.mxu0 0.0
  %601 = vmatprep.subr.mxu0 0.0
  %602 = vmatpush1.msra.mxu0 0.0
  %603 = vmatprep.subr.mxu0 0.0
  %604 = vmatpush1.msra.mxu0 0.0
  %605 = vmatprep.subr.mxu0 0.0
  %606 = vmatpush1.msra.mxu0 0.0
  %607 = vmatprep.subr.mxu0 0.0
  %608 = vmatpush1.msra.mxu0 0.0
  %609 = vmatprep.subr.mxu0 0.0
  %610 = vmatpush1.msra.mxu0 0.0
  %611 = vmatprep.subr.mxu0 0.0
  %612 = vmatpush1.msra.mxu0 0.0
  %613 = vmatprep.subr.mxu0 0.0
  %614 = vmatpush1.msra.mxu0 0.0
  %615 = vmatprep.subr.mxu0 0.0
  %616 = vmatpush1.msra.mxu0 0.0
  %617 = vmatprep.subr.mxu0 0.0
  %618 = vmatpush1.msra.mxu0 0.0
  %619 = vmatprep.subr.mxu0 0.0
  %620 = vmatpush1.msra.mxu0 0.0
  %621 = vmatprep.subr.mxu0 0.0
  %622 = vmatpush1.msra.mxu0 0.0
  %623 = vmatprep.subr.mxu0 0.0
  %624 = vmatpush1.msra.mxu0 0.0
  %625 = vmatprep.subr.mxu0 0.0
  %626 = vmatpush1.msra.mxu0 0.0
  %627 = vmatprep.subr.mxu0 0.0
  %628 = vmatpush1.msra.mxu0 0.0
  %629 = vmatprep.subr.mxu0 0.0
  %630 = vmatpush1.msra.mxu0 0.0
  %631 = vmatprep.subr.mxu0 0.0
  %632 = vmatpush1.msra.mxu0 0.0
  %633 = vmatprep.mubr.f32.mxu0 0.0
  %v634 = vand.u32 %v56, 4294901760
  %635 = vmatmul.mubr.f32.gmra.mrb[0].mxu0 %v634
  %v636 = vpop.f32.mrb[0].mxu0
  %v637 = vadd.f32 %v511, %v636
  %v638 = vpop.f32.mrb[0].mxu0
  %v639 = vadd.f32 %v513, %v638
  %640 = vdwg.mxu0
  %v641 = vand.u32 %v19, 4294901760
  %642 = vmatprep.subr.mxu0 %v641
  %v643 = vand.u32 %v18, 4294901760
  %644 = vmatpush1.msra.mxu0 %v643
  %v645 = vand.u32 %v23, 4294901760
  %646 = vmatprep.subr.mxu0 %v645
  %v647 = vand.u32 %v22, 4294901760
  %648 = vmatpush1.msra.mxu0 %v647
  %v649 = vand.u32 %v27, 4294901760
  %650 = vmatprep.subr.mxu0 %v649
  %v651 = vand.u32 %v26, 4294901760
  %652 = vmatpush1.msra.mxu0 %v651
  %v653 = vand.u32 %v31, 4294901760
  %654 = vmatprep.subr.mxu0 %v653
  %v655 = vand.u32 %v30, 4294901760
  %656 = vmatpush1.msra.mxu0 %v655
  %v657 = vand.u32 %v35, 4294901760
  %658 = vmatprep.subr.mxu0 %v657
  %v659 = vand.u32 %v34, 4294901760
  %660 = vmatpush1.msra.mxu0 %v659
  %v661 = vand.u32 %v39, 4294901760
  %662 = vmatprep.subr.mxu0 %v661
  %v663 = vand.u32 %v38, 4294901760
  %664 = vmatpush1.msra.mxu0 %v663
  %v665 = vand.u32 %v43, 4294901760
  %666 = vmatprep.subr.mxu0 %v665
  %v667 = vand.u32 %v42, 4294901760
  %668 = vmatpush1.msra.mxu0 %v667
  %v669 = vand.u32 %v47, 4294901760
  %670 = vmatprep.subr.mxu0 %v669
  %v671 = vand.u32 %v46, 4294901760
  %672 = vmatpush1.msra.mxu0 %v671
  %v673 = vand.u32 %v51, 4294901760
  %674 = vmatprep.subr.mxu0 %v673
  %v675 = vand.u32 %v50, 4294901760
  %676 = vmatpush1.msra.mxu0 %v675
  %677 = vmatprep.subr.mxu0 0.0
  %678 = vmatpush1.msra.mxu0 0.0
  %679 = vmatprep.subr.mxu0 0.0
  %680 = vmatpush1.msra.mxu0 0.0
  %681 = vmatprep.subr.mxu0 0.0
  %682 = vmatpush1.msra.mxu0 0.0
  %683 = vmatprep.subr.mxu0 0.0
  %684 = vmatpush1.msra.mxu0 0.0
  %685 = vmatprep.subr.mxu0 0.0
  %686 = vmatpush1.msra.mxu0 0.0
  %687 = vmatprep.subr.mxu0 0.0
  %688 = vmatpush1.msra.mxu0 0.0
  %689 = vmatprep.subr.mxu0 0.0
  %690 = vmatpush1.msra.mxu0 0.0
  %691 = vmatprep.subr.mxu0 0.0
  %692 = vmatpush1.msra.mxu0 0.0
  %693 = vmatprep.subr.mxu0 0.0
  %694 = vmatpush1.msra.mxu0 0.0
  %695 = vmatprep.subr.mxu0 0.0
  %696 = vmatpush1.msra.mxu0 0.0
  %697 = vmatprep.subr.mxu0 0.0
  %698 = vmatpush1.msra.mxu0 0.0
  %699 = vmatprep.subr.mxu0 0.0
  %700 = vmatpush1.msra.mxu0 0.0
  %701 = vmatprep.subr.mxu0 0.0
  %702 = vmatpush1.msra.mxu0 0.0
  %703 = vmatprep.subr.mxu0 0.0
  %704 = vmatpush1.msra.mxu0 0.0
  %705 = vmatprep.subr.mxu0 0.0
  %706 = vmatpush1.msra.mxu0 0.0
  %707 = vmatprep.subr.mxu0 0.0
  %708 = vmatpush1.msra.mxu0 0.0
  %709 = vmatprep.subr.mxu0 0.0
  %710 = vmatpush1.msra.mxu0 0.0
  %711 = vmatprep.subr.mxu0 0.0
  %712 = vmatpush1.msra.mxu0 0.0
  %713 = vmatprep.subr.mxu0 0.0
  %714 = vmatpush1.msra.mxu0 0.0
  %715 = vmatprep.subr.mxu0 0.0
  %716 = vmatpush1.msra.mxu0 0.0
  %717 = vmatprep.subr.mxu0 0.0
  %718 = vmatpush1.msra.mxu0 0.0
  %719 = vmatprep.subr.mxu0 0.0
  %720 = vmatpush1.msra.mxu0 0.0
  %721 = vmatprep.subr.mxu0 0.0
  %722 = vmatpush1.msra.mxu0 0.0
  %723 = vmatprep.mubr.f32.mxu0 0.0
  %v724 = vand.u32 %v56, 4294901760
  %725 = vmatmul.mubr.f32.gmra.mrb[0].mxu0 %v724
  %v726 = vpop.f32.mrb[0].mxu0
  %v727 = vadd.f32 %v637, %v726
  %v728 = vpop.f32.mrb[0].mxu0
  %v729 = vadd.f32 %v639, %v728
  %730 = vdwg.mxu0
  %v731 = vand.u32 %v21, 4294901760
  %732 = vmatprep.subr.mxu0 %v731
  %v733 = vand.u32 %v20, 4294901760
  %734 = vmatpush1.msra.mxu0 %v733
  %v735 = vand.u32 %v25, 4294901760
  %736 = vmatprep.subr.mxu0 %v735
  %v737 = vand.u32 %v24, 4294901760
  %738 = vmatpush1.msra.mxu0 %v737
  %v739 = vand.u32 %v29, 4294901760
  %740 = vmatprep.subr.mxu0 %v739
  %v741 = vand.u32 %v28, 4294901760
  %742 = vmatpush1.msra.mxu0 %v741
  %v743 = vand.u32 %v33, 4294901760
  %744 = vmatprep.subr.mxu0 %v743
  %v745 = vand.u32 %v32, 4294901760
  %746 = vmatpush1.msra.mxu0 %v745
  %v747 = vand.u32 %v37, 4294901760
  %748 = vmatprep.subr.mxu0 %v747
  %v749 = vand.u32 %v36, 4294901760
  %750 = vmatpush1.msra.mxu0 %v749
  %v751 = vand.u32 %v41, 4294901760
  %752 = vmatprep.subr.mxu0 %v751
  %v753 = vand.u32 %v40, 4294901760
  %754 = vmatpush1.msra.mxu0 %v753
  %v755 = vand.u32 %v45, 4294901760
  %756 = vmatprep.subr.mxu0 %v755
  %v757 = vand.u32 %v44, 4294901760
  %758 = vmatpush1.msra.mxu0 %v757
  %v759 = vand.u32 %v49, 4294901760
  %760 = vmatprep.subr.mxu0 %v759
  %v761 = vand.u32 %v48, 4294901760
  %762 = vmatpush1.msra.mxu0 %v761
  %v763 = vand.u32 %v53, 4294901760
  %764 = vmatprep.subr.mxu0 %v763
  %v765 = vand.u32 %v52, 4294901760
  %766 = vmatpush1.msra.mxu0 %v765
  %767 = vmatprep.subr.mxu0 0.0
  %768 = vmatpush1.msra.mxu0 0.0
  %769 = vmatprep.subr.mxu0 0.0
  %770 = vmatpush1.msra.mxu0 0.0
  %771 = vmatprep.subr.mxu0 0.0
  %772 = vmatpush1.msra.mxu0 0.0
  %773 = vmatprep.subr.mxu0 0.0
  %774 = vmatpush1.msra.mxu0 0.0
  %775 = vmatprep.subr.mxu0 0.0
  %776 = vmatpush1.msra.mxu0 0.0
  %777 = vmatprep.subr.mxu0 0.0
  %778 = vmatpush1.msra.mxu0 0.0
  %779 = vmatprep.subr.mxu0 0.0
  %780 = vmatpush1.msra.mxu0 0.0
  %781 = vmatprep.subr.mxu0 0.0
  %782 = vmatpush1.msra.mxu0 0.0
  %783 = vmatprep.subr.mxu0 0.0
  %784 = vmatpush1.msra.mxu0 0.0
  %785 = vmatprep.subr.mxu0 0.0
  %786 = vmatpush1.msra.mxu0 0.0
  %787 = vmatprep.subr.mxu0 0.0
  %788 = vmatpush1.msra.mxu0 0.0
  %789 = vmatprep.subr.mxu0 0.0
  %790 = vmatpush1.msra.mxu0 0.0
  %791 = vmatprep.subr.mxu0 0.0
  %792 = vmatpush1.msra.mxu0 0.0
  %793 = vmatprep.subr.mxu0 0.0
  %794 = vmatpush1.msra.mxu0 0.0
  %795 = vmatprep.subr.mxu0 0.0
  %796 = vmatpush1.msra.mxu0 0.0
  %797 = vmatprep.subr.mxu0 0.0
  %798 = vmatpush1.msra.mxu0 0.0
  %799 = vmatprep.subr.mxu0 0.0
  %800 = vmatpush1.msra.mxu0 0.0
  %801 = vmatprep.subr.mxu0 0.0
  %802 = vmatpush1.msra.mxu0 0.0
  %803 = vmatprep.subr.mxu0 0.0
  %804 = vmatpush1.msra.mxu0 0.0
  %805 = vmatprep.subr.mxu0 0.0
  %806 = vmatpush1.msra.mxu0 0.0
  %807 = vmatprep.subr.mxu0 0.0
  %808 = vmatpush1.msra.mxu0 0.0
  %809 = vmatprep.subr.mxu0 0.0
  %810 = vmatpush1.msra.mxu0 0.0
  %811 = vmatprep.subr.mxu0 0.0
  %812 = vmatpush1.msra.mxu0 0.0
  %813 = vmatprep.mubr.f32.mxu0 0.0
  %v814 = vand.u32 %v56, 4294901760
  %v815 = vsub.f32 %v56, %v814
  %v816 = vand.u32 %v815, 4294901760
  %v817 = vsub.f32 %v815, %v816
  %v818 = vand.u32 %v817, 4294901760
  %819 = vmatmul.mubr.f32.gmra.mrb[0].mxu0 %v818
  %v820 = vpop.f32.mrb[0].mxu0
  %v821 = vadd.f32 0.0, %v820
  %v822 = vpop.f32.mrb[0].mxu0
  %v823 = vadd.f32 0.0, %v822
  %824 = vdwg.mxu0
  %v825 = vand.u32 %v21, 4294901760
  %v826 = vsub.f32 %v21, %v825
  %v827 = vand.u32 %v826, 4294901760
  %v828 = vsub.f32 %v826, %v827
  %v829 = vand.u32 %v828, 4294901760
  %830 = vmatprep.subr.mxu0 %v829
  %v831 = vand.u32 %v20, 4294901760
  %v832 = vsub.f32 %v20, %v831
  %v833 = vand.u32 %v832, 4294901760
  %v834 = vsub.f32 %v832, %v833
  %v835 = vand.u32 %v834, 4294901760
  %836 = vmatpush1.msra.mxu0 %v835
  %v837 = vand.u32 %v25, 4294901760
  %v838 = vsub.f32 %v25, %v837
  %v839 = vand.u32 %v838, 4294901760
  %v840 = vsub.f32 %v838, %v839
  %v841 = vand.u32 %v840, 4294901760
  %842 = vmatprep.subr.mxu0 %v841
  %v843 = vand.u32 %v24, 4294901760
  %v844 = vsub.f32 %v24, %v843
  %v845 = vand.u32 %v844, 4294901760
  %v846 = vsub.f32 %v844, %v845
  %v847 = vand.u32 %v846, 4294901760
  %848 = vmatpush1.msra.mxu0 %v847
  %v849 = vand.u32 %v29, 4294901760
  %v850 = vsub.f32 %v29, %v849
  %v851 = vand.u32 %v850, 4294901760
  %v852 = vsub.f32 %v850, %v851
  %v853 = vand.u32 %v852, 4294901760
  %854 = vmatprep.subr.mxu0 %v853
  %v855 = vand.u32 %v28, 4294901760
  %v856 = vsub.f32 %v28, %v855
  %v857 = vand.u32 %v856, 4294901760
  %v858 = vsub.f32 %v856, %v857
  %v859 = vand.u32 %v858, 4294901760
  %860 = vmatpush1.msra.mxu0 %v859
  %v861 = vand.u32 %v33, 4294901760
  %v862 = vsub.f32 %v33, %v861
  %v863 = vand.u32 %v862, 4294901760
  %v864 = vsub.f32 %v862, %v863
  %v865 = vand.u32 %v864, 4294901760
  %866 = vmatprep.subr.mxu0 %v865
  %v867 = vand.u32 %v32, 4294901760
  %v868 = vsub.f32 %v32, %v867
  %v869 = vand.u32 %v868, 4294901760
  %v870 = vsub.f32 %v868, %v869
  %v871 = vand.u32 %v870, 4294901760
  %872 = vmatpush1.msra.mxu0 %v871
  %v873 = vand.u32 %v37, 4294901760
  %v874 = vsub.f32 %v37, %v873
  %v875 = vand.u32 %v874, 4294901760
  %v876 = vsub.f32 %v874, %v875
  %v877 = vand.u32 %v876, 4294901760
  %878 = vmatprep.subr.mxu0 %v877
  %v879 = vand.u32 %v36, 4294901760
  %v880 = vsub.f32 %v36, %v879
  %v881 = vand.u32 %v880, 4294901760
  %v882 = vsub.f32 %v880, %v881
  %v883 = vand.u32 %v882, 4294901760
  %884 = vmatpush1.msra.mxu0 %v883
  %v885 = vand.u32 %v41, 4294901760
  %v886 = vsub.f32 %v41, %v885
  %v887 = vand.u32 %v886, 4294901760
  %v888 = vsub.f32 %v886, %v887
  %v889 = vand.u32 %v888, 4294901760
  %890 = vmatprep.subr.mxu0 %v889
  %v891 = vand.u32 %v40, 4294901760
  %v892 = vsub.f32 %v40, %v891
  %v893 = vand.u32 %v892, 4294901760
  %v894 = vsub.f32 %v892, %v893
  %v895 = vand.u32 %v894, 4294901760
  %896 = vmatpush1.msra.mxu0 %v895
  %v897 = vand.u32 %v45, 4294901760
  %v898 = vsub.f32 %v45, %v897
  %v899 = vand.u32 %v898, 4294901760
  %v900 = vsub.f32 %v898, %v899
  %v901 = vand.u32 %v900, 4294901760
  %902 = vmatprep.subr.mxu0 %v901
  %v903 = vand.u32 %v44, 4294901760
  %v904 = vsub.f32 %v44, %v903
  %v905 = vand.u32 %v904, 4294901760
  %v906 = vsub.f32 %v904, %v905
  %v907 = vand.u32 %v906, 4294901760
  %908 = vmatpush1.msra.mxu0 %v907
  %v909 = vand.u32 %v49, 4294901760
  %v910 = vsub.f32 %v49, %v909
  %v911 = vand.u32 %v910, 4294901760
  %v912 = vsub.f32 %v910, %v911
  %v913 = vand.u32 %v912, 4294901760
  %914 = vmatprep.subr.mxu0 %v913
  %v915 = vand.u32 %v48, 4294901760
  %v916 = vsub.f32 %v48, %v915
  %v917 = vand.u32 %v916, 4294901760
  %v918 = vsub.f32 %v916, %v917
  %v919 = vand.u32 %v918, 4294901760
  %920 = vmatpush1.msra.mxu0 %v919
  %v921 = vand.u32 %v53, 4294901760
  %v922 = vsub.f32 %v53, %v921
  %v923 = vand.u32 %v922, 4294901760
  %v924 = vsub.f32 %v922, %v923
  %v925 = vand.u32 %v924, 4294901760
  %926 = vmatprep.subr.mxu0 %v925
  %v927 = vand.u32 %v52, 4294901760
  %v928 = vsub.f32 %v52, %v927
  %v929 = vand.u32 %v928, 4294901760
  %v930 = vsub.f32 %v928, %v929
  %v931 = vand.u32 %v930, 4294901760
  %932 = vmatpush1.msra.mxu0 %v931
  %933 = vmatprep.subr.mxu0 0.0
  %934 = vmatpush1.msra.mxu0 0.0
  %935 = vmatprep.subr.mxu0 0.0
  %936 = vmatpush1.msra.mxu0 0.0
  %937 = vmatprep.subr.mxu0 0.0
  %938 = vmatpush1.msra.mxu0 0.0
  %939 = vmatprep.subr.mxu0 0.0
  %940 = vmatpush1.msra.mxu0 0.0
  %941 = vmatprep.subr.mxu0 0.0
  %942 = vmatpush1.msra.mxu0 0.0
  %943 = vmatprep.subr.mxu0 0.0
  %944 = vmatpush1.msra.mxu0 0.0
  %945 = vmatprep.subr.mxu0 0.0
  %946 = vmatpush1.msra.mxu0 0.0
  %947 = vmatprep.subr.mxu0 0.0
  %948 = vmatpush1.msra.mxu0 0.0
  %949 = vmatprep.subr.mxu0 0.0
  %950 = vmatpush1.msra.mxu0 0.0
  %951 = vmatprep.subr.mxu0 0.0
  %952 = vmatpush1.msra.mxu0 0.0
  %953 = vmatprep.subr.mxu0 0.0
  %954 = vmatpush1.msra.mxu0 0.0
  %955 = vmatprep.subr.mxu0 0.0
  %956 = vmatpush1.msra.mxu0 0.0
  %957 = vmatprep.subr.mxu0 0.0
  %958 = vmatpush1.msra.mxu0 0.0
  %959 = vmatprep.subr.mxu0 0.0
  %960 = vmatpush1.msra.mxu0 0.0
  %961 = vmatprep.subr.mxu0 0.0
  %962 = vmatpush1.msra.mxu0 0.0
  %963 = vmatprep.subr.mxu0 0.0
  %964 = vmatpush1.msra.mxu0 0.0
  %965 = vmatprep.subr.mxu0 0.0
  %966 = vmatpush1.msra.mxu0 0.0
  %967 = vmatprep.subr.mxu0 0.0
  %968 = vmatpush1.msra.mxu0 0.0
  %969 = vmatprep.subr.mxu0 0.0
  %970 = vmatpush1.msra.mxu0 0.0
  %971 = vmatprep.subr.mxu0 0.0
  %972 = vmatpush1.msra.mxu0 0.0
  %973 = vmatprep.subr.mxu0 0.0
  %974 = vmatpush1.msra.mxu0 0.0
  %975 = vmatprep.subr.mxu0 0.0
  %976 = vmatpush1.msra.mxu0 0.0
  %977 = vmatprep.subr.mxu0 0.0
  %978 = vmatpush1.msra.mxu0 0.0
  %979 = vmatprep.mubr.f32.mxu0 0.0
  %v980 = vand.u32 %v56, 4294901760
  %981 = vmatmul.mubr.f32.gmra.mrb[0].mxu0 %v980
  %v982 = vpop.f32.mrb[0].mxu0
  %v983 = vadd.f32 %v821, %v982
  %v984 = vpop.f32.mrb[0].mxu0
  %v985 = vadd.f32 %v823, %v984
  %986 = vdwg.mxu0
  %v987 = vand.u32 %v21, 4294901760
  %v988 = vsub.f32 %v21, %v987
  %989 = vmatprep.subr.mxu0 %v988
  %v990 = vand.u32 %v20, 4294901760
  %v991 = vsub.f32 %v20, %v990
  %992 = vmatpush1.msra.mxu0 %v991
  %v993 = vand.u32 %v25, 4294901760
  %v994 = vsub.f32 %v25, %v993
  %995 = vmatprep.subr.mxu0 %v994
  %v996 = vand.u32 %v24, 4294901760
  %v997 = vsub.f32 %v24, %v996
  %998 = vmatpush1.msra.mxu0 %v997
  %v999 = vand.u32 %v29, 4294901760
  %v1000 = vsub.f32 %v29, %v999
  %1001 = vmatprep.subr.mxu0 %v1000
  %v1002 = vand.u32 %v28, 4294901760
  %v1003 = vsub.f32 %v28, %v1002
  %1004 = vmatpush1.msra.mxu0 %v1003
  %v1005 = vand.u32 %v33, 4294901760
  %v1006 = vsub.f32 %v33, %v1005
  %1007 = vmatprep.subr.mxu0 %v1006
  %v1008 = vand.u32 %v32, 4294901760
  %v1009 = vsub.f32 %v32, %v1008
  %1010 = vmatpush1.msra.mxu0 %v1009
  %v1011 = vand.u32 %v37, 4294901760
  %v1012 = vsub.f32 %v37, %v1011
  %1013 = vmatprep.subr.mxu0 %v1012
  %v1014 = vand.u32 %v36, 4294901760
  %v1015 = vsub.f32 %v36, %v1014
  %1016 = vmatpush1.msra.mxu0 %v1015
  %v1017 = vand.u32 %v41, 4294901760
  %v1018 = vsub.f32 %v41, %v1017
  %1019 = vmatprep.subr.mxu0 %v1018
  %v1020 = vand.u32 %v40, 4294901760
  %v1021 = vsub.f32 %v40, %v1020
  %1022 = vmatpush1.msra.mxu0 %v1021
  %v1023 = vand.u32 %v45, 4294901760
  %v1024 = vsub.f32 %v45, %v1023
  %1025 = vmatprep.subr.mxu0 %v1024
  %v1026 = vand.u32 %v44, 4294901760
  %v1027 = vsub.f32 %v44, %v1026
  %1028 = vmatpush1.msra.mxu0 %v1027
  %v1029 = vand.u32 %v49, 4294901760
  %v1030 = vsub.f32 %v49, %v1029
  %1031 = vmatprep.subr.mxu0 %v1030
  %v1032 = vand.u32 %v48, 4294901760
  %v1033 = vsub.f32 %v48, %v1032
  %1034 = vmatpush1.msra.mxu0 %v1033
  %v1035 = vand.u32 %v53, 4294901760
  %v1036 = vsub.f32 %v53, %v1035
  %1037 = vmatprep.subr.mxu0 %v1036
  %v1038 = vand.u32 %v52, 4294901760
  %v1039 = vsub.f32 %v52, %v1038
  %1040 = vmatpush1.msra.mxu0 %v1039
  %1041 = vmatprep.subr.mxu0 0.0
  %1042 = vmatpush1.msra.mxu0 0.0
  %1043 = vmatprep.subr.mxu0 0.0
  %1044 = vmatpush1.msra.mxu0 0.0
  %1045 = vmatprep.subr.mxu0 0.0
  %1046 = vmatpush1.msra.mxu0 0.0
  %1047 = vmatprep.subr.mxu0 0.0
  %1048 = vmatpush1.msra.mxu0 0.0
  %1049 = vmatprep.subr.mxu0 0.0
  %1050 = vmatpush1.msra.mxu0 0.0
  %1051 = vmatprep.subr.mxu0 0.0
  %1052 = vmatpush1.msra.mxu0 0.0
  %1053 = vmatprep.subr.mxu0 0.0
  %1054 = vmatpush1.msra.mxu0 0.0
  %1055 = vmatprep.subr.mxu0 0.0
  %1056 = vmatpush1.msra.mxu0 0.0
  %1057 = vmatprep.subr.mxu0 0.0
  %1058 = vmatpush1.msra.mxu0 0.0
  %1059 = vmatprep.subr.mxu0 0.0
  %1060 = vmatpush1.msra.mxu0 0.0
  %1061 = vmatprep.subr.mxu0 0.0
  %1062 = vmatpush1.msra.mxu0 0.0
  %1063 = vmatprep.subr.mxu0 0.0
  %1064 = vmatpush1.msra.mxu0 0.0
  %1065 = vmatprep.subr.mxu0 0.0
  %1066 = vmatpush1.msra.mxu0 0.0
  %1067 = vmatprep.subr.mxu0 0.0
  %1068 = vmatpush1.msra.mxu0 0.0
  %1069 = vmatprep.subr.mxu0 0.0
  %1070 = vmatpush1.msra.mxu0 0.0
  %1071 = vmatprep.subr.mxu0 0.0
  %1072 = vmatpush1.msra.mxu0 0.0
  %1073 = vmatprep.subr.mxu0 0.0
  %1074 = vmatpush1.msra.mxu0 0.0
  %1075 = vmatprep.subr.mxu0 0.0
  %1076 = vmatpush1.msra.mxu0 0.0
  %1077 = vmatprep.subr.mxu0 0.0
  %1078 = vmatpush1.msra.mxu0 0.0
  %1079 = vmatprep.subr.mxu0 0.0
  %1080 = vmatpush1.msra.mxu0 0.0
  %1081 = vmatprep.subr.mxu0 0.0
  %1082 = vmatpush1.msra.mxu0 0.0
  %1083 = vmatprep.subr.mxu0 0.0
  %1084 = vmatpush1.msra.mxu0 0.0
  %1085 = vmatprep.subr.mxu0 0.0
  %1086 = vmatpush1.msra.mxu0 0.0
  %1087 = vmatprep.mubr.f32.mxu0 0.0
  %v1088 = vand.u32 %v56, 4294901760
  %v1089 = vsub.f32 %v56, %v1088
  %1090 = vmatmul.mubr.f32.gmra.mrb[0].mxu0 %v1089
  %v1091 = vpop.f32.mrb[0].mxu0
  %v1092 = vadd.f32 %v983, %v1091
  %v1093 = vpop.f32.mrb[0].mxu0
  %v1094 = vadd.f32 %v985, %v1093
  %1095 = vdwg.mxu0
  %v1096 = vand.u32 %v21, 4294901760
  %1097 = vmatprep.subr.mxu0 %v1096
  %v1098 = vand.u32 %v20, 4294901760
  %1099 = vmatpush1.msra.mxu0 %v1098
  %v1100 = vand.u32 %v25, 4294901760
  %1101 = vmatprep.subr.mxu0 %v1100
  %v1102 = vand.u32 %v24, 4294901760
  %1103 = vmatpush1.msra.mxu0 %v1102
  %v1104 = vand.u32 %v29, 4294901760
  %1105 = vmatprep.subr.mxu0 %v1104
  %v1106 = vand.u32 %v28, 4294901760
  %1107 = vmatpush1.msra.mxu0 %v1106
  %v1108 = vand.u32 %v33, 4294901760
  %1109 = vmatprep.subr.mxu0 %v1108
  %v1110 = vand.u32 %v32, 4294901760
  %1111 = vmatpush1.msra.mxu0 %v1110
  %v1112 = vand.u32 %v37, 4294901760
  %1113 = vmatprep.subr.mxu0 %v1112
  %v1114 = vand.u32 %v36, 4294901760
  %1115 = vmatpush1.msra.mxu0 %v1114
  %v1116 = vand.u32 %v41, 4294901760
  %1117 = vmatprep.subr.mxu0 %v1116
  %v1118 = vand.u32 %v40, 4294901760
  %1119 = vmatpush1.msra.mxu0 %v1118
  %v1120 = vand.u32 %v45, 4294901760
  %1121 = vmatprep.subr.mxu0 %v1120
  %v1122 = vand.u32 %v44, 4294901760
  %1123 = vmatpush1.msra.mxu0 %v1122
  %v1124 = vand.u32 %v49, 4294901760
  %1125 = vmatprep.subr.mxu0 %v1124
  %v1126 = vand.u32 %v48, 4294901760
  %1127 = vmatpush1.msra.mxu0 %v1126
  %v1128 = vand.u32 %v53, 4294901760
  %1129 = vmatprep.subr.mxu0 %v1128
  %v1130 = vand.u32 %v52, 4294901760
  %1131 = vmatpush1.msra.mxu0 %v1130
  %1132 = vmatprep.subr.mxu0 0.0
  %1133 = vmatpush1.msra.mxu0 0.0
  %1134 = vmatprep.subr.mxu0 0.0
  %1135 = vmatpush1.msra.mxu0 0.0
  %1136 = vmatprep.subr.mxu0 0.0
  %1137 = vmatpush1.msra.mxu0 0.0
  %1138 = vmatprep.subr.mxu0 0.0
  %1139 = vmatpush1.msra.mxu0 0.0
  %1140 = vmatprep.subr.mxu0 0.0
  %1141 = vmatpush1.msra.mxu0 0.0
  %1142 = vmatprep.subr.mxu0 0.0
  %1143 = vmatpush1.msra.mxu0 0.0
  %1144 = vmatprep.subr.mxu0 0.0
  %1145 = vmatpush1.msra.mxu0 0.0
  %1146 = vmatprep.subr.mxu0 0.0
  %1147 = vmatpush1.msra.mxu0 0.0
  %1148 = vmatprep.subr.mxu0 0.0
  %1149 = vmatpush1.msra.mxu0 0.0
  %1150 = vmatprep.subr.mxu0 0.0
  %1151 = vmatpush1.msra.mxu0 0.0
  %1152 = vmatprep.subr.mxu0 0.0
  %1153 = vmatpush1.msra.mxu0 0.0
  %1154 = vmatprep.subr.mxu0 0.0
  %1155 = vmatpush1.msra.mxu0 0.0
  %1156 = vmatprep.subr.mxu0 0.0
  %1157 = vmatpush1.msra.mxu0 0.0
  %1158 = vmatprep.subr.mxu0 0.0
  %1159 = vmatpush1.msra.mxu0 0.0
  %1160 = vmatprep.subr.mxu0 0.0
  %1161 = vmatpush1.msra.mxu0 0.0
  %1162 = vmatprep.subr.mxu0 0.0
  %1163 = vmatpush1.msra.mxu0 0.0
  %1164 = vmatprep.subr.mxu0 0.0
  %1165 = vmatpush1.msra.mxu0 0.0
  %1166 = vmatprep.subr.mxu0 0.0
  %1167 = vmatpush1.msra.mxu0 0.0
  %1168 = vmatprep.subr.mxu0 0.0
  %1169 = vmatpush1.msra.mxu0 0.0
  %1170 = vmatprep.subr.mxu0 0.0
  %1171 = vmatpush1.msra.mxu0 0.0
  %1172 = vmatprep.subr.mxu0 0.0
  %1173 = vmatpush1.msra.mxu0 0.0
  %1174 = vmatprep.subr.mxu0 0.0
  %1175 = vmatpush1.msra.mxu0 0.0
  %1176 = vmatprep.subr.mxu0 0.0
  %1177 = vmatpush1.msra.mxu0 0.0
  %1178 = vmatprep.mubr.f32.mxu0 0.0
  %v1179 = vand.u32 %v56, 4294901760
  %v1180 = vsub.f32 %v56, %v1179
  %v1181 = vand.u32 %v1180, 4294901760
  %1182 = vmatmul.mubr.f32.gmra.mrb[0].mxu0 %v1181
  %v1183 = vpop.f32.mrb[0].mxu0
  %v1184 = vadd.f32 %v1092, %v1183
  %v1185 = vpop.f32.mrb[0].mxu0
  %v1186 = vadd.f32 %v1094, %v1185
  %1187 = vdwg.mxu0
  %v1188 = vand.u32 %v21, 4294901760
  %v1189 = vsub.f32 %v21, %v1188
  %v1190 = vand.u32 %v1189, 4294901760
  %1191 = vmatprep.subr.mxu0 %v1190
  %v1192 = vand.u32 %v20, 4294901760
  %v1193 = vsub.f32 %v20, %v1192
  %v1194 = vand.u32 %v1193, 4294901760
  %1195 = vmatpush1.msra.mxu0 %v1194
  %v1196 = vand.u32 %v25, 4294901760
  %v1197 = vsub.f32 %v25, %v1196
  %v1198 = vand.u32 %v1197, 4294901760
  %1199 = vmatprep.subr.mxu0 %v1198
  %v1200 = vand.u32 %v24, 4294901760
  %v1201 = vsub.f32 %v24, %v1200
  %v1202 = vand.u32 %v1201, 4294901760
  %1203 = vmatpush1.msra.mxu0 %v1202
  %v1204 = vand.u32 %v29, 4294901760
  %v1205 = vsub.f32 %v29, %v1204
  %v1206 = vand.u32 %v1205, 4294901760
  %1207 = vmatprep.subr.mxu0 %v1206
  %v1208 = vand.u32 %v28, 4294901760
  %v1209 = vsub.f32 %v28, %v1208
  %v1210 = vand.u32 %v1209, 4294901760
  %1211 = vmatpush1.msra.mxu0 %v1210
  %v1212 = vand.u32 %v33, 4294901760
  %v1213 = vsub.f32 %v33, %v1212
  %v1214 = vand.u32 %v1213, 4294901760
  %1215 = vmatprep.subr.mxu0 %v1214
  %v1216 = vand.u32 %v32, 4294901760
  %v1217 = vsub.f32 %v32, %v1216
  %v1218 = vand.u32 %v1217, 4294901760
  %1219 = vmatpush1.msra.mxu0 %v1218
  %v1220 = vand.u32 %v37, 4294901760
  %v1221 = vsub.f32 %v37, %v1220
  %v1222 = vand.u32 %v1221, 4294901760
  %1223 = vmatprep.subr.mxu0 %v1222
  %v1224 = vand.u32 %v36, 4294901760
  %v1225 = vsub.f32 %v36, %v1224
  %v1226 = vand.u32 %v1225, 4294901760
  %1227 = vmatpush1.msra.mxu0 %v1226
  %v1228 = vand.u32 %v41, 4294901760
  %v1229 = vsub.f32 %v41, %v1228
  %v1230 = vand.u32 %v1229, 4294901760
  %1231 = vmatprep.subr.mxu0 %v1230
  %v1232 = vand.u32 %v40, 4294901760
  %v1233 = vsub.f32 %v40, %v1232
  %v1234 = vand.u32 %v1233, 4294901760
  %1235 = vmatpush1.msra.mxu0 %v1234
  %v1236 = vand.u32 %v45, 4294901760
  %v1237 = vsub.f32 %v45, %v1236
  %v1238 = vand.u32 %v1237, 4294901760
  %1239 = vmatprep.subr.mxu0 %v1238
  %v1240 = vand.u32 %v44, 4294901760
  %v1241 = vsub.f32 %v44, %v1240
  %v1242 = vand.u32 %v1241, 4294901760
  %1243 = vmatpush1.msra.mxu0 %v1242
  %v1244 = vand.u32 %v49, 4294901760
  %v1245 = vsub.f32 %v49, %v1244
  %v1246 = vand.u32 %v1245, 4294901760
  %1247 = vmatprep.subr.mxu0 %v1246
  %v1248 = vand.u32 %v48, 4294901760
  %v1249 = vsub.f32 %v48, %v1248
  %v1250 = vand.u32 %v1249, 4294901760
  %1251 = vmatpush1.msra.mxu0 %v1250
  %v1252 = vand.u32 %v53, 4294901760
  %v1253 = vsub.f32 %v53, %v1252
  %v1254 = vand.u32 %v1253, 4294901760
  %1255 = vmatprep.subr.mxu0 %v1254
  %v1256 = vand.u32 %v52, 4294901760
  %v1257 = vsub.f32 %v52, %v1256
  %v1258 = vand.u32 %v1257, 4294901760
  %1259 = vmatpush1.msra.mxu0 %v1258
  %1260 = vmatprep.subr.mxu0 0.0
  %1261 = vmatpush1.msra.mxu0 0.0
  %1262 = vmatprep.subr.mxu0 0.0
  %1263 = vmatpush1.msra.mxu0 0.0
  %1264 = vmatprep.subr.mxu0 0.0
  %1265 = vmatpush1.msra.mxu0 0.0
  %1266 = vmatprep.subr.mxu0 0.0
  %1267 = vmatpush1.msra.mxu0 0.0
  %1268 = vmatprep.subr.mxu0 0.0
  %1269 = vmatpush1.msra.mxu0 0.0
  %1270 = vmatprep.subr.mxu0 0.0
  %1271 = vmatpush1.msra.mxu0 0.0
  %1272 = vmatprep.subr.mxu0 0.0
  %1273 = vmatpush1.msra.mxu0 0.0
  %1274 = vmatprep.subr.mxu0 0.0
  %1275 = vmatpush1.msra.mxu0 0.0
  %1276 = vmatprep.subr.mxu0 0.0
  %1277 = vmatpush1.msra.mxu0 0.0
  %1278 = vmatprep.subr.mxu0 0.0
  %1279 = vmatpush1.msra.mxu0 0.0
  %1280 = vmatprep.subr.mxu0 0.0
  %1281 = vmatpush1.msra.mxu0 0.0
  %1282 = vmatprep.subr.mxu0 0.0
  %1283 = vmatpush1.msra.mxu0 0.0
  %1284 = vmatprep.subr.mxu0 0.0
  %1285 = vmatpush1.msra.mxu0 0.0
  %1286 = vmatprep.subr.mxu0 0.0
  %1287 = vmatpush1.msra.mxu0 0.0
  %1288 = vmatprep.subr.mxu0 0.0
  %1289 = vmatpush1.msra.mxu0 0.0
  %1290 = vmatprep.subr.mxu0 0.0
  %1291 = vmatpush1.msra.mxu0 0.0
  %1292 = vmatprep.subr.mxu0 0.0
  %1293 = vmatpush1.msra.mxu0 0.0
  %1294 = vmatprep.subr.mxu0 0.0
  %1295 = vmatpush1.msra.mxu0 0.0
  %1296 = vmatprep.subr.mxu0 0.0
  %1297 = vmatpush1.msra.mxu0 0.0
  %1298 = vmatprep.subr.mxu0 0.0
  %1299 = vmatpush1.msra.mxu0 0.0
  %1300 = vmatprep.subr.mxu0 0.0
  %1301 = vmatpush1.msra.mxu0 0.0
  %1302 = vmatprep.subr.mxu0 0.0
  %1303 = vmatpush1.msra.mxu0 0.0
  %1304 = vmatprep.subr.mxu0 0.0
  %1305 = vmatpush1.msra.mxu0 0.0
  %1306 = vmatprep.mubr.f32.mxu0 0.0
  %v1307 = vand.u32 %v56, 4294901760
  %1308 = vmatmul.mubr.f32.gmra.mrb[0].mxu0 %v1307
  %v1309 = vpop.f32.mrb[0].mxu0
  %v1310 = vadd.f32 %v1184, %v1309
  %v1311 = vpop.f32.mrb[0].mxu0
  %v1312 = vadd.f32 %v1186, %v1311
  %1313 = vdwg.mxu0
  %v1314 = vand.u32 %v21, 4294901760
  %1315 = vmatprep.subr.mxu0 %v1314
  %v1316 = vand.u32 %v20, 4294901760
  %1317 = vmatpush1.msra.mxu0 %v1316
  %v1318 = vand.u32 %v25, 4294901760
  %1319 = vmatprep.subr.mxu0 %v1318
  %v1320 = vand.u32 %v24, 4294901760
  %1321 = vmatpush1.msra.mxu0 %v1320
  %v1322 = vand.u32 %v29, 4294901760
  %1323 = vmatprep.subr.mxu0 %v1322
  %v1324 = vand.u32 %v28, 4294901760
  %1325 = vmatpush1.msra.mxu0 %v1324
  %v1326 = vand.u32 %v33, 4294901760
  %1327 = vmatprep.subr.mxu0 %v1326
  %v1328 = vand.u32 %v32, 4294901760
  %1329 = vmatpush1.msra.mxu0 %v1328
  %v1330 = vand.u32 %v37, 4294901760
  %1331 = vmatprep.subr.mxu0 %v1330
  %v1332 = vand.u32 %v36, 4294901760
  %1333 = vmatpush1.msra.mxu0 %v1332
  %v1334 = vand.u32 %v41, 4294901760
  %1335 = vmatprep.subr.mxu0 %v1334
  %v1336 = vand.u32 %v40, 4294901760
  %1337 = vmatpush1.msra.mxu0 %v1336
  %v1338 = vand.u32 %v45, 4294901760
  %1339 = vmatprep.subr.mxu0 %v1338
  %v1340 = vand.u32 %v44, 4294901760
  %1341 = vmatpush1.msra.mxu0 %v1340
  %v1342 = vand.u32 %v49, 4294901760
  %1343 = vmatprep.subr.mxu0 %v1342
  %v1344 = vand.u32 %v48, 4294901760
  %1345 = vmatpush1.msra.mxu0 %v1344
  %v1346 = vand.u32 %v53, 4294901760
  %1347 = vmatprep.subr.mxu0 %v1346
  %v1348 = vand.u32 %v52, 4294901760
  %1349 = vmatpush1.msra.mxu0 %v1348
  %1350 = vmatprep.subr.mxu0 0.0
  %1351 = vmatpush1.msra.mxu0 0.0
  %1352 = vmatprep.subr.mxu0 0.0
  %1353 = vmatpush1.msra.mxu0 0.0
  %1354 = vmatprep.subr.mxu0 0.0
  %1355 = vmatpush1.msra.mxu0 0.0
  %1356 = vmatprep.subr.mxu0 0.0
  %1357 = vmatpush1.msra.mxu0 0.0
  %1358 = vmatprep.subr.mxu0 0.0
  %1359 = vmatpush1.msra.mxu0 0.0
  %1360 = vmatprep.subr.mxu0 0.0
  %1361 = vmatpush1.msra.mxu0 0.0
  %1362 = vmatprep.subr.mxu0 0.0
  %1363 = vmatpush1.msra.mxu0 0.0
  %1364 = vmatprep.subr.mxu0 0.0
  %1365 = vmatpush1.msra.mxu0 0.0
  %1366 = vmatprep.subr.mxu0 0.0
  %1367 = vmatpush1.msra.mxu0 0.0
  %1368 = vmatprep.subr.mxu0 0.0
  %1369 = vmatpush1.msra.mxu0 0.0
  %1370 = vmatprep.subr.mxu0 0.0
  %1371 = vmatpush1.msra.mxu0 0.0
  %1372 = vmatprep.subr.mxu0 0.0
  %1373 = vmatpush1.msra.mxu0 0.0
  %1374 = vmatprep.subr.mxu0 0.0
  %1375 = vmatpush1.msra.mxu0 0.0
  %1376 = vmatprep.subr.mxu0 0.0
  %1377 = vmatpush1.msra.mxu0 0.0
  %1378 = vmatprep.subr.mxu0 0.0
  %1379 = vmatpush1.msra.mxu0 0.0
  %1380 = vmatprep.subr.mxu0 0.0
  %1381 = vmatpush1.msra.mxu0 0.0
  %1382 = vmatprep.subr.mxu0 0.0
  %1383 = vmatpush1.msra.mxu0 0.0
  %1384 = vmatprep.subr.mxu0 0.0
  %1385 = vmatpush1.msra.mxu0 0.0
  %1386 = vmatprep.subr.mxu0 0.0
  %1387 = vmatpush1.msra.mxu0 0.0
  %1388 = vmatprep.subr.mxu0 0.0
  %1389 = vmatpush1.msra.mxu0 0.0
  %1390 = vmatprep.subr.mxu0 0.0
  %1391 = vmatpush1.msra.mxu0 0.0
  %1392 = vmatprep.subr.mxu0 0.0
  %1393 = vmatpush1.msra.mxu0 0.0
  %1394 = vmatprep.subr.mxu0 0.0
  %1395 = vmatpush1.msra.mxu0 0.0
  %1396 = vmatprep.mubr.f32.mxu0 0.0
  %v1397 = vand.u32 %v56, 4294901760
  %1398 = vmatmul.mubr.f32.gmra.mrb[0].mxu0 %v1397
  %v1399 = vpop.f32.mrb[0].mxu0
  %v1400 = vadd.f32 %v1310, %v1399
  %v1401 = vpop.f32.mrb[0].mxu0
  %v1402 = vadd.f32 %v1312, %v1401
  %1403 = vdwg.mxu0
  %v1404 = vadd.f32 %v727, %v729
  %v1405 = vadd.f32 %v1404, %v1400
  %v1406 = vadd.f32 %v1405, %v1402
  %1407 = vadd.xlane.f32.xlu0 %v1406
  %v1408 = vpop.xlane.xlu0 %1407
  %v1409 = vmul.f32 %v727, %v727
  %v1410 = vmul.f32 %v729, %v729
  %v1411 = vmul.f32 %v1400, %v1400
  %v1412 = vmul.f32 %v1402, %v1402
  %v1413 = vadd.f32 %v1409, %v1410
  %v1414 = vadd.f32 %v1413, %v1411
  %v1415 = vadd.f32 %v1414, %v1412
  %1416 = vadd.xlane.f32.xlu0 %v1415
  %v1417 = vpop.xlane.xlu0 %1416
  %v1418 = vmul.f32 %v1408, 0.001953125
  %v1419 = vmul.f32 %v1417, 0.001953125
  %v1420 = vmul.f32 %v1418, %v1418
  %v1421 = vsub.f32 %v1419, %v1420
  %v1422 = vld [vmem:[%s2] sm:$0xff]
  %v1423 = vadd.f32 %v1421, 1e-05
  %v1424 = vrsqrt.pop %v1423
  %v1425 = vmul.f32 %v1422, %v1424
  %v1426 = vld [vmem:[%s3] sm:$0xff]
  %v1427 = vmul.f32 %v1418, %v1425
  %v1428 = vsub.f32 %v1426, %v1427
  %1430 = vset.pattern.permute.xlu0 0
  %1431 = vperm.xlu0 %1430, %v1425
  %v1432 = vpop.permute.xlu0 %1431
  %v1434 = vmul.f32 %v727, %v1432
  %v1435 = vmul.f32 %v729, %v1432
  %v1436 = vmul.f32 %v1400, %v1432
  %v1437 = vmul.f32 %v1402, %v1432
  %1439 = vset.pattern.permute.xlu0 0
  %1440 = vperm.xlu0 %1439, %v1428
  %v1441 = vpop.permute.xlu0 %1440
  %v1443 = vadd.f32 %v1434, %v1441
  %v1444 = vadd.f32 %v1435, %v1441
  %v1445 = vadd.f32 %v1436, %v1441
  %v1446 = vadd.f32 %v1437, %v1441
  %v1447 = vmax.f32 %v1443, 0.0
  %v1448 = vmax.f32 %v1444, 0.0
  %v1449 = vmax.f32 %v1445, 0.0
  %v1450 = vmax.f32 %v1446, 0.0
  %1451 = vst [vmem:[%s4] sm:$0xff] %v1447
  %1452 = vst [vmem:[%s4 + $0x8] sm:$0xff] %v1448
  %1453 = vst [vmem:[%s4 + $0x10] sm:$0xff] %v1449
  %1454 = vst [vmem:[%s4 + $0x18] sm:$0xff] %v1450
  // Predicated region
  $region18: #{baseline_unet_pallas.12} parent=0 // pred_check
    _
  $region19: #{baseline_unet_pallas.12} parent=0 // pred_check_branch
    %1456 = sbr.rel (0) target = $region21
  $region20: #{baseline_unet_pallas.12} parent=0 // pred_region
    _
  $region21: #{baseline_unet_pallas.12} parent=0 // pred_fallthru
    _
  // Predicated region
  $region22: #{baseline_unet_pallas.12} parent=0 // pred_check
    _
  $region23: #{baseline_unet_pallas.12} parent=0 // pred_check_branch
    %1458 = sbr.rel (0) target = $region25
  $region24: #{baseline_unet_pallas.12} parent=0 // pred_region
    _
  $region25: #{baseline_unet_pallas.12} parent=0 // pred_fallthru
    _

// kernel: baseline_unet_pallas.13
$region0: #{baseline_unet_pallas.13}
  #allocation0 [shape = 'u32[]', space=smem, size = 0x4, offset = 0x4, fixed_abs, tag = 'smem constant byte address 0x4 - core index']
  #allocation1 [shape = 'u32[144,128]{1,0:T(1,128)}', space=vmem, size = 0x12000, scoped, tag = 'internal scratch']
  %s0 = inlined_call_operand.vmem [shape: f32[8,128], index: 0, kind: input, shape index: {}]
  %s1 = inlined_call_operand.vmem [shape: f32[8,128], index: 1, kind: input, shape index: {}]
  %s2 = inlined_call_operand.vmem [shape: f32[8,128], index: 2, kind: input, shape index: {}]
  %s3 = inlined_call_operand.vmem [shape: f32[8,128], index: 3, kind: input, shape index: {}]
  %s4 = inlined_call_operand.vmem [shape: f32[8,128], index: 4, kind: output, shape index: {}]
  %s5 = sld [smem:[#allocation0]]
  $region26: #{baseline_unet_pallas.13} parent=0
    _
  %s7 = ssub.s32 1, %s5
  %s8 = scalar_select 0, %s7, %s5
  // Predicated region
  $region2: #{baseline_unet_pallas.13} parent=0 // pred_check
    _
  $region3: #{baseline_unet_pallas.13} parent=0 // pred_check_branch
    %10 = sbr.rel (0) target = $region5
  $region4: #{baseline_unet_pallas.13} parent=0 // pred_region
    _
  $region5: #{baseline_unet_pallas.13} parent=0 // pred_fallthru
    _
  // Predicated region
  $region6: #{baseline_unet_pallas.13} parent=0 // pred_check
    _
  $region7: #{baseline_unet_pallas.13} parent=0 // pred_check_branch
    %12 = sbr.rel (0) target = $region9
  $region8: #{baseline_unet_pallas.13} parent=0 // pred_region
    _
  $region9: #{baseline_unet_pallas.13} parent=0 // pred_fallthru
    _
  // Predicated region
  $region10: #{baseline_unet_pallas.13} parent=0 // pred_check
    _
  $region11: #{baseline_unet_pallas.13} parent=0 // pred_check_branch
    %14 = sbr.rel (0) target = $region13
  $region12: #{baseline_unet_pallas.13} parent=0 // pred_region
    _
  $region13: #{baseline_unet_pallas.13} parent=0 // pred_fallthru
    _
  // Predicated region
  $region14: #{baseline_unet_pallas.13} parent=0 // pred_check
    _
  $region15: #{baseline_unet_pallas.13} parent=0 // pred_check_branch
    %16 = sbr.rel (0) target = $region17
  $region16: #{baseline_unet_pallas.13} parent=0 // pred_region
    _
  $region17: #{baseline_unet_pallas.13} parent=0 // pred_fallthru
    _
  %v17 = vld [vmem:[%s0] sm:$0xff]
  %v18 = vld [vmem:[%s1] sm:$0xff]
  %v19 = vmax.f32 %v17, %v18
  %v20 = vld [vmem:[%s2] sm:$0xff]
  %v21 = vld [vmem:[%s3] sm:$0xff]
  %v22 = vmax.f32 %v20, %v21
  %v23 = vmax.f32 %v19, %v22
  %24 = vst [vmem:[%s4] sm:$0xff] %v23
  // Predicated region
  $region18: #{baseline_unet_pallas.13} parent=0 // pred_check
    _
  $region19: #{baseline_unet_pallas.13} parent=0 // pred_check_branch
    %26 = sbr.rel (0) target = $region21
  $region20: #{baseline_unet_pallas.13} parent=0 // pred_region
    _
  $region21: #{baseline_unet_pallas.13} parent=0 // pred_fallthru
    _
  // Predicated region
  $region22: #{baseline_unet_pallas.13} parent=0 // pred_check
    _
  $region23: #{baseline_unet_pallas.13} parent=0 // pred_check_branch
    %28 = sbr.rel (0) target = $region25
  $region24: #{baseline_unet_pallas.13} parent=0 // pred_region
    _
  $region25: #{baseline_unet_pallas.13} parent=0 // pred_fallthru
    _

// kernel: baseline_unet_pallas.14
$region0: #{baseline_unet_pallas.14}
  #allocation0 [shape = 'u32[]', space=smem, size = 0x4, offset = 0x4, fixed_abs, tag = 'smem constant byte address 0x4 - core index']
  #allocation1 [shape = 'u32[144,128]{1,0:T(1,128)}', space=vmem, size = 0x12000, scoped, tag = 'internal scratch']
  %s0 = inlined_call_operand.vmem [shape: f32[16,72], index: 0, kind: input, shape index: {}]
  %s1 = inlined_call_operand.vmem [shape: f32[72,128], index: 1, kind: input, shape index: {}]
  %s2 = inlined_call_operand.vmem [shape: f32[16,1], index: 2, kind: input, shape index: {}]
  %s3 = inlined_call_operand.vmem [shape: f32[16,1], index: 3, kind: input, shape index: {}]
  %s4 = inlined_call_operand.vmem [shape: f32[16,128], index: 4, kind: output, shape index: {}]
  %s5 = sld [smem:[#allocation0]]
  $region26: #{baseline_unet_pallas.14} parent=0
    _
  %s7 = ssub.s32 1, %s5
  %s8 = scalar_select 0, %s7, %s5
  // Predicated region
  $region2: #{baseline_unet_pallas.14} parent=0 // pred_check
    _
  $region3: #{baseline_unet_pallas.14} parent=0 // pred_check_branch
    %10 = sbr.rel (0) target = $region5
  $region4: #{baseline_unet_pallas.14} parent=0 // pred_region
    _
  $region5: #{baseline_unet_pallas.14} parent=0 // pred_fallthru
    _
  // Predicated region
  $region6: #{baseline_unet_pallas.14} parent=0 // pred_check
    _
  $region7: #{baseline_unet_pallas.14} parent=0 // pred_check_branch
    %12 = sbr.rel (0) target = $region9
  $region8: #{baseline_unet_pallas.14} parent=0 // pred_region
    _
  $region9: #{baseline_unet_pallas.14} parent=0 // pred_fallthru
    _
  // Predicated region
  $region10: #{baseline_unet_pallas.14} parent=0 // pred_check
    _
  $region11: #{baseline_unet_pallas.14} parent=0 // pred_check_branch
    %14 = sbr.rel (0) target = $region13
  $region12: #{baseline_unet_pallas.14} parent=0 // pred_region
    _
  $region13: #{baseline_unet_pallas.14} parent=0 // pred_fallthru
    _
  // Predicated region
  $region14: #{baseline_unet_pallas.14} parent=0 // pred_check
    _
  $region15: #{baseline_unet_pallas.14} parent=0 // pred_check_branch
    %16 = sbr.rel (0) target = $region17
  $region16: #{baseline_unet_pallas.14} parent=0 // pred_region
    _
  $region17: #{baseline_unet_pallas.14} parent=0 // pred_fallthru
    _
  %v17 = vld [vmem:[%s0] sm:$0xff]
  %v18 = vld [vmem:[%s0 + $0x8] sm:$0xff]
  %v19 = vld [vmem:[%s1] sm:$0xff]
  %v20 = vld [vmem:[%s1 + $0x8] sm:$0xff]
  %v21 = vld [vmem:[%s1 + $0x10] sm:$0xff]
  %v22 = vld [vmem:[%s1 + $0x18] sm:$0xff]
  %v23 = vld [vmem:[%s1 + $0x20] sm:$0xff]
  %v24 = vld [vmem:[%s1 + $0x28] sm:$0xff]
  %v25 = vld [vmem:[%s1 + $0x30] sm:$0xff]
  %v26 = vld [vmem:[%s1 + $0x38] sm:$0xff]
  %v27 = vld [vmem:[%s1 + $0x40] sm:$0xff]
  %vm28 = vcmask 588800
  %v30 = vsel %vm28, %v17, 0
  %v33 = vsel %vm28, %v18, 0
  %35 = vmatprep.subr.mxu0 0.0
  %v36 = vand.u32 %v19, 4294901760
  %37 = vmatpush1.msra.mxu0 %v36
  %38 = vmatprep.subr.mxu0 0.0
  %v39 = vand.u32 %v20, 4294901760
  %40 = vmatpush1.msra.mxu0 %v39
  %41 = vmatprep.subr.mxu0 0.0
  %v42 = vand.u32 %v21, 4294901760
  %43 = vmatpush1.msra.mxu0 %v42
  %44 = vmatprep.subr.mxu0 0.0
  %v45 = vand.u32 %v22, 4294901760
  %46 = vmatpush1.msra.mxu0 %v45
  %47 = vmatprep.subr.mxu0 0.0
  %v48 = vand.u32 %v23, 4294901760
  %49 = vmatpush1.msra.mxu0 %v48
  %50 = vmatprep.subr.mxu0 0.0
  %v51 = vand.u32 %v24, 4294901760
  %52 = vmatpush1.msra.mxu0 %v51
  %53 = vmatprep.subr.mxu0 0.0
  %v54 = vand.u32 %v25, 4294901760
  %55 = vmatpush1.msra.mxu0 %v54
  %56 = vmatprep.subr.mxu0 0.0
  %v57 = vand.u32 %v26, 4294901760
  %58 = vmatpush1.msra.mxu0 %v57
  %59 = vmatprep.subr.mxu0 0.0
  %v60 = vand.u32 %v27, 4294901760
  %61 = vmatpush1.msra.mxu0 %v60
  %62 = vmatprep.subr.mxu0 0.0
  %63 = vmatpush1.msra.mxu0 0.0
  %64 = vmatprep.subr.mxu0 0.0
  %65 = vmatpush1.msra.mxu0 0.0
  %66 = vmatprep.subr.mxu0 0.0
  %67 = vmatpush1.msra.mxu0 0.0
  %68 = vmatprep.subr.mxu0 0.0
  %69 = vmatpush1.msra.mxu0 0.0
  %70 = vmatprep.subr.mxu0 0.0
  %71 = vmatpush1.msra.mxu0 0.0
  %72 = vmatprep.subr.mxu0 0.0
  %73 = vmatpush1.msra.mxu0 0.0
  %74 = vmatprep.subr.mxu0 0.0
  %75 = vmatpush1.msra.mxu0 0.0
  %76 = vmatprep.subr.mxu0 0.0
  %77 = vmatpush1.msra.mxu0 0.0
  %78 = vmatprep.subr.mxu0 0.0
  %79 = vmatpush1.msra.mxu0 0.0
  %80 = vmatprep.subr.mxu0 0.0
  %81 = vmatpush1.msra.mxu0 0.0
  %82 = vmatprep.subr.mxu0 0.0
  %83 = vmatpush1.msra.mxu0 0.0
  %84 = vmatprep.subr.mxu0 0.0
  %85 = vmatpush1.msra.mxu0 0.0
  %86 = vmatprep.subr.mxu0 0.0
  %87 = vmatpush1.msra.mxu0 0.0
  %88 = vmatprep.subr.mxu0 0.0
  %89 = vmatpush1.msra.mxu0 0.0
  %90 = vmatprep.subr.mxu0 0.0
  %91 = vmatpush1.msra.mxu0 0.0
  %92 = vmatprep.subr.mxu0 0.0
  %93 = vmatpush1.msra.mxu0 0.0
  %94 = vmatprep.subr.mxu0 0.0
  %95 = vmatpush1.msra.mxu0 0.0
  %96 = vmatprep.subr.mxu0 0.0
  %97 = vmatpush1.msra.mxu0 0.0
  %98 = vmatprep.subr.mxu0 0.0
  %99 = vmatpush1.msra.mxu0 0.0
  %100 = vmatprep.subr.mxu0 0.0
  %101 = vmatpush1.msra.mxu0 0.0
  %102 = vmatprep.subr.mxu0 0.0
  %103 = vmatpush1.msra.mxu0 0.0
  %104 = vmatprep.subr.mxu0 0.0
  %105 = vmatpush1.msra.mxu0 0.0
  %106 = vmatprep.subr.mxu0 0.0
  %107 = vmatpush1.msra.mxu0 0.0
  %108 = vmatprep.mubr.f32.mxu0 0.0
  %v109 = vand.u32 %v30, 4294901760
  %v110 = vsub.f32 %v30, %v109
  %v111 = vand.u32 %v110, 4294901760
  %v112 = vsub.f32 %v110, %v111
  %v113 = vand.u32 %v112, 4294901760
  %114 = vmatmul.mubr.f32.gmra.mrb[0].mxu0 %v113
  %v115 = vpop.f32.mrb[0].mxu0
  %v116 = vadd.f32 0.0, %v115
  %v117 = vpop.f32.mrb[0].mxu0
  %118 = vmatprep.mubr.f32.mxu0 0.0
  %v119 = vand.u32 %v33, 4294901760
  %v120 = vsub.f32 %v33, %v119
  %v121 = vand.u32 %v120, 4294901760
  %v122 = vsub.f32 %v120, %v121
  %v123 = vand.u32 %v122, 4294901760
  %124 = vmatmul.mubr.f32.gmra.mrb[0].mxu0 %v123
  %v125 = vpop.f32.mrb[0].mxu0
  %v126 = vadd.f32 0.0, %v125
  %v127 = vpop.f32.mrb[0].mxu0
  %128 = vdwg.mxu0
  %129 = vmatprep.subr.mxu0 0.0
  %v130 = vand.u32 %v19, 4294901760
  %v131 = vsub.f32 %v19, %v130
  %v132 = vand.u32 %v131, 4294901760
  %v133 = vsub.f32 %v131, %v132
  %v134 = vand.u32 %v133, 4294901760
  %135 = vmatpush1.msra.mxu0 %v134
  %136 = vmatprep.subr.mxu0 0.0
  %v137 = vand.u32 %v20, 4294901760
  %v138 = vsub.f32 %v20, %v137
  %v139 = vand.u32 %v138, 4294901760
  %v140 = vsub.f32 %v138, %v139
  %v141 = vand.u32 %v140, 4294901760
  %142 = vmatpush1.msra.mxu0 %v141
  %143 = vmatprep.subr.mxu0 0.0
  %v144 = vand.u32 %v21, 4294901760
  %v145 = vsub.f32 %v21, %v144
  %v146 = vand.u32 %v145, 4294901760
  %v147 = vsub.f32 %v145, %v146
  %v148 = vand.u32 %v147, 4294901760
  %149 = vmatpush1.msra.mxu0 %v148
  %150 = vmatprep.subr.mxu0 0.0
  %v151 = vand.u32 %v22, 4294901760
  %v152 = vsub.f32 %v22, %v151
  %v153 = vand.u32 %v152, 4294901760
  %v154 = vsub.f32 %v152, %v153
  %v155 = vand.u32 %v154, 4294901760
  %156 = vmatpush1.msra.mxu0 %v155
  %157 = vmatprep.subr.mxu0 0.0
  %v158 = vand.u32 %v23, 4294901760
  %v159 = vsub.f32 %v23, %v158
  %v160 = vand.u32 %v159, 4294901760
  %v161 = vsub.f32 %v159, %v160
  %v162 = vand.u32 %v161, 4294901760
  %163 = vmatpush1.msra.mxu0 %v162
  %164 = vmatprep.subr.mxu0 0.0
  %v165 = vand.u32 %v24, 4294901760
  %v166 = vsub.f32 %v24, %v165
  %v167 = vand.u32 %v166, 4294901760
  %v168 = vsub.f32 %v166, %v167
  %v169 = vand.u32 %v168, 4294901760
  %170 = vmatpush1.msra.mxu0 %v169
  %171 = vmatprep.subr.mxu0 0.0
  %v172 = vand.u32 %v25, 4294901760
  %v173 = vsub.f32 %v25, %v172
  %v174 = vand.u32 %v173, 4294901760
  %v175 = vsub.f32 %v173, %v174
  %v176 = vand.u32 %v175, 4294901760
  %177 = vmatpush1.msra.mxu0 %v176
  %178 = vmatprep.subr.mxu0 0.0
  %v179 = vand.u32 %v26, 4294901760
  %v180 = vsub.f32 %v26, %v179
  %v181 = vand.u32 %v180, 4294901760
  %v182 = vsub.f32 %v180, %v181
  %v183 = vand.u32 %v182, 4294901760
  %184 = vmatpush1.msra.mxu0 %v183
  %185 = vmatprep.subr.mxu0 0.0
  %v186 = vand.u32 %v27, 4294901760
  %v187 = vsub.f32 %v27, %v186
  %v188 = vand.u32 %v187, 4294901760
  %v189 = vsub.f32 %v187, %v188
  %v190 = vand.u32 %v189, 4294901760
  %191 = vmatpush1.msra.mxu0 %v190
  %192 = vmatprep.subr.mxu0 0.0
  %193 = vmatpush1.msra.mxu0 0.0
  %194 = vmatprep.subr.mxu0 0.0
  %195 = vmatpush1.msra.mxu0 0.0
  %196 = vmatprep.subr.mxu0 0.0
  %197 = vmatpush1.msra.mxu0 0.0
  %198 = vmatprep.subr.mxu0 0.0
  %199 = vmatpush1.msra.mxu0 0.0
  %200 = vmatprep.subr.mxu0 0.0
  %201 = vmatpush1.msra.mxu0 0.0
  %202 = vmatprep.subr.mxu0 0.0
  %203 = vmatpush1.msra.mxu0 0.0
  %204 = vmatprep.subr.mxu0 0.0
  %205 = vmatpush1.msra.mxu0 0.0
  %206 = vmatprep.subr.mxu0 0.0
  %207 = vmatpush1.msra.mxu0 0.0
  %208 = vmatprep.subr.mxu0 0.0
  %209 = vmatpush1.msra.mxu0 0.0
  %210 = vmatprep.subr.mxu0 0.0
  %211 = vmatpush1.msra.mxu0 0.0
  %212 = vmatprep.subr.mxu0 0.0
  %213 = vmatpush1.msra.mxu0 0.0
  %214 = vmatprep.subr.mxu0 0.0
  %215 = vmatpush1.msra.mxu0 0.0
  %216 = vmatprep.subr.mxu0 0.0
  %217 = vmatpush1.msra.mxu0 0.0
  %218 = vmatprep.subr.mxu0 0.0
  %219 = vmatpush1.msra.mxu0 0.0
  %220 = vmatprep.subr.mxu0 0.0
  %221 = vmatpush1.msra.mxu0 0.0
  %222 = vmatprep.subr.mxu0 0.0
  %223 = vmatpush1.msra.mxu0 0.0
  %224 = vmatprep.subr.mxu0 0.0
  %225 = vmatpush1.msra.mxu0 0.0
  %226 = vmatprep.subr.mxu0 0.0
  %227 = vmatpush1.msra.mxu0 0.0
  %228 = vmatprep.subr.mxu0 0.0
  %229 = vmatpush1.msra.mxu0 0.0
  %230 = vmatprep.subr.mxu0 0.0
  %231 = vmatpush1.msra.mxu0 0.0
  %232 = vmatprep.subr.mxu0 0.0
  %233 = vmatpush1.msra.mxu0 0.0
  %234 = vmatprep.subr.mxu0 0.0
  %235 = vmatpush1.msra.mxu0 0.0
  %236 = vmatprep.subr.mxu0 0.0
  %237 = vmatpush1.msra.mxu0 0.0
  %238 = vmatprep.mubr.f32.mxu0 0.0
  %v239 = vand.u32 %v30, 4294901760
  %240 = vmatmul.mubr.f32.gmra.mrb[0].mxu0 %v239
  %v241 = vpop.f32.mrb[0].mxu0
  %v242 = vadd.f32 %v116, %v241
  %v243 = vpop.f32.mrb[0].mxu0
  %244 = vmatprep.mubr.f32.mxu0 0.0
  %v245 = vand.u32 %v33, 4294901760
  %246 = vmatmul.mubr.f32.gmra.mrb[0].mxu0 %v245
  %v247 = vpop.f32.mrb[0].mxu0
  %v248 = vadd.f32 %v126, %v247
  %v249 = vpop.f32.mrb[0].mxu0
  %250 = vdwg.mxu0
  %251 = vmatprep.subr.mxu0 0.0
  %v252 = vand.u32 %v19, 4294901760
  %v253 = vsub.f32 %v19, %v252
  %254 = vmatpush1.msra.mxu0 %v253
  %255 = vmatprep.subr.mxu0 0.0
  %v256 = vand.u32 %v20, 4294901760
  %v257 = vsub.f32 %v20, %v256
  %258 = vmatpush1.msra.mxu0 %v257
  %259 = vmatprep.subr.mxu0 0.0
  %v260 = vand.u32 %v21, 4294901760
  %v261 = vsub.f32 %v21, %v260
  %262 = vmatpush1.msra.mxu0 %v261
  %263 = vmatprep.subr.mxu0 0.0
  %v264 = vand.u32 %v22, 4294901760
  %v265 = vsub.f32 %v22, %v264
  %266 = vmatpush1.msra.mxu0 %v265
  %267 = vmatprep.subr.mxu0 0.0
  %v268 = vand.u32 %v23, 4294901760
  %v269 = vsub.f32 %v23, %v268
  %270 = vmatpush1.msra.mxu0 %v269
  %271 = vmatprep.subr.mxu0 0.0
  %v272 = vand.u32 %v24, 4294901760
  %v273 = vsub.f32 %v24, %v272
  %274 = vmatpush1.msra.mxu0 %v273
  %275 = vmatprep.subr.mxu0 0.0
  %v276 = vand.u32 %v25, 4294901760
  %v277 = vsub.f32 %v25, %v276
  %278 = vmatpush1.msra.mxu0 %v277
  %279 = vmatprep.subr.mxu0 0.0
  %v280 = vand.u32 %v26, 4294901760
  %v281 = vsub.f32 %v26, %v280
  %282 = vmatpush1.msra.mxu0 %v281
  %283 = vmatprep.subr.mxu0 0.0
  %v284 = vand.u32 %v27, 4294901760
  %v285 = vsub.f32 %v27, %v284
  %286 = vmatpush1.msra.mxu0 %v285
  %287 = vmatprep.subr.mxu0 0.0
  %288 = vmatpush1.msra.mxu0 0.0
  %289 = vmatprep.subr.mxu0 0.0
  %290 = vmatpush1.msra.mxu0 0.0
  %291 = vmatprep.subr.mxu0 0.0
  %292 = vmatpush1.msra.mxu0 0.0
  %293 = vmatprep.subr.mxu0 0.0
  %294 = vmatpush1.msra.mxu0 0.0
  %295 = vmatprep.subr.mxu0 0.0
  %296 = vmatpush1.msra.mxu0 0.0
  %297 = vmatprep.subr.mxu0 0.0
  %298 = vmatpush1.msra.mxu0 0.0
  %299 = vmatprep.subr.mxu0 0.0
  %300 = vmatpush1.msra.mxu0 0.0
  %301 = vmatprep.subr.mxu0 0.0
  %302 = vmatpush1.msra.mxu0 0.0
  %303 = vmatprep.subr.mxu0 0.0
  %304 = vmatpush1.msra.mxu0 0.0
  %305 = vmatprep.subr.mxu0 0.0
  %306 = vmatpush1.msra.mxu0 0.0
  %307 = vmatprep.subr.mxu0 0.0
  %308 = vmatpush1.msra.mxu0 0.0
  %309 = vmatprep.subr.mxu0 0.0
  %310 = vmatpush1.msra.mxu0 0.0
  %311 = vmatprep.subr.mxu0 0.0
  %312 = vmatpush1.msra.mxu0 0.0
  %313 = vmatprep.subr.mxu0 0.0
  %314 = vmatpush1.msra.mxu0 0.0
  %315 = vmatprep.subr.mxu0 0.0
  %316 = vmatpush1.msra.mxu0 0.0
  %317 = vmatprep.subr.mxu0 0.0
  %318 = vmatpush1.msra.mxu0 0.0
  %319 = vmatprep.subr.mxu0 0.0
  %320 = vmatpush1.msra.mxu0 0.0
  %321 = vmatprep.subr.mxu0 0.0
  %322 = vmatpush1.msra.mxu0 0.0
  %323 = vmatprep.subr.mxu0 0.0
  %324 = vmatpush1.msra.mxu0 0.0
  %325 = vmatprep.subr.mxu0 0.0
  %326 = vmatpush1.msra.mxu0 0.0
  %327 = vmatprep.subr.mxu0 0.0
  %328 = vmatpush1.msra.mxu0 0.0
  %329 = vmatprep.subr.mxu0 0.0
  %330 = vmatpush1.msra.mxu0 0.0
  %331 = vmatprep.subr.mxu0 0.0
  %332 = vmatpush1.msra.mxu0 0.0
  %333 = vmatprep.mubr.f32.mxu0 0.0
  %v334 = vand.u32 %v30, 4294901760
  %v335 = vsub.f32 %v30, %v334
  %336 = vmatmul.mubr.f32.gmra.mrb[0].mxu0 %v335
  %v337 = vpop.f32.mrb[0].mxu0
  %v338 = vadd.f32 %v242, %v337
  %v339 = vpop.f32.mrb[0].mxu0
  %340 = vmatprep.mubr.f32.mxu0 0.0
  %v341 = vand.u32 %v33, 4294901760
  %v342 = vsub.f32 %v33, %v341
  %343 = vmatmul.mubr.f32.gmra.mrb[0].mxu0 %v342
  %v344 = vpop.f32.mrb[0].mxu0
  %v345 = vadd.f32 %v248, %v344
  %v346 = vpop.f32.mrb[0].mxu0
  %347 = vdwg.mxu0
  %348 = vmatprep.subr.mxu0 0.0
  %v349 = vand.u32 %v19, 4294901760
  %350 = vmatpush1.msra.mxu0 %v349
  %351 = vmatprep.subr.mxu0 0.0
  %v352 = vand.u32 %v20, 4294901760
  %353 = vmatpush1.msra.mxu0 %v352
  %354 = vmatprep.subr.mxu0 0.0
  %v355 = vand.u32 %v21, 4294901760
  %356 = vmatpush1.msra.mxu0 %v355
  %357 = vmatprep.subr.mxu0 0.0
  %v358 = vand.u32 %v22, 4294901760
  %359 = vmatpush1.msra.mxu0 %v358
  %360 = vmatprep.subr.mxu0 0.0
  %v361 = vand.u32 %v23, 4294901760
  %362 = vmatpush1.msra.mxu0 %v361
  %363 = vmatprep.subr.mxu0 0.0
  %v364 = vand.u32 %v24, 4294901760
  %365 = vmatpush1.msra.mxu0 %v364
  %366 = vmatprep.subr.mxu0 0.0
  %v367 = vand.u32 %v25, 4294901760
  %368 = vmatpush1.msra.mxu0 %v367
  %369 = vmatprep.subr.mxu0 0.0
  %v370 = vand.u32 %v26, 4294901760
  %371 = vmatpush1.msra.mxu0 %v370
  %372 = vmatprep.subr.mxu0 0.0
  %v373 = vand.u32 %v27, 4294901760
  %374 = vmatpush1.msra.mxu0 %v373
  %375 = vmatprep.subr.mxu0 0.0
  %376 = vmatpush1.msra.mxu0 0.0
  %377 = vmatprep.subr.mxu0 0.0
  %378 = vmatpush1.msra.mxu0 0.0
  %379 = vmatprep.subr.mxu0 0.0
  %380 = vmatpush1.msra.mxu0 0.0
  %381 = vmatprep.subr.mxu0 0.0
  %382 = vmatpush1.msra.mxu0 0.0
  %383 = vmatprep.subr.mxu0 0.0
  %384 = vmatpush1.msra.mxu0 0.0
  %385 = vmatprep.subr.mxu0 0.0
  %386 = vmatpush1.msra.mxu0 0.0
  %387 = vmatprep.subr.mxu0 0.0
  %388 = vmatpush1.msra.mxu0 0.0
  %389 = vmatprep.subr.mxu0 0.0
  %390 = vmatpush1.msra.mxu0 0.0
  %391 = vmatprep.subr.mxu0 0.0
  %392 = vmatpush1.msra.mxu0 0.0
  %393 = vmatprep.subr.mxu0 0.0
  %394 = vmatpush1.msra.mxu0 0.0
  %395 = vmatprep.subr.mxu0 0.0
  %396 = vmatpush1.msra.mxu0 0.0
  %397 = vmatprep.subr.mxu0 0.0
  %398 = vmatpush1.msra.mxu0 0.0
  %399 = vmatprep.subr.mxu0 0.0
  %400 = vmatpush1.msra.mxu0 0.0
  %401 = vmatprep.subr.mxu0 0.0
  %402 = vmatpush1.msra.mxu0 0.0
  %403 = vmatprep.subr.mxu0 0.0
  %404 = vmatpush1.msra.mxu0 0.0
  %405 = vmatprep.subr.mxu0 0.0
  %406 = vmatpush1.msra.mxu0 0.0
  %407 = vmatprep.subr.mxu0 0.0
  %408 = vmatpush1.msra.mxu0 0.0
  %409 = vmatprep.subr.mxu0 0.0
  %410 = vmatpush1.msra.mxu0 0.0
  %411 = vmatprep.subr.mxu0 0.0
  %412 = vmatpush1.msra.mxu0 0.0
  %413 = vmatprep.subr.mxu0 0.0
  %414 = vmatpush1.msra.mxu0 0.0
  %415 = vmatprep.subr.mxu0 0.0
  %416 = vmatpush1.msra.mxu0 0.0
  %417 = vmatprep.subr.mxu0 0.0
  %418 = vmatpush1.msra.mxu0 0.0
  %419 = vmatprep.subr.mxu0 0.0
  %420 = vmatpush1.msra.mxu0 0.0
  %421 = vmatprep.mubr.f32.mxu0 0.0
  %v422 = vand.u32 %v30, 4294901760
  %v423 = vsub.f32 %v30, %v422
  %v424 = vand.u32 %v423, 4294901760
  %425 = vmatmul.mubr.f32.gmra.mrb[0].mxu0 %v424
  %v426 = vpop.f32.mrb[0].mxu0
  %v427 = vadd.f32 %v338, %v426
  %v428 = vpop.f32.mrb[0].mxu0
  %429 = vmatprep.mubr.f32.mxu0 0.0
  %v430 = vand.u32 %v33, 4294901760
  %v431 = vsub.f32 %v33, %v430
  %v432 = vand.u32 %v431, 4294901760
  %433 = vmatmul.mubr.f32.gmra.mrb[0].mxu0 %v432
  %v434 = vpop.f32.mrb[0].mxu0
  %v435 = vadd.f32 %v345, %v434
  %v436 = vpop.f32.mrb[0].mxu0
  %437 = vdwg.mxu0
  %438 = vmatprep.subr.mxu0 0.0
  %v439 = vand.u32 %v19, 4294901760
  %v440 = vsub.f32 %v19, %v439
  %v441 = vand.u32 %v440, 4294901760
  %442 = vmatpush1.msra.mxu0 %v441
  %443 = vmatprep.subr.mxu0 0.0
  %v444 = vand.u32 %v20, 4294901760
  %v445 = vsub.f32 %v20, %v444
  %v446 = vand.u32 %v445, 4294901760
  %447 = vmatpush1.msra.mxu0 %v446
  %448 = vmatprep.subr.mxu0 0.0
  %v449 = vand.u32 %v21, 4294901760
  %v450 = vsub.f32 %v21, %v449
  %v451 = vand.u32 %v450, 4294901760
  %452 = vmatpush1.msra.mxu0 %v451
  %453 = vmatprep.subr.mxu0 0.0
  %v454 = vand.u32 %v22, 4294901760
  %v455 = vsub.f32 %v22, %v454
  %v456 = vand.u32 %v455, 4294901760
  %457 = vmatpush1.msra.mxu0 %v456
  %458 = vmatprep.subr.mxu0 0.0
  %v459 = vand.u32 %v23, 4294901760
  %v460 = vsub.f32 %v23, %v459
  %v461 = vand.u32 %v460, 4294901760
  %462 = vmatpush1.msra.mxu0 %v461
  %463 = vmatprep.subr.mxu0 0.0
  %v464 = vand.u32 %v24, 4294901760
  %v465 = vsub.f32 %v24, %v464
  %v466 = vand.u32 %v465, 4294901760
  %467 = vmatpush1.msra.mxu0 %v466
  %468 = vmatprep.subr.mxu0 0.0
  %v469 = vand.u32 %v25, 4294901760
  %v470 = vsub.f32 %v25, %v469
  %v471 = vand.u32 %v470, 4294901760
  %472 = vmatpush1.msra.mxu0 %v471
  %473 = vmatprep.subr.mxu0 0.0
  %v474 = vand.u32 %v26, 4294901760
  %v475 = vsub.f32 %v26, %v474
  %v476 = vand.u32 %v475, 4294901760
  %477 = vmatpush1.msra.mxu0 %v476
  %478 = vmatprep.subr.mxu0 0.0
  %v479 = vand.u32 %v27, 4294901760
  %v480 = vsub.f32 %v27, %v479
  %v481 = vand.u32 %v480, 4294901760
  %482 = vmatpush1.msra.mxu0 %v481
  %483 = vmatprep.subr.mxu0 0.0
  %484 = vmatpush1.msra.mxu0 0.0
  %485 = vmatprep.subr.mxu0 0.0
  %486 = vmatpush1.msra.mxu0 0.0
  %487 = vmatprep.subr.mxu0 0.0
  %488 = vmatpush1.msra.mxu0 0.0
  %489 = vmatprep.subr.mxu0 0.0
  %490 = vmatpush1.msra.mxu0 0.0
  %491 = vmatprep.subr.mxu0 0.0
  %492 = vmatpush1.msra.mxu0 0.0
  %493 = vmatprep.subr.mxu0 0.0
  %494 = vmatpush1.msra.mxu0 0.0
  %495 = vmatprep.subr.mxu0 0.0
  %496 = vmatpush1.msra.mxu0 0.0
  %497 = vmatprep.subr.mxu0 0.0
  %498 = vmatpush1.msra.mxu0 0.0
  %499 = vmatprep.subr.mxu0 0.0
  %500 = vmatpush1.msra.mxu0 0.0
  %501 = vmatprep.subr.mxu0 0.0
  %502 = vmatpush1.msra.mxu0 0.0
  %503 = vmatprep.subr.mxu0 0.0
  %504 = vmatpush1.msra.mxu0 0.0
  %505 = vmatprep.subr.mxu0 0.0
  %506 = vmatpush1.msra.mxu0 0.0
  %507 = vmatprep.subr.mxu0 0.0
  %508 = vmatpush1.msra.mxu0 0.0
  %509 = vmatprep.subr.mxu0 0.0
  %510 = vmatpush1.msra.mxu0 0.0
  %511 = vmatprep.subr.mxu0 0.0
  %512 = vmatpush1.msra.mxu0 0.0
  %513 = vmatprep.subr.mxu0 0.0
  %514 = vmatpush1.msra.mxu0 0.0
  %515 = vmatprep.subr.mxu0 0.0
  %516 = vmatpush1.msra.mxu0 0.0
  %517 = vmatprep.subr.mxu0 0.0
  %518 = vmatpush1.msra.mxu0 0.0
  %519 = vmatprep.subr.mxu0 0.0
  %520 = vmatpush1.msra.mxu0 0.0
  %521 = vmatprep.subr.mxu0 0.0
  %522 = vmatpush1.msra.mxu0 0.0
  %523 = vmatprep.subr.mxu0 0.0
  %524 = vmatpush1.msra.mxu0 0.0
  %525 = vmatprep.subr.mxu0 0.0
  %526 = vmatpush1.msra.mxu0 0.0
  %527 = vmatprep.subr.mxu0 0.0
  %528 = vmatpush1.msra.mxu0 0.0
  %529 = vmatprep.mubr.f32.mxu0 0.0
  %v530 = vand.u32 %v30, 4294901760
  %531 = vmatmul.mubr.f32.gmra.mrb[0].mxu0 %v530
  %v532 = vpop.f32.mrb[0].mxu0
  %v533 = vadd.f32 %v427, %v532
  %v534 = vpop.f32.mrb[0].mxu0
  %535 = vmatprep.mubr.f32.mxu0 0.0
  %v536 = vand.u32 %v33, 4294901760
  %537 = vmatmul.mubr.f32.gmra.mrb[0].mxu0 %v536
  %v538 = vpop.f32.mrb[0].mxu0
  %v539 = vadd.f32 %v435, %v538
  %v540 = vpop.f32.mrb[0].mxu0
  %541 = vdwg.mxu0
  %542 = vmatprep.subr.mxu0 0.0
  %v543 = vand.u32 %v19, 4294901760
  %544 = vmatpush1.msra.mxu0 %v543
  %545 = vmatprep.subr.mxu0 0.0
  %v546 = vand.u32 %v20, 4294901760
  %547 = vmatpush1.msra.mxu0 %v546
  %548 = vmatprep.subr.mxu0 0.0
  %v549 = vand.u32 %v21, 4294901760
  %550 = vmatpush1.msra.mxu0 %v549
  %551 = vmatprep.subr.mxu0 0.0
  %v552 = vand.u32 %v22, 4294901760
  %553 = vmatpush1.msra.mxu0 %v552
  %554 = vmatprep.subr.mxu0 0.0
  %v555 = vand.u32 %v23, 4294901760
  %556 = vmatpush1.msra.mxu0 %v555
  %557 = vmatprep.subr.mxu0 0.0
  %v558 = vand.u32 %v24, 4294901760
  %559 = vmatpush1.msra.mxu0 %v558
  %560 = vmatprep.subr.mxu0 0.0
  %v561 = vand.u32 %v25, 4294901760
  %562 = vmatpush1.msra.mxu0 %v561
  %563 = vmatprep.subr.mxu0 0.0
  %v564 = vand.u32 %v26, 4294901760
  %565 = vmatpush1.msra.mxu0 %v564
  %566 = vmatprep.subr.mxu0 0.0
  %v567 = vand.u32 %v27, 4294901760
  %568 = vmatpush1.msra.mxu0 %v567
  %569 = vmatprep.subr.mxu0 0.0
  %570 = vmatpush1.msra.mxu0 0.0
  %571 = vmatprep.subr.mxu0 0.0
  %572 = vmatpush1.msra.mxu0 0.0
  %573 = vmatprep.subr.mxu0 0.0
  %574 = vmatpush1.msra.mxu0 0.0
  %575 = vmatprep.subr.mxu0 0.0
  %576 = vmatpush1.msra.mxu0 0.0
  %577 = vmatprep.subr.mxu0 0.0
  %578 = vmatpush1.msra.mxu0 0.0
  %579 = vmatprep.subr.mxu0 0.0
  %580 = vmatpush1.msra.mxu0 0.0
  %581 = vmatprep.subr.mxu0 0.0
  %582 = vmatpush1.msra.mxu0 0.0
  %583 = vmatprep.subr.mxu0 0.0
  %584 = vmatpush1.msra.mxu0 0.0
  %585 = vmatprep.subr.mxu0 0.0
  %586 = vmatpush1.msra.mxu0 0.0
  %587 = vmatprep.subr.mxu0 0.0
  %588 = vmatpush1.msra.mxu0 0.0
  %589 = vmatprep.subr.mxu0 0.0
  %590 = vmatpush1.msra.mxu0 0.0
  %591 = vmatprep.subr.mxu0 0.0
  %592 = vmatpush1.msra.mxu0 0.0
  %593 = vmatprep.subr.mxu0 0.0
  %594 = vmatpush1.msra.mxu0 0.0
  %595 = vmatprep.subr.mxu0 0.0
  %596 = vmatpush1.msra.mxu0 0.0
  %597 = vmatprep.subr.mxu0 0.0
  %598 = vmatpush1.msra.mxu0 0.0
  %599 = vmatprep.subr.mxu0 0.0
  %600 = vmatpush1.msra.mxu0 0.0
  %601 = vmatprep.subr.mxu0 0.0
  %602 = vmatpush1.msra.mxu0 0.0
  %603 = vmatprep.subr.mxu0 0.0
  %604 = vmatpush1.msra.mxu0 0.0
  %605 = vmatprep.subr.mxu0 0.0
  %606 = vmatpush1.msra.mxu0 0.0
  %607 = vmatprep.subr.mxu0 0.0
  %608 = vmatpush1.msra.mxu0 0.0
  %609 = vmatprep.subr.mxu0 0.0
  %610 = vmatpush1.msra.mxu0 0.0
  %611 = vmatprep.subr.mxu0 0.0
  %612 = vmatpush1.msra.mxu0 0.0
  %613 = vmatprep.subr.mxu0 0.0
  %614 = vmatpush1.msra.mxu0 0.0
  %615 = vmatprep.mubr.f32.mxu0 0.0
  %v616 = vand.u32 %v30, 4294901760
  %617 = vmatmul.mubr.f32.gmra.mrb[0].mxu0 %v616
  %v618 = vpop.f32.mrb[0].mxu0
  %v619 = vadd.f32 %v533, %v618
  %v620 = vpop.f32.mrb[0].mxu0
  %621 = vmatprep.mubr.f32.mxu0 0.0
  %v622 = vand.u32 %v33, 4294901760
  %623 = vmatmul.mubr.f32.gmra.mrb[0].mxu0 %v622
  %v624 = vpop.f32.mrb[0].mxu0
  %v625 = vadd.f32 %v539, %v624
  %v626 = vpop.f32.mrb[0].mxu0
  %627 = vdwg.mxu0
  %628 = vadd.xlane.f32.xlu0 %v619
  %v629 = vpop.xlane.xlu0 %628
  %630 = vadd.xlane.f32.xlu0 %v625
  %v631 = vpop.xlane.xlu0 %630
  %v632 = vmul.f32 %v619, %v619
  %v633 = vmul.f32 %v625, %v625
  %634 = vadd.xlane.f32.xlu0 %v632
  %v635 = vpop.xlane.xlu0 %634
  %636 = vadd.xlane.f32.xlu0 %v633
  %v637 = vpop.xlane.xlu0 %636
  %v638 = vmul.f32 %v629, 0.0078125
  %v639 = vmul.f32 %v631, 0.0078125
  %v640 = vmul.f32 %v635, 0.0078125
  %v641 = vmul.f32 %v637, 0.0078125
  %v642 = vmul.f32 %v638, %v638
  %v643 = vmul.f32 %v639, %v639
  %v644 = vsub.f32 %v640, %v642
  %v645 = vsub.f32 %v641, %v643
  %v646 = vld [vmem:[%s2] sm:$0xff]
  %v647 = vld [vmem:[%s2 + $0x8] sm:$0xff]
  %v648 = vadd.f32 %v644, 1e-05
  %v649 = vadd.f32 %v645, 1e-05
  %v650 = vrsqrt.pop %v648
  %v651 = vrsqrt.pop %v649
  %v652 = vmul.f32 %v646, %v650
  %v653 = vmul.f32 %v647, %v651
  %v654 = vld [vmem:[%s3] sm:$0xff]
  %v655 = vld [vmem:[%s3 + $0x8] sm:$0xff]
  %v656 = vmul.f32 %v638, %v652
  %v657 = vmul.f32 %v639, %v653
  %v658 = vsub.f32 %v654, %v656
  %v659 = vsub.f32 %v655, %v657
  %661 = vset.pattern.permute.xlu0 0
  %662 = vperm.xlu0 %661, %v652
  %v663 = vpop.permute.xlu0 %662
  %666 = vset.pattern.permute.xlu0 0
  %667 = vperm.xlu0 %666, %v653
  %v668 = vpop.permute.xlu0 %667
  %v670 = vmul.f32 %v619, %v663
  %v671 = vmul.f32 %v625, %v668
  %673 = vset.pattern.permute.xlu0 0
  %674 = vperm.xlu0 %673, %v658
  %v675 = vpop.permute.xlu0 %674
  %678 = vset.pattern.permute.xlu0 0
  %679 = vperm.xlu0 %678, %v659
  %v680 = vpop.permute.xlu0 %679
  %v682 = vadd.f32 %v670, %v675
  %v683 = vadd.f32 %v671, %v680
  %v684 = vmax.f32 %v682, 0.0
  %v685 = vmax.f32 %v683, 0.0
  %686 = vst [vmem:[%s4] sm:$0xff] %v684
  %687 = vst [vmem:[%s4 + $0x8] sm:$0xff] %v685
  // Predicated region
  $region18: #{baseline_unet_pallas.14} parent=0 // pred_check
    _
  $region19: #{baseline_unet_pallas.14} parent=0 // pred_check_branch
    %689 = sbr.rel (0) target = $region21
  $region20: #{baseline_unet_pallas.14} parent=0 // pred_region
    _
  $region21: #{baseline_unet_pallas.14} parent=0 // pred_fallthru
    _
  // Predicated region
  $region22: #{baseline_unet_pallas.14} parent=0 // pred_check
    _
  $region23: #{baseline_unet_pallas.14} parent=0 // pred_check_branch
    %691 = sbr.rel (0) target = $region25
  $region24: #{baseline_unet_pallas.14} parent=0 // pred_region
    _
  $region25: #{baseline_unet_pallas.14} parent=0 // pred_fallthru
    _

// kernel: baseline_unet_pallas.15
$region0: #{baseline_unet_pallas.15}
  #allocation0 [shape = 'u32[]', space=smem, size = 0x4, offset = 0x4, fixed_abs, tag = 'smem constant byte address 0x4 - core index']
  #allocation1 [shape = 'u32[144,128]{1,0:T(1,128)}', space=vmem, size = 0x12000, scoped, tag = 'internal scratch']
  %s0 = inlined_call_operand.vmem [shape: f32[16,144], index: 0, kind: input, shape index: {}]
  %s1 = inlined_call_operand.vmem [shape: f32[144,128], index: 1, kind: input, shape index: {}]
  %s2 = inlined_call_operand.vmem [shape: f32[16,1], index: 2, kind: input, shape index: {}]
  %s3 = inlined_call_operand.vmem [shape: f32[16,1], index: 3, kind: input, shape index: {}]
  %s4 = inlined_call_operand.vmem [shape: f32[16,128], index: 4, kind: output, shape index: {}]
  %s5 = sld [smem:[#allocation0]]
  $region26: #{baseline_unet_pallas.15} parent=0
    _
  %s7 = ssub.s32 1, %s5
  %s8 = scalar_select 0, %s7, %s5
  // Predicated region
  $region2: #{baseline_unet_pallas.15} parent=0 // pred_check
    _
  $region3: #{baseline_unet_pallas.15} parent=0 // pred_check_branch
    %10 = sbr.rel (0) target = $region5
  $region4: #{baseline_unet_pallas.15} parent=0 // pred_region
    _
  $region5: #{baseline_unet_pallas.15} parent=0 // pred_fallthru
    _
  // Predicated region
  $region6: #{baseline_unet_pallas.15} parent=0 // pred_check
    _
  $region7: #{baseline_unet_pallas.15} parent=0 // pred_check_branch
    %12 = sbr.rel (0) target = $region9
  $region8: #{baseline_unet_pallas.15} parent=0 // pred_region
    _
  $region9: #{baseline_unet_pallas.15} parent=0 // pred_fallthru
    _
  // Predicated region
  $region10: #{baseline_unet_pallas.15} parent=0 // pred_check
    _
  $region11: #{baseline_unet_pallas.15} parent=0 // pred_check_branch
    %14 = sbr.rel (0) target = $region13
  $region12: #{baseline_unet_pallas.15} parent=0 // pred_region
    _
  $region13: #{baseline_unet_pallas.15} parent=0 // pred_fallthru
    _
  // Predicated region
  $region14: #{baseline_unet_pallas.15} parent=0 // pred_check
    _
  $region15: #{baseline_unet_pallas.15} parent=0 // pred_check_branch
    %16 = sbr.rel (0) target = $region17
  $region16: #{baseline_unet_pallas.15} parent=0 // pred_region
    _
  $region17: #{baseline_unet_pallas.15} parent=0 // pred_fallthru
    _
  %v17 = vld [vmem:[%s0] sm:$0xff]
  %v18 = vld [vmem:[%s0 + $0x8] sm:$0xff]
  %v19 = vld [vmem:[%s0 + $0x10] sm:$0xff]
  %v20 = vld [vmem:[%s0 + $0x18] sm:$0xff]
  %v21 = vld [vmem:[%s1] sm:$0xff]
  %v22 = vld [vmem:[%s1 + $0x8] sm:$0xff]
  %v23 = vld [vmem:[%s1 + $0x10] sm:$0xff]
  %v24 = vld [vmem:[%s1 + $0x18] sm:$0xff]
  %v25 = vld [vmem:[%s1 + $0x20] sm:$0xff]
  %v26 = vld [vmem:[%s1 + $0x28] sm:$0xff]
  %v27 = vld [vmem:[%s1 + $0x30] sm:$0xff]
  %v28 = vld [vmem:[%s1 + $0x38] sm:$0xff]
  %v29 = vld [vmem:[%s1 + $0x40] sm:$0xff]
  %v30 = vld [vmem:[%s1 + $0x48] sm:$0xff]
  %v31 = vld [vmem:[%s1 + $0x50] sm:$0xff]
  %v32 = vld [vmem:[%s1 + $0x58] sm:$0xff]
  %v33 = vld [vmem:[%s1 + $0x60] sm:$0xff]
  %v34 = vld [vmem:[%s1 + $0x68] sm:$0xff]
  %v35 = vld [vmem:[%s1 + $0x70] sm:$0xff]
  %v36 = vld [vmem:[%s1 + $0x78] sm:$0xff]
  %v37 = vld [vmem:[%s1 + $0x80] sm:$0xff]
  %v38 = vld [vmem:[%s1 + $0x88] sm:$0xff]
  %vm39 = vcmask 130048
  %v41 = vsel %vm39, %v18, 0
  %v44 = vsel %vm39, %v20, 0
  %46 = vmatprep.subr.mxu0 0.0
  %v47 = vand.u32 %v21, 4294901760
  %48 = vmatpush1.msra.mxu0 %v47
  %49 = vmatprep.subr.mxu0 0.0
  %v50 = vand.u32 %v22, 4294901760
  %51 = vmatpush1.msra.mxu0 %v50
  %52 = vmatprep.subr.mxu0 0.0
  %v53 = vand.u32 %v23, 4294901760
  %54 = vmatpush1.msra.mxu0 %v53
  %55 = vmatprep.subr.mxu0 0.0
  %v56 = vand.u32 %v24, 4294901760
  %57 = vmatpush1.msra.mxu0 %v56
  %58 = vmatprep.subr.mxu0 0.0
  %v59 = vand.u32 %v25, 4294901760
  %60 = vmatpush1.msra.mxu0 %v59
  %61 = vmatprep.subr.mxu0 0.0
  %v62 = vand.u32 %v26, 4294901760
  %63 = vmatpush1.msra.mxu0 %v62
  %64 = vmatprep.subr.mxu0 0.0
  %v65 = vand.u32 %v27, 4294901760
  %66 = vmatpush1.msra.mxu0 %v65
  %67 = vmatprep.subr.mxu0 0.0
  %v68 = vand.u32 %v28, 4294901760
  %69 = vmatpush1.msra.mxu0 %v68
  %70 = vmatprep.subr.mxu0 0.0
  %v71 = vand.u32 %v29, 4294901760
  %72 = vmatpush1.msra.mxu0 %v71
  %73 = vmatprep.subr.mxu0 0.0
  %v74 = vand.u32 %v30, 4294901760
  %75 = vmatpush1.msra.mxu0 %v74
  %76 = vmatprep.subr.mxu0 0.0
  %v77 = vand.u32 %v31, 4294901760
  %78 = vmatpush1.msra.mxu0 %v77
  %79 = vmatprep.subr.mxu0 0.0
  %v80 = vand.u32 %v32, 4294901760
  %81 = vmatpush1.msra.mxu0 %v80
  %82 = vmatprep.subr.mxu0 0.0
  %v83 = vand.u32 %v33, 4294901760
  %84 = vmatpush1.msra.mxu0 %v83
  %85 = vmatprep.subr.mxu0 0.0
  %v86 = vand.u32 %v34, 4294901760
  %87 = vmatpush1.msra.mxu0 %v86
  %88 = vmatprep.subr.mxu0 0.0
  %v89 = vand.u32 %v35, 4294901760
  %90 = vmatpush1.msra.mxu0 %v89
  %91 = vmatprep.subr.mxu0 0.0
  %v92 = vand.u32 %v36, 4294901760
  %93 = vmatpush1.msra.mxu0 %v92
  %94 = vmatprep.subr.mxu0 0.0
  %v95 = vand.u32 %v37, 4294901760
  %96 = vmatpush1.msra.mxu0 %v95
  %97 = vmatprep.subr.mxu0 0.0
  %v98 = vand.u32 %v38, 4294901760
  %99 = vmatpush1.msra.mxu0 %v98
  %100 = vmatprep.subr.mxu0 0.0
  %101 = vmatpush1.msra.mxu0 0.0
  %102 = vmatprep.subr.mxu0 0.0
  %103 = vmatpush1.msra.mxu0 0.0
  %104 = vmatprep.subr.mxu0 0.0
  %105 = vmatpush1.msra.mxu0 0.0
  %106 = vmatprep.subr.mxu0 0.0
  %107 = vmatpush1.msra.mxu0 0.0
  %108 = vmatprep.subr.mxu0 0.0
  %109 = vmatpush1.msra.mxu0 0.0
  %110 = vmatprep.subr.mxu0 0.0
  %111 = vmatpush1.msra.mxu0 0.0
  %112 = vmatprep.subr.mxu0 0.0
  %113 = vmatpush1.msra.mxu0 0.0
  %114 = vmatprep.subr.mxu0 0.0
  %115 = vmatpush1.msra.mxu0 0.0
  %116 = vmatprep.subr.mxu0 0.0
  %117 = vmatpush1.msra.mxu0 0.0
  %118 = vmatprep.subr.mxu0 0.0
  %119 = vmatpush1.msra.mxu0 0.0
  %120 = vmatprep.subr.mxu0 0.0
  %121 = vmatpush1.msra.mxu0 0.0
  %122 = vmatprep.subr.mxu0 0.0
  %123 = vmatpush1.msra.mxu0 0.0
  %124 = vmatprep.subr.mxu0 0.0
  %125 = vmatpush1.msra.mxu0 0.0
  %126 = vmatprep.subr.mxu0 0.0
  %127 = vmatpush1.msra.mxu0 0.0
  %v128 = vand.u32 %v41, 4294901760
  %v129 = vsub.f32 %v41, %v128
  %v130 = vand.u32 %v129, 4294901760
  %v131 = vsub.f32 %v129, %v130
  %v132 = vand.u32 %v131, 4294901760
  %133 = vmatprep.mubr.f32.mxu0 %v132
  %v134 = vand.u32 %v17, 4294901760
  %v135 = vsub.f32 %v17, %v134
  %v136 = vand.u32 %v135, 4294901760
  %v137 = vsub.f32 %v135, %v136
  %v138 = vand.u32 %v137, 4294901760
  %139 = vmatmul.mubr.f32.gmra.mrb[0].mxu0 %v138
  %v140 = vpop.f32.mrb[0].mxu0
  %v141 = vadd.f32 0.0, %v140
  %v142 = vpop.f32.mrb[0].mxu0
  %v143 = vand.u32 %v44, 4294901760
  %v144 = vsub.f32 %v44, %v143
  %v145 = vand.u32 %v144, 4294901760
  %v146 = vsub.f32 %v144, %v145
  %v147 = vand.u32 %v146, 4294901760
  %148 = vmatprep.mubr.f32.mxu0 %v147
  %v149 = vand.u32 %v19, 4294901760
  %v150 = vsub.f32 %v19, %v149
  %v151 = vand.u32 %v150, 4294901760
  %v152 = vsub.f32 %v150, %v151
  %v153 = vand.u32 %v152, 4294901760
  %154 = vmatmul.mubr.f32.gmra.mrb[0].mxu0 %v153
  %v155 = vpop.f32.mrb[0].mxu0
  %v156 = vadd.f32 0.0, %v155
  %v157 = vpop.f32.mrb[0].mxu0
  %158 = vdwg.mxu0
  %159 = vmatprep.subr.mxu0 0.0
  %v160 = vand.u32 %v21, 4294901760
  %v161 = vsub.f32 %v21, %v160
  %v162 = vand.u32 %v161, 4294901760
  %v163 = vsub.f32 %v161, %v162
  %v164 = vand.u32 %v163, 4294901760
  %165 = vmatpush1.msra.mxu0 %v164
  %166 = vmatprep.subr.mxu0 0.0
  %v167 = vand.u32 %v22, 4294901760
  %v168 = vsub.f32 %v22, %v167
  %v169 = vand.u32 %v168, 4294901760
  %v170 = vsub.f32 %v168, %v169
  %v171 = vand.u32 %v170, 4294901760
  %172 = vmatpush1.msra.mxu0 %v171
  %173 = vmatprep.subr.mxu0 0.0
  %v174 = vand.u32 %v23, 4294901760
  %v175 = vsub.f32 %v23, %v174
  %v176 = vand.u32 %v175, 4294901760
  %v177 = vsub.f32 %v175, %v176
  %v178 = vand.u32 %v177, 4294901760
  %179 = vmatpush1.msra.mxu0 %v178
  %180 = vmatprep.subr.mxu0 0.0
  %v181 = vand.u32 %v24, 4294901760
  %v182 = vsub.f32 %v24, %v181
  %v183 = vand.u32 %v182, 4294901760
  %v184 = vsub.f32 %v182, %v183
  %v185 = vand.u32 %v184, 4294901760
  %186 = vmatpush1.msra.mxu0 %v185
  %187 = vmatprep.subr.mxu0 0.0
  %v188 = vand.u32 %v25, 4294901760
  %v189 = vsub.f32 %v25, %v188
  %v190 = vand.u32 %v189, 4294901760
  %v191 = vsub.f32 %v189, %v190
  %v192 = vand.u32 %v191, 4294901760
  %193 = vmatpush1.msra.mxu0 %v192
  %194 = vmatprep.subr.mxu0 0.0
  %v195 = vand.u32 %v26, 4294901760
  %v196 = vsub.f32 %v26, %v195
  %v197 = vand.u32 %v196, 4294901760
  %v198 = vsub.f32 %v196, %v197
  %v199 = vand.u32 %v198, 4294901760
  %200 = vmatpush1.msra.mxu0 %v199
  %201 = vmatprep.subr.mxu0 0.0
  %v202 = vand.u32 %v27, 4294901760
  %v203 = vsub.f32 %v27, %v202
  %v204 = vand.u32 %v203, 4294901760
  %v205 = vsub.f32 %v203, %v204
  %v206 = vand.u32 %v205, 4294901760
  %207 = vmatpush1.msra.mxu0 %v206
  %208 = vmatprep.subr.mxu0 0.0
  %v209 = vand.u32 %v28, 4294901760
  %v210 = vsub.f32 %v28, %v209
  %v211 = vand.u32 %v210, 4294901760
  %v212 = vsub.f32 %v210, %v211
  %v213 = vand.u32 %v212, 4294901760
  %214 = vmatpush1.msra.mxu0 %v213
  %215 = vmatprep.subr.mxu0 0.0
  %v216 = vand.u32 %v29, 4294901760
  %v217 = vsub.f32 %v29, %v216
  %v218 = vand.u32 %v217, 4294901760
  %v219 = vsub.f32 %v217, %v218
  %v220 = vand.u32 %v219, 4294901760
  %221 = vmatpush1.msra.mxu0 %v220
  %222 = vmatprep.subr.mxu0 0.0
  %v223 = vand.u32 %v30, 4294901760
  %v224 = vsub.f32 %v30, %v223
  %v225 = vand.u32 %v224, 4294901760
  %v226 = vsub.f32 %v224, %v225
  %v227 = vand.u32 %v226, 4294901760
  %228 = vmatpush1.msra.mxu0 %v227
  %229 = vmatprep.subr.mxu0 0.0
  %v230 = vand.u32 %v31, 4294901760
  %v231 = vsub.f32 %v31, %v230
  %v232 = vand.u32 %v231, 4294901760
  %v233 = vsub.f32 %v231, %v232
  %v234 = vand.u32 %v233, 4294901760
  %235 = vmatpush1.msra.mxu0 %v234
  %236 = vmatprep.subr.mxu0 0.0
  %v237 = vand.u32 %v32, 4294901760
  %v238 = vsub.f32 %v32, %v237
  %v239 = vand.u32 %v238, 4294901760
  %v240 = vsub.f32 %v238, %v239
  %v241 = vand.u32 %v240, 4294901760
  %242 = vmatpush1.msra.mxu0 %v241
  %243 = vmatprep.subr.mxu0 0.0
  %v244 = vand.u32 %v33, 4294901760
  %v245 = vsub.f32 %v33, %v244
  %v246 = vand.u32 %v245, 4294901760
  %v247 = vsub.f32 %v245, %v246
  %v248 = vand.u32 %v247, 4294901760
  %249 = vmatpush1.msra.mxu0 %v248
  %250 = vmatprep.subr.mxu0 0.0
  %v251 = vand.u32 %v34, 4294901760
  %v252 = vsub.f32 %v34, %v251
  %v253 = vand.u32 %v252, 4294901760
  %v254 = vsub.f32 %v252, %v253
  %v255 = vand.u32 %v254, 4294901760
  %256 = vmatpush1.msra.mxu0 %v255
  %257 = vmatprep.subr.mxu0 0.0
  %v258 = vand.u32 %v35, 4294901760
  %v259 = vsub.f32 %v35, %v258
  %v260 = vand.u32 %v259, 4294901760
  %v261 = vsub.f32 %v259, %v260
  %v262 = vand.u32 %v261, 4294901760
  %263 = vmatpush1.msra.mxu0 %v262
  %264 = vmatprep.subr.mxu0 0.0
  %v265 = vand.u32 %v36, 4294901760
  %v266 = vsub.f32 %v36, %v265
  %v267 = vand.u32 %v266, 4294901760
  %v268 = vsub.f32 %v266, %v267
  %v269 = vand.u32 %v268, 4294901760
  %270 = vmatpush1.msra.mxu0 %v269
  %271 = vmatprep.subr.mxu0 0.0
  %v272 = vand.u32 %v37, 4294901760
  %v273 = vsub.f32 %v37, %v272
  %v274 = vand.u32 %v273, 4294901760
  %v275 = vsub.f32 %v273, %v274
  %v276 = vand.u32 %v275, 4294901760
  %277 = vmatpush1.msra.mxu0 %v276
  %278 = vmatprep.subr.mxu0 0.0
  %v279 = vand.u32 %v38, 4294901760
  %v280 = vsub.f32 %v38, %v279
  %v281 = vand.u32 %v280, 4294901760
  %v282 = vsub.f32 %v280, %v281
  %v283 = vand.u32 %v282, 4294901760
  %284 = vmatpush1.msra.mxu0 %v283
  %285 = vmatprep.subr.mxu0 0.0
  %286 = vmatpush1.msra.mxu0 0.0
  %287 = vmatprep.subr.mxu0 0.0
  %288 = vmatpush1.msra.mxu0 0.0
  %289 = vmatprep.subr.mxu0 0.0
  %290 = vmatpush1.msra.mxu0 0.0
  %291 = vmatprep.subr.mxu0 0.0
  %292 = vmatpush1.msra.mxu0 0.0
  %293 = vmatprep.subr.mxu0 0.0
  %294 = vmatpush1.msra.mxu0 0.0
  %295 = vmatprep.subr.mxu0 0.0
  %296 = vmatpush1.msra.mxu0 0.0
  %297 = vmatprep.subr.mxu0 0.0
  %298 = vmatpush1.msra.mxu0 0.0
  %299 = vmatprep.subr.mxu0 0.0
  %300 = vmatpush1.msra.mxu0 0.0
  %301 = vmatprep.subr.mxu0 0.0
  %302 = vmatpush1.msra.mxu0 0.0
  %303 = vmatprep.subr.mxu0 0.0
  %304 = vmatpush1.msra.mxu0 0.0
  %305 = vmatprep.subr.mxu0 0.0
  %306 = vmatpush1.msra.mxu0 0.0
  %307 = vmatprep.subr.mxu0 0.0
  %308 = vmatpush1.msra.mxu0 0.0
  %309 = vmatprep.subr.mxu0 0.0
  %310 = vmatpush1.msra.mxu0 0.0
  %311 = vmatprep.subr.mxu0 0.0
  %312 = vmatpush1.msra.mxu0 0.0
  %v313 = vand.u32 %v41, 4294901760
  %314 = vmatprep.mubr.f32.mxu0 %v313
  %v315 = vand.u32 %v17, 4294901760
  %316 = vmatmul.mubr.f32.gmra.mrb[0].mxu0 %v315
  %v317 = vpop.f32.mrb[0].mxu0
  %v318 = vadd.f32 %v141, %v317
  %v319 = vpop.f32.mrb[0].mxu0
  %v320 = vand.u32 %v44, 4294901760
  %321 = vmatprep.mubr.f32.mxu0 %v320
  %v322 = vand.u32 %v19, 4294901760
  %323 = vmatmul.mubr.f32.gmra.mrb[0].mxu0 %v322
  %v324 = vpop.f32.mrb[0].mxu0
  %v325 = vadd.f32 %v156, %v324
  %v326 = vpop.f32.mrb[0].mxu0
  %327 = vdwg.mxu0
  %328 = vmatprep.subr.mxu0 0.0
  %v329 = vand.u32 %v21, 4294901760
  %v330 = vsub.f32 %v21, %v329
  %331 = vmatpush1.msra.mxu0 %v330
  %332 = vmatprep.subr.mxu0 0.0
  %v333 = vand.u32 %v22, 4294901760
  %v334 = vsub.f32 %v22, %v333
  %335 = vmatpush1.msra.mxu0 %v334
  %336 = vmatprep.subr.mxu0 0.0
  %v337 = vand.u32 %v23, 4294901760
  %v338 = vsub.f32 %v23, %v337
  %339 = vmatpush1.msra.mxu0 %v338
  %340 = vmatprep.subr.mxu0 0.0
  %v341 = vand.u32 %v24, 4294901760
  %v342 = vsub.f32 %v24, %v341
  %343 = vmatpush1.msra.mxu0 %v342
  %344 = vmatprep.subr.mxu0 0.0
  %v345 = vand.u32 %v25, 4294901760
  %v346 = vsub.f32 %v25, %v345
  %347 = vmatpush1.msra.mxu0 %v346
  %348 = vmatprep.subr.mxu0 0.0
  %v349 = vand.u32 %v26, 4294901760
  %v350 = vsub.f32 %v26, %v349
  %351 = vmatpush1.msra.mxu0 %v350
  %352 = vmatprep.subr.mxu0 0.0
  %v353 = vand.u32 %v27, 4294901760
  %v354 = vsub.f32 %v27, %v353
  %355 = vmatpush1.msra.mxu0 %v354
  %356 = vmatprep.subr.mxu0 0.0
  %v357 = vand.u32 %v28, 4294901760
  %v358 = vsub.f32 %v28, %v357
  %359 = vmatpush1.msra.mxu0 %v358
  %360 = vmatprep.subr.mxu0 0.0
  %v361 = vand.u32 %v29, 4294901760
  %v362 = vsub.f32 %v29, %v361
  %363 = vmatpush1.msra.mxu0 %v362
  %364 = vmatprep.subr.mxu0 0.0
  %v365 = vand.u32 %v30, 4294901760
  %v366 = vsub.f32 %v30, %v365
  %367 = vmatpush1.msra.mxu0 %v366
  %368 = vmatprep.subr.mxu0 0.0
  %v369 = vand.u32 %v31, 4294901760
  %v370 = vsub.f32 %v31, %v369
  %371 = vmatpush1.msra.mxu0 %v370
  %372 = vmatprep.subr.mxu0 0.0
  %v373 = vand.u32 %v32, 4294901760
  %v374 = vsub.f32 %v32, %v373
  %375 = vmatpush1.msra.mxu0 %v374
  %376 = vmatprep.subr.mxu0 0.0
  %v377 = vand.u32 %v33, 4294901760
  %v378 = vsub.f32 %v33, %v377
  %379 = vmatpush1.msra.mxu0 %v378
  %380 = vmatprep.subr.mxu0 0.0
  %v381 = vand.u32 %v34, 4294901760
  %v382 = vsub.f32 %v34, %v381
  %383 = vmatpush1.msra.mxu0 %v382
  %384 = vmatprep.subr.mxu0 0.0
  %v385 = vand.u32 %v35, 4294901760
  %v386 = vsub.f32 %v35, %v385
  %387 = vmatpush1.msra.mxu0 %v386
  %388 = vmatprep.subr.mxu0 0.0
  %v389 = vand.u32 %v36, 4294901760
  %v390 = vsub.f32 %v36, %v389
  %391 = vmatpush1.msra.mxu0 %v390
  %392 = vmatprep.subr.mxu0 0.0
  %v393 = vand.u32 %v37, 4294901760
  %v394 = vsub.f32 %v37, %v393
  %395 = vmatpush1.msra.mxu0 %v394
  %396 = vmatprep.subr.mxu0 0.0
  %v397 = vand.u32 %v38, 4294901760
  %v398 = vsub.f32 %v38, %v397
  %399 = vmatpush1.msra.mxu0 %v398
  %400 = vmatprep.subr.mxu0 0.0
  %401 = vmatpush1.msra.mxu0 0.0
  %402 = vmatprep.subr.mxu0 0.0
  %403 = vmatpush1.msra.mxu0 0.0
  %404 = vmatprep.subr.mxu0 0.0
  %405 = vmatpush1.msra.mxu0 0.0
  %406 = vmatprep.subr.mxu0 0.0
  %407 = vmatpush1.msra.mxu0 0.0
  %408 = vmatprep.subr.mxu0 0.0
  %409 = vmatpush1.msra.mxu0 0.0
  %410 = vmatprep.subr.mxu0 0.0
  %411 = vmatpush1.msra.mxu0 0.0
  %412 = vmatprep.subr.mxu0 0.0
  %413 = vmatpush1.msra.mxu0 0.0
  %414 = vmatprep.subr.mxu0 0.0
  %415 = vmatpush1.msra.mxu0 0.0
  %416 = vmatprep.subr.mxu0 0.0
  %417 = vmatpush1.msra.mxu0 0.0
  %418 = vmatprep.subr.mxu0 0.0
  %419 = vmatpush1.msra.mxu0 0.0
  %420 = vmatprep.subr.mxu0 0.0
  %421 = vmatpush1.msra.mxu0 0.0
  %422 = vmatprep.subr.mxu0 0.0
  %423 = vmatpush1.msra.mxu0 0.0
  %424 = vmatprep.subr.mxu0 0.0
  %425 = vmatpush1.msra.mxu0 0.0
  %426 = vmatprep.subr.mxu0 0.0
  %427 = vmatpush1.msra.mxu0 0.0
  %v428 = vand.u32 %v41, 4294901760
  %v429 = vsub.f32 %v41, %v428
  %430 = vmatprep.mubr.f32.mxu0 %v429
  %v431 = vand.u32 %v17, 4294901760
  %v432 = vsub.f32 %v17, %v431
  %433 = vmatmul.mubr.f32.gmra.mrb[0].mxu0 %v432
  %v434 = vpop.f32.mrb[0].mxu0
  %v435 = vadd.f32 %v318, %v434
  %v436 = vpop.f32.mrb[0].mxu0
  %v437 = vand.u32 %v44, 4294901760
  %v438 = vsub.f32 %v44, %v437
  %439 = vmatprep.mubr.f32.mxu0 %v438
  %v440 = vand.u32 %v19, 4294901760
  %v441 = vsub.f32 %v19, %v440
  %442 = vmatmul.mubr.f32.gmra.mrb[0].mxu0 %v441
  %v443 = vpop.f32.mrb[0].mxu0
  %v444 = vadd.f32 %v325, %v443
  %v445 = vpop.f32.mrb[0].mxu0
  %446 = vdwg.mxu0
  %447 = vmatprep.subr.mxu0 0.0
  %v448 = vand.u32 %v21, 4294901760
  %449 = vmatpush1.msra.mxu0 %v448
  %450 = vmatprep.subr.mxu0 0.0
  %v451 = vand.u32 %v22, 4294901760
  %452 = vmatpush1.msra.mxu0 %v451
  %453 = vmatprep.subr.mxu0 0.0
  %v454 = vand.u32 %v23, 4294901760
  %455 = vmatpush1.msra.mxu0 %v454
  %456 = vmatprep.subr.mxu0 0.0
  %v457 = vand.u32 %v24, 4294901760
  %458 = vmatpush1.msra.mxu0 %v457
  %459 = vmatprep.subr.mxu0 0.0
  %v460 = vand.u32 %v25, 4294901760
  %461 = vmatpush1.msra.mxu0 %v460
  %462 = vmatprep.subr.mxu0 0.0
  %v463 = vand.u32 %v26, 4294901760
  %464 = vmatpush1.msra.mxu0 %v463
  %465 = vmatprep.subr.mxu0 0.0
  %v466 = vand.u32 %v27, 4294901760
  %467 = vmatpush1.msra.mxu0 %v466
  %468 = vmatprep.subr.mxu0 0.0
  %v469 = vand.u32 %v28, 4294901760
  %470 = vmatpush1.msra.mxu0 %v469
  %471 = vmatprep.subr.mxu0 0.0
  %v472 = vand.u32 %v29, 4294901760
  %473 = vmatpush1.msra.mxu0 %v472
  %474 = vmatprep.subr.mxu0 0.0
  %v475 = vand.u32 %v30, 4294901760
  %476 = vmatpush1.msra.mxu0 %v475
  %477 = vmatprep.subr.mxu0 0.0
  %v478 = vand.u32 %v31, 4294901760
  %479 = vmatpush1.msra.mxu0 %v478
  %480 = vmatprep.subr.mxu0 0.0
  %v481 = vand.u32 %v32, 4294901760
  %482 = vmatpush1.msra.mxu0 %v481
  %483 = vmatprep.subr.mxu0 0.0
  %v484 = vand.u32 %v33, 4294901760
  %485 = vmatpush1.msra.mxu0 %v484
  %486 = vmatprep.subr.mxu0 0.0
  %v487 = vand.u32 %v34, 4294901760
  %488 = vmatpush1.msra.mxu0 %v487
  %489 = vmatprep.subr.mxu0 0.0
  %v490 = vand.u32 %v35, 4294901760
  %491 = vmatpush1.msra.mxu0 %v490
  %492 = vmatprep.subr.mxu0 0.0
  %v493 = vand.u32 %v36, 4294901760
  %494 = vmatpush1.msra.mxu0 %v493
  %495 = vmatprep.subr.mxu0 0.0
  %v496 = vand.u32 %v37, 4294901760
  %497 = vmatpush1.msra.mxu0 %v496
  %498 = vmatprep.subr.mxu0 0.0
  %v499 = vand.u32 %v38, 4294901760
  %500 = vmatpush1.msra.mxu0 %v499
  %501 = vmatprep.subr.mxu0 0.0
  %502 = vmatpush1.msra.mxu0 0.0
  %503 = vmatprep.subr.mxu0 0.0
  %504 = vmatpush1.msra.mxu0 0.0
  %505 = vmatprep.subr.mxu0 0.0
  %506 = vmatpush1.msra.mxu0 0.0
  %507 = vmatprep.subr.mxu0 0.0
  %508 = vmatpush1.msra.mxu0 0.0
  %509 = vmatprep.subr.mxu0 0.0
  %510 = vmatpush1.msra.mxu0 0.0
  %511 = vmatprep.subr.mxu0 0.0
  %512 = vmatpush1.msra.mxu0 0.0
  %513 = vmatprep.subr.mxu0 0.0
  %514 = vmatpush1.msra.mxu0 0.0
  %515 = vmatprep.subr.mxu0 0.0
  %516 = vmatpush1.msra.mxu0 0.0
  %517 = vmatprep.subr.mxu0 0.0
  %518 = vmatpush1.msra.mxu0 0.0
  %519 = vmatprep.subr.mxu0 0.0
  %520 = vmatpush1.msra.mxu0 0.0
  %521 = vmatprep.subr.mxu0 0.0
  %522 = vmatpush1.msra.mxu0 0.0
  %523 = vmatprep.subr.mxu0 0.0
  %524 = vmatpush1.msra.mxu0 0.0
  %525 = vmatprep.subr.mxu0 0.0
  %526 = vmatpush1.msra.mxu0 0.0
  %527 = vmatprep.subr.mxu0 0.0
  %528 = vmatpush1.msra.mxu0 0.0
  %v529 = vand.u32 %v41, 4294901760
  %v530 = vsub.f32 %v41, %v529
  %v531 = vand.u32 %v530, 4294901760
  %532 = vmatprep.mubr.f32.mxu0 %v531
  %v533 = vand.u32 %v17, 4294901760
  %v534 = vsub.f32 %v17, %v533
  %v535 = vand.u32 %v534, 4294901760
  %536 = vmatmul.mubr.f32.gmra.mrb[0].mxu0 %v535
  %v537 = vpop.f32.mrb[0].mxu0
  %v538 = vadd.f32 %v435, %v537
  %v539 = vpop.f32.mrb[0].mxu0
  %v540 = vand.u32 %v44, 4294901760
  %v541 = vsub.f32 %v44, %v540
  %v542 = vand.u32 %v541, 4294901760
  %543 = vmatprep.mubr.f32.mxu0 %v542
  %v544 = vand.u32 %v19, 4294901760
  %v545 = vsub.f32 %v19, %v544
  %v546 = vand.u32 %v545, 4294901760
  %547 = vmatmul.mubr.f32.gmra.mrb[0].mxu0 %v546
  %v548 = vpop.f32.mrb[0].mxu0
  %v549 = vadd.f32 %v444, %v548
  %v550 = vpop.f32.mrb[0].mxu0
  %551 = vdwg.mxu0
  %552 = vmatprep.subr.mxu0 0.0
  %v553 = vand.u32 %v21, 4294901760
  %v554 = vsub.f32 %v21, %v553
  %v555 = vand.u32 %v554, 4294901760
  %556 = vmatpush1.msra.mxu0 %v555
  %557 = vmatprep.subr.mxu0 0.0
  %v558 = vand.u32 %v22, 4294901760
  %v559 = vsub.f32 %v22, %v558
  %v560 = vand.u32 %v559, 4294901760
  %561 = vmatpush1.msra.mxu0 %v560
  %562 = vmatprep.subr.mxu0 0.0
  %v563 = vand.u32 %v23, 4294901760
  %v564 = vsub.f32 %v23, %v563
  %v565 = vand.u32 %v564, 4294901760
  %566 = vmatpush1.msra.mxu0 %v565
  %567 = vmatprep.subr.mxu0 0.0
  %v568 = vand.u32 %v24, 4294901760
  %v569 = vsub.f32 %v24, %v568
  %v570 = vand.u32 %v569, 4294901760
  %571 = vmatpush1.msra.mxu0 %v570
  %572 = vmatprep.subr.mxu0 0.0
  %v573 = vand.u32 %v25, 4294901760
  %v574 = vsub.f32 %v25, %v573
  %v575 = vand.u32 %v574, 4294901760
  %576 = vmatpush1.msra.mxu0 %v575
  %577 = vmatprep.subr.mxu0 0.0
  %v578 = vand.u32 %v26, 4294901760
  %v579 = vsub.f32 %v26, %v578
  %v580 = vand.u32 %v579, 4294901760
  %581 = vmatpush1.msra.mxu0 %v580
  %582 = vmatprep.subr.mxu0 0.0
  %v583 = vand.u32 %v27, 4294901760
  %v584 = vsub.f32 %v27, %v583
  %v585 = vand.u32 %v584, 4294901760
  %586 = vmatpush1.msra.mxu0 %v585
  %587 = vmatprep.subr.mxu0 0.0
  %v588 = vand.u32 %v28, 4294901760
  %v589 = vsub.f32 %v28, %v588
  %v590 = vand.u32 %v589, 4294901760
  %591 = vmatpush1.msra.mxu0 %v590
  %592 = vmatprep.subr.mxu0 0.0
  %v593 = vand.u32 %v29, 4294901760
  %v594 = vsub.f32 %v29, %v593
  %v595 = vand.u32 %v594, 4294901760
  %596 = vmatpush1.msra.mxu0 %v595
  %597 = vmatprep.subr.mxu0 0.0
  %v598 = vand.u32 %v30, 4294901760
  %v599 = vsub.f32 %v30, %v598
  %v600 = vand.u32 %v599, 4294901760
  %601 = vmatpush1.msra.mxu0 %v600
  %602 = vmatprep.subr.mxu0 0.0
  %v603 = vand.u32 %v31, 4294901760
  %v604 = vsub.f32 %v31, %v603
  %v605 = vand.u32 %v604, 4294901760
  %606 = vmatpush1.msra.mxu0 %v605
  %607 = vmatprep.subr.mxu0 0.0
  %v608 = vand.u32 %v32, 4294901760
  %v609 = vsub.f32 %v32, %v608
  %v610 = vand.u32 %v609, 4294901760
  %611 = vmatpush1.msra.mxu0 %v610
  %612 = vmatprep.subr.mxu0 0.0
  %v613 = vand.u32 %v33, 4294901760
  %v614 = vsub.f32 %v33, %v613
  %v615 = vand.u32 %v614, 4294901760
  %616 = vmatpush1.msra.mxu0 %v615
  %617 = vmatprep.subr.mxu0 0.0
  %v618 = vand.u32 %v34, 4294901760
  %v619 = vsub.f32 %v34, %v618
  %v620 = vand.u32 %v619, 4294901760
  %621 = vmatpush1.msra.mxu0 %v620
  %622 = vmatprep.subr.mxu0 0.0
  %v623 = vand.u32 %v35, 4294901760
  %v624 = vsub.f32 %v35, %v623
  %v625 = vand.u32 %v624, 4294901760
  %626 = vmatpush1.msra.mxu0 %v625
  %627 = vmatprep.subr.mxu0 0.0
  %v628 = vand.u32 %v36, 4294901760
  %v629 = vsub.f32 %v36, %v628
  %v630 = vand.u32 %v629, 4294901760
  %631 = vmatpush1.msra.mxu0 %v630
  %632 = vmatprep.subr.mxu0 0.0
  %v633 = vand.u32 %v37, 4294901760
  %v634 = vsub.f32 %v37, %v633
  %v635 = vand.u32 %v634, 4294901760
  %636 = vmatpush1.msra.mxu0 %v635
  %637 = vmatprep.subr.mxu0 0.0
  %v638 = vand.u32 %v38, 4294901760
  %v639 = vsub.f32 %v38, %v638
  %v640 = vand.u32 %v639, 4294901760
  %641 = vmatpush1.msra.mxu0 %v640
  %642 = vmatprep.subr.mxu0 0.0
  %643 = vmatpush1.msra.mxu0 0.0
  %644 = vmatprep.subr.mxu0 0.0
  %645 = vmatpush1.msra.mxu0 0.0
  %646 = vmatprep.subr.mxu0 0.0
  %647 = vmatpush1.msra.mxu0 0.0
  %648 = vmatprep.subr.mxu0 0.0
  %649 = vmatpush1.msra.mxu0 0.0
  %650 = vmatprep.subr.mxu0 0.0
  %651 = vmatpush1.msra.mxu0 0.0
  %652 = vmatprep.subr.mxu0 0.0
  %653 = vmatpush1.msra.mxu0 0.0
  %654 = vmatprep.subr.mxu0 0.0
  %655 = vmatpush1.msra.mxu0 0.0
  %656 = vmatprep.subr.mxu0 0.0
  %657 = vmatpush1.msra.mxu0 0.0
  %658 = vmatprep.subr.mxu0 0.0
  %659 = vmatpush1.msra.mxu0 0.0
  %660 = vmatprep.subr.mxu0 0.0
  %661 = vmatpush1.msra.mxu0 0.0
  %662 = vmatprep.subr.mxu0 0.0
  %663 = vmatpush1.msra.mxu0 0.0
  %664 = vmatprep.subr.mxu0 0.0
  %665 = vmatpush1.msra.mxu0 0.0
  %666 = vmatprep.subr.mxu0 0.0
  %667 = vmatpush1.msra.mxu0 0.0
  %668 = vmatprep.subr.mxu0 0.0
  %669 = vmatpush1.msra.mxu0 0.0
  %v670 = vand.u32 %v41, 4294901760
  %671 = vmatprep.mubr.f32.mxu0 %v670
  %v672 = vand.u32 %v17, 4294901760
  %673 = vmatmul.mubr.f32.gmra.mrb[0].mxu0 %v672
  %v674 = vpop.f32.mrb[0].mxu0
  %v675 = vadd.f32 %v538, %v674
  %v676 = vpop.f32.mrb[0].mxu0
  %v677 = vand.u32 %v44, 4294901760
  %678 = vmatprep.mubr.f32.mxu0 %v677
  %v679 = vand.u32 %v19, 4294901760
  %680 = vmatmul.mubr.f32.gmra.mrb[0].mxu0 %v679
  %v681 = vpop.f32.mrb[0].mxu0
  %v682 = vadd.f32 %v549, %v681
  %v683 = vpop.f32.mrb[0].mxu0
  %684 = vdwg.mxu0
  %685 = vmatprep.subr.mxu0 0.0
  %v686 = vand.u32 %v21, 4294901760
  %687 = vmatpush1.msra.mxu0 %v686
  %688 = vmatprep.subr.mxu0 0.0
  %v689 = vand.u32 %v22, 4294901760
  %690 = vmatpush1.msra.mxu0 %v689
  %691 = vmatprep.subr.mxu0 0.0
  %v692 = vand.u32 %v23, 4294901760
  %693 = vmatpush1.msra.mxu0 %v692
  %694 = vmatprep.subr.mxu0 0.0
  %v695 = vand.u32 %v24, 4294901760
  %696 = vmatpush1.msra.mxu0 %v695
  %697 = vmatprep.subr.mxu0 0.0
  %v698 = vand.u32 %v25, 4294901760
  %699 = vmatpush1.msra.mxu0 %v698
  %700 = vmatprep.subr.mxu0 0.0
  %v701 = vand.u32 %v26, 4294901760
  %702 = vmatpush1.msra.mxu0 %v701
  %703 = vmatprep.subr.mxu0 0.0
  %v704 = vand.u32 %v27, 4294901760
  %705 = vmatpush1.msra.mxu0 %v704
  %706 = vmatprep.subr.mxu0 0.0
  %v707 = vand.u32 %v28, 4294901760
  %708 = vmatpush1.msra.mxu0 %v707
  %709 = vmatprep.subr.mxu0 0.0
  %v710 = vand.u32 %v29, 4294901760
  %711 = vmatpush1.msra.mxu0 %v710
  %712 = vmatprep.subr.mxu0 0.0
  %v713 = vand.u32 %v30, 4294901760
  %714 = vmatpush1.msra.mxu0 %v713
  %715 = vmatprep.subr.mxu0 0.0
  %v716 = vand.u32 %v31, 4294901760
  %717 = vmatpush1.msra.mxu0 %v716
  %718 = vmatprep.subr.mxu0 0.0
  %v719 = vand.u32 %v32, 4294901760
  %720 = vmatpush1.msra.mxu0 %v719
  %721 = vmatprep.subr.mxu0 0.0
  %v722 = vand.u32 %v33, 4294901760
  %723 = vmatpush1.msra.mxu0 %v722
  %724 = vmatprep.subr.mxu0 0.0
  %v725 = vand.u32 %v34, 4294901760
  %726 = vmatpush1.msra.mxu0 %v725
  %727 = vmatprep.subr.mxu0 0.0
  %v728 = vand.u32 %v35, 4294901760
  %729 = vmatpush1.msra.mxu0 %v728
  %730 = vmatprep.subr.mxu0 0.0
  %v731 = vand.u32 %v36, 4294901760
  %732 = vmatpush1.msra.mxu0 %v731
  %733 = vmatprep.subr.mxu0 0.0
  %v734 = vand.u32 %v37, 4294901760
  %735 = vmatpush1.msra.mxu0 %v734
  %736 = vmatprep.subr.mxu0 0.0
  %v737 = vand.u32 %v38, 4294901760
  %738 = vmatpush1.msra.mxu0 %v737
  %739 = vmatprep.subr.mxu0 0.0
  %740 = vmatpush1.msra.mxu0 0.0
  %741 = vmatprep.subr.mxu0 0.0
  %742 = vmatpush1.msra.mxu0 0.0
  %743 = vmatprep.subr.mxu0 0.0
  %744 = vmatpush1.msra.mxu0 0.0
  %745 = vmatprep.subr.mxu0 0.0
  %746 = vmatpush1.msra.mxu0 0.0
  %747 = vmatprep.subr.mxu0 0.0
  %748 = vmatpush1.msra.mxu0 0.0
  %749 = vmatprep.subr.mxu0 0.0
  %750 = vmatpush1.msra.mxu0 0.0
  %751 = vmatprep.subr.mxu0 0.0
  %752 = vmatpush1.msra.mxu0 0.0
  %753 = vmatprep.subr.mxu0 0.0
  %754 = vmatpush1.msra.mxu0 0.0
  %755 = vmatprep.subr.mxu0 0.0
  %756 = vmatpush1.msra.mxu0 0.0
  %757 = vmatprep.subr.mxu0 0.0
  %758 = vmatpush1.msra.mxu0 0.0
  %759 = vmatprep.subr.mxu0 0.0
  %760 = vmatpush1.msra.mxu0 0.0
  %761 = vmatprep.subr.mxu0 0.0
  %762 = vmatpush1.msra.mxu0 0.0
  %763 = vmatprep.subr.mxu0 0.0
  %764 = vmatpush1.msra.mxu0 0.0
  %765 = vmatprep.subr.mxu0 0.0
  %766 = vmatpush1.msra.mxu0 0.0
  %v767 = vand.u32 %v41, 4294901760
  %768 = vmatprep.mubr.f32.mxu0 %v767
  %v769 = vand.u32 %v17, 4294901760
  %770 = vmatmul.mubr.f32.gmra.mrb[0].mxu0 %v769
  %v771 = vpop.f32.mrb[0].mxu0
  %v772 = vadd.f32 %v675, %v771
  %v773 = vpop.f32.mrb[0].mxu0
  %v774 = vand.u32 %v44, 4294901760
  %775 = vmatprep.mubr.f32.mxu0 %v774
  %v776 = vand.u32 %v19, 4294901760
  %777 = vmatmul.mubr.f32.gmra.mrb[0].mxu0 %v776
  %v778 = vpop.f32.mrb[0].mxu0
  %v779 = vadd.f32 %v682, %v778
  %v780 = vpop.f32.mrb[0].mxu0
  %781 = vdwg.mxu0
  %782 = vadd.xlane.f32.xlu0 %v772
  %v783 = vpop.xlane.xlu0 %782
  %784 = vadd.xlane.f32.xlu0 %v779
  %v785 = vpop.xlane.xlu0 %784
  %v786 = vmul.f32 %v772, %v772
  %v787 = vmul.f32 %v779, %v779
  %788 = vadd.xlane.f32.xlu0 %v786
  %v789 = vpop.xlane.xlu0 %788
  %790 = vadd.xlane.f32.xlu0 %v787
  %v791 = vpop.xlane.xlu0 %790
  %v792 = vmul.f32 %v783, 0.0078125
  %v793 = vmul.f32 %v785, 0.0078125
  %v794 = vmul.f32 %v789, 0.0078125
  %v795 = vmul.f32 %v791, 0.0078125
  %v796 = vmul.f32 %v792, %v792
  %v797 = vmul.f32 %v793, %v793
  %v798 = vsub.f32 %v794, %v796
  %v799 = vsub.f32 %v795, %v797
  %v800 = vld [vmem:[%s2] sm:$0xff]
  %v801 = vld [vmem:[%s2 + $0x8] sm:$0xff]
  %v802 = vadd.f32 %v798, 1e-05
  %v803 = vadd.f32 %v799, 1e-05
  %v804 = vrsqrt.pop %v802
  %v805 = vrsqrt.pop %v803
  %v806 = vmul.f32 %v800, %v804
  %v807 = vmul.f32 %v801, %v805
  %v808 = vld [vmem:[%s3] sm:$0xff]
  %v809 = vld [vmem:[%s3 + $0x8] sm:$0xff]
  %v810 = vmul.f32 %v792, %v806
  %v811 = vmul.f32 %v793, %v807
  %v812 = vsub.f32 %v808, %v810
  %v813 = vsub.f32 %v809, %v811
  %815 = vset.pattern.permute.xlu0 0
  %816 = vperm.xlu0 %815, %v806
  %v817 = vpop.permute.xlu0 %816
  %820 = vset.pattern.permute.xlu0 0
  %821 = vperm.xlu0 %820, %v807
  %v822 = vpop.permute.xlu0 %821
  %v824 = vmul.f32 %v772, %v817
  %v825 = vmul.f32 %v779, %v822
  %827 = vset.pattern.permute.xlu0 0
  %828 = vperm.xlu0 %827, %v812
  %v829 = vpop.permute.xlu0 %828
  %832 = vset.pattern.permute.xlu0 0
  %833 = vperm.xlu0 %832, %v813
  %v834 = vpop.permute.xlu0 %833
  %v836 = vadd.f32 %v824, %v829
  %v837 = vadd.f32 %v825, %v834
  %v838 = vmax.f32 %v836, 0.0
  %v839 = vmax.f32 %v837, 0.0
  %840 = vst [vmem:[%s4] sm:$0xff] %v838
  %841 = vst [vmem:[%s4 + $0x8] sm:$0xff] %v839
  // Predicated region
  $region18: #{baseline_unet_pallas.15} parent=0 // pred_check
    _
  $region19: #{baseline_unet_pallas.15} parent=0 // pred_check_branch
    %843 = sbr.rel (0) target = $region21
  $region20: #{baseline_unet_pallas.15} parent=0 // pred_region
    _
  $region21: #{baseline_unet_pallas.15} parent=0 // pred_fallthru
    _
  // Predicated region
  $region22: #{baseline_unet_pallas.15} parent=0 // pred_check
    _
  $region23: #{baseline_unet_pallas.15} parent=0 // pred_check_branch
    %845 = sbr.rel (0) target = $region25
  $region24: #{baseline_unet_pallas.15} parent=0 // pred_region
    _
  $region25: #{baseline_unet_pallas.15} parent=0 // pred_fallthru
    _

// kernel: baseline_unet_pallas.16
$region0: #{baseline_unet_pallas.16}
  #allocation0 [shape = 'u32[]', space=smem, size = 0x4, offset = 0x4, fixed_abs, tag = 'smem constant byte address 0x4 - core index']
  #allocation1 [shape = 'u32[144,128]{1,0:T(1,128)}', space=vmem, size = 0x12000, scoped, tag = 'internal scratch']
  %s0 = inlined_call_operand.vmem [shape: f32[16,32], index: 0, kind: input, shape index: {}]
  %s1 = inlined_call_operand.vmem [shape: f32[16,32], index: 1, kind: input, shape index: {}]
  %s2 = inlined_call_operand.vmem [shape: f32[16,32], index: 2, kind: input, shape index: {}]
  %s3 = inlined_call_operand.vmem [shape: f32[16,32], index: 3, kind: input, shape index: {}]
  %s4 = inlined_call_operand.vmem [shape: f32[16,32], index: 4, kind: output, shape index: {}]
  %s5 = sld [smem:[#allocation0]]
  $region26: #{baseline_unet_pallas.16} parent=0
    _
  %s7 = ssub.s32 1, %s5
  %s8 = scalar_select 0, %s7, %s5
  // Predicated region
  $region2: #{baseline_unet_pallas.16} parent=0 // pred_check
    _
  $region3: #{baseline_unet_pallas.16} parent=0 // pred_check_branch
    %10 = sbr.rel (0) target = $region5
  $region4: #{baseline_unet_pallas.16} parent=0 // pred_region
    _
  $region5: #{baseline_unet_pallas.16} parent=0 // pred_fallthru
    _
  // Predicated region
  $region6: #{baseline_unet_pallas.16} parent=0 // pred_check
    _
  $region7: #{baseline_unet_pallas.16} parent=0 // pred_check_branch
    %12 = sbr.rel (0) target = $region9
  $region8: #{baseline_unet_pallas.16} parent=0 // pred_region
    _
  $region9: #{baseline_unet_pallas.16} parent=0 // pred_fallthru
    _
  // Predicated region
  $region10: #{baseline_unet_pallas.16} parent=0 // pred_check
    _
  $region11: #{baseline_unet_pallas.16} parent=0 // pred_check_branch
    %14 = sbr.rel (0) target = $region13
  $region12: #{baseline_unet_pallas.16} parent=0 // pred_region
    _
  $region13: #{baseline_unet_pallas.16} parent=0 // pred_fallthru
    _
  // Predicated region
  $region14: #{baseline_unet_pallas.16} parent=0 // pred_check
    _
  $region15: #{baseline_unet_pallas.16} parent=0 // pred_check_branch
    %16 = sbr.rel (0) target = $region17
  $region16: #{baseline_unet_pallas.16} parent=0 // pred_region
    _
  $region17: #{baseline_unet_pallas.16} parent=0 // pred_fallthru
    _
  %v17 = vld [vmem:[%s0] sm:$0xff]
  %v18 = vld [vmem:[%s0 + $0x8] sm:$0xff]
  %v19 = vld [vmem:[%s1] sm:$0xff]
  %v20 = vld [vmem:[%s1 + $0x8] sm:$0xff]
  %v21 = vmax.f32 %v17, %v19
  %v22 = vmax.f32 %v18, %v20
  %v23 = vld [vmem:[%s2] sm:$0xff]
  %v24 = vld [vmem:[%s2 + $0x8] sm:$0xff]
  %v25 = vld [vmem:[%s3] sm:$0xff]
  %v26 = vld [vmem:[%s3 + $0x8] sm:$0xff]
  %v27 = vmax.f32 %v23, %v25
  %v28 = vmax.f32 %v24, %v26
  %v29 = vmax.f32 %v21, %v27
  %v30 = vmax.f32 %v22, %v28
  %vm31 = vcmask 261120
  %32 = vst.msk [vmem:[%s4] sm:$0xff] %vm31, %v29
  %33 = vst.msk [vmem:[%s4 + $0x8] sm:$0xff] %vm31, %v30
  // Predicated region
  $region18: #{baseline_unet_pallas.16} parent=0 // pred_check
    _
  $region19: #{baseline_unet_pallas.16} parent=0 // pred_check_branch
    %35 = sbr.rel (0) target = $region21
  $region20: #{baseline_unet_pallas.16} parent=0 // pred_region
    _
  $region21: #{baseline_unet_pallas.16} parent=0 // pred_fallthru
    _
  // Predicated region
  $region22: #{baseline_unet_pallas.16} parent=0 // pred_check
    _
  $region23: #{baseline_unet_pallas.16} parent=0 // pred_check_branch
    %37 = sbr.rel (0) target = $region25
  $region24: #{baseline_unet_pallas.16} parent=0 // pred_region
    _
  $region25: #{baseline_unet_pallas.16} parent=0 // pred_fallthru
    _

// kernel: tile.8
$region0: #{tile.8}
  #allocation0 [shape = 's32[1]{0}', space=sflag, size = 0x4, scoped, tag = 'scoped memory for tile.8']
  %s0 = inlined_call_operand.vmem [shape: f32[32], index: 0, kind: input, shape index: {}]
  %s1 = inlined_call_operand.vmem [shape: f32[4,32], index: 1, kind: output, shape index: {}]
  // Predicated region
  $region2: #{tile.8} parent=0 // pred_check
    _
  $region3: #{tile.8} parent=0 // pred_check_branch
    %3 = sbr.rel (0) target = $region5
  $region4: #{tile.8} parent=0 // pred_region
    _
  $region5: #{tile.8} parent=0 // pred_fallthru
    _
  %v4 = vld [vmem:[%s0] ss:$0 sm:$0xff]
  %5 = vst [vmem:[%s1] sm:$0xf] %v4

// kernel: tile.0
$region0: #{tile.0}
  %s0 = inlined_call_operand.vmem [shape: f32[4,32], index: 0, kind: input, shape index: {}]
  %s1 = inlined_call_operand.vmem [shape: f32[128,1], index: 1, kind: output, shape index: {}]
  $region1: #{tile.0} parent=0
    #allocation0 [shape = 'u8[4096]{0}', space=vmem, size = 0x1000, scoped, tag = 'scoped mem for input reshape']
    %s3 = sshllo.u32 0, 4
    %v4 = vld [vmem:[%s0] sm:%s3]
    %5 = vst [vmem:[#allocation0] sm:%s3] %v4
    %v6 = vld [vmem:[#allocation0] sm:$0xf]
    %vm7 = vcmask 7168
    %8 = vst.msk [vmem:[%s1] sm:$0x1] %vm7, %v6
    %s9 = scalar_lea.vmem %s1, 31
    %10 = vst.msk [vmem:[%s9] sm:$0x2] %vm7, %v6
    %s11 = scalar_lea.vmem %s1, 62
    %12 = vst.msk [vmem:[%s11] sm:$0x4] %vm7, %v6
    %s13 = scalar_lea.vmem %s1, 93
    %14 = vst.msk [vmem:[%s13] sm:$0x8] %vm7, %v6
    %v15 = vld [vmem:[#allocation0] sm:$0xf]
    %16 = vrot.lane.b32.xlu0 %v15, 127
    %v17 = vpop.permute.xlu0 %16
    %vm18 = vcmask 7168
    %s19 = scalar_lea.vmem %s1, 1
    %20 = vst.msk [vmem:[%s19] sm:$0x1] %vm18, %v17
    %s21 = scalar_lea.vmem %s1, 32
    %22 = vst.msk [vmem:[%s21] sm:$0x2] %vm18, %v17
    %s23 = scalar_lea.vmem %s1, 63
    %24 = vst.msk [vmem:[%s23] sm:$0x4] %vm18, %v17
    %s25 = scalar_lea.vmem %s1, 94
    %26 = vst.msk [vmem:[%s25] sm:$0x8] %vm18, %v17
    %v27 = vld [vmem:[#allocation0] sm:$0xf]
    %28 = vrot.lane.b32.xlu0 %v27, 126
    %v29 = vpop.permute.xlu0 %28
    %vm30 = vcmask 7168
    %s31 = scalar_lea.vmem %s1, 2
    %32 = vst.msk [vmem:[%s31] sm:$0x1] %vm30, %v29
    %s33 = scalar_lea.vmem %s1, 33
    %34 = vst.msk [vmem:[%s33] sm:$0x2] %vm30, %v29
    %s35 = scalar_lea.vmem %s1, 64
    %36 = vst.msk [vmem:[%s35] sm:$0x4] %vm30, %v29
    %s37 = scalar_lea.vmem %s1, 95
    %38 = vst.msk [vmem:[%s37] sm:$0x8] %vm30, %v29
    %v39 = vld [vmem:[#allocation0] sm:$0xf]
    %40 = vrot.lane.b32.xlu0 %v39, 125
    %v41 = vpop.permute.xlu0 %40
    %vm42 = vcmask 7168
    %s43 = scalar_lea.vmem %s1, 3
    %44 = vst.msk [vmem:[%s43] sm:$0x1] %vm42, %v41
    %s45 = scalar_lea.vmem %s1, 34
    %46 = vst.msk [vmem:[%s45] sm:$0x2] %vm42, %v41
    %s47 = scalar_lea.vmem %s1, 65
    %48 = vst.msk [vmem:[%s47] sm:$0x4] %vm42, %v41
    %s49 = scalar_lea.vmem %s1, 96
    %50 = vst.msk [vmem:[%s49] sm:$0x8] %vm42, %v41
    %v51 = vld [vmem:[#allocation0] sm:$0xf]
    %52 = vrot.lane.b32.xlu0 %v51, 124
    %v53 = vpop.permute.xlu0 %52
    %vm54 = vcmask 7168
    %s55 = scalar_lea.vmem %s1, 4
    %56 = vst.msk [vmem:[%s55] sm:$0x1] %vm54, %v53
    %s57 = scalar_lea.vmem %s1, 35
    %58 = vst.msk [vmem:[%s57] sm:$0x2] %vm54, %v53
    %s59 = scalar_lea.vmem %s1, 66
    %60 = vst.msk [vmem:[%s59] sm:$0x4] %vm54, %v53
    %s61 = scalar_lea.vmem %s1, 97
    %62 = vst.msk [vmem:[%s61] sm:$0x8] %vm54, %v53
    %v63 = vld [vmem:[#allocation0] sm:$0xf]
    %64 = vrot.lane.b32.xlu0 %v63, 123
    %v65 = vpop.permute.xlu0 %64
    %vm66 = vcmask 7168
    %s67 = scalar_lea.vmem %s1, 5
    %68 = vst.msk [vmem:[%s67] sm:$0x1] %vm66, %v65
    %s69 = scalar_lea.vmem %s1, 36
    %70 = vst.msk [vmem:[%s69] sm:$0x2] %vm66, %v65
    %s71 = scalar_lea.vmem %s1, 67
    %72 = vst.msk [vmem:[%s71] sm:$0x4] %vm66, %v65
    %s73 = scalar_lea.vmem %s1, 98
    %74 = vst.msk [vmem:[%s73] sm:$0x8] %vm66, %v65
    %v75 = vld [vmem:[#allocation0] sm:$0xf]
    %76 = vrot.lane.b32.xlu0 %v75, 122
    %v77 = vpop.permute.xlu0 %76
    %vm78 = vcmask 7168
    %s79 = scalar_lea.vmem %s1, 6
    %80 = vst.msk [vmem:[%s79] sm:$0x1] %vm78, %v77
    %s81 = scalar_lea.vmem %s1, 37
    %82 = vst.msk [vmem:[%s81] sm:$0x2] %vm78, %v77
    %s83 = scalar_lea.vmem %s1, 68
    %84 = vst.msk [vmem:[%s83] sm:$0x4] %vm78, %v77
    %s85 = scalar_lea.vmem %s1, 99
    %86 = vst.msk [vmem:[%s85] sm:$0x8] %vm78, %v77
    %v87 = vld [vmem:[#allocation0] sm:$0xf]
    %88 = vrot.lane.b32.xlu0 %v87, 121
    %v89 = vpop.permute.xlu0 %88
    %vm90 = vcmask 7168
    %s91 = scalar_lea.vmem %s1, 7
    %92 = vst.msk [vmem:[%s91] sm:$0x1] %vm90, %v89
    %s93 = scalar_lea.vmem %s1, 38
    %94 = vst.msk [vmem:[%s93] sm:$0x2] %vm90, %v89
    %s95 = scalar_lea.vmem %s1, 69
    %96 = vst.msk [vmem:[%s95] sm:$0x4] %vm90, %v89
    %s97 = scalar_lea.vmem %s1, 100
    %98 = vst.msk [vmem:[%s97] sm:$0x8] %vm90, %v89
    %v99 = vld [vmem:[#allocation0] sm:$0xf]
    %100 = vrot.lane.b32.xlu0 %v99, 120
    %v101 = vpop.permute.xlu0 %100
    %vm102 = vcmask 7168
    %s103 = scalar_lea.vmem %s1, 8
    %104 = vst.msk [vmem:[%s103] sm:$0x1] %vm102, %v101
    %s105 = scalar_lea.vmem %s1, 39
    %106 = vst.msk [vmem:[%s105] sm:$0x2] %vm102, %v101
    %s107 = scalar_lea.vmem %s1, 70
    %108 = vst.msk [vmem:[%s107] sm:$0x4] %vm102, %v101
    %s109 = scalar_lea.vmem %s1, 101
    %110 = vst.msk [vmem:[%s109] sm:$0x8] %vm102, %v101
    %v111 = vld [vmem:[#allocation0] sm:$0xf]
    %112 = vrot.lane.b32.xlu0 %v111, 119
    %v113 = vpop.permute.xlu0 %112
    %vm114 = vcmask 7168
    %s115 = scalar_lea.vmem %s1, 9
    %116 = vst.msk [vmem:[%s115] sm:$0x1] %vm114, %v113
    %s117 = scalar_lea.vmem %s1, 40
    %118 = vst.msk [vmem:[%s117] sm:$0x2] %vm114, %v113
    %s119 = scalar_lea.vmem %s1, 71
    %120 = vst.msk [vmem:[%s119] sm:$0x4] %vm114, %v113
    %s121 = scalar_lea.vmem %s1, 102
    %122 = vst.msk [vmem:[%s121] sm:$0x8] %vm114, %v113
    %v123 = vld [vmem:[#allocation0] sm:$0xf]
    %124 = vrot.lane.b32.xlu0 %v123, 118
    %v125 = vpop.permute.xlu0 %124
    %vm126 = vcmask 7168
    %s127 = scalar_lea.vmem %s1, 10
    %128 = vst.msk [vmem:[%s127] sm:$0x1] %vm126, %v125
    %s129 = scalar_lea.vmem %s1, 41
    %130 = vst.msk [vmem:[%s129] sm:$0x2] %vm126, %v125
    %s131 = scalar_lea.vmem %s1, 72
    %132 = vst.msk [vmem:[%s131] sm:$0x4] %vm126, %v125
    %s133 = scalar_lea.vmem %s1, 103
    %134 = vst.msk [vmem:[%s133] sm:$0x8] %vm126, %v125
    %v135 = vld [vmem:[#allocation0] sm:$0xf]
    %136 = vrot.lane.b32.xlu0 %v135, 117
    %v137 = vpop.permute.xlu0 %136
    %vm138 = vcmask 7168
    %s139 = scalar_lea.vmem %s1, 11
    %140 = vst.msk [vmem:[%s139] sm:$0x1] %vm138, %v137
    %s141 = scalar_lea.vmem %s1, 42
    %142 = vst.msk [vmem:[%s141] sm:$0x2] %vm138, %v137
    %s143 = scalar_lea.vmem %s1, 73
    %144 = vst.msk [vmem:[%s143] sm:$0x4] %vm138, %v137
    %s145 = scalar_lea.vmem %s1, 104
    %146 = vst.msk [vmem:[%s145] sm:$0x8] %vm138, %v137
    %v147 = vld [vmem:[#allocation0] sm:$0xf]
    %148 = vrot.lane.b32.xlu0 %v147, 116
    %v149 = vpop.permute.xlu0 %148
    %vm150 = vcmask 7168
    %s151 = scalar_lea.vmem %s1, 12
    %152 = vst.msk [vmem:[%s151] sm:$0x1] %vm150, %v149
    %s153 = scalar_lea.vmem %s1, 43
    %154 = vst.msk [vmem:[%s153] sm:$0x2] %vm150, %v149
    %s155 = scalar_lea.vmem %s1, 74
    %156 = vst.msk [vmem:[%s155] sm:$0x4] %vm150, %v149
    %s157 = scalar_lea.vmem %s1, 105
    %158 = vst.msk [vmem:[%s157] sm:$0x8] %vm150, %v149
    %v159 = vld [vmem:[#allocation0] sm:$0xf]
    %160 = vrot.lane.b32.xlu0 %v159, 115
    %v161 = vpop.permute.xlu0 %160
    %vm162 = vcmask 7168
    %s163 = scalar_lea.vmem %s1, 13
    %164 = vst.msk [vmem:[%s163] sm:$0x1] %vm162, %v161
    %s165 = scalar_lea.vmem %s1, 44
    %166 = vst.msk [vmem:[%s165] sm:$0x2] %vm162, %v161
    %s167 = scalar_lea.vmem %s1, 75
    %168 = vst.msk [vmem:[%s167] sm:$0x4] %vm162, %v161
    %s169 = scalar_lea.vmem %s1, 106
    %170 = vst.msk [vmem:[%s169] sm:$0x8] %vm162, %v161
    %v171 = vld [vmem:[#allocation0] sm:$0xf]
    %172 = vrot.lane.b32.xlu0 %v171, 114
    %v173 = vpop.permute.xlu0 %172
    %vm174 = vcmask 7168
    %s175 = scalar_lea.vmem %s1, 14
    %176 = vst.msk [vmem:[%s175] sm:$0x1] %vm174, %v173
    %s177 = scalar_lea.vmem %s1, 45
    %178 = vst.msk [vmem:[%s177] sm:$0x2] %vm174, %v173
    %s179 = scalar_lea.vmem %s1, 76
    %180 = vst.msk [vmem:[%s179] sm:$0x4] %vm174, %v173
    %s181 = scalar_lea.vmem %s1, 107
    %182 = vst.msk [vmem:[%s181] sm:$0x8] %vm174, %v173
    %v183 = vld [vmem:[#allocation0] sm:$0xf]
    %184 = vrot.lane.b32.xlu0 %v183, 113
    %v185 = vpop.permute.xlu0 %184
    %vm186 = vcmask 7168
    %s187 = scalar_lea.vmem %s1, 15
    %188 = vst.msk [vmem:[%s187] sm:$0x1] %vm186, %v185
    %s189 = scalar_lea.vmem %s1, 46
    %190 = vst.msk [vmem:[%s189] sm:$0x2] %vm186, %v185
    %s191 = scalar_lea.vmem %s1, 77
    %192 = vst.msk [vmem:[%s191] sm:$0x4] %vm186, %v185
    %s193 = scalar_lea.vmem %s1, 108
    %194 = vst.msk [vmem:[%s193] sm:$0x8] %vm186, %v185
    %v195 = vld [vmem:[#allocation0] sm:$0xf]
    %196 = vrot.lane.b32.xlu0 %v195, 112
    %v197 = vpop.permute.xlu0 %196
    %vm198 = vcmask 7168
    %s199 = scalar_lea.vmem %s1, 16
    %200 = vst.msk [vmem:[%s199] sm:$0x1] %vm198, %v197
    %s201 = scalar_lea.vmem %s1, 47
    %202 = vst.msk [vmem:[%s201] sm:$0x2] %vm198, %v197
    %s203 = scalar_lea.vmem %s1, 78
    %204 = vst.msk [vmem:[%s203] sm:$0x4] %vm198, %v197
    %s205 = scalar_lea.vmem %s1, 109
    %206 = vst.msk [vmem:[%s205] sm:$0x8] %vm198, %v197
    %v207 = vld [vmem:[#allocation0] sm:$0xf]
    %208 = vrot.lane.b32.xlu0 %v207, 111
    %v209 = vpop.permute.xlu0 %208
    %vm210 = vcmask 7168
    %s211 = scalar_lea.vmem %s1, 17
    %212 = vst.msk [vmem:[%s211] sm:$0x1] %vm210, %v209
    %s213 = scalar_lea.vmem %s1, 48
    %214 = vst.msk [vmem:[%s213] sm:$0x2] %vm210, %v209
    %s215 = scalar_lea.vmem %s1, 79
    %216 = vst.msk [vmem:[%s215] sm:$0x4] %vm210, %v209
    %s217 = scalar_lea.vmem %s1, 110
    %218 = vst.msk [vmem:[%s217] sm:$0x8] %vm210, %v209
    %v219 = vld [vmem:[#allocation0] sm:$0xf]
    %220 = vrot.lane.b32.xlu0 %v219, 110
    %v221 = vpop.permute.xlu0 %220
    %vm222 = vcmask 7168
    %s223 = scalar_lea.vmem %s1, 18
    %224 = vst.msk [vmem:[%s223] sm:$0x1] %vm222, %v221
    %s225 = scalar_lea.vmem %s1, 49
    %226 = vst.msk [vmem:[%s225] sm:$0x2] %vm222, %v221
    %s227 = scalar_lea.vmem %s1, 80
    %228 = vst.msk [vmem:[%s227] sm:$0x4] %vm222, %v221
    %s229 = scalar_lea.vmem %s1, 111
    %230 = vst.msk [vmem:[%s229] sm:$0x8] %vm222, %v221
    %v231 = vld [vmem:[#allocation0] sm:$0xf]
    %232 = vrot.lane.b32.xlu0 %v231, 109
    %v233 = vpop.permute.xlu0 %232
    %vm234 = vcmask 7168
    %s235 = scalar_lea.vmem %s1, 19
    %236 = vst.msk [vmem:[%s235] sm:$0x1] %vm234, %v233
    %s237 = scalar_lea.vmem %s1, 50
    %238 = vst.msk [vmem:[%s237] sm:$0x2] %vm234, %v233
    %s239 = scalar_lea.vmem %s1, 81
    %240 = vst.msk [vmem:[%s239] sm:$0x4] %vm234, %v233
    %s241 = scalar_lea.vmem %s1, 112
    %242 = vst.msk [vmem:[%s241] sm:$0x8] %vm234, %v233
    %v243 = vld [vmem:[#allocation0] sm:$0xf]
    %244 = vrot.lane.b32.xlu0 %v243, 108
    %v245 = vpop.permute.xlu0 %244
    %vm246 = vcmask 7168
    %s247 = scalar_lea.vmem %s1, 20
    %248 = vst.msk [vmem:[%s247] sm:$0x1] %vm246, %v245
    %s249 = scalar_lea.vmem %s1, 51
    %250 = vst.msk [vmem:[%s249] sm:$0x2] %vm246, %v245
    %s251 = scalar_lea.vmem %s1, 82
    %252 = vst.msk [vmem:[%s251] sm:$0x4] %vm246, %v245
    %s253 = scalar_lea.vmem %s1, 113
    %254 = vst.msk [vmem:[%s253] sm:$0x8] %vm246, %v245
    %v255 = vld [vmem:[#allocation0] sm:$0xf]
    %256 = vrot.lane.b32.xlu0 %v255, 107
    %v257 = vpop.permute.xlu0 %256
    %vm258 = vcmask 7168
    %s259 = scalar_lea.vmem %s1, 21
    %260 = vst.msk [vmem:[%s259] sm:$0x1] %vm258, %v257
    %s261 = scalar_lea.vmem %s1, 52
    %262 = vst.msk [vmem:[%s261] sm:$0x2] %vm258, %v257
    %s263 = scalar_lea.vmem %s1, 83
    %264 = vst.msk [vmem:[%s263] sm:$0x4] %vm258, %v257
    %s265 = scalar_lea.vmem %s1, 114
    %266 = vst.msk [vmem:[%s265] sm:$0x8] %vm258, %v257
    %v267 = vld [vmem:[#allocation0] sm:$0xf]
    %268 = vrot.lane.b32.xlu0 %v267, 106
    %v269 = vpop.permute.xlu0 %268
    %vm270 = vcmask 7168
    %s271 = scalar_lea.vmem %s1, 22
    %272 = vst.msk [vmem:[%s271] sm:$0x1] %vm270, %v269
    %s273 = scalar_lea.vmem %s1, 53
    %274 = vst.msk [vmem:[%s273] sm:$0x2] %vm270, %v269
    %s275 = scalar_lea.vmem %s1, 84
    %276 = vst.msk [vmem:[%s275] sm:$0x4] %vm270, %v269
    %s277 = scalar_lea.vmem %s1, 115
    %278 = vst.msk [vmem:[%s277] sm:$0x8] %vm270, %v269
    %v279 = vld [vmem:[#allocation0] sm:$0xf]
    %280 = vrot.lane.b32.xlu0 %v279, 105
    %v281 = vpop.permute.xlu0 %280
    %vm282 = vcmask 7168
    %s283 = scalar_lea.vmem %s1, 23
    %284 = vst.msk [vmem:[%s283] sm:$0x1] %vm282, %v281
    %s285 = scalar_lea.vmem %s1, 54
    %286 = vst.msk [vmem:[%s285] sm:$0x2] %vm282, %v281
    %s287 = scalar_lea.vmem %s1, 85
    %288 = vst.msk [vmem:[%s287] sm:$0x4] %vm282, %v281
    %s289 = scalar_lea.vmem %s1, 116
    %290 = vst.msk [vmem:[%s289] sm:$0x8] %vm282, %v281
    %v291 = vld [vmem:[#allocation0] sm:$0xf]
    %292 = vrot.lane.b32.xlu0 %v291, 104
    %v293 = vpop.permute.xlu0 %292
    %vm294 = vcmask 7168
    %s295 = scalar_lea.vmem %s1, 24
    %296 = vst.msk [vmem:[%s295] sm:$0x1] %vm294, %v293
    %s297 = scalar_lea.vmem %s1, 55
    %298 = vst.msk [vmem:[%s297] sm:$0x2] %vm294, %v293
    %s299 = scalar_lea.vmem %s1, 86
    %300 = vst.msk [vmem:[%s299] sm:$0x4] %vm294, %v293
    %s301 = scalar_lea.vmem %s1, 117
    %302 = vst.msk [vmem:[%s301] sm:$0x8] %vm294, %v293
    %v303 = vld [vmem:[#allocation0] sm:$0xf]
    %304 = vrot.lane.b32.xlu0 %v303, 103
    %v305 = vpop.permute.xlu0 %304
    %vm306 = vcmask 7168
    %s307 = scalar_lea.vmem %s1, 25
    %308 = vst.msk [vmem:[%s307] sm:$0x1] %vm306, %v305
    %s309 = scalar_lea.vmem %s1, 56
    %310 = vst.msk [vmem:[%s309] sm:$0x2] %vm306, %v305
    %s311 = scalar_lea.vmem %s1, 87
    %312 = vst.msk [vmem:[%s311] sm:$0x4] %vm306, %v305
    %s313 = scalar_lea.vmem %s1, 118
    %314 = vst.msk [vmem:[%s313] sm:$0x8] %vm306, %v305
    %v315 = vld [vmem:[#allocation0] sm:$0xf]
    %316 = vrot.lane.b32.xlu0 %v315, 102
    %v317 = vpop.permute.xlu0 %316
    %vm318 = vcmask 7168
    %s319 = scalar_lea.vmem %s1, 26
    %320 = vst.msk [vmem:[%s319] sm:$0x1] %vm318, %v317
    %s321 = scalar_lea.vmem %s1, 57
    %322 = vst.msk [vmem:[%s321] sm:$0x2] %vm318, %v317
    %s323 = scalar_lea.vmem %s1, 88
    %324 = vst.msk [vmem:[%s323] sm:$0x4] %vm318, %v317
    %s325 = scalar_lea.vmem %s1, 119
    %326 = vst.msk [vmem:[%s325] sm:$0x8] %vm318, %v317
    %v327 = vld [vmem:[#allocation0] sm:$0xf]
    %328 = vrot.lane.b32.xlu0 %v327, 101
    %v329 = vpop.permute.xlu0 %328
    %vm330 = vcmask 7168
    %s331 = scalar_lea.vmem %s1, 27
    %332 = vst.msk [vmem:[%s331] sm:$0x1] %vm330, %v329
    %s333 = scalar_lea.vmem %s1, 58
    %334 = vst.msk [vmem:[%s333] sm:$0x2] %vm330, %v329
    %s335 = scalar_lea.vmem %s1, 89
    %336 = vst.msk [vmem:[%s335] sm:$0x4] %vm330, %v329
    %s337 = scalar_lea.vmem %s1, 120
    %338 = vst.msk [vmem:[%s337] sm:$0x8] %vm330, %v329
    %v339 = vld [vmem:[#allocation0] sm:$0xf]
    %340 = vrot.lane.b32.xlu0 %v339, 100
    %v341 = vpop.permute.xlu0 %340
    %vm342 = vcmask 7168
    %s343 = scalar_lea.vmem %s1, 28
    %344 = vst.msk [vmem:[%s343] sm:$0x1] %vm342, %v341
    %s345 = scalar_lea.vmem %s1, 59
    %346 = vst.msk [vmem:[%s345] sm:$0x2] %vm342, %v341
    %s347 = scalar_lea.vmem %s1, 90
    %348 = vst.msk [vmem:[%s347] sm:$0x4] %vm342, %v341
    %s349 = scalar_lea.vmem %s1, 121
    %350 = vst.msk [vmem:[%s349] sm:$0x8] %vm342, %v341
    %v351 = vld [vmem:[#allocation0] sm:$0xf]
    %352 = vrot.lane.b32.xlu0 %v351, 99
    %v353 = vpop.permute.xlu0 %352
    %vm354 = vcmask 7168
    %s355 = scalar_lea.vmem %s1, 29
    %356 = vst.msk [vmem:[%s355] sm:$0x1] %vm354, %v353
    %s357 = scalar_lea.vmem %s1, 60
    %358 = vst.msk [vmem:[%s357] sm:$0x2] %vm354, %v353
    %s359 = scalar_lea.vmem %s1, 91
    %360 = vst.msk [vmem:[%s359] sm:$0x4] %vm354, %v353
    %s361 = scalar_lea.vmem %s1, 122
    %362 = vst.msk [vmem:[%s361] sm:$0x8] %vm354, %v353
    %v363 = vld [vmem:[#allocation0] sm:$0xf]
    %364 = vrot.lane.b32.xlu0 %v363, 98
    %v365 = vpop.permute.xlu0 %364
    %vm366 = vcmask 7168
    %s367 = scalar_lea.vmem %s1, 30
    %368 = vst.msk [vmem:[%s367] sm:$0x1] %vm366, %v365
    %s369 = scalar_lea.vmem %s1, 61
    %370 = vst.msk [vmem:[%s369] sm:$0x2] %vm366, %v365
    %s371 = scalar_lea.vmem %s1, 92
    %372 = vst.msk [vmem:[%s371] sm:$0x4] %vm366, %v365
    %s373 = scalar_lea.vmem %s1, 123
    %374 = vst.msk [vmem:[%s373] sm:$0x8] %vm366, %v365
    %v375 = vld [vmem:[#allocation0] sm:$0xf]
    %376 = vrot.lane.b32.xlu0 %v375, 97
    %v377 = vpop.permute.xlu0 %376
    %vm378 = vcmask 7168
    %s379 = scalar_lea.vmem %s1, 31
    %380 = vst.msk [vmem:[%s379] sm:$0x1] %vm378, %v377
    %s381 = scalar_lea.vmem %s1, 62
    %382 = vst.msk [vmem:[%s381] sm:$0x2] %vm378, %v377
    %s383 = scalar_lea.vmem %s1, 93
    %384 = vst.msk [vmem:[%s383] sm:$0x4] %vm378, %v377
    %s385 = scalar_lea.vmem %s1, 124
    %386 = vst.msk [vmem:[%s385] sm:$0x8] %vm378, %v377

// kernel: baseline_unet_pallas.17
$region0: #{baseline_unet_pallas.17}
  #allocation0 [shape = 'u32[]', space=smem, size = 0x4, offset = 0x4, fixed_abs, tag = 'smem constant byte address 0x4 - core index']
  #allocation1 [shape = 'u32[144,128]{1,0:T(1,128)}', space=vmem, size = 0x12000, scoped, tag = 'internal scratch']
  %s0 = inlined_call_operand.vmem [shape: f32[32,144], index: 0, kind: input, shape index: {}]
  %s1 = inlined_call_operand.vmem [shape: f32[144,32], index: 1, kind: input, shape index: {}]
  %s2 = inlined_call_operand.vmem [shape: f32[32,1], index: 2, kind: input, shape index: {}]
  %s3 = inlined_call_operand.vmem [shape: f32[32,1], index: 3, kind: input, shape index: {}]
  %s4 = inlined_call_operand.vmem [shape: f32[32,32], index: 4, kind: output, shape index: {}]
  %s5 = sld [smem:[#allocation0]]
  $region26: #{baseline_unet_pallas.17} parent=0
    _
  %s7 = ssub.s32 1, %s5
  %s8 = scalar_select 0, %s7, %s5
  // Predicated region
  $region2: #{baseline_unet_pallas.17} parent=0 // pred_check
    _
  $region3: #{baseline_unet_pallas.17} parent=0 // pred_check_branch
    %10 = sbr.rel (0) target = $region5
  $region4: #{baseline_unet_pallas.17} parent=0 // pred_region
    _
  $region5: #{baseline_unet_pallas.17} parent=0 // pred_fallthru
    _
  // Predicated region
  $region6: #{baseline_unet_pallas.17} parent=0 // pred_check
    _
  $region7: #{baseline_unet_pallas.17} parent=0 // pred_check_branch
    %12 = sbr.rel (0) target = $region9
  $region8: #{baseline_unet_pallas.17} parent=0 // pred_region
    _
  $region9: #{baseline_unet_pallas.17} parent=0 // pred_fallthru
    _
  // Predicated region
  $region10: #{baseline_unet_pallas.17} parent=0 // pred_check
    _
  $region11: #{baseline_unet_pallas.17} parent=0 // pred_check_branch
    %14 = sbr.rel (0) target = $region13
  $region12: #{baseline_unet_pallas.17} parent=0 // pred_region
    _
  $region13: #{baseline_unet_pallas.17} parent=0 // pred_fallthru
    _
  // Predicated region
  $region14: #{baseline_unet_pallas.17} parent=0 // pred_check
    _
  $region15: #{baseline_unet_pallas.17} parent=0 // pred_check_branch
    %16 = sbr.rel (0) target = $region17
  $region16: #{baseline_unet_pallas.17} parent=0 // pred_region
    _
  $region17: #{baseline_unet_pallas.17} parent=0 // pred_fallthru
    _
  %v17 = vld [vmem:[%s0] sm:$0xff]
  %v18 = vld [vmem:[%s0 + $0x8] sm:$0xff]
  %v19 = vld [vmem:[%s0 + $0x10] sm:$0xff]
  %v20 = vld [vmem:[%s0 + $0x18] sm:$0xff]
  %v21 = vld [vmem:[%s0 + $0x20] sm:$0xff]
  %v22 = vld [vmem:[%s0 + $0x28] sm:$0xff]
  %v23 = vld [vmem:[%s0 + $0x30] sm:$0xff]
  %v24 = vld [vmem:[%s0 + $0x38] sm:$0xff]
  %v25 = vld [vmem:[%s1] sm:$0xff]
  %v26 = vld [vmem:[%s1 + $0x8] sm:$0xff]
  %v27 = vld [vmem:[%s1 + $0x10] sm:$0xff]
  %v28 = vld [vmem:[%s1 + $0x18] sm:$0xff]
  %v29 = vld [vmem:[%s1 + $0x20] sm:$0xff]
  %v30 = vld [vmem:[%s1 + $0x28] sm:$0xff]
  %v31 = vld [vmem:[%s1 + $0x30] sm:$0xff]
  %v32 = vld [vmem:[%s1 + $0x38] sm:$0xff]
  %v33 = vld [vmem:[%s1 + $0x40] sm:$0xff]
  %v34 = vld [vmem:[%s1 + $0x48] sm:$0xff]
  %v35 = vld [vmem:[%s1 + $0x50] sm:$0xff]
  %v36 = vld [vmem:[%s1 + $0x58] sm:$0xff]
  %v37 = vld [vmem:[%s1 + $0x60] sm:$0xff]
  %v38 = vld [vmem:[%s1 + $0x68] sm:$0xff]
  %v39 = vld [vmem:[%s1 + $0x70] sm:$0xff]
  %v40 = vld [vmem:[%s1 + $0x78] sm:$0xff]
  %v41 = vld [vmem:[%s1 + $0x80] sm:$0xff]
  %v42 = vld [vmem:[%s1 + $0x88] sm:$0xff]
  %vm43 = vcmask 130048
  %v45 = vsel %vm43, %v18, 0
  %v48 = vsel %vm43, %v20, 0
  %v51 = vsel %vm43, %v22, 0
  %v54 = vsel %vm43, %v24, 0
  %56 = vmatprep.subr.mxu0 0.0
  %v57 = vand.u32 %v25, 4294901760
  %58 = vmatpush1.msra.mxu0 %v57
  %59 = vmatprep.subr.mxu0 0.0
  %v60 = vand.u32 %v26, 4294901760
  %61 = vmatpush1.msra.mxu0 %v60
  %62 = vmatprep.subr.mxu0 0.0
  %v63 = vand.u32 %v27, 4294901760
  %64 = vmatpush1.msra.mxu0 %v63
  %65 = vmatprep.subr.mxu0 0.0
  %v66 = vand.u32 %v28, 4294901760
  %67 = vmatpush1.msra.mxu0 %v66
  %68 = vmatprep.subr.mxu0 0.0
  %v69 = vand.u32 %v29, 4294901760
  %70 = vmatpush1.msra.mxu0 %v69
  %71 = vmatprep.subr.mxu0 0.0
  %v72 = vand.u32 %v30, 4294901760
  %73 = vmatpush1.msra.mxu0 %v72
  %74 = vmatprep.subr.mxu0 0.0
  %v75 = vand.u32 %v31, 4294901760
  %76 = vmatpush1.msra.mxu0 %v75
  %77 = vmatprep.subr.mxu0 0.0
  %v78 = vand.u32 %v32, 4294901760
  %79 = vmatpush1.msra.mxu0 %v78
  %80 = vmatprep.subr.mxu0 0.0
  %v81 = vand.u32 %v33, 4294901760
  %82 = vmatpush1.msra.mxu0 %v81
  %83 = vmatprep.subr.mxu0 0.0
  %v84 = vand.u32 %v34, 4294901760
  %85 = vmatpush1.msra.mxu0 %v84
  %86 = vmatprep.subr.mxu0 0.0
  %v87 = vand.u32 %v35, 4294901760
  %88 = vmatpush1.msra.mxu0 %v87
  %89 = vmatprep.subr.mxu0 0.0
  %v90 = vand.u32 %v36, 4294901760
  %91 = vmatpush1.msra.mxu0 %v90
  %92 = vmatprep.subr.mxu0 0.0
  %v93 = vand.u32 %v37, 4294901760
  %94 = vmatpush1.msra.mxu0 %v93
  %95 = vmatprep.subr.mxu0 0.0
  %v96 = vand.u32 %v38, 4294901760
  %97 = vmatpush1.msra.mxu0 %v96
  %98 = vmatprep.subr.mxu0 0.0
  %v99 = vand.u32 %v39, 4294901760
  %100 = vmatpush1.msra.mxu0 %v99
  %101 = vmatprep.subr.mxu0 0.0
  %v102 = vand.u32 %v40, 4294901760
  %103 = vmatpush1.msra.mxu0 %v102
  %104 = vmatprep.subr.mxu0 0.0
  %v105 = vand.u32 %v41, 4294901760
  %106 = vmatpush1.msra.mxu0 %v105
  %107 = vmatprep.subr.mxu0 0.0
  %v108 = vand.u32 %v42, 4294901760
  %109 = vmatpush1.msra.mxu0 %v108
  %110 = vmatprep.subr.mxu0 0.0
  %111 = vmatpush1.msra.mxu0 0.0
  %112 = vmatprep.subr.mxu0 0.0
  %113 = vmatpush1.msra.mxu0 0.0
  %114 = vmatprep.subr.mxu0 0.0
  %115 = vmatpush1.msra.mxu0 0.0
  %116 = vmatprep.subr.mxu0 0.0
  %117 = vmatpush1.msra.mxu0 0.0
  %118 = vmatprep.subr.mxu0 0.0
  %119 = vmatpush1.msra.mxu0 0.0
  %120 = vmatprep.subr.mxu0 0.0
  %121 = vmatpush1.msra.mxu0 0.0
  %122 = vmatprep.subr.mxu0 0.0
  %123 = vmatpush1.msra.mxu0 0.0
  %124 = vmatprep.subr.mxu0 0.0
  %125 = vmatpush1.msra.mxu0 0.0
  %126 = vmatprep.subr.mxu0 0.0
  %127 = vmatpush1.msra.mxu0 0.0
  %128 = vmatprep.subr.mxu0 0.0
  %129 = vmatpush1.msra.mxu0 0.0
  %130 = vmatprep.subr.mxu0 0.0
  %131 = vmatpush1.msra.mxu0 0.0
  %132 = vmatprep.subr.mxu0 0.0
  %133 = vmatpush1.msra.mxu0 0.0
  %134 = vmatprep.subr.mxu0 0.0
  %135 = vmatpush1.msra.mxu0 0.0
  %136 = vmatprep.subr.mxu0 0.0
  %137 = vmatpush1.msra.mxu0 0.0
  %v138 = vand.u32 %v45, 4294901760
  %v139 = vsub.f32 %v45, %v138
  %v140 = vand.u32 %v139, 4294901760
  %v141 = vsub.f32 %v139, %v140
  %v142 = vand.u32 %v141, 4294901760
  %143 = vmatprep.mubr.f32.mxu0 %v142
  %v144 = vand.u32 %v17, 4294901760
  %v145 = vsub.f32 %v17, %v144
  %v146 = vand.u32 %v145, 4294901760
  %v147 = vsub.f32 %v145, %v146
  %v148 = vand.u32 %v147, 4294901760
  %149 = vmatmul.mubr.f32.gmra.mrb[0].mxu0 %v148
  %v150 = vpop.f32.mrb[0].mxu0
  %v151 = vadd.f32 0.0, %v150
  %v152 = vpop.f32.mrb[0].mxu0
  %v153 = vand.u32 %v48, 4294901760
  %v154 = vsub.f32 %v48, %v153
  %v155 = vand.u32 %v154, 4294901760
  %v156 = vsub.f32 %v154, %v155
  %v157 = vand.u32 %v156, 4294901760
  %158 = vmatprep.mubr.f32.mxu0 %v157
  %v159 = vand.u32 %v19, 4294901760
  %v160 = vsub.f32 %v19, %v159
  %v161 = vand.u32 %v160, 4294901760
  %v162 = vsub.f32 %v160, %v161
  %v163 = vand.u32 %v162, 4294901760
  %164 = vmatmul.mubr.f32.gmra.mrb[0].mxu0 %v163
  %v165 = vpop.f32.mrb[0].mxu0
  %v166 = vadd.f32 0.0, %v165
  %v167 = vpop.f32.mrb[0].mxu0
  %v168 = vand.u32 %v51, 4294901760
  %v169 = vsub.f32 %v51, %v168
  %v170 = vand.u32 %v169, 4294901760
  %v171 = vsub.f32 %v169, %v170
  %v172 = vand.u32 %v171, 4294901760
  %173 = vmatprep.mubr.f32.mxu0 %v172
  %v174 = vand.u32 %v21, 4294901760
  %v175 = vsub.f32 %v21, %v174
  %v176 = vand.u32 %v175, 4294901760
  %v177 = vsub.f32 %v175, %v176
  %v178 = vand.u32 %v177, 4294901760
  %179 = vmatmul.mubr.f32.gmra.mrb[0].mxu0 %v178
  %v180 = vpop.f32.mrb[0].mxu0
  %v181 = vadd.f32 0.0, %v180
  %v182 = vpop.f32.mrb[0].mxu0
  %v183 = vand.u32 %v54, 4294901760
  %v184 = vsub.f32 %v54, %v183
  %v185 = vand.u32 %v184, 4294901760
  %v186 = vsub.f32 %v184, %v185
  %v187 = vand.u32 %v186, 4294901760
  %188 = vmatprep.mubr.f32.mxu0 %v187
  %v189 = vand.u32 %v23, 4294901760
  %v190 = vsub.f32 %v23, %v189
  %v191 = vand.u32 %v190, 4294901760
  %v192 = vsub.f32 %v190, %v191
  %v193 = vand.u32 %v192, 4294901760
  %194 = vmatmul.mubr.f32.gmra.mrb[0].mxu0 %v193
  %v195 = vpop.f32.mrb[0].mxu0
  %v196 = vadd.f32 0.0, %v195
  %v197 = vpop.f32.mrb[0].mxu0
  %198 = vdwg.mxu0
  %199 = vmatprep.subr.mxu0 0.0
  %v200 = vand.u32 %v25, 4294901760
  %v201 = vsub.f32 %v25, %v200
  %v202 = vand.u32 %v201, 4294901760
  %v203 = vsub.f32 %v201, %v202
  %v204 = vand.u32 %v203, 4294901760
  %205 = vmatpush1.msra.mxu0 %v204
  %206 = vmatprep.subr.mxu0 0.0
  %v207 = vand.u32 %v26, 4294901760
  %v208 = vsub.f32 %v26, %v207
  %v209 = vand.u32 %v208, 4294901760
  %v210 = vsub.f32 %v208, %v209
  %v211 = vand.u32 %v210, 4294901760
  %212 = vmatpush1.msra.mxu0 %v211
  %213 = vmatprep.subr.mxu0 0.0
  %v214 = vand.u32 %v27, 4294901760
  %v215 = vsub.f32 %v27, %v214
  %v216 = vand.u32 %v215, 4294901760
  %v217 = vsub.f32 %v215, %v216
  %v218 = vand.u32 %v217, 4294901760
  %219 = vmatpush1.msra.mxu0 %v218
  %220 = vmatprep.subr.mxu0 0.0
  %v221 = vand.u32 %v28, 4294901760
  %v222 = vsub.f32 %v28, %v221
  %v223 = vand.u32 %v222, 4294901760
  %v224 = vsub.f32 %v222, %v223
  %v225 = vand.u32 %v224, 4294901760
  %226 = vmatpush1.msra.mxu0 %v225
  %227 = vmatprep.subr.mxu0 0.0
  %v228 = vand.u32 %v29, 4294901760
  %v229 = vsub.f32 %v29, %v228
  %v230 = vand.u32 %v229, 4294901760
  %v231 = vsub.f32 %v229, %v230
  %v232 = vand.u32 %v231, 4294901760
  %233 = vmatpush1.msra.mxu0 %v232
  %234 = vmatprep.subr.mxu0 0.0
  %v235 = vand.u32 %v30, 4294901760
  %v236 = vsub.f32 %v30, %v235
  %v237 = vand.u32 %v236, 4294901760
  %v238 = vsub.f32 %v236, %v237
  %v239 = vand.u32 %v238, 4294901760
  %240 = vmatpush1.msra.mxu0 %v239
  %241 = vmatprep.subr.mxu0 0.0
  %v242 = vand.u32 %v31, 4294901760
  %v243 = vsub.f32 %v31, %v242
  %v244 = vand.u32 %v243, 4294901760
  %v245 = vsub.f32 %v243, %v244
  %v246 = vand.u32 %v245, 4294901760
  %247 = vmatpush1.msra.mxu0 %v246
  %248 = vmatprep.subr.mxu0 0.0
  %v249 = vand.u32 %v32, 4294901760
  %v250 = vsub.f32 %v32, %v249
  %v251 = vand.u32 %v250, 4294901760
  %v252 = vsub.f32 %v250, %v251
  %v253 = vand.u32 %v252, 4294901760
  %254 = vmatpush1.msra.mxu0 %v253
  %255 = vmatprep.subr.mxu0 0.0
  %v256 = vand.u32 %v33, 4294901760
  %v257 = vsub.f32 %v33, %v256
  %v258 = vand.u32 %v257, 4294901760
  %v259 = vsub.f32 %v257, %v258
  %v260 = vand.u32 %v259, 4294901760
  %261 = vmatpush1.msra.mxu0 %v260
  %262 = vmatprep.subr.mxu0 0.0
  %v263 = vand.u32 %v34, 4294901760
  %v264 = vsub.f32 %v34, %v263
  %v265 = vand.u32 %v264, 4294901760
  %v266 = vsub.f32 %v264, %v265
  %v267 = vand.u32 %v266, 4294901760
  %268 = vmatpush1.msra.mxu0 %v267
  %269 = vmatprep.subr.mxu0 0.0
  %v270 = vand.u32 %v35, 4294901760
  %v271 = vsub.f32 %v35, %v270
  %v272 = vand.u32 %v271, 4294901760
  %v273 = vsub.f32 %v271, %v272
  %v274 = vand.u32 %v273, 4294901760
  %275 = vmatpush1.msra.mxu0 %v274
  %276 = vmatprep.subr.mxu0 0.0
  %v277 = vand.u32 %v36, 4294901760
  %v278 = vsub.f32 %v36, %v277
  %v279 = vand.u32 %v278, 4294901760
  %v280 = vsub.f32 %v278, %v279
  %v281 = vand.u32 %v280, 4294901760
  %282 = vmatpush1.msra.mxu0 %v281
  %283 = vmatprep.subr.mxu0 0.0
  %v284 = vand.u32 %v37, 4294901760
  %v285 = vsub.f32 %v37, %v284
  %v286 = vand.u32 %v285, 4294901760
  %v287 = vsub.f32 %v285, %v286
  %v288 = vand.u32 %v287, 4294901760
  %289 = vmatpush1.msra.mxu0 %v288
  %290 = vmatprep.subr.mxu0 0.0
  %v291 = vand.u32 %v38, 4294901760
  %v292 = vsub.f32 %v38, %v291
  %v293 = vand.u32 %v292, 4294901760
  %v294 = vsub.f32 %v292, %v293
  %v295 = vand.u32 %v294, 4294901760
  %296 = vmatpush1.msra.mxu0 %v295
  %297 = vmatprep.subr.mxu0 0.0
  %v298 = vand.u32 %v39, 4294901760
  %v299 = vsub.f32 %v39, %v298
  %v300 = vand.u32 %v299, 4294901760
  %v301 = vsub.f32 %v299, %v300
  %v302 = vand.u32 %v301, 4294901760
  %303 = vmatpush1.msra.mxu0 %v302
  %304 = vmatprep.subr.mxu0 0.0
  %v305 = vand.u32 %v40, 4294901760
  %v306 = vsub.f32 %v40, %v305
  %v307 = vand.u32 %v306, 4294901760
  %v308 = vsub.f32 %v306, %v307
  %v309 = vand.u32 %v308, 4294901760
  %310 = vmatpush1.msra.mxu0 %v309
  %311 = vmatprep.subr.mxu0 0.0
  %v312 = vand.u32 %v41, 4294901760
  %v313 = vsub.f32 %v41, %v312
  %v314 = vand.u32 %v313, 4294901760
  %v315 = vsub.f32 %v313, %v314
  %v316 = vand.u32 %v315, 4294901760
  %317 = vmatpush1.msra.mxu0 %v316
  %318 = vmatprep.subr.mxu0 0.0
  %v319 = vand.u32 %v42, 4294901760
  %v320 = vsub.f32 %v42, %v319
  %v321 = vand.u32 %v320, 4294901760
  %v322 = vsub.f32 %v320, %v321
  %v323 = vand.u32 %v322, 4294901760
  %324 = vmatpush1.msra.mxu0 %v323
  %325 = vmatprep.subr.mxu0 0.0
  %326 = vmatpush1.msra.mxu0 0.0
  %327 = vmatprep.subr.mxu0 0.0
  %328 = vmatpush1.msra.mxu0 0.0
  %329 = vmatprep.subr.mxu0 0.0
  %330 = vmatpush1.msra.mxu0 0.0
  %331 = vmatprep.subr.mxu0 0.0
  %332 = vmatpush1.msra.mxu0 0.0
  %333 = vmatprep.subr.mxu0 0.0
  %334 = vmatpush1.msra.mxu0 0.0
  %335 = vmatprep.subr.mxu0 0.0
  %336 = vmatpush1.msra.mxu0 0.0
  %337 = vmatprep.subr.mxu0 0.0
  %338 = vmatpush1.msra.mxu0 0.0
  %339 = vmatprep.subr.mxu0 0.0
  %340 = vmatpush1.msra.mxu0 0.0
  %341 = vmatprep.subr.mxu0 0.0
  %342 = vmatpush1.msra.mxu0 0.0
  %343 = vmatprep.subr.mxu0 0.0
  %344 = vmatpush1.msra.mxu0 0.0
  %345 = vmatprep.subr.mxu0 0.0
  %346 = vmatpush1.msra.mxu0 0.0
  %347 = vmatprep.subr.mxu0 0.0
  %348 = vmatpush1.msra.mxu0 0.0
  %349 = vmatprep.subr.mxu0 0.0
  %350 = vmatpush1.msra.mxu0 0.0
  %351 = vmatprep.subr.mxu0 0.0
  %352 = vmatpush1.msra.mxu0 0.0
  %v353 = vand.u32 %v45, 4294901760
  %354 = vmatprep.mubr.f32.mxu0 %v353
  %v355 = vand.u32 %v17, 4294901760
  %356 = vmatmul.mubr.f32.gmra.mrb[0].mxu0 %v355
  %v357 = vpop.f32.mrb[0].mxu0
  %v358 = vadd.f32 %v151, %v357
  %v359 = vpop.f32.mrb[0].mxu0
  %v360 = vand.u32 %v48, 4294901760
  %361 = vmatprep.mubr.f32.mxu0 %v360
  %v362 = vand.u32 %v19, 4294901760
  %363 = vmatmul.mubr.f32.gmra.mrb[0].mxu0 %v362
  %v364 = vpop.f32.mrb[0].mxu0
  %v365 = vadd.f32 %v166, %v364
  %v366 = vpop.f32.mrb[0].mxu0
  %v367 = vand.u32 %v51, 4294901760
  %368 = vmatprep.mubr.f32.mxu0 %v367
  %v369 = vand.u32 %v21, 4294901760
  %370 = vmatmul.mubr.f32.gmra.mrb[0].mxu0 %v369
  %v371 = vpop.f32.mrb[0].mxu0
  %v372 = vadd.f32 %v181, %v371
  %v373 = vpop.f32.mrb[0].mxu0
  %v374 = vand.u32 %v54, 4294901760
  %375 = vmatprep.mubr.f32.mxu0 %v374
  %v376 = vand.u32 %v23, 4294901760
  %377 = vmatmul.mubr.f32.gmra.mrb[0].mxu0 %v376
  %v378 = vpop.f32.mrb[0].mxu0
  %v379 = vadd.f32 %v196, %v378
  %v380 = vpop.f32.mrb[0].mxu0
  %381 = vdwg.mxu0
  %382 = vmatprep.subr.mxu0 0.0
  %v383 = vand.u32 %v25, 4294901760
  %v384 = vsub.f32 %v25, %v383
  %385 = vmatpush1.msra.mxu0 %v384
  %386 = vmatprep.subr.mxu0 0.0
  %v387 = vand.u32 %v26, 4294901760
  %v388 = vsub.f32 %v26, %v387
  %389 = vmatpush1.msra.mxu0 %v388
  %390 = vmatprep.subr.mxu0 0.0
  %v391 = vand.u32 %v27, 4294901760
  %v392 = vsub.f32 %v27, %v391
  %393 = vmatpush1.msra.mxu0 %v392
  %394 = vmatprep.subr.mxu0 0.0
  %v395 = vand.u32 %v28, 4294901760
  %v396 = vsub.f32 %v28, %v395
  %397 = vmatpush1.msra.mxu0 %v396
  %398 = vmatprep.subr.mxu0 0.0
  %v399 = vand.u32 %v29, 4294901760
  %v400 = vsub.f32 %v29, %v399
  %401 = vmatpush1.msra.mxu0 %v400
  %402 = vmatprep.subr.mxu0 0.0
  %v403 = vand.u32 %v30, 4294901760
  %v404 = vsub.f32 %v30, %v403
  %405 = vmatpush1.msra.mxu0 %v404
  %406 = vmatprep.subr.mxu0 0.0
  %v407 = vand.u32 %v31, 4294901760
  %v408 = vsub.f32 %v31, %v407
  %409 = vmatpush1.msra.mxu0 %v408
  %410 = vmatprep.subr.mxu0 0.0
  %v411 = vand.u32 %v32, 4294901760
  %v412 = vsub.f32 %v32, %v411
  %413 = vmatpush1.msra.mxu0 %v412
  %414 = vmatprep.subr.mxu0 0.0
  %v415 = vand.u32 %v33, 4294901760
  %v416 = vsub.f32 %v33, %v415
  %417 = vmatpush1.msra.mxu0 %v416
  %418 = vmatprep.subr.mxu0 0.0
  %v419 = vand.u32 %v34, 4294901760
  %v420 = vsub.f32 %v34, %v419
  %421 = vmatpush1.msra.mxu0 %v420
  %422 = vmatprep.subr.mxu0 0.0
  %v423 = vand.u32 %v35, 4294901760
  %v424 = vsub.f32 %v35, %v423
  %425 = vmatpush1.msra.mxu0 %v424
  %426 = vmatprep.subr.mxu0 0.0
  %v427 = vand.u32 %v36, 4294901760
  %v428 = vsub.f32 %v36, %v427
  %429 = vmatpush1.msra.mxu0 %v428
  %430 = vmatprep.subr.mxu0 0.0
  %v431 = vand.u32 %v37, 4294901760
  %v432 = vsub.f32 %v37, %v431
  %433 = vmatpush1.msra.mxu0 %v432
  %434 = vmatprep.subr.mxu0 0.0
  %v435 = vand.u32 %v38, 4294901760
  %v436 = vsub.f32 %v38, %v435
  %437 = vmatpush1.msra.mxu0 %v436
  %438 = vmatprep.subr.mxu0 0.0
  %v439 = vand.u32 %v39, 4294901760
  %v440 = vsub.f32 %v39, %v439
  %441 = vmatpush1.msra.mxu0 %v440
  %442 = vmatprep.subr.mxu0 0.0
  %v443 = vand.u32 %v40, 4294901760
  %v444 = vsub.f32 %v40, %v443
  %445 = vmatpush1.msra.mxu0 %v444
  %446 = vmatprep.subr.mxu0 0.0
  %v447 = vand.u32 %v41, 4294901760
  %v448 = vsub.f32 %v41, %v447
  %449 = vmatpush1.msra.mxu0 %v448
  %450 = vmatprep.subr.mxu0 0.0
  %v451 = vand.u32 %v42, 4294901760
  %v452 = vsub.f32 %v42, %v451
  %453 = vmatpush1.msra.mxu0 %v452
  %454 = vmatprep.subr.mxu0 0.0
  %455 = vmatpush1.msra.mxu0 0.0
  %456 = vmatprep.subr.mxu0 0.0
  %457 = vmatpush1.msra.mxu0 0.0
  %458 = vmatprep.subr.mxu0 0.0
  %459 = vmatpush1.msra.mxu0 0.0
  %460 = vmatprep.subr.mxu0 0.0
  %461 = vmatpush1.msra.mxu0 0.0
  %462 = vmatprep.subr.mxu0 0.0
  %463 = vmatpush1.msra.mxu0 0.0
  %464 = vmatprep.subr.mxu0 0.0
  %465 = vmatpush1.msra.mxu0 0.0
  %466 = vmatprep.subr.mxu0 0.0
  %467 = vmatpush1.msra.mxu0 0.0
  %468 = vmatprep.subr.mxu0 0.0
  %469 = vmatpush1.msra.mxu0 0.0
  %470 = vmatprep.subr.mxu0 0.0
  %471 = vmatpush1.msra.mxu0 0.0
  %472 = vmatprep.subr.mxu0 0.0
  %473 = vmatpush1.msra.mxu0 0.0
  %474 = vmatprep.subr.mxu0 0.0
  %475 = vmatpush1.msra.mxu0 0.0
  %476 = vmatprep.subr.mxu0 0.0
  %477 = vmatpush1.msra.mxu0 0.0
  %478 = vmatprep.subr.mxu0 0.0
  %479 = vmatpush1.msra.mxu0 0.0
  %480 = vmatprep.subr.mxu0 0.0
  %481 = vmatpush1.msra.mxu0 0.0
  %v482 = vand.u32 %v45, 4294901760
  %v483 = vsub.f32 %v45, %v482
  %484 = vmatprep.mubr.f32.mxu0 %v483
  %v485 = vand.u32 %v17, 4294901760
  %v486 = vsub.f32 %v17, %v485
  %487 = vmatmul.mubr.f32.gmra.mrb[0].mxu0 %v486
  %v488 = vpop.f32.mrb[0].mxu0
  %v489 = vadd.f32 %v358, %v488
  %v490 = vpop.f32.mrb[0].mxu0
  %v491 = vand.u32 %v48, 4294901760
  %v492 = vsub.f32 %v48, %v491
  %493 = vmatprep.mubr.f32.mxu0 %v492
  %v494 = vand.u32 %v19, 4294901760
  %v495 = vsub.f32 %v19, %v494
  %496 = vmatmul.mubr.f32.gmra.mrb[0].mxu0 %v495
  %v497 = vpop.f32.mrb[0].mxu0
  %v498 = vadd.f32 %v365, %v497
  %v499 = vpop.f32.mrb[0].mxu0
  %v500 = vand.u32 %v51, 4294901760
  %v501 = vsub.f32 %v51, %v500
  %502 = vmatprep.mubr.f32.mxu0 %v501
  %v503 = vand.u32 %v21, 4294901760
  %v504 = vsub.f32 %v21, %v503
  %505 = vmatmul.mubr.f32.gmra.mrb[0].mxu0 %v504
  %v506 = vpop.f32.mrb[0].mxu0
  %v507 = vadd.f32 %v372, %v506
  %v508 = vpop.f32.mrb[0].mxu0
  %v509 = vand.u32 %v54, 4294901760
  %v510 = vsub.f32 %v54, %v509
  %511 = vmatprep.mubr.f32.mxu0 %v510
  %v512 = vand.u32 %v23, 4294901760
  %v513 = vsub.f32 %v23, %v512
  %514 = vmatmul.mubr.f32.gmra.mrb[0].mxu0 %v513
  %v515 = vpop.f32.mrb[0].mxu0
  %v516 = vadd.f32 %v379, %v515
  %v517 = vpop.f32.mrb[0].mxu0
  %518 = vdwg.mxu0
  %519 = vmatprep.subr.mxu0 0.0
  %v520 = vand.u32 %v25, 4294901760
  %521 = vmatpush1.msra.mxu0 %v520
  %522 = vmatprep.subr.mxu0 0.0
  %v523 = vand.u32 %v26, 4294901760
  %524 = vmatpush1.msra.mxu0 %v523
  %525 = vmatprep.subr.mxu0 0.0
  %v526 = vand.u32 %v27, 4294901760
  %527 = vmatpush1.msra.mxu0 %v526
  %528 = vmatprep.subr.mxu0 0.0
  %v529 = vand.u32 %v28, 4294901760
  %530 = vmatpush1.msra.mxu0 %v529
  %531 = vmatprep.subr.mxu0 0.0
  %v532 = vand.u32 %v29, 4294901760
  %533 = vmatpush1.msra.mxu0 %v532
  %534 = vmatprep.subr.mxu0 0.0
  %v535 = vand.u32 %v30, 4294901760
  %536 = vmatpush1.msra.mxu0 %v535
  %537 = vmatprep.subr.mxu0 0.0
  %v538 = vand.u32 %v31, 4294901760
  %539 = vmatpush1.msra.mxu0 %v538
  %540 = vmatprep.subr.mxu0 0.0
  %v541 = vand.u32 %v32, 4294901760
  %542 = vmatpush1.msra.mxu0 %v541
  %543 = vmatprep.subr.mxu0 0.0
  %v544 = vand.u32 %v33, 4294901760
  %545 = vmatpush1.msra.mxu0 %v544
  %546 = vmatprep.subr.mxu0 0.0
  %v547 = vand.u32 %v34, 4294901760
  %548 = vmatpush1.msra.mxu0 %v547
  %549 = vmatprep.subr.mxu0 0.0
  %v550 = vand.u32 %v35, 4294901760
  %551 = vmatpush1.msra.mxu0 %v550
  %552 = vmatprep.subr.mxu0 0.0
  %v553 = vand.u32 %v36, 4294901760
  %554 = vmatpush1.msra.mxu0 %v553
  %555 = vmatprep.subr.mxu0 0.0
  %v556 = vand.u32 %v37, 4294901760
  %557 = vmatpush1.msra.mxu0 %v556
  %558 = vmatprep.subr.mxu0 0.0
  %v559 = vand.u32 %v38, 4294901760
  %560 = vmatpush1.msra.mxu0 %v559
  %561 = vmatprep.subr.mxu0 0.0
  %v562 = vand.u32 %v39, 4294901760
  %563 = vmatpush1.msra.mxu0 %v562
  %564 = vmatprep.subr.mxu0 0.0
  %v565 = vand.u32 %v40, 4294901760
  %566 = vmatpush1.msra.mxu0 %v565
  %567 = vmatprep.subr.mxu0 0.0
  %v568 = vand.u32 %v41, 4294901760
  %569 = vmatpush1.msra.mxu0 %v568
  %570 = vmatprep.subr.mxu0 0.0
  %v571 = vand.u32 %v42, 4294901760
  %572 = vmatpush1.msra.mxu0 %v571
  %573 = vmatprep.subr.mxu0 0.0
  %574 = vmatpush1.msra.mxu0 0.0
  %575 = vmatprep.subr.mxu0 0.0
  %576 = vmatpush1.msra.mxu0 0.0
  %577 = vmatprep.subr.mxu0 0.0
  %578 = vmatpush1.msra.mxu0 0.0
  %579 = vmatprep.subr.mxu0 0.0
  %580 = vmatpush1.msra.mxu0 0.0
  %581 = vmatprep.subr.mxu0 0.0
  %582 = vmatpush1.msra.mxu0 0.0
  %583 = vmatprep.subr.mxu0 0.0
  %584 = vmatpush1.msra.mxu0 0.0
  %585 = vmatprep.subr.mxu0 0.0
  %586 = vmatpush1.msra.mxu0 0.0
  %587 = vmatprep.subr.mxu0 0.0
  %588 = vmatpush1.msra.mxu0 0.0
  %589 = vmatprep.subr.mxu0 0.0
  %590 = vmatpush1.msra.mxu0 0.0
  %591 = vmatprep.subr.mxu0 0.0
  %592 = vmatpush1.msra.mxu0 0.0
  %593 = vmatprep.subr.mxu0 0.0
  %594 = vmatpush1.msra.mxu0 0.0
  %595 = vmatprep.subr.mxu0 0.0
  %596 = vmatpush1.msra.mxu0 0.0
  %597 = vmatprep.subr.mxu0 0.0
  %598 = vmatpush1.msra.mxu0 0.0
  %599 = vmatprep.subr.mxu0 0.0
  %600 = vmatpush1.msra.mxu0 0.0
  %v601 = vand.u32 %v45, 4294901760
  %v602 = vsub.f32 %v45, %v601
  %v603 = vand.u32 %v602, 4294901760
  %604 = vmatprep.mubr.f32.mxu0 %v603
  %v605 = vand.u32 %v17, 4294901760
  %v606 = vsub.f32 %v17, %v605
  %v607 = vand.u32 %v606, 4294901760
  %608 = vmatmul.mubr.f32.gmra.mrb[0].mxu0 %v607
  %v609 = vpop.f32.mrb[0].mxu0
  %v610 = vadd.f32 %v489, %v609
  %v611 = vpop.f32.mrb[0].mxu0
  %v612 = vand.u32 %v48, 4294901760
  %v613 = vsub.f32 %v48, %v612
  %v614 = vand.u32 %v613, 4294901760
  %615 = vmatprep.mubr.f32.mxu0 %v614
  %v616 = vand.u32 %v19, 4294901760
  %v617 = vsub.f32 %v19, %v616
  %v618 = vand.u32 %v617, 4294901760
  %619 = vmatmul.mubr.f32.gmra.mrb[0].mxu0 %v618
  %v620 = vpop.f32.mrb[0].mxu0
  %v621 = vadd.f32 %v498, %v620
  %v622 = vpop.f32.mrb[0].mxu0
  %v623 = vand.u32 %v51, 4294901760
  %v624 = vsub.f32 %v51, %v623
  %v625 = vand.u32 %v624, 4294901760
  %626 = vmatprep.mubr.f32.mxu0 %v625
  %v627 = vand.u32 %v21, 4294901760
  %v628 = vsub.f32 %v21, %v627
  %v629 = vand.u32 %v628, 4294901760
  %630 = vmatmul.mubr.f32.gmra.mrb[0].mxu0 %v629
  %v631 = vpop.f32.mrb[0].mxu0
  %v632 = vadd.f32 %v507, %v631
  %v633 = vpop.f32.mrb[0].mxu0
  %v634 = vand.u32 %v54, 4294901760
  %v635 = vsub.f32 %v54, %v634
  %v636 = vand.u32 %v635, 4294901760
  %637 = vmatprep.mubr.f32.mxu0 %v636
  %v638 = vand.u32 %v23, 4294901760
  %v639 = vsub.f32 %v23, %v638
  %v640 = vand.u32 %v639, 4294901760
  %641 = vmatmul.mubr.f32.gmra.mrb[0].mxu0 %v640
  %v642 = vpop.f32.mrb[0].mxu0
  %v643 = vadd.f32 %v516, %v642
  %v644 = vpop.f32.mrb[0].mxu0
  %645 = vdwg.mxu0
  %646 = vmatprep.subr.mxu0 0.0
  %v647 = vand.u32 %v25, 4294901760
  %v648 = vsub.f32 %v25, %v647
  %v649 = vand.u32 %v648, 4294901760
  %650 = vmatpush1.msra.mxu0 %v649
  %651 = vmatprep.subr.mxu0 0.0
  %v652 = vand.u32 %v26, 4294901760
  %v653 = vsub.f32 %v26, %v652
  %v654 = vand.u32 %v653, 4294901760
  %655 = vmatpush1.msra.mxu0 %v654
  %656 = vmatprep.subr.mxu0 0.0
  %v657 = vand.u32 %v27, 4294901760
  %v658 = vsub.f32 %v27, %v657
  %v659 = vand.u32 %v658, 4294901760
  %660 = vmatpush1.msra.mxu0 %v659
  %661 = vmatprep.subr.mxu0 0.0
  %v662 = vand.u32 %v28, 4294901760
  %v663 = vsub.f32 %v28, %v662
  %v664 = vand.u32 %v663, 4294901760
  %665 = vmatpush1.msra.mxu0 %v664
  %666 = vmatprep.subr.mxu0 0.0
  %v667 = vand.u32 %v29, 4294901760
  %v668 = vsub.f32 %v29, %v667
  %v669 = vand.u32 %v668, 4294901760
  %670 = vmatpush1.msra.mxu0 %v669
  %671 = vmatprep.subr.mxu0 0.0
  %v672 = vand.u32 %v30, 4294901760
  %v673 = vsub.f32 %v30, %v672
  %v674 = vand.u32 %v673, 4294901760
  %675 = vmatpush1.msra.mxu0 %v674
  %676 = vmatprep.subr.mxu0 0.0
  %v677 = vand.u32 %v31, 4294901760
  %v678 = vsub.f32 %v31, %v677
  %v679 = vand.u32 %v678, 4294901760
  %680 = vmatpush1.msra.mxu0 %v679
  %681 = vmatprep.subr.mxu0 0.0
  %v682 = vand.u32 %v32, 4294901760
  %v683 = vsub.f32 %v32, %v682
  %v684 = vand.u32 %v683, 4294901760
  %685 = vmatpush1.msra.mxu0 %v684
  %686 = vmatprep.subr.mxu0 0.0
  %v687 = vand.u32 %v33, 4294901760
  %v688 = vsub.f32 %v33, %v687
  %v689 = vand.u32 %v688, 4294901760
  %690 = vmatpush1.msra.mxu0 %v689
  %691 = vmatprep.subr.mxu0 0.0
  %v692 = vand.u32 %v34, 4294901760
  %v693 = vsub.f32 %v34, %v692
  %v694 = vand.u32 %v693, 4294901760
  %695 = vmatpush1.msra.mxu0 %v694
  %696 = vmatprep.subr.mxu0 0.0
  %v697 = vand.u32 %v35, 4294901760
  %v698 = vsub.f32 %v35, %v697
  %v699 = vand.u32 %v698, 4294901760
  %700 = vmatpush1.msra.mxu0 %v699
  %701 = vmatprep.subr.mxu0 0.0
  %v702 = vand.u32 %v36, 4294901760
  %v703 = vsub.f32 %v36, %v702
  %v704 = vand.u32 %v703, 4294901760
  %705 = vmatpush1.msra.mxu0 %v704
  %706 = vmatprep.subr.mxu0 0.0
  %v707 = vand.u32 %v37, 4294901760
  %v708 = vsub.f32 %v37, %v707
  %v709 = vand.u32 %v708, 4294901760
  %710 = vmatpush1.msra.mxu0 %v709
  %711 = vmatprep.subr.mxu0 0.0
  %v712 = vand.u32 %v38, 4294901760
  %v713 = vsub.f32 %v38, %v712
  %v714 = vand.u32 %v713, 4294901760
  %715 = vmatpush1.msra.mxu0 %v714
  %716 = vmatprep.subr.mxu0 0.0
  %v717 = vand.u32 %v39, 4294901760
  %v718 = vsub.f32 %v39, %v717
  %v719 = vand.u32 %v718, 4294901760
  %720 = vmatpush1.msra.mxu0 %v719
  %721 = vmatprep.subr.mxu0 0.0
  %v722 = vand.u32 %v40, 4294901760
  %v723 = vsub.f32 %v40, %v722
  %v724 = vand.u32 %v723, 4294901760
  %725 = vmatpush1.msra.mxu0 %v724
  %726 = vmatprep.subr.mxu0 0.0
  %v727 = vand.u32 %v41, 4294901760
  %v728 = vsub.f32 %v41, %v727
  %v729 = vand.u32 %v728, 4294901760
  %730 = vmatpush1.msra.mxu0 %v729
  %731 = vmatprep.subr.mxu0 0.0
  %v732 = vand.u32 %v42, 4294901760
  %v733 = vsub.f32 %v42, %v732
  %v734 = vand.u32 %v733, 4294901760
  %735 = vmatpush1.msra.mxu0 %v734
  %736 = vmatprep.subr.mxu0 0.0
  %737 = vmatpush1.msra.mxu0 0.0
  %738 = vmatprep.subr.mxu0 0.0
  %739 = vmatpush1.msra.mxu0 0.0
  %740 = vmatprep.subr.mxu0 0.0
  %741 = vmatpush1.msra.mxu0 0.0
  %742 = vmatprep.subr.mxu0 0.0
  %743 = vmatpush1.msra.mxu0 0.0
  %744 = vmatprep.subr.mxu0 0.0
  %745 = vmatpush1.msra.mxu0 0.0
  %746 = vmatprep.subr.mxu0 0.0
  %747 = vmatpush1.msra.mxu0 0.0
  %748 = vmatprep.subr.mxu0 0.0
  %749 = vmatpush1.msra.mxu0 0.0
  %750 = vmatprep.subr.mxu0 0.0
  %751 = vmatpush1.msra.mxu0 0.0
  %752 = vmatprep.subr.mxu0 0.0
  %753 = vmatpush1.msra.mxu0 0.0
  %754 = vmatprep.subr.mxu0 0.0
  %755 = vmatpush1.msra.mxu0 0.0
  %756 = vmatprep.subr.mxu0 0.0
  %757 = vmatpush1.msra.mxu0 0.0
  %758 = vmatprep.subr.mxu0 0.0
  %759 = vmatpush1.msra.mxu0 0.0
  %760 = vmatprep.subr.mxu0 0.0
  %761 = vmatpush1.msra.mxu0 0.0
  %762 = vmatprep.subr.mxu0 0.0
  %763 = vmatpush1.msra.mxu0 0.0
  %v764 = vand.u32 %v45, 4294901760
  %765 = vmatprep.mubr.f32.mxu0 %v764
  %v766 = vand.u32 %v17, 4294901760
  %767 = vmatmul.mubr.f32.gmra.mrb[0].mxu0 %v766
  %v768 = vpop.f32.mrb[0].mxu0
  %v769 = vadd.f32 %v610, %v768
  %v770 = vpop.f32.mrb[0].mxu0
  %v771 = vand.u32 %v48, 4294901760
  %772 = vmatprep.mubr.f32.mxu0 %v771
  %v773 = vand.u32 %v19, 4294901760
  %774 = vmatmul.mubr.f32.gmra.mrb[0].mxu0 %v773
  %v775 = vpop.f32.mrb[0].mxu0
  %v776 = vadd.f32 %v621, %v775
  %v777 = vpop.f32.mrb[0].mxu0
  %v778 = vand.u32 %v51, 4294901760
  %779 = vmatprep.mubr.f32.mxu0 %v778
  %v780 = vand.u32 %v21, 4294901760
  %781 = vmatmul.mubr.f32.gmra.mrb[0].mxu0 %v780
  %v782 = vpop.f32.mrb[0].mxu0
  %v783 = vadd.f32 %v632, %v782
  %v784 = vpop.f32.mrb[0].mxu0
  %v785 = vand.u32 %v54, 4294901760
  %786 = vmatprep.mubr.f32.mxu0 %v785
  %v787 = vand.u32 %v23, 4294901760
  %788 = vmatmul.mubr.f32.gmra.mrb[0].mxu0 %v787
  %v789 = vpop.f32.mrb[0].mxu0
  %v790 = vadd.f32 %v643, %v789
  %v791 = vpop.f32.mrb[0].mxu0
  %792 = vdwg.mxu0
  %793 = vmatprep.subr.mxu0 0.0
  %v794 = vand.u32 %v25, 4294901760
  %795 = vmatpush1.msra.mxu0 %v794
  %796 = vmatprep.subr.mxu0 0.0
  %v797 = vand.u32 %v26, 4294901760
  %798 = vmatpush1.msra.mxu0 %v797
  %799 = vmatprep.subr.mxu0 0.0
  %v800 = vand.u32 %v27, 4294901760
  %801 = vmatpush1.msra.mxu0 %v800
  %802 = vmatprep.subr.mxu0 0.0
  %v803 = vand.u32 %v28, 4294901760
  %804 = vmatpush1.msra.mxu0 %v803
  %805 = vmatprep.subr.mxu0 0.0
  %v806 = vand.u32 %v29, 4294901760
  %807 = vmatpush1.msra.mxu0 %v806
  %808 = vmatprep.subr.mxu0 0.0
  %v809 = vand.u32 %v30, 4294901760
  %810 = vmatpush1.msra.mxu0 %v809
  %811 = vmatprep.subr.mxu0 0.0
  %v812 = vand.u32 %v31, 4294901760
  %813 = vmatpush1.msra.mxu0 %v812
  %814 = vmatprep.subr.mxu0 0.0
  %v815 = vand.u32 %v32, 4294901760
  %816 = vmatpush1.msra.mxu0 %v815
  %817 = vmatprep.subr.mxu0 0.0
  %v818 = vand.u32 %v33, 4294901760
  %819 = vmatpush1.msra.mxu0 %v818
  %820 = vmatprep.subr.mxu0 0.0
  %v821 = vand.u32 %v34, 4294901760
  %822 = vmatpush1.msra.mxu0 %v821
  %823 = vmatprep.subr.mxu0 0.0
  %v824 = vand.u32 %v35, 4294901760
  %825 = vmatpush1.msra.mxu0 %v824
  %826 = vmatprep.subr.mxu0 0.0
  %v827 = vand.u32 %v36, 4294901760
  %828 = vmatpush1.msra.mxu0 %v827
  %829 = vmatprep.subr.mxu0 0.0
  %v830 = vand.u32 %v37, 4294901760
  %831 = vmatpush1.msra.mxu0 %v830
  %832 = vmatprep.subr.mxu0 0.0
  %v833 = vand.u32 %v38, 4294901760
  %834 = vmatpush1.msra.mxu0 %v833
  %835 = vmatprep.subr.mxu0 0.0
  %v836 = vand.u32 %v39, 4294901760
  %837 = vmatpush1.msra.mxu0 %v836
  %838 = vmatprep.subr.mxu0 0.0
  %v839 = vand.u32 %v40, 4294901760
  %840 = vmatpush1.msra.mxu0 %v839
  %841 = vmatprep.subr.mxu0 0.0
  %v842 = vand.u32 %v41, 4294901760
  %843 = vmatpush1.msra.mxu0 %v842
  %844 = vmatprep.subr.mxu0 0.0
  %v845 = vand.u32 %v42, 4294901760
  %846 = vmatpush1.msra.mxu0 %v845
  %847 = vmatprep.subr.mxu0 0.0
  %848 = vmatpush1.msra.mxu0 0.0
  %849 = vmatprep.subr.mxu0 0.0
  %850 = vmatpush1.msra.mxu0 0.0
  %851 = vmatprep.subr.mxu0 0.0
  %852 = vmatpush1.msra.mxu0 0.0
  %853 = vmatprep.subr.mxu0 0.0
  %854 = vmatpush1.msra.mxu0 0.0
  %855 = vmatprep.subr.mxu0 0.0
  %856 = vmatpush1.msra.mxu0 0.0
  %857 = vmatprep.subr.mxu0 0.0
  %858 = vmatpush1.msra.mxu0 0.0
  %859 = vmatprep.subr.mxu0 0.0
  %860 = vmatpush1.msra.mxu0 0.0
  %861 = vmatprep.subr.mxu0 0.0
  %862 = vmatpush1.msra.mxu0 0.0
  %863 = vmatprep.subr.mxu0 0.0
  %864 = vmatpush1.msra.mxu0 0.0
  %865 = vmatprep.subr.mxu0 0.0
  %866 = vmatpush1.msra.mxu0 0.0
  %867 = vmatprep.subr.mxu0 0.0
  %868 = vmatpush1.msra.mxu0 0.0
  %869 = vmatprep.subr.mxu0 0.0
  %870 = vmatpush1.msra.mxu0 0.0
  %871 = vmatprep.subr.mxu0 0.0
  %872 = vmatpush1.msra.mxu0 0.0
  %873 = vmatprep.subr.mxu0 0.0
  %874 = vmatpush1.msra.mxu0 0.0
  %v875 = vand.u32 %v45, 4294901760
  %876 = vmatprep.mubr.f32.mxu0 %v875
  %v877 = vand.u32 %v17, 4294901760
  %878 = vmatmul.mubr.f32.gmra.mrb[0].mxu0 %v877
  %v879 = vpop.f32.mrb[0].mxu0
  %v880 = vadd.f32 %v769, %v879
  %v881 = vpop.f32.mrb[0].mxu0
  %v882 = vand.u32 %v48, 4294901760
  %883 = vmatprep.mubr.f32.mxu0 %v882
  %v884 = vand.u32 %v19, 4294901760
  %885 = vmatmul.mubr.f32.gmra.mrb[0].mxu0 %v884
  %v886 = vpop.f32.mrb[0].mxu0
  %v887 = vadd.f32 %v776, %v886
  %v888 = vpop.f32.mrb[0].mxu0
  %v889 = vand.u32 %v51, 4294901760
  %890 = vmatprep.mubr.f32.mxu0 %v889
  %v891 = vand.u32 %v21, 4294901760
  %892 = vmatmul.mubr.f32.gmra.mrb[0].mxu0 %v891
  %v893 = vpop.f32.mrb[0].mxu0
  %v894 = vadd.f32 %v783, %v893
  %v895 = vpop.f32.mrb[0].mxu0
  %v896 = vand.u32 %v54, 4294901760
  %897 = vmatprep.mubr.f32.mxu0 %v896
  %v898 = vand.u32 %v23, 4294901760
  %899 = vmatmul.mubr.f32.gmra.mrb[0].mxu0 %v898
  %v900 = vpop.f32.mrb[0].mxu0
  %v901 = vadd.f32 %v790, %v900
  %v902 = vpop.f32.mrb[0].mxu0
  %903 = vdwg.mxu0
  %vm904 = vcmask 261120
  %v905 = vsel %vm904, %v880, 0.0
  %906 = vadd.xlane.f32.xlu0 %v905
  %v907 = vpop.xlane.xlu0 %906
  %v908 = vsel %vm904, %v887, 0.0
  %909 = vadd.xlane.f32.xlu0 %v908
  %v910 = vpop.xlane.xlu0 %909
  %v911 = vsel %vm904, %v894, 0.0
  %912 = vadd.xlane.f32.xlu0 %v911
  %v913 = vpop.xlane.xlu0 %912
  %v914 = vsel %vm904, %v901, 0.0
  %915 = vadd.xlane.f32.xlu0 %v914
  %v916 = vpop.xlane.xlu0 %915
  %v917 = vmul.f32 %v880, %v880
  %v918 = vmul.f32 %v887, %v887
  %v919 = vmul.f32 %v894, %v894
  %v920 = vmul.f32 %v901, %v901
  %v921 = vsel %vm904, %v917, 0.0
  %922 = vadd.xlane.f32.xlu0 %v921
  %v923 = vpop.xlane.xlu0 %922
  %v924 = vsel %vm904, %v918, 0.0
  %925 = vadd.xlane.f32.xlu0 %v924
  %v926 = vpop.xlane.xlu0 %925
  %v927 = vsel %vm904, %v919, 0.0
  %928 = vadd.xlane.f32.xlu0 %v927
  %v929 = vpop.xlane.xlu0 %928
  %v930 = vsel %vm904, %v920, 0.0
  %931 = vadd.xlane.f32.xlu0 %v930
  %v932 = vpop.xlane.xlu0 %931
  %v933 = vmul.f32 %v907, 0.03125
  %v934 = vmul.f32 %v910, 0.03125
  %v935 = vmul.f32 %v913, 0.03125
  %v936 = vmul.f32 %v916, 0.03125
  %v937 = vmul.f32 %v923, 0.03125
  %v938 = vmul.f32 %v926, 0.03125
  %v939 = vmul.f32 %v929, 0.03125
  %v940 = vmul.f32 %v932, 0.03125
  %v941 = vmul.f32 %v933, %v933
  %v942 = vmul.f32 %v934, %v934
  %v943 = vmul.f32 %v935, %v935
  %v944 = vmul.f32 %v936, %v936
  %v945 = vsub.f32 %v937, %v941
  %v946 = vsub.f32 %v938, %v942
  %v947 = vsub.f32 %v939, %v943
  %v948 = vsub.f32 %v940, %v944
  %v949 = vld [vmem:[%s2] sm:$0xff]
  %v950 = vld [vmem:[%s2 + $0x8] sm:$0xff]
  %v951 = vld [vmem:[%s2 + $0x10] sm:$0xff]
  %v952 = vld [vmem:[%s2 + $0x18] sm:$0xff]
  %v953 = vadd.f32 %v945, 1e-05
  %v954 = vadd.f32 %v946, 1e-05
  %v955 = vadd.f32 %v947, 1e-05
  %v956 = vadd.f32 %v948, 1e-05
  %v957 = vrsqrt.pop %v953
  %v958 = vrsqrt.pop %v954
  %v959 = vrsqrt.pop %v955
  %v960 = vrsqrt.pop %v956
  %v961 = vmul.f32 %v949, %v957
  %v962 = vmul.f32 %v950, %v958
  %v963 = vmul.f32 %v951, %v959
  %v964 = vmul.f32 %v952, %v960
  %v965 = vld [vmem:[%s3] sm:$0xff]
  %v966 = vld [vmem:[%s3 + $0x8] sm:$0xff]
  %v967 = vld [vmem:[%s3 + $0x10] sm:$0xff]
  %v968 = vld [vmem:[%s3 + $0x18] sm:$0xff]
  %v969 = vmul.f32 %v933, %v961
  %v970 = vmul.f32 %v934, %v962
  %v971 = vmul.f32 %v935, %v963
  %v972 = vmul.f32 %v936, %v964
  %v973 = vsub.f32 %v965, %v969
  %v974 = vsub.f32 %v966, %v970
  %v975 = vsub.f32 %v967, %v971
  %v976 = vsub.f32 %v968, %v972
  %978 = vset.pattern.permute.xlu0 0
  %979 = vperm.xlu0 %978, %v961
  %v980 = vpop.permute.xlu0 %979
  %983 = vset.pattern.permute.xlu0 0
  %984 = vperm.xlu0 %983, %v962
  %v985 = vpop.permute.xlu0 %984
  %988 = vset.pattern.permute.xlu0 0
  %989 = vperm.xlu0 %988, %v963
  %v990 = vpop.permute.xlu0 %989
  %993 = vset.pattern.permute.xlu0 0
  %994 = vperm.xlu0 %993, %v964
  %v995 = vpop.permute.xlu0 %994
  %v997 = vmul.f32 %v880, %v980
  %v998 = vmul.f32 %v887, %v985
  %v999 = vmul.f32 %v894, %v990
  %v1000 = vmul.f32 %v901, %v995
  %1002 = vset.pattern.permute.xlu0 0
  %1003 = vperm.xlu0 %1002, %v973
  %v1004 = vpop.permute.xlu0 %1003
  %1007 = vset.pattern.permute.xlu0 0
  %1008 = vperm.xlu0 %1007, %v974
  %v1009 = vpop.permute.xlu0 %1008
  %1012 = vset.pattern.permute.xlu0 0
  %1013 = vperm.xlu0 %1012, %v975
  %v1014 = vpop.permute.xlu0 %1013
  %1017 = vset.pattern.permute.xlu0 0
  %1018 = vperm.xlu0 %1017, %v976
  %v1019 = vpop.permute.xlu0 %1018
  %v1021 = vadd.f32 %v997, %v1004
  %v1022 = vadd.f32 %v998, %v1009
  %v1023 = vadd.f32 %v999, %v1014
  %v1024 = vadd.f32 %v1000, %v1019
  %v1025 = vmax.f32 %v1021, 0.0
  %v1026 = vmax.f32 %v1022, 0.0
  %v1027 = vmax.f32 %v1023, 0.0
  %v1028 = vmax.f32 %v1024, 0.0
  %1029 = vst.msk [vmem:[%s4] sm:$0xff] %vm904, %v1025
  %1030 = vst.msk [vmem:[%s4 + $0x8] sm:$0xff] %vm904, %v1026
  %1031 = vst.msk [vmem:[%s4 + $0x10] sm:$0xff] %vm904, %v1027
  %1032 = vst.msk [vmem:[%s4 + $0x18] sm:$0xff] %vm904, %v1028
  // Predicated region
  $region18: #{baseline_unet_pallas.17} parent=0 // pred_check
    _
  $region19: #{baseline_unet_pallas.17} parent=0 // pred_check_branch
    %1034 = sbr.rel (0) target = $region21
  $region20: #{baseline_unet_pallas.17} parent=0 // pred_region
    _
  $region21: #{baseline_unet_pallas.17} parent=0 // pred_fallthru
    _
  // Predicated region
  $region22: #{baseline_unet_pallas.17} parent=0 // pred_check
    _
  $region23: #{baseline_unet_pallas.17} parent=0 // pred_check_branch
    %1036 = sbr.rel (0) target = $region25
  $region24: #{baseline_unet_pallas.17} parent=0 // pred_region
    _
  $region25: #{baseline_unet_pallas.17} parent=0 // pred_fallthru
    _

// kernel: baseline_unet_pallas.18
$region0: #{baseline_unet_pallas.18}
  #allocation0 [shape = 'u32[]', space=smem, size = 0x4, offset = 0x4, fixed_abs, tag = 'smem constant byte address 0x4 - core index']
  #allocation1 [shape = 'u32[144,128]{1,0:T(1,128)}', space=vmem, size = 0x12000, scoped, tag = 'internal scratch']
  %s0 = inlined_call_operand.vmem [shape: f32[128,32], index: 0, kind: input, shape index: {}]
  %s1 = inlined_call_operand.vmem [shape: f32[32,32], index: 1, kind: input, shape index: {}]
  %s2 = inlined_call_operand.vmem [shape: f32[128,1], index: 2, kind: input, shape index: {}]
  %s3 = inlined_call_operand.vmem [shape: f32[128,32], index: 3, kind: output, shape index: {}]
  %s4 = sld [smem:[#allocation0]]
  $region22: #{baseline_unet_pallas.18} parent=0
    _
  %s6 = ssub.s32 1, %s4
  %s7 = scalar_select 0, %s6, %s4
  // Predicated region
  $region2: #{baseline_unet_pallas.18} parent=0 // pred_check
    _
  $region3: #{baseline_unet_pallas.18} parent=0 // pred_check_branch
    %9 = sbr.rel (0) target = $region5
  $region4: #{baseline_unet_pallas.18} parent=0 // pred_region
    _
  $region5: #{baseline_unet_pallas.18} parent=0 // pred_fallthru
    _
  // Predicated region
  $region6: #{baseline_unet_pallas.18} parent=0 // pred_check
    _
  $region7: #{baseline_unet_pallas.18} parent=0 // pred_check_branch
    %11 = sbr.rel (0) target = $region9
  $region8: #{baseline_unet_pallas.18} parent=0 // pred_region
    _
  $region9: #{baseline_unet_pallas.18} parent=0 // pred_fallthru
    _
  // Predicated region
  $region10: #{baseline_unet_pallas.18} parent=0 // pred_check
    _
  $region11: #{baseline_unet_pallas.18} parent=0 // pred_check_branch
    %13 = sbr.rel (0) target = $region13
  $region12: #{baseline_unet_pallas.18} parent=0 // pred_region
    _
  $region13: #{baseline_unet_pallas.18} parent=0 // pred_fallthru
    _
  %v14 = vld [vmem:[%s0] sm:$0xff]
  %v15 = vld [vmem:[%s0 + $0x8] sm:$0xff]
  %v16 = vld [vmem:[%s0 + $0x10] sm:$0xff]
  %v17 = vld [vmem:[%s0 + $0x18] sm:$0xff]
  %v18 = vld [vmem:[%s0 + $0x20] sm:$0xff]
  %v19 = vld [vmem:[%s0 + $0x28] sm:$0xff]
  %v20 = vld [vmem:[%s0 + $0x30] sm:$0xff]
  %v21 = vld [vmem:[%s0 + $0x38] sm:$0xff]
  %v22 = vld [vmem:[%s0 + $0x40] sm:$0xff]
  %v23 = vld [vmem:[%s0 + $0x48] sm:$0xff]
  %v24 = vld [vmem:[%s0 + $0x50] sm:$0xff]
  %v25 = vld [vmem:[%s0 + $0x58] sm:$0xff]
  %v26 = vld [vmem:[%s0 + $0x60] sm:$0xff]
  %v27 = vld [vmem:[%s0 + $0x68] sm:$0xff]
  %v28 = vld [vmem:[%s0 + $0x70] sm:$0xff]
  %v29 = vld [vmem:[%s0 + $0x78] sm:$0xff]
  %v30 = vld [vmem:[%s1] sm:$0xff]
  %v31 = vld [vmem:[%s1 + $0x8] sm:$0xff]
  %v32 = vld [vmem:[%s1 + $0x10] sm:$0xff]
  %v33 = vld [vmem:[%s1 + $0x18] sm:$0xff]
  %v34 = vld [vmem:[%s2] sm:$0xff]
  %v35 = vld [vmem:[%s2 + $0x8] sm:$0xff]
  %v36 = vld [vmem:[%s2 + $0x10] sm:$0xff]
  %v37 = vld [vmem:[%s2 + $0x18] sm:$0xff]
  %v38 = vld [vmem:[%s2 + $0x20] sm:$0xff]
  %v39 = vld [vmem:[%s2 + $0x28] sm:$0xff]
  %v40 = vld [vmem:[%s2 + $0x30] sm:$0xff]
  %v41 = vld [vmem:[%s2 + $0x38] sm:$0xff]
  %v42 = vld [vmem:[%s2 + $0x40] sm:$0xff]
  %v43 = vld [vmem:[%s2 + $0x48] sm:$0xff]
  %v44 = vld [vmem:[%s2 + $0x50] sm:$0xff]
  %v45 = vld [vmem:[%s2 + $0x58] sm:$0xff]
  %v46 = vld [vmem:[%s2 + $0x60] sm:$0xff]
  %v47 = vld [vmem:[%s2 + $0x68] sm:$0xff]
  %v48 = vld [vmem:[%s2 + $0x70] sm:$0xff]
  %v49 = vld [vmem:[%s2 + $0x78] sm:$0xff]
  %51 = vset.pattern.permute.xlu0 0
  %52 = vperm.xlu0 %51, %v34
  %v53 = vpop.permute.xlu0 %52
  %56 = vset.pattern.permute.xlu0 0
  %57 = vperm.xlu0 %56, %v35
  %v58 = vpop.permute.xlu0 %57
  %61 = vset.pattern.permute.xlu0 0
  %62 = vperm.xlu0 %61, %v36
  %v63 = vpop.permute.xlu0 %62
  %66 = vset.pattern.permute.xlu0 0
  %67 = vperm.xlu0 %66, %v37
  %v68 = vpop.permute.xlu0 %67
  %71 = vset.pattern.permute.xlu0 0
  %72 = vperm.xlu0 %71, %v38
  %v73 = vpop.permute.xlu0 %72
  %76 = vset.pattern.permute.xlu0 0
  %77 = vperm.xlu0 %76, %v39
  %v78 = vpop.permute.xlu0 %77
  %81 = vset.pattern.permute.xlu0 0
  %82 = vperm.xlu0 %81, %v40
  %v83 = vpop.permute.xlu0 %82
  %86 = vset.pattern.permute.xlu0 0
  %87 = vperm.xlu0 %86, %v41
  %v88 = vpop.permute.xlu0 %87
  %91 = vset.pattern.permute.xlu0 0
  %92 = vperm.xlu0 %91, %v42
  %v93 = vpop.permute.xlu0 %92
  %96 = vset.pattern.permute.xlu0 0
  %97 = vperm.xlu0 %96, %v43
  %v98 = vpop.permute.xlu0 %97
  %101 = vset.pattern.permute.xlu0 0
  %102 = vperm.xlu0 %101, %v44
  %v103 = vpop.permute.xlu0 %102
  %106 = vset.pattern.permute.xlu0 0
  %107 = vperm.xlu0 %106, %v45
  %v108 = vpop.permute.xlu0 %107
  %111 = vset.pattern.permute.xlu0 0
  %112 = vperm.xlu0 %111, %v46
  %v113 = vpop.permute.xlu0 %112
  %116 = vset.pattern.permute.xlu0 0
  %117 = vperm.xlu0 %116, %v47
  %v118 = vpop.permute.xlu0 %117
  %121 = vset.pattern.permute.xlu0 0
  %122 = vperm.xlu0 %121, %v48
  %v123 = vpop.permute.xlu0 %122
  %126 = vset.pattern.permute.xlu0 0
  %127 = vperm.xlu0 %126, %v49
  %v128 = vpop.permute.xlu0 %127
  %vm130 = vcmask 261120
  %v132 = vsel %vm130, %v14, 0
  %v135 = vsel %vm130, %v15, 0
  %v138 = vsel %vm130, %v16, 0
  %v141 = vsel %vm130, %v17, 0
  %v144 = vsel %vm130, %v18, 0
  %v147 = vsel %vm130, %v19, 0
  %v150 = vsel %vm130, %v20, 0
  %v153 = vsel %vm130, %v21, 0
  %v156 = vsel %vm130, %v22, 0
  %v159 = vsel %vm130, %v23, 0
  %v162 = vsel %vm130, %v24, 0
  %v165 = vsel %vm130, %v25, 0
  %v168 = vsel %vm130, %v26, 0
  %v171 = vsel %vm130, %v27, 0
  %v174 = vsel %vm130, %v28, 0
  %v177 = vsel %vm130, %v29, 0
  %179 = vmatprep.subr.mxu0 0.0
  %v180 = vand.u32 %v30, 4294901760
  %181 = vmatpush1.msra.mxu0 %v180
  %182 = vmatprep.subr.mxu0 0.0
  %v183 = vand.u32 %v31, 4294901760
  %184 = vmatpush1.msra.mxu0 %v183
  %185 = vmatprep.subr.mxu0 0.0
  %v186 = vand.u32 %v32, 4294901760
  %187 = vmatpush1.msra.mxu0 %v186
  %188 = vmatprep.subr.mxu0 0.0
  %v189 = vand.u32 %v33, 4294901760
  %190 = vmatpush1.msra.mxu0 %v189
  %191 = vmatprep.subr.mxu0 0.0
  %192 = vmatpush1.msra.mxu0 0.0
  %193 = vmatprep.subr.mxu0 0.0
  %194 = vmatpush1.msra.mxu0 0.0
  %195 = vmatprep.subr.mxu0 0.0
  %196 = vmatpush1.msra.mxu0 0.0
  %197 = vmatprep.subr.mxu0 0.0
  %198 = vmatpush1.msra.mxu0 0.0
  %199 = vmatprep.subr.mxu0 0.0
  %200 = vmatpush1.msra.mxu0 0.0
  %201 = vmatprep.subr.mxu0 0.0
  %202 = vmatpush1.msra.mxu0 0.0
  %203 = vmatprep.subr.mxu0 0.0
  %204 = vmatpush1.msra.mxu0 0.0
  %205 = vmatprep.subr.mxu0 0.0
  %206 = vmatpush1.msra.mxu0 0.0
  %207 = vmatprep.subr.mxu0 0.0
  %208 = vmatpush1.msra.mxu0 0.0
  %209 = vmatprep.subr.mxu0 0.0
  %210 = vmatpush1.msra.mxu0 0.0
  %211 = vmatprep.subr.mxu0 0.0
  %212 = vmatpush1.msra.mxu0 0.0
  %213 = vmatprep.subr.mxu0 0.0
  %214 = vmatpush1.msra.mxu0 0.0
  %215 = vmatprep.subr.mxu0 0.0
  %216 = vmatpush1.msra.mxu0 0.0
  %217 = vmatprep.subr.mxu0 0.0
  %218 = vmatpush1.msra.mxu0 0.0
  %219 = vmatprep.subr.mxu0 0.0
  %220 = vmatpush1.msra.mxu0 0.0
  %221 = vmatprep.subr.mxu0 0.0
  %222 = vmatpush1.msra.mxu0 0.0
  %223 = vmatprep.subr.mxu0 0.0
  %224 = vmatpush1.msra.mxu0 0.0
  %225 = vmatprep.subr.mxu0 0.0
  %226 = vmatpush1.msra.mxu0 0.0
  %227 = vmatprep.subr.mxu0 0.0
  %228 = vmatpush1.msra.mxu0 0.0
  %229 = vmatprep.subr.mxu0 0.0
  %230 = vmatpush1.msra.mxu0 0.0
  %231 = vmatprep.subr.mxu0 0.0
  %232 = vmatpush1.msra.mxu0 0.0
  %233 = vmatprep.subr.mxu0 0.0
  %234 = vmatpush1.msra.mxu0 0.0
  %235 = vmatprep.subr.mxu0 0.0
  %236 = vmatpush1.msra.mxu0 0.0
  %237 = vmatprep.subr.mxu0 0.0
  %238 = vmatpush1.msra.mxu0 0.0
  %239 = vmatprep.subr.mxu0 0.0
  %240 = vmatpush1.msra.mxu0 0.0
  %241 = vmatprep.subr.mxu0 0.0
  %242 = vmatpush1.msra.mxu0 0.0
  %243 = vmatprep.subr.mxu0 0.0
  %244 = vmatpush1.msra.mxu0 0.0
  %245 = vmatprep.subr.mxu0 0.0
  %246 = vmatpush1.msra.mxu0 0.0
  %247 = vmatprep.mubr.f32.mxu0 0.0
  %v248 = vand.u32 %v132, 4294901760
  %v249 = vsub.f32 %v132, %v248
  %v250 = vand.u32 %v249, 4294901760
  %v251 = vsub.f32 %v249, %v250
  %v252 = vand.u32 %v251, 4294901760
  %253 = vmatmul.mubr.f32.gmra.mrb[0].mxu0 %v252
  %v254 = vpop.f32.mrb[0].mxu0
  %v255 = vadd.f32 %v53, %v254
  %v256 = vpop.f32.mrb[0].mxu0
  %257 = vmatprep.mubr.f32.mxu0 0.0
  %v258 = vand.u32 %v135, 4294901760
  %v259 = vsub.f32 %v135, %v258
  %v260 = vand.u32 %v259, 4294901760
  %v261 = vsub.f32 %v259, %v260
  %v262 = vand.u32 %v261, 4294901760
  %263 = vmatmul.mubr.f32.gmra.mrb[0].mxu0 %v262
  %v264 = vpop.f32.mrb[0].mxu0
  %v265 = vadd.f32 %v58, %v264
  %v266 = vpop.f32.mrb[0].mxu0
  %267 = vmatprep.mubr.f32.mxu0 0.0
  %v268 = vand.u32 %v138, 4294901760
  %v269 = vsub.f32 %v138, %v268
  %v270 = vand.u32 %v269, 4294901760
  %v271 = vsub.f32 %v269, %v270
  %v272 = vand.u32 %v271, 4294901760
  %273 = vmatmul.mubr.f32.gmra.mrb[0].mxu0 %v272
  %v274 = vpop.f32.mrb[0].mxu0
  %v275 = vadd.f32 %v63, %v274
  %v276 = vpop.f32.mrb[0].mxu0
  %277 = vmatprep.mubr.f32.mxu0 0.0
  %v278 = vand.u32 %v141, 4294901760
  %v279 = vsub.f32 %v141, %v278
  %v280 = vand.u32 %v279, 4294901760
  %v281 = vsub.f32 %v279, %v280
  %v282 = vand.u32 %v281, 4294901760
  %283 = vmatmul.mubr.f32.gmra.mrb[0].mxu0 %v282
  %v284 = vpop.f32.mrb[0].mxu0
  %v285 = vadd.f32 %v68, %v284
  %v286 = vpop.f32.mrb[0].mxu0
  %287 = vmatprep.mubr.f32.mxu0 0.0
  %v288 = vand.u32 %v144, 4294901760
  %v289 = vsub.f32 %v144, %v288
  %v290 = vand.u32 %v289, 4294901760
  %v291 = vsub.f32 %v289, %v290
  %v292 = vand.u32 %v291, 4294901760
  %293 = vmatmul.mubr.f32.gmra.mrb[0].mxu0 %v292
  %v294 = vpop.f32.mrb[0].mxu0
  %v295 = vadd.f32 %v73, %v294
  %v296 = vpop.f32.mrb[0].mxu0
  %297 = vmatprep.mubr.f32.mxu0 0.0
  %v298 = vand.u32 %v147, 4294901760
  %v299 = vsub.f32 %v147, %v298
  %v300 = vand.u32 %v299, 4294901760
  %v301 = vsub.f32 %v299, %v300
  %v302 = vand.u32 %v301, 4294901760
  %303 = vmatmul.mubr.f32.gmra.mrb[0].mxu0 %v302
  %v304 = vpop.f32.mrb[0].mxu0
  %v305 = vadd.f32 %v78, %v304
  %v306 = vpop.f32.mrb[0].mxu0
  %307 = vmatprep.mubr.f32.mxu0 0.0
  %v308 = vand.u32 %v150, 4294901760
  %v309 = vsub.f32 %v150, %v308
  %v310 = vand.u32 %v309, 4294901760
  %v311 = vsub.f32 %v309, %v310
  %v312 = vand.u32 %v311, 4294901760
  %313 = vmatmul.mubr.f32.gmra.mrb[0].mxu0 %v312
  %v314 = vpop.f32.mrb[0].mxu0
  %v315 = vadd.f32 %v83, %v314
  %v316 = vpop.f32.mrb[0].mxu0
  %317 = vmatprep.mubr.f32.mxu0 0.0
  %v318 = vand.u32 %v153, 4294901760
  %v319 = vsub.f32 %v153, %v318
  %v320 = vand.u32 %v319, 4294901760
  %v321 = vsub.f32 %v319, %v320
  %v322 = vand.u32 %v321, 4294901760
  %323 = vmatmul.mubr.f32.gmra.mrb[0].mxu0 %v322
  %v324 = vpop.f32.mrb[0].mxu0
  %v325 = vadd.f32 %v88, %v324
  %v326 = vpop.f32.mrb[0].mxu0
  %327 = vmatprep.mubr.f32.mxu0 0.0
  %v328 = vand.u32 %v156, 4294901760
  %v329 = vsub.f32 %v156, %v328
  %v330 = vand.u32 %v329, 4294901760
  %v331 = vsub.f32 %v329, %v330
  %v332 = vand.u32 %v331, 4294901760
  %333 = vmatmul.mubr.f32.gmra.mrb[0].mxu0 %v332
  %v334 = vpop.f32.mrb[0].mxu0
  %v335 = vadd.f32 %v93, %v334
  %v336 = vpop.f32.mrb[0].mxu0
  %337 = vmatprep.mubr.f32.mxu0 0.0
  %v338 = vand.u32 %v159, 4294901760
  %v339 = vsub.f32 %v159, %v338
  %v340 = vand.u32 %v339, 4294901760
  %v341 = vsub.f32 %v339, %v340
  %v342 = vand.u32 %v341, 4294901760
  %343 = vmatmul.mubr.f32.gmra.mrb[0].mxu0 %v342
  %v344 = vpop.f32.mrb[0].mxu0
  %v345 = vadd.f32 %v98, %v344
  %v346 = vpop.f32.mrb[0].mxu0
  %347 = vmatprep.mubr.f32.mxu0 0.0
  %v348 = vand.u32 %v162, 4294901760
  %v349 = vsub.f32 %v162, %v348
  %v350 = vand.u32 %v349, 4294901760
  %v351 = vsub.f32 %v349, %v350
  %v352 = vand.u32 %v351, 4294901760
  %353 = vmatmul.mubr.f32.gmra.mrb[0].mxu0 %v352
  %v354 = vpop.f32.mrb[0].mxu0
  %v355 = vadd.f32 %v103, %v354
  %v356 = vpop.f32.mrb[0].mxu0
  %357 = vmatprep.mubr.f32.mxu0 0.0
  %v358 = vand.u32 %v165, 4294901760
  %v359 = vsub.f32 %v165, %v358
  %v360 = vand.u32 %v359, 4294901760
  %v361 = vsub.f32 %v359, %v360
  %v362 = vand.u32 %v361, 4294901760
  %363 = vmatmul.mubr.f32.gmra.mrb[0].mxu0 %v362
  %v364 = vpop.f32.mrb[0].mxu0
  %v365 = vadd.f32 %v108, %v364
  %v366 = vpop.f32.mrb[0].mxu0
  %367 = vmatprep.mubr.f32.mxu0 0.0
  %v368 = vand.u32 %v168, 4294901760
  %v369 = vsub.f32 %v168, %v368
  %v370 = vand.u32 %v369, 4294901760
  %v371 = vsub.f32 %v369, %v370
  %v372 = vand.u32 %v371, 4294901760
  %373 = vmatmul.mubr.f32.gmra.mrb[0].mxu0 %v372
  %v374 = vpop.f32.mrb[0].mxu0
  %v375 = vadd.f32 %v113, %v374
  %v376 = vpop.f32.mrb[0].mxu0
  %377 = vmatprep.mubr.f32.mxu0 0.0
  %v378 = vand.u32 %v171, 4294901760
  %v379 = vsub.f32 %v171, %v378
  %v380 = vand.u32 %v379, 4294901760
  %v381 = vsub.f32 %v379, %v380
  %v382 = vand.u32 %v381, 4294901760
  %383 = vmatmul.mubr.f32.gmra.mrb[0].mxu0 %v382
  %v384 = vpop.f32.mrb[0].mxu0
  %v385 = vadd.f32 %v118, %v384
  %v386 = vpop.f32.mrb[0].mxu0
  %387 = vmatprep.mubr.f32.mxu0 0.0
  %v388 = vand.u32 %v174, 4294901760
  %v389 = vsub.f32 %v174, %v388
  %v390 = vand.u32 %v389, 4294901760
  %v391 = vsub.f32 %v389, %v390
  %v392 = vand.u32 %v391, 4294901760
  %393 = vmatmul.mubr.f32.gmra.mrb[0].mxu0 %v392
  %v394 = vpop.f32.mrb[0].mxu0
  %v395 = vadd.f32 %v123, %v394
  %v396 = vpop.f32.mrb[0].mxu0
  %397 = vmatprep.mubr.f32.mxu0 0.0
  %v398 = vand.u32 %v177, 4294901760
  %v399 = vsub.f32 %v177, %v398
  %v400 = vand.u32 %v399, 4294901760
  %v401 = vsub.f32 %v399, %v400
  %v402 = vand.u32 %v401, 4294901760
  %403 = vmatmul.mubr.f32.gmra.mrb[0].mxu0 %v402
  %v404 = vpop.f32.mrb[0].mxu0
  %v405 = vadd.f32 %v128, %v404
  %v406 = vpop.f32.mrb[0].mxu0
  %407 = vdwg.mxu0
  %408 = vmatprep.subr.mxu0 0.0
  %v409 = vand.u32 %v30, 4294901760
  %v410 = vsub.f32 %v30, %v409
  %v411 = vand.u32 %v410, 4294901760
  %v412 = vsub.f32 %v410, %v411
  %v413 = vand.u32 %v412, 4294901760
  %414 = vmatpush1.msra.mxu0 %v413
  %415 = vmatprep.subr.mxu0 0.0
  %v416 = vand.u32 %v31, 4294901760
  %v417 = vsub.f32 %v31, %v416
  %v418 = vand.u32 %v417, 4294901760
  %v419 = vsub.f32 %v417, %v418
  %v420 = vand.u32 %v419, 4294901760
  %421 = vmatpush1.msra.mxu0 %v420
  %422 = vmatprep.subr.mxu0 0.0
  %v423 = vand.u32 %v32, 4294901760
  %v424 = vsub.f32 %v32, %v423
  %v425 = vand.u32 %v424, 4294901760
  %v426 = vsub.f32 %v424, %v425
  %v427 = vand.u32 %v426, 4294901760
  %428 = vmatpush1.msra.mxu0 %v427
  %429 = vmatprep.subr.mxu0 0.0
  %v430 = vand.u32 %v33, 4294901760
  %v431 = vsub.f32 %v33, %v430
  %v432 = vand.u32 %v431, 4294901760
  %v433 = vsub.f32 %v431, %v432
  %v434 = vand.u32 %v433, 4294901760
  %435 = vmatpush1.msra.mxu0 %v434
  %436 = vmatprep.subr.mxu0 0.0
  %437 = vmatpush1.msra.mxu0 0.0
  %438 = vmatprep.subr.mxu0 0.0
  %439 = vmatpush1.msra.mxu0 0.0
  %440 = vmatprep.subr.mxu0 0.0
  %441 = vmatpush1.msra.mxu0 0.0
  %442 = vmatprep.subr.mxu0 0.0
  %443 = vmatpush1.msra.mxu0 0.0
  %444 = vmatprep.subr.mxu0 0.0
  %445 = vmatpush1.msra.mxu0 0.0
  %446 = vmatprep.subr.mxu0 0.0
  %447 = vmatpush1.msra.mxu0 0.0
  %448 = vmatprep.subr.mxu0 0.0
  %449 = vmatpush1.msra.mxu0 0.0
  %450 = vmatprep.subr.mxu0 0.0
  %451 = vmatpush1.msra.mxu0 0.0
  %452 = vmatprep.subr.mxu0 0.0
  %453 = vmatpush1.msra.mxu0 0.0
  %454 = vmatprep.subr.mxu0 0.0
  %455 = vmatpush1.msra.mxu0 0.0
  %456 = vmatprep.subr.mxu0 0.0
  %457 = vmatpush1.msra.mxu0 0.0
  %458 = vmatprep.subr.mxu0 0.0
  %459 = vmatpush1.msra.mxu0 0.0
  %460 = vmatprep.subr.mxu0 0.0
  %461 = vmatpush1.msra.mxu0 0.0
  %462 = vmatprep.subr.mxu0 0.0
  %463 = vmatpush1.msra.mxu0 0.0
  %464 = vmatprep.subr.mxu0 0.0
  %465 = vmatpush1.msra.mxu0 0.0
  %466 = vmatprep.subr.mxu0 0.0
  %467 = vmatpush1.msra.mxu0 0.0
  %468 = vmatprep.subr.mxu0 0.0
  %469 = vmatpush1.msra.mxu0 0.0
  %470 = vmatprep.subr.mxu0 0.0
  %471 = vmatpush1.msra.mxu0 0.0
  %472 = vmatprep.subr.mxu0 0.0
  %473 = vmatpush1.msra.mxu0 0.0
  %474 = vmatprep.subr.mxu0 0.0
  %475 = vmatpush1.msra.mxu0 0.0
  %476 = vmatprep.subr.mxu0 0.0
  %477 = vmatpush1.msra.mxu0 0.0
  %478 = vmatprep.subr.mxu0 0.0
  %479 = vmatpush1.msra.mxu0 0.0
  %480 = vmatprep.subr.mxu0 0.0
  %481 = vmatpush1.msra.mxu0 0.0
  %482 = vmatprep.subr.mxu0 0.0
  %483 = vmatpush1.msra.mxu0 0.0
  %484 = vmatprep.subr.mxu0 0.0
  %485 = vmatpush1.msra.mxu0 0.0
  %486 = vmatprep.subr.mxu0 0.0
  %487 = vmatpush1.msra.mxu0 0.0
  %488 = vmatprep.subr.mxu0 0.0
  %489 = vmatpush1.msra.mxu0 0.0
  %490 = vmatprep.subr.mxu0 0.0
  %491 = vmatpush1.msra.mxu0 0.0
  %492 = vmatprep.mubr.f32.mxu0 0.0
  %v493 = vand.u32 %v132, 4294901760
  %494 = vmatmul.mubr.f32.gmra.mrb[0].mxu0 %v493
  %v495 = vpop.f32.mrb[0].mxu0
  %v496 = vadd.f32 %v255, %v495
  %v497 = vpop.f32.mrb[0].mxu0
  %498 = vmatprep.mubr.f32.mxu0 0.0
  %v499 = vand.u32 %v135, 4294901760
  %500 = vmatmul.mubr.f32.gmra.mrb[0].mxu0 %v499
  %v501 = vpop.f32.mrb[0].mxu0
  %v502 = vadd.f32 %v265, %v501
  %v503 = vpop.f32.mrb[0].mxu0
  %504 = vmatprep.mubr.f32.mxu0 0.0
  %v505 = vand.u32 %v138, 4294901760
  %506 = vmatmul.mubr.f32.gmra.mrb[0].mxu0 %v505
  %v507 = vpop.f32.mrb[0].mxu0
  %v508 = vadd.f32 %v275, %v507
  %v509 = vpop.f32.mrb[0].mxu0
  %510 = vmatprep.mubr.f32.mxu0 0.0
  %v511 = vand.u32 %v141, 4294901760
  %512 = vmatmul.mubr.f32.gmra.mrb[0].mxu0 %v511
  %v513 = vpop.f32.mrb[0].mxu0
  %v514 = vadd.f32 %v285, %v513
  %v515 = vpop.f32.mrb[0].mxu0
  %516 = vmatprep.mubr.f32.mxu0 0.0
  %v517 = vand.u32 %v144, 4294901760
  %518 = vmatmul.mubr.f32.gmra.mrb[0].mxu0 %v517
  %v519 = vpop.f32.mrb[0].mxu0
  %v520 = vadd.f32 %v295, %v519
  %v521 = vpop.f32.mrb[0].mxu0
  %522 = vmatprep.mubr.f32.mxu0 0.0
  %v523 = vand.u32 %v147, 4294901760
  %524 = vmatmul.mubr.f32.gmra.mrb[0].mxu0 %v523
  %v525 = vpop.f32.mrb[0].mxu0
  %v526 = vadd.f32 %v305, %v525
  %v527 = vpop.f32.mrb[0].mxu0
  %528 = vmatprep.mubr.f32.mxu0 0.0
  %v529 = vand.u32 %v150, 4294901760
  %530 = vmatmul.mubr.f32.gmra.mrb[0].mxu0 %v529
  %v531 = vpop.f32.mrb[0].mxu0
  %v532 = vadd.f32 %v315, %v531
  %v533 = vpop.f32.mrb[0].mxu0
  %534 = vmatprep.mubr.f32.mxu0 0.0
  %v535 = vand.u32 %v153, 4294901760
  %536 = vmatmul.mubr.f32.gmra.mrb[0].mxu0 %v535
  %v537 = vpop.f32.mrb[0].mxu0
  %v538 = vadd.f32 %v325, %v537
  %v539 = vpop.f32.mrb[0].mxu0
  %540 = vmatprep.mubr.f32.mxu0 0.0
  %v541 = vand.u32 %v156, 4294901760
  %542 = vmatmul.mubr.f32.gmra.mrb[0].mxu0 %v541
  %v543 = vpop.f32.mrb[0].mxu0
  %v544 = vadd.f32 %v335, %v543
  %v545 = vpop.f32.mrb[0].mxu0
  %546 = vmatprep.mubr.f32.mxu0 0.0
  %v547 = vand.u32 %v159, 4294901760
  %548 = vmatmul.mubr.f32.gmra.mrb[0].mxu0 %v547
  %v549 = vpop.f32.mrb[0].mxu0
  %v550 = vadd.f32 %v345, %v549
  %v551 = vpop.f32.mrb[0].mxu0
  %552 = vmatprep.mubr.f32.mxu0 0.0
  %v553 = vand.u32 %v162, 4294901760
  %554 = vmatmul.mubr.f32.gmra.mrb[0].mxu0 %v553
  %v555 = vpop.f32.mrb[0].mxu0
  %v556 = vadd.f32 %v355, %v555
  %v557 = vpop.f32.mrb[0].mxu0
  %558 = vmatprep.mubr.f32.mxu0 0.0
  %v559 = vand.u32 %v165, 4294901760
  %560 = vmatmul.mubr.f32.gmra.mrb[0].mxu0 %v559
  %v561 = vpop.f32.mrb[0].mxu0
  %v562 = vadd.f32 %v365, %v561
  %v563 = vpop.f32.mrb[0].mxu0
  %564 = vmatprep.mubr.f32.mxu0 0.0
  %v565 = vand.u32 %v168, 4294901760
  %566 = vmatmul.mubr.f32.gmra.mrb[0].mxu0 %v565
  %v567 = vpop.f32.mrb[0].mxu0
  %v568 = vadd.f32 %v375, %v567
  %v569 = vpop.f32.mrb[0].mxu0
  %570 = vmatprep.mubr.f32.mxu0 0.0
  %v571 = vand.u32 %v171, 4294901760
  %572 = vmatmul.mubr.f32.gmra.mrb[0].mxu0 %v571
  %v573 = vpop.f32.mrb[0].mxu0
  %v574 = vadd.f32 %v385, %v573
  %v575 = vpop.f32.mrb[0].mxu0
  %576 = vmatprep.mubr.f32.mxu0 0.0
  %v577 = vand.u32 %v174, 4294901760
  %578 = vmatmul.mubr.f32.gmra.mrb[0].mxu0 %v577
  %v579 = vpop.f32.mrb[0].mxu0
  %v580 = vadd.f32 %v395, %v579
  %v581 = vpop.f32.mrb[0].mxu0
  %582 = vmatprep.mubr.f32.mxu0 0.0
  %v583 = vand.u32 %v177, 4294901760
  %584 = vmatmul.mubr.f32.gmra.mrb[0].mxu0 %v583
  %v585 = vpop.f32.mrb[0].mxu0
  %v586 = vadd.f32 %v405, %v585
  %v587 = vpop.f32.mrb[0].mxu0
  %588 = vdwg.mxu0
  %589 = vmatprep.subr.mxu0 0.0
  %v590 = vand.u32 %v30, 4294901760
  %v591 = vsub.f32 %v30, %v590
  %592 = vmatpush1.msra.mxu0 %v591
  %593 = vmatprep.subr.mxu0 0.0
  %v594 = vand.u32 %v31, 4294901760
  %v595 = vsub.f32 %v31, %v594
  %596 = vmatpush1.msra.mxu0 %v595
  %597 = vmatprep.subr.mxu0 0.0
  %v598 = vand.u32 %v32, 4294901760
  %v599 = vsub.f32 %v32, %v598
  %600 = vmatpush1.msra.mxu0 %v599
  %601 = vmatprep.subr.mxu0 0.0
  %v602 = vand.u32 %v33, 4294901760
  %v603 = vsub.f32 %v33, %v602
  %604 = vmatpush1.msra.mxu0 %v603
  %605 = vmatprep.subr.mxu0 0.0
  %606 = vmatpush1.msra.mxu0 0.0
  %607 = vmatprep.subr.mxu0 0.0
  %608 = vmatpush1.msra.mxu0 0.0
  %609 = vmatprep.subr.mxu0 0.0
  %610 = vmatpush1.msra.mxu0 0.0
  %611 = vmatprep.subr.mxu0 0.0
  %612 = vmatpush1.msra.mxu0 0.0
  %613 = vmatprep.subr.mxu0 0.0
  %614 = vmatpush1.msra.mxu0 0.0
  %615 = vmatprep.subr.mxu0 0.0
  %616 = vmatpush1.msra.mxu0 0.0
  %617 = vmatprep.subr.mxu0 0.0
  %618 = vmatpush1.msra.mxu0 0.0
  %619 = vmatprep.subr.mxu0 0.0
  %620 = vmatpush1.msra.mxu0 0.0
  %621 = vmatprep.subr.mxu0 0.0
  %622 = vmatpush1.msra.mxu0 0.0
  %623 = vmatprep.subr.mxu0 0.0
  %624 = vmatpush1.msra.mxu0 0.0
  %625 = vmatprep.subr.mxu0 0.0
  %626 = vmatpush1.msra.mxu0 0.0
  %627 = vmatprep.subr.mxu0 0.0
  %628 = vmatpush1.msra.mxu0 0.0
  %629 = vmatprep.subr.mxu0 0.0
  %630 = vmatpush1.msra.mxu0 0.0
  %631 = vmatprep.subr.mxu0 0.0
  %632 = vmatpush1.msra.mxu0 0.0
  %633 = vmatprep.subr.mxu0 0.0
  %634 = vmatpush1.msra.mxu0 0.0
  %635 = vmatprep.subr.mxu0 0.0
  %636 = vmatpush1.msra.mxu0 0.0
  %637 = vmatprep.subr.mxu0 0.0
  %638 = vmatpush1.msra.mxu0 0.0
  %639 = vmatprep.subr.mxu0 0.0
  %640 = vmatpush1.msra.mxu0 0.0
  %641 = vmatprep.subr.mxu0 0.0
  %642 = vmatpush1.msra.mxu0 0.0
  %643 = vmatprep.subr.mxu0 0.0
  %644 = vmatpush1.msra.mxu0 0.0
  %645 = vmatprep.subr.mxu0 0.0
  %646 = vmatpush1.msra.mxu0 0.0
  %647 = vmatprep.subr.mxu0 0.0
  %648 = vmatpush1.msra.mxu0 0.0
  %649 = vmatprep.subr.mxu0 0.0
  %650 = vmatpush1.msra.mxu0 0.0
  %651 = vmatprep.subr.mxu0 0.0
  %652 = vmatpush1.msra.mxu0 0.0
  %653 = vmatprep.subr.mxu0 0.0
  %654 = vmatpush1.msra.mxu0 0.0
  %655 = vmatprep.subr.mxu0 0.0
  %656 = vmatpush1.msra.mxu0 0.0
  %657 = vmatprep.subr.mxu0 0.0
  %658 = vmatpush1.msra.mxu0 0.0
  %659 = vmatprep.subr.mxu0 0.0
  %660 = vmatpush1.msra.mxu0 0.0
  %661 = vmatprep.mubr.f32.mxu0 0.0
  %v662 = vand.u32 %v132, 4294901760
  %v663 = vsub.f32 %v132, %v662
  %664 = vmatmul.mubr.f32.gmra.mrb[0].mxu0 %v663
  %v665 = vpop.f32.mrb[0].mxu0
  %v666 = vadd.f32 %v496, %v665
  %v667 = vpop.f32.mrb[0].mxu0
  %668 = vmatprep.mubr.f32.mxu0 0.0
  %v669 = vand.u32 %v135, 4294901760
  %v670 = vsub.f32 %v135, %v669
  %671 = vmatmul.mubr.f32.gmra.mrb[0].mxu0 %v670
  %v672 = vpop.f32.mrb[0].mxu0
  %v673 = vadd.f32 %v502, %v672
  %v674 = vpop.f32.mrb[0].mxu0
  %675 = vmatprep.mubr.f32.mxu0 0.0
  %v676 = vand.u32 %v138, 4294901760
  %v677 = vsub.f32 %v138, %v676
  %678 = vmatmul.mubr.f32.gmra.mrb[0].mxu0 %v677
  %v679 = vpop.f32.mrb[0].mxu0
  %v680 = vadd.f32 %v508, %v679
  %v681 = vpop.f32.mrb[0].mxu0
  %682 = vmatprep.mubr.f32.mxu0 0.0
  %v683 = vand.u32 %v141, 4294901760
  %v684 = vsub.f32 %v141, %v683
  %685 = vmatmul.mubr.f32.gmra.mrb[0].mxu0 %v684
  %v686 = vpop.f32.mrb[0].mxu0
  %v687 = vadd.f32 %v514, %v686
  %v688 = vpop.f32.mrb[0].mxu0
  %689 = vmatprep.mubr.f32.mxu0 0.0
  %v690 = vand.u32 %v144, 4294901760
  %v691 = vsub.f32 %v144, %v690
  %692 = vmatmul.mubr.f32.gmra.mrb[0].mxu0 %v691
  %v693 = vpop.f32.mrb[0].mxu0
  %v694 = vadd.f32 %v520, %v693
  %v695 = vpop.f32.mrb[0].mxu0
  %696 = vmatprep.mubr.f32.mxu0 0.0
  %v697 = vand.u32 %v147, 4294901760
  %v698 = vsub.f32 %v147, %v697
  %699 = vmatmul.mubr.f32.gmra.mrb[0].mxu0 %v698
  %v700 = vpop.f32.mrb[0].mxu0
  %v701 = vadd.f32 %v526, %v700
  %v702 = vpop.f32.mrb[0].mxu0
  %703 = vmatprep.mubr.f32.mxu0 0.0
  %v704 = vand.u32 %v150, 4294901760
  %v705 = vsub.f32 %v150, %v704
  %706 = vmatmul.mubr.f32.gmra.mrb[0].mxu0 %v705
  %v707 = vpop.f32.mrb[0].mxu0
  %v708 = vadd.f32 %v532, %v707
  %v709 = vpop.f32.mrb[0].mxu0
  %710 = vmatprep.mubr.f32.mxu0 0.0
  %v711 = vand.u32 %v153, 4294901760
  %v712 = vsub.f32 %v153, %v711
  %713 = vmatmul.mubr.f32.gmra.mrb[0].mxu0 %v712
  %v714 = vpop.f32.mrb[0].mxu0
  %v715 = vadd.f32 %v538, %v714
  %v716 = vpop.f32.mrb[0].mxu0
  %717 = vmatprep.mubr.f32.mxu0 0.0
  %v718 = vand.u32 %v156, 4294901760
  %v719 = vsub.f32 %v156, %v718
  %720 = vmatmul.mubr.f32.gmra.mrb[0].mxu0 %v719
  %v721 = vpop.f32.mrb[0].mxu0
  %v722 = vadd.f32 %v544, %v721
  %v723 = vpop.f32.mrb[0].mxu0
  %724 = vmatprep.mubr.f32.mxu0 0.0
  %v725 = vand.u32 %v159, 4294901760
  %v726 = vsub.f32 %v159, %v725
  %727 = vmatmul.mubr.f32.gmra.mrb[0].mxu0 %v726
  %v728 = vpop.f32.mrb[0].mxu0
  %v729 = vadd.f32 %v550, %v728
  %v730 = vpop.f32.mrb[0].mxu0
  %731 = vmatprep.mubr.f32.mxu0 0.0
  %v732 = vand.u32 %v162, 4294901760
  %v733 = vsub.f32 %v162, %v732
  %734 = vmatmul.mubr.f32.gmra.mrb[0].mxu0 %v733
  %v735 = vpop.f32.mrb[0].mxu0
  %v736 = vadd.f32 %v556, %v735
  %v737 = vpop.f32.mrb[0].mxu0
  %738 = vmatprep.mubr.f32.mxu0 0.0
  %v739 = vand.u32 %v165, 4294901760
  %v740 = vsub.f32 %v165, %v739
  %741 = vmatmul.mubr.f32.gmra.mrb[0].mxu0 %v740
  %v742 = vpop.f32.mrb[0].mxu0
  %v743 = vadd.f32 %v562, %v742
  %v744 = vpop.f32.mrb[0].mxu0
  %745 = vmatprep.mubr.f32.mxu0 0.0
  %v746 = vand.u32 %v168, 4294901760
  %v747 = vsub.f32 %v168, %v746
  %748 = vmatmul.mubr.f32.gmra.mrb[0].mxu0 %v747
  %v749 = vpop.f32.mrb[0].mxu0
  %v750 = vadd.f32 %v568, %v749
  %v751 = vpop.f32.mrb[0].mxu0
  %752 = vmatprep.mubr.f32.mxu0 0.0
  %v753 = vand.u32 %v171, 4294901760
  %v754 = vsub.f32 %v171, %v753
  %755 = vmatmul.mubr.f32.gmra.mrb[0].mxu0 %v754
  %v756 = vpop.f32.mrb[0].mxu0
  %v757 = vadd.f32 %v574, %v756
  %v758 = vpop.f32.mrb[0].mxu0
  %759 = vmatprep.mubr.f32.mxu0 0.0
  %v760 = vand.u32 %v174, 4294901760
  %v761 = vsub.f32 %v174, %v760
  %762 = vmatmul.mubr.f32.gmra.mrb[0].mxu0 %v761
  %v763 = vpop.f32.mrb[0].mxu0
  %v764 = vadd.f32 %v580, %v763
  %v765 = vpop.f32.mrb[0].mxu0
  %766 = vmatprep.mubr.f32.mxu0 0.0
  %v767 = vand.u32 %v177, 4294901760
  %v768 = vsub.f32 %v177, %v767
  %769 = vmatmul.mubr.f32.gmra.mrb[0].mxu0 %v768
  %v770 = vpop.f32.mrb[0].mxu0
  %v771 = vadd.f32 %v586, %v770
  %v772 = vpop.f32.mrb[0].mxu0
  %773 = vdwg.mxu0
  %774 = vmatprep.subr.mxu0 0.0
  %v775 = vand.u32 %v30, 4294901760
  %776 = vmatpush1.msra.mxu0 %v775
  %777 = vmatprep.subr.mxu0 0.0
  %v778 = vand.u32 %v31, 4294901760
  %779 = vmatpush1.msra.mxu0 %v778
  %780 = vmatprep.subr.mxu0 0.0
  %v781 = vand.u32 %v32, 4294901760
  %782 = vmatpush1.msra.mxu0 %v781
  %783 = vmatprep.subr.mxu0 0.0
  %v784 = vand.u32 %v33, 4294901760
  %785 = vmatpush1.msra.mxu0 %v784
  %786 = vmatprep.subr.mxu0 0.0
  %787 = vmatpush1.msra.mxu0 0.0
  %788 = vmatprep.subr.mxu0 0.0
  %789 = vmatpush1.msra.mxu0 0.0
  %790 = vmatprep.subr.mxu0 0.0
  %791 = vmatpush1.msra.mxu0 0.0
  %792 = vmatprep.subr.mxu0 0.0
  %793 = vmatpush1.msra.mxu0 0.0
  %794 = vmatprep.subr.mxu0 0.0
  %795 = vmatpush1.msra.mxu0 0.0
  %796 = vmatprep.subr.mxu0 0.0
  %797 = vmatpush1.msra.mxu0 0.0
  %798 = vmatprep.subr.mxu0 0.0
  %799 = vmatpush1.msra.mxu0 0.0
  %800 = vmatprep.subr.mxu0 0.0
  %801 = vmatpush1.msra.mxu0 0.0
  %802 = vmatprep.subr.mxu0 0.0
  %803 = vmatpush1.msra.mxu0 0.0
  %804 = vmatprep.subr.mxu0 0.0
  %805 = vmatpush1.msra.mxu0 0.0
  %806 = vmatprep.subr.mxu0 0.0
  %807 = vmatpush1.msra.mxu0 0.0
  %808 = vmatprep.subr.mxu0 0.0
  %809 = vmatpush1.msra.mxu0 0.0
  %810 = vmatprep.subr.mxu0 0.0
  %811 = vmatpush1.msra.mxu0 0.0
  %812 = vmatprep.subr.mxu0 0.0
  %813 = vmatpush1.msra.mxu0 0.0
  %814 = vmatprep.subr.mxu0 0.0
  %815 = vmatpush1.msra.mxu0 0.0
  %816 = vmatprep.subr.mxu0 0.0
  %817 = vmatpush1.msra.mxu0 0.0
  %818 = vmatprep.subr.mxu0 0.0
  %819 = vmatpush1.msra.mxu0 0.0
  %820 = vmatprep.subr.mxu0 0.0
  %821 = vmatpush1.msra.mxu0 0.0
  %822 = vmatprep.subr.mxu0 0.0
  %823 = vmatpush1.msra.mxu0 0.0
  %824 = vmatprep.subr.mxu0 0.0
  %825 = vmatpush1.msra.mxu0 0.0
  %826 = vmatprep.subr.mxu0 0.0
  %827 = vmatpush1.msra.mxu0 0.0
  %828 = vmatprep.subr.mxu0 0.0
  %829 = vmatpush1.msra.mxu0 0.0
  %830 = vmatprep.subr.mxu0 0.0
  %831 = vmatpush1.msra.mxu0 0.0
  %832 = vmatprep.subr.mxu0 0.0
  %833 = vmatpush1.msra.mxu0 0.0
  %834 = vmatprep.subr.mxu0 0.0
  %835 = vmatpush1.msra.mxu0 0.0
  %836 = vmatprep.subr.mxu0 0.0
  %837 = vmatpush1.msra.mxu0 0.0
  %838 = vmatprep.subr.mxu0 0.0
  %839 = vmatpush1.msra.mxu0 0.0
  %840 = vmatprep.subr.mxu0 0.0
  %841 = vmatpush1.msra.mxu0 0.0
  %842 = vmatprep.mubr.f32.mxu0 0.0
  %v843 = vand.u32 %v132, 4294901760
  %v844 = vsub.f32 %v132, %v843
  %v845 = vand.u32 %v844, 4294901760
  %846 = vmatmul.mubr.f32.gmra.mrb[0].mxu0 %v845
  %v847 = vpop.f32.mrb[0].mxu0
  %v848 = vadd.f32 %v666, %v847
  %v849 = vpop.f32.mrb[0].mxu0
  %850 = vmatprep.mubr.f32.mxu0 0.0
  %v851 = vand.u32 %v135, 4294901760
  %v852 = vsub.f32 %v135, %v851
  %v853 = vand.u32 %v852, 4294901760
  %854 = vmatmul.mubr.f32.gmra.mrb[0].mxu0 %v853
  %v855 = vpop.f32.mrb[0].mxu0
  %v856 = vadd.f32 %v673, %v855
  %v857 = vpop.f32.mrb[0].mxu0
  %858 = vmatprep.mubr.f32.mxu0 0.0
  %v859 = vand.u32 %v138, 4294901760
  %v860 = vsub.f32 %v138, %v859
  %v861 = vand.u32 %v860, 4294901760
  %862 = vmatmul.mubr.f32.gmra.mrb[0].mxu0 %v861
  %v863 = vpop.f32.mrb[0].mxu0
  %v864 = vadd.f32 %v680, %v863
  %v865 = vpop.f32.mrb[0].mxu0
  %866 = vmatprep.mubr.f32.mxu0 0.0
  %v867 = vand.u32 %v141, 4294901760
  %v868 = vsub.f32 %v141, %v867
  %v869 = vand.u32 %v868, 4294901760
  %870 = vmatmul.mubr.f32.gmra.mrb[0].mxu0 %v869
  %v871 = vpop.f32.mrb[0].mxu0
  %v872 = vadd.f32 %v687, %v871
  %v873 = vpop.f32.mrb[0].mxu0
  %874 = vmatprep.mubr.f32.mxu0 0.0
  %v875 = vand.u32 %v144, 4294901760
  %v876 = vsub.f32 %v144, %v875
  %v877 = vand.u32 %v876, 4294901760
  %878 = vmatmul.mubr.f32.gmra.mrb[0].mxu0 %v877
  %v879 = vpop.f32.mrb[0].mxu0
  %v880 = vadd.f32 %v694, %v879
  %v881 = vpop.f32.mrb[0].mxu0
  %882 = vmatprep.mubr.f32.mxu0 0.0
  %v883 = vand.u32 %v147, 4294901760
  %v884 = vsub.f32 %v147, %v883
  %v885 = vand.u32 %v884, 4294901760
  %886 = vmatmul.mubr.f32.gmra.mrb[0].mxu0 %v885
  %v887 = vpop.f32.mrb[0].mxu0
  %v888 = vadd.f32 %v701, %v887
  %v889 = vpop.f32.mrb[0].mxu0
  %890 = vmatprep.mubr.f32.mxu0 0.0
  %v891 = vand.u32 %v150, 4294901760
  %v892 = vsub.f32 %v150, %v891
  %v893 = vand.u32 %v892, 4294901760
  %894 = vmatmul.mubr.f32.gmra.mrb[0].mxu0 %v893
  %v895 = vpop.f32.mrb[0].mxu0
  %v896 = vadd.f32 %v708, %v895
  %v897 = vpop.f32.mrb[0].mxu0
  %898 = vmatprep.mubr.f32.mxu0 0.0
  %v899 = vand.u32 %v153, 4294901760
  %v900 = vsub.f32 %v153, %v899
  %v901 = vand.u32 %v900, 4294901760
  %902 = vmatmul.mubr.f32.gmra.mrb[0].mxu0 %v901
  %v903 = vpop.f32.mrb[0].mxu0
  %v904 = vadd.f32 %v715, %v903
  %v905 = vpop.f32.mrb[0].mxu0
  %906 = vmatprep.mubr.f32.mxu0 0.0
  %v907 = vand.u32 %v156, 4294901760
  %v908 = vsub.f32 %v156, %v907
  %v909 = vand.u32 %v908, 4294901760
  %910 = vmatmul.mubr.f32.gmra.mrb[0].mxu0 %v909
  %v911 = vpop.f32.mrb[0].mxu0
  %v912 = vadd.f32 %v722, %v911
  %v913 = vpop.f32.mrb[0].mxu0
  %914 = vmatprep.mubr.f32.mxu0 0.0
  %v915 = vand.u32 %v159, 4294901760
  %v916 = vsub.f32 %v159, %v915
  %v917 = vand.u32 %v916, 4294901760
  %918 = vmatmul.mubr.f32.gmra.mrb[0].mxu0 %v917
  %v919 = vpop.f32.mrb[0].mxu0
  %v920 = vadd.f32 %v729, %v919
  %v921 = vpop.f32.mrb[0].mxu0
  %922 = vmatprep.mubr.f32.mxu0 0.0
  %v923 = vand.u32 %v162, 4294901760
  %v924 = vsub.f32 %v162, %v923
  %v925 = vand.u32 %v924, 4294901760
  %926 = vmatmul.mubr.f32.gmra.mrb[0].mxu0 %v925
  %v927 = vpop.f32.mrb[0].mxu0
  %v928 = vadd.f32 %v736, %v927
  %v929 = vpop.f32.mrb[0].mxu0
  %930 = vmatprep.mubr.f32.mxu0 0.0
  %v931 = vand.u32 %v165, 4294901760
  %v932 = vsub.f32 %v165, %v931
  %v933 = vand.u32 %v932, 4294901760
  %934 = vmatmul.mubr.f32.gmra.mrb[0].mxu0 %v933
  %v935 = vpop.f32.mrb[0].mxu0
  %v936 = vadd.f32 %v743, %v935
  %v937 = vpop.f32.mrb[0].mxu0
  %938 = vmatprep.mubr.f32.mxu0 0.0
  %v939 = vand.u32 %v168, 4294901760
  %v940 = vsub.f32 %v168, %v939
  %v941 = vand.u32 %v940, 4294901760
  %942 = vmatmul.mubr.f32.gmra.mrb[0].mxu0 %v941
  %v943 = vpop.f32.mrb[0].mxu0
  %v944 = vadd.f32 %v750, %v943
  %v945 = vpop.f32.mrb[0].mxu0
  %946 = vmatprep.mubr.f32.mxu0 0.0
  %v947 = vand.u32 %v171, 4294901760
  %v948 = vsub.f32 %v171, %v947
  %v949 = vand.u32 %v948, 4294901760
  %950 = vmatmul.mubr.f32.gmra.mrb[0].mxu0 %v949
  %v951 = vpop.f32.mrb[0].mxu0
  %v952 = vadd.f32 %v757, %v951
  %v953 = vpop.f32.mrb[0].mxu0
  %954 = vmatprep.mubr.f32.mxu0 0.0
  %v955 = vand.u32 %v174, 4294901760
  %v956 = vsub.f32 %v174, %v955
  %v957 = vand.u32 %v956, 4294901760
  %958 = vmatmul.mubr.f32.gmra.mrb[0].mxu0 %v957
  %v959 = vpop.f32.mrb[0].mxu0
  %v960 = vadd.f32 %v764, %v959
  %v961 = vpop.f32.mrb[0].mxu0
  %962 = vmatprep.mubr.f32.mxu0 0.0
  %v963 = vand.u32 %v177, 4294901760
  %v964 = vsub.f32 %v177, %v963
  %v965 = vand.u32 %v964, 4294901760
  %966 = vmatmul.mubr.f32.gmra.mrb[0].mxu0 %v965
  %v967 = vpop.f32.mrb[0].mxu0
  %v968 = vadd.f32 %v771, %v967
  %v969 = vpop.f32.mrb[0].mxu0
  %970 = vdwg.mxu0
  %971 = vmatprep.subr.mxu0 0.0
  %v972 = vand.u32 %v30, 4294901760
  %v973 = vsub.f32 %v30, %v972
  %v974 = vand.u32 %v973, 4294901760
  %975 = vmatpush1.msra.mxu0 %v974
  %976 = vmatprep.subr.mxu0 0.0
  %v977 = vand.u32 %v31, 4294901760
  %v978 = vsub.f32 %v31, %v977
  %v979 = vand.u32 %v978, 4294901760
  %980 = vmatpush1.msra.mxu0 %v979
  %981 = vmatprep.subr.mxu0 0.0
  %v982 = vand.u32 %v32, 4294901760
  %v983 = vsub.f32 %v32, %v982
  %v984 = vand.u32 %v983, 4294901760
  %985 = vmatpush1.msra.mxu0 %v984
  %986 = vmatprep.subr.mxu0 0.0
  %v987 = vand.u32 %v33, 4294901760
  %v988 = vsub.f32 %v33, %v987
  %v989 = vand.u32 %v988, 4294901760
  %990 = vmatpush1.msra.mxu0 %v989
  %991 = vmatprep.subr.mxu0 0.0
  %992 = vmatpush1.msra.mxu0 0.0
  %993 = vmatprep.subr.mxu0 0.0
  %994 = vmatpush1.msra.mxu0 0.0
  %995 = vmatprep.subr.mxu0 0.0
  %996 = vmatpush1.msra.mxu0 0.0
  %997 = vmatprep.subr.mxu0 0.0
  %998 = vmatpush1.msra.mxu0 0.0
  %999 = vmatprep.subr.mxu0 0.0
  %1000 = vmatpush1.msra.mxu0 0.0
  %1001 = vmatprep.subr.mxu0 0.0
  %1002 = vmatpush1.msra.mxu0 0.0
  %1003 = vmatprep.subr.mxu0 0.0
  %1004 = vmatpush1.msra.mxu0 0.0
  %1005 = vmatprep.subr.mxu0 0.0
  %1006 = vmatpush1.msra.mxu0 0.0
  %1007 = vmatprep.subr.mxu0 0.0
  %1008 = vmatpush1.msra.mxu0 0.0
  %1009 = vmatprep.subr.mxu0 0.0
  %1010 = vmatpush1.msra.mxu0 0.0
  %1011 = vmatprep.subr.mxu0 0.0
  %1012 = vmatpush1.msra.mxu0 0.0
  %1013 = vmatprep.subr.mxu0 0.0
  %1014 = vmatpush1.msra.mxu0 0.0
  %1015 = vmatprep.subr.mxu0 0.0
  %1016 = vmatpush1.msra.mxu0 0.0
  %1017 = vmatprep.subr.mxu0 0.0
  %1018 = vmatpush1.msra.mxu0 0.0
  %1019 = vmatprep.subr.mxu0 0.0
  %1020 = vmatpush1.msra.mxu0 0.0
  %1021 = vmatprep.subr.mxu0 0.0
  %1022 = vmatpush1.msra.mxu0 0.0
  %1023 = vmatprep.subr.mxu0 0.0
  %1024 = vmatpush1.msra.mxu0 0.0
  %1025 = vmatprep.subr.mxu0 0.0
  %1026 = vmatpush1.msra.mxu0 0.0
  %1027 = vmatprep.subr.mxu0 0.0
  %1028 = vmatpush1.msra.mxu0 0.0
  %1029 = vmatprep.subr.mxu0 0.0
  %1030 = vmatpush1.msra.mxu0 0.0
  %1031 = vmatprep.subr.mxu0 0.0
  %1032 = vmatpush1.msra.mxu0 0.0
  %1033 = vmatprep.subr.mxu0 0.0
  %1034 = vmatpush1.msra.mxu0 0.0
  %1035 = vmatprep.subr.mxu0 0.0
  %1036 = vmatpush1.msra.mxu0 0.0
  %1037 = vmatprep.subr.mxu0 0.0
  %1038 = vmatpush1.msra.mxu0 0.0
  %1039 = vmatprep.subr.mxu0 0.0
  %1040 = vmatpush1.msra.mxu0 0.0
  %1041 = vmatprep.subr.mxu0 0.0
  %1042 = vmatpush1.msra.mxu0 0.0
  %1043 = vmatprep.subr.mxu0 0.0
  %1044 = vmatpush1.msra.mxu0 0.0
  %1045 = vmatprep.subr.mxu0 0.0
  %1046 = vmatpush1.msra.mxu0 0.0
  %1047 = vmatprep.mubr.f32.mxu0 0.0
  %v1048 = vand.u32 %v132, 4294901760
  %1049 = vmatmul.mubr.f32.gmra.mrb[0].mxu0 %v1048
  %v1050 = vpop.f32.mrb[0].mxu0
  %v1051 = vadd.f32 %v848, %v1050
  %v1052 = vpop.f32.mrb[0].mxu0
  %1053 = vmatprep.mubr.f32.mxu0 0.0
  %v1054 = vand.u32 %v135, 4294901760
  %1055 = vmatmul.mubr.f32.gmra.mrb[0].mxu0 %v1054
  %v1056 = vpop.f32.mrb[0].mxu0
  %v1057 = vadd.f32 %v856, %v1056
  %v1058 = vpop.f32.mrb[0].mxu0
  %1059 = vmatprep.mubr.f32.mxu0 0.0
  %v1060 = vand.u32 %v138, 4294901760
  %1061 = vmatmul.mubr.f32.gmra.mrb[0].mxu0 %v1060
  %v1062 = vpop.f32.mrb[0].mxu0
  %v1063 = vadd.f32 %v864, %v1062
  %v1064 = vpop.f32.mrb[0].mxu0
  %1065 = vmatprep.mubr.f32.mxu0 0.0
  %v1066 = vand.u32 %v141, 4294901760
  %1067 = vmatmul.mubr.f32.gmra.mrb[0].mxu0 %v1066
  %v1068 = vpop.f32.mrb[0].mxu0
  %v1069 = vadd.f32 %v872, %v1068
  %v1070 = vpop.f32.mrb[0].mxu0
  %1071 = vmatprep.mubr.f32.mxu0 0.0
  %v1072 = vand.u32 %v144, 4294901760
  %1073 = vmatmul.mubr.f32.gmra.mrb[0].mxu0 %v1072
  %v1074 = vpop.f32.mrb[0].mxu0
  %v1075 = vadd.f32 %v880, %v1074
  %v1076 = vpop.f32.mrb[0].mxu0
  %1077 = vmatprep.mubr.f32.mxu0 0.0
  %v1078 = vand.u32 %v147, 4294901760
  %1079 = vmatmul.mubr.f32.gmra.mrb[0].mxu0 %v1078
  %v1080 = vpop.f32.mrb[0].mxu0
  %v1081 = vadd.f32 %v888, %v1080
  %v1082 = vpop.f32.mrb[0].mxu0
  %1083 = vmatprep.mubr.f32.mxu0 0.0
  %v1084 = vand.u32 %v150, 4294901760
  %1085 = vmatmul.mubr.f32.gmra.mrb[0].mxu0 %v1084
  %v1086 = vpop.f32.mrb[0].mxu0
  %v1087 = vadd.f32 %v896, %v1086
  %v1088 = vpop.f32.mrb[0].mxu0
  %1089 = vmatprep.mubr.f32.mxu0 0.0
  %v1090 = vand.u32 %v153, 4294901760
  %1091 = vmatmul.mubr.f32.gmra.mrb[0].mxu0 %v1090
  %v1092 = vpop.f32.mrb[0].mxu0
  %v1093 = vadd.f32 %v904, %v1092
  %v1094 = vpop.f32.mrb[0].mxu0
  %1095 = vmatprep.mubr.f32.mxu0 0.0
  %v1096 = vand.u32 %v156, 4294901760
  %1097 = vmatmul.mubr.f32.gmra.mrb[0].mxu0 %v1096
  %v1098 = vpop.f32.mrb[0].mxu0
  %v1099 = vadd.f32 %v912, %v1098
  %v1100 = vpop.f32.mrb[0].mxu0
  %1101 = vmatprep.mubr.f32.mxu0 0.0
  %v1102 = vand.u32 %v159, 4294901760
  %1103 = vmatmul.mubr.f32.gmra.mrb[0].mxu0 %v1102
  %v1104 = vpop.f32.mrb[0].mxu0
  %v1105 = vadd.f32 %v920, %v1104
  %v1106 = vpop.f32.mrb[0].mxu0
  %1107 = vmatprep.mubr.f32.mxu0 0.0
  %v1108 = vand.u32 %v162, 4294901760
  %1109 = vmatmul.mubr.f32.gmra.mrb[0].mxu0 %v1108
  %v1110 = vpop.f32.mrb[0].mxu0
  %v1111 = vadd.f32 %v928, %v1110
  %v1112 = vpop.f32.mrb[0].mxu0
  %1113 = vmatprep.mubr.f32.mxu0 0.0
  %v1114 = vand.u32 %v165, 4294901760
  %1115 = vmatmul.mubr.f32.gmra.mrb[0].mxu0 %v1114
  %v1116 = vpop.f32.mrb[0].mxu0
  %v1117 = vadd.f32 %v936, %v1116
  %v1118 = vpop.f32.mrb[0].mxu0
  %1119 = vmatprep.mubr.f32.mxu0 0.0
  %v1120 = vand.u32 %v168, 4294901760
  %1121 = vmatmul.mubr.f32.gmra.mrb[0].mxu0 %v1120
  %v1122 = vpop.f32.mrb[0].mxu0
  %v1123 = vadd.f32 %v944, %v1122
  %v1124 = vpop.f32.mrb[0].mxu0
  %1125 = vmatprep.mubr.f32.mxu0 0.0
  %v1126 = vand.u32 %v171, 4294901760
  %1127 = vmatmul.mubr.f32.gmra.mrb[0].mxu0 %v1126
  %v1128 = vpop.f32.mrb[0].mxu0
  %v1129 = vadd.f32 %v952, %v1128
  %v1130 = vpop.f32.mrb[0].mxu0
  %1131 = vmatprep.mubr.f32.mxu0 0.0
  %v1132 = vand.u32 %v174, 4294901760
  %1133 = vmatmul.mubr.f32.gmra.mrb[0].mxu0 %v1132
  %v1134 = vpop.f32.mrb[0].mxu0
  %v1135 = vadd.f32 %v960, %v1134
  %v1136 = vpop.f32.mrb[0].mxu0
  %1137 = vmatprep.mubr.f32.mxu0 0.0
  %v1138 = vand.u32 %v177, 4294901760
  %1139 = vmatmul.mubr.f32.gmra.mrb[0].mxu0 %v1138
  %v1140 = vpop.f32.mrb[0].mxu0
  %v1141 = vadd.f32 %v968, %v1140
  %v1142 = vpop.f32.mrb[0].mxu0
  %1143 = vdwg.mxu0
  %1144 = vmatprep.subr.mxu0 0.0
  %v1145 = vand.u32 %v30, 4294901760
  %1146 = vmatpush1.msra.mxu0 %v1145
  %1147 = vmatprep.subr.mxu0 0.0
  %v1148 = vand.u32 %v31, 4294901760
  %1149 = vmatpush1.msra.mxu0 %v1148
  %1150 = vmatprep.subr.mxu0 0.0
  %v1151 = vand.u32 %v32, 4294901760
  %1152 = vmatpush1.msra.mxu0 %v1151
  %1153 = vmatprep.subr.mxu0 0.0
  %v1154 = vand.u32 %v33, 4294901760
  %1155 = vmatpush1.msra.mxu0 %v1154
  %1156 = vmatprep.subr.mxu0 0.0
  %1157 = vmatpush1.msra.mxu0 0.0
  %1158 = vmatprep.subr.mxu0 0.0
  %1159 = vmatpush1.msra.mxu0 0.0
  %1160 = vmatprep.subr.mxu0 0.0
  %1161 = vmatpush1.msra.mxu0 0.0
  %1162 = vmatprep.subr.mxu0 0.0
  %1163 = vmatpush1.msra.mxu0 0.0
  %1164 = vmatprep.subr.mxu0 0.0
  %1165 = vmatpush1.msra.mxu0 0.0
  %1166 = vmatprep.subr.mxu0 0.0
  %1167 = vmatpush1.msra.mxu0 0.0
  %1168 = vmatprep.subr.mxu0 0.0
  %1169 = vmatpush1.msra.mxu0 0.0
  %1170 = vmatprep.subr.mxu0 0.0
  %1171 = vmatpush1.msra.mxu0 0.0
  %1172 = vmatprep.subr.mxu0 0.0
  %1173 = vmatpush1.msra.mxu0 0.0
  %1174 = vmatprep.subr.mxu0 0.0
  %1175 = vmatpush1.msra.mxu0 0.0
  %1176 = vmatprep.subr.mxu0 0.0
  %1177 = vmatpush1.msra.mxu0 0.0
  %1178 = vmatprep.subr.mxu0 0.0
  %1179 = vmatpush1.msra.mxu0 0.0
  %1180 = vmatprep.subr.mxu0 0.0
  %1181 = vmatpush1.msra.mxu0 0.0
  %1182 = vmatprep.subr.mxu0 0.0
  %1183 = vmatpush1.msra.mxu0 0.0
  %1184 = vmatprep.subr.mxu0 0.0
  %1185 = vmatpush1.msra.mxu0 0.0
  %1186 = vmatprep.subr.mxu0 0.0
  %1187 = vmatpush1.msra.mxu0 0.0
  %1188 = vmatprep.subr.mxu0 0.0
  %1189 = vmatpush1.msra.mxu0 0.0
  %1190 = vmatprep.subr.mxu0 0.0
  %1191 = vmatpush1.msra.mxu0 0.0
  %1192 = vmatprep.subr.mxu0 0.0
  %1193 = vmatpush1.msra.mxu0 0.0
  %1194 = vmatprep.subr.mxu0 0.0
  %1195 = vmatpush1.msra.mxu0 0.0
  %1196 = vmatprep.subr.mxu0 0.0
  %1197 = vmatpush1.msra.mxu0 0.0
  %1198 = vmatprep.subr.mxu0 0.0
  %1199 = vmatpush1.msra.mxu0 0.0
  %1200 = vmatprep.subr.mxu0 0.0
  %1201 = vmatpush1.msra.mxu0 0.0
  %1202 = vmatprep.subr.mxu0 0.0
  %1203 = vmatpush1.msra.mxu0 0.0
  %1204 = vmatprep.subr.mxu0 0.0
  %1205 = vmatpush1.msra.mxu0 0.0
  %1206 = vmatprep.subr.mxu0 0.0
  %1207 = vmatpush1.msra.mxu0 0.0
  %1208 = vmatprep.subr.mxu0 0.0
  %1209 = vmatpush1.msra.mxu0 0.0
  %1210 = vmatprep.subr.mxu0 0.0
  %1211 = vmatpush1.msra.mxu0 0.0
  %1212 = vmatprep.mubr.f32.mxu0 0.0
  %v1213 = vand.u32 %v132, 4294901760
  %1214 = vmatmul.mubr.f32.gmra.mrb[0].mxu0 %v1213
  %v1215 = vpop.f32.mrb[0].mxu0
  %v1216 = vadd.f32 %v1051, %v1215
  %v1217 = vpop.f32.mrb[0].mxu0
  %1218 = vmatprep.mubr.f32.mxu0 0.0
  %v1219 = vand.u32 %v135, 4294901760
  %1220 = vmatmul.mubr.f32.gmra.mrb[0].mxu0 %v1219
  %v1221 = vpop.f32.mrb[0].mxu0
  %v1222 = vadd.f32 %v1057, %v1221
  %v1223 = vpop.f32.mrb[0].mxu0
  %1224 = vmatprep.mubr.f32.mxu0 0.0
  %v1225 = vand.u32 %v138, 4294901760
  %1226 = vmatmul.mubr.f32.gmra.mrb[0].mxu0 %v1225
  %v1227 = vpop.f32.mrb[0].mxu0
  %v1228 = vadd.f32 %v1063, %v1227
  %v1229 = vpop.f32.mrb[0].mxu0
  %1230 = vmatprep.mubr.f32.mxu0 0.0
  %v1231 = vand.u32 %v141, 4294901760
  %1232 = vmatmul.mubr.f32.gmra.mrb[0].mxu0 %v1231
  %v1233 = vpop.f32.mrb[0].mxu0
  %v1234 = vadd.f32 %v1069, %v1233
  %v1235 = vpop.f32.mrb[0].mxu0
  %1236 = vmatprep.mubr.f32.mxu0 0.0
  %v1237 = vand.u32 %v144, 4294901760
  %1238 = vmatmul.mubr.f32.gmra.mrb[0].mxu0 %v1237
  %v1239 = vpop.f32.mrb[0].mxu0
  %v1240 = vadd.f32 %v1075, %v1239
  %v1241 = vpop.f32.mrb[0].mxu0
  %1242 = vmatprep.mubr.f32.mxu0 0.0
  %v1243 = vand.u32 %v147, 4294901760
  %1244 = vmatmul.mubr.f32.gmra.mrb[0].mxu0 %v1243
  %v1245 = vpop.f32.mrb[0].mxu0
  %v1246 = vadd.f32 %v1081, %v1245
  %v1247 = vpop.f32.mrb[0].mxu0
  %1248 = vmatprep.mubr.f32.mxu0 0.0
  %v1249 = vand.u32 %v150, 4294901760
  %1250 = vmatmul.mubr.f32.gmra.mrb[0].mxu0 %v1249
  %v1251 = vpop.f32.mrb[0].mxu0
  %v1252 = vadd.f32 %v1087, %v1251
  %v1253 = vpop.f32.mrb[0].mxu0
  %1254 = vmatprep.mubr.f32.mxu0 0.0
  %v1255 = vand.u32 %v153, 4294901760
  %1256 = vmatmul.mubr.f32.gmra.mrb[0].mxu0 %v1255
  %v1257 = vpop.f32.mrb[0].mxu0
  %v1258 = vadd.f32 %v1093, %v1257
  %v1259 = vpop.f32.mrb[0].mxu0
  %1260 = vmatprep.mubr.f32.mxu0 0.0
  %v1261 = vand.u32 %v156, 4294901760
  %1262 = vmatmul.mubr.f32.gmra.mrb[0].mxu0 %v1261
  %v1263 = vpop.f32.mrb[0].mxu0
  %v1264 = vadd.f32 %v1099, %v1263
  %v1265 = vpop.f32.mrb[0].mxu0
  %1266 = vmatprep.mubr.f32.mxu0 0.0
  %v1267 = vand.u32 %v159, 4294901760
  %1268 = vmatmul.mubr.f32.gmra.mrb[0].mxu0 %v1267
  %v1269 = vpop.f32.mrb[0].mxu0
  %v1270 = vadd.f32 %v1105, %v1269
  %v1271 = vpop.f32.mrb[0].mxu0
  %1272 = vmatprep.mubr.f32.mxu0 0.0
  %v1273 = vand.u32 %v162, 4294901760
  %1274 = vmatmul.mubr.f32.gmra.mrb[0].mxu0 %v1273
  %v1275 = vpop.f32.mrb[0].mxu0
  %v1276 = vadd.f32 %v1111, %v1275
  %v1277 = vpop.f32.mrb[0].mxu0
  %1278 = vmatprep.mubr.f32.mxu0 0.0
  %v1279 = vand.u32 %v165, 4294901760
  %1280 = vmatmul.mubr.f32.gmra.mrb[0].mxu0 %v1279
  %v1281 = vpop.f32.mrb[0].mxu0
  %v1282 = vadd.f32 %v1117, %v1281
  %v1283 = vpop.f32.mrb[0].mxu0
  %1284 = vmatprep.mubr.f32.mxu0 0.0
  %v1285 = vand.u32 %v168, 4294901760
  %1286 = vmatmul.mubr.f32.gmra.mrb[0].mxu0 %v1285
  %v1287 = vpop.f32.mrb[0].mxu0
  %v1288 = vadd.f32 %v1123, %v1287
  %v1289 = vpop.f32.mrb[0].mxu0
  %1290 = vmatprep.mubr.f32.mxu0 0.0
  %v1291 = vand.u32 %v171, 4294901760
  %1292 = vmatmul.mubr.f32.gmra.mrb[0].mxu0 %v1291
  %v1293 = vpop.f32.mrb[0].mxu0
  %v1294 = vadd.f32 %v1129, %v1293
  %v1295 = vpop.f32.mrb[0].mxu0
  %1296 = vmatprep.mubr.f32.mxu0 0.0
  %v1297 = vand.u32 %v174, 4294901760
  %1298 = vmatmul.mubr.f32.gmra.mrb[0].mxu0 %v1297
  %v1299 = vpop.f32.mrb[0].mxu0
  %v1300 = vadd.f32 %v1135, %v1299
  %v1301 = vpop.f32.mrb[0].mxu0
  %1302 = vmatprep.mubr.f32.mxu0 0.0
  %v1303 = vand.u32 %v177, 4294901760
  %1304 = vmatmul.mubr.f32.gmra.mrb[0].mxu0 %v1303
  %v1305 = vpop.f32.mrb[0].mxu0
  %v1306 = vadd.f32 %v1141, %v1305
  %v1307 = vpop.f32.mrb[0].mxu0
  %1308 = vdwg.mxu0
  %1309 = vst.msk [vmem:[%s3] sm:$0xff] %vm130, %v1216
  %1310 = vst.msk [vmem:[%s3 + $0x8] sm:$0xff] %vm130, %v1222
  %1311 = vst.msk [vmem:[%s3 + $0x10] sm:$0xff] %vm130, %v1228
  %1312 = vst.msk [vmem:[%s3 + $0x18] sm:$0xff] %vm130, %v1234
  %1313 = vst.msk [vmem:[%s3 + $0x20] sm:$0xff] %vm130, %v1240
  %1314 = vst.msk [vmem:[%s3 + $0x28] sm:$0xff] %vm130, %v1246
  %1315 = vst.msk [vmem:[%s3 + $0x30] sm:$0xff] %vm130, %v1252
  %1316 = vst.msk [vmem:[%s3 + $0x38] sm:$0xff] %vm130, %v1258
  %1317 = vst.msk [vmem:[%s3 + $0x40] sm:$0xff] %vm130, %v1264
  %1318 = vst.msk [vmem:[%s3 + $0x48] sm:$0xff] %vm130, %v1270
  %1319 = vst.msk [vmem:[%s3 + $0x50] sm:$0xff] %vm130, %v1276
  %1320 = vst.msk [vmem:[%s3 + $0x58] sm:$0xff] %vm130, %v1282
  %1321 = vst.msk [vmem:[%s3 + $0x60] sm:$0xff] %vm130, %v1288
  %1322 = vst.msk [vmem:[%s3 + $0x68] sm:$0xff] %vm130, %v1294
  %1323 = vst.msk [vmem:[%s3 + $0x70] sm:$0xff] %vm130, %v1300
  %1324 = vst.msk [vmem:[%s3 + $0x78] sm:$0xff] %vm130, %v1306
  // Predicated region
  $region14: #{baseline_unet_pallas.18} parent=0 // pred_check
    _
  $region15: #{baseline_unet_pallas.18} parent=0 // pred_check_branch
    %1326 = sbr.rel (0) target = $region17
  $region16: #{baseline_unet_pallas.18} parent=0 // pred_region
    _
  $region17: #{baseline_unet_pallas.18} parent=0 // pred_fallthru
    _
  // Predicated region
  $region18: #{baseline_unet_pallas.18} parent=0 // pred_check
    _
  $region19: #{baseline_unet_pallas.18} parent=0 // pred_check_branch
    %1328 = sbr.rel (0) target = $region21
  $region20: #{baseline_unet_pallas.18} parent=0 // pred_region
    _
  $region21: #{baseline_unet_pallas.18} parent=0 // pred_fallthru
    _

// kernel: baseline_unet_pallas.20
$region0: #{baseline_unet_pallas.20}
  #allocation0 [shape = 'u32[]', space=smem, size = 0x4, offset = 0x4, fixed_abs, tag = 'smem constant byte address 0x4 - core index']
  #allocation1 [shape = 'u32[144,128]{1,0:T(1,128)}', space=vmem, size = 0x12000, scoped, tag = 'internal scratch']
  %s0 = inlined_call_operand.vmem [shape: f32[8,72], index: 0, kind: input, shape index: {}]
  %s1 = inlined_call_operand.vmem [shape: f32[72,128], index: 1, kind: input, shape index: {}]
  %s2 = inlined_call_operand.vmem [shape: f32[8,1], index: 2, kind: input, shape index: {}]
  %s3 = inlined_call_operand.vmem [shape: f32[8,1], index: 3, kind: input, shape index: {}]
  %s4 = inlined_call_operand.vmem [shape: f32[8,128], index: 4, kind: output, shape index: {}]
  %s5 = sld [smem:[#allocation0]]
  $region26: #{baseline_unet_pallas.20} parent=0
    _
  %s7 = ssub.s32 1, %s5
  %s8 = scalar_select 0, %s7, %s5
  // Predicated region
  $region2: #{baseline_unet_pallas.20} parent=0 // pred_check
    _
  $region3: #{baseline_unet_pallas.20} parent=0 // pred_check_branch
    %10 = sbr.rel (0) target = $region5
  $region4: #{baseline_unet_pallas.20} parent=0 // pred_region
    _
  $region5: #{baseline_unet_pallas.20} parent=0 // pred_fallthru
    _
  // Predicated region
  $region6: #{baseline_unet_pallas.20} parent=0 // pred_check
    _
  $region7: #{baseline_unet_pallas.20} parent=0 // pred_check_branch
    %12 = sbr.rel (0) target = $region9
  $region8: #{baseline_unet_pallas.20} parent=0 // pred_region
    _
  $region9: #{baseline_unet_pallas.20} parent=0 // pred_fallthru
    _
  // Predicated region
  $region10: #{baseline_unet_pallas.20} parent=0 // pred_check
    _
  $region11: #{baseline_unet_pallas.20} parent=0 // pred_check_branch
    %14 = sbr.rel (0) target = $region13
  $region12: #{baseline_unet_pallas.20} parent=0 // pred_region
    _
  $region13: #{baseline_unet_pallas.20} parent=0 // pred_fallthru
    _
  // Predicated region
  $region14: #{baseline_unet_pallas.20} parent=0 // pred_check
    _
  $region15: #{baseline_unet_pallas.20} parent=0 // pred_check_branch
    %16 = sbr.rel (0) target = $region17
  $region16: #{baseline_unet_pallas.20} parent=0 // pred_region
    _
  $region17: #{baseline_unet_pallas.20} parent=0 // pred_fallthru
    _
  %v17 = vld [vmem:[%s0] sm:$0xff]
  %v18 = vld [vmem:[%s1] sm:$0xff]
  %v19 = vld [vmem:[%s1 + $0x8] sm:$0xff]
  %v20 = vld [vmem:[%s1 + $0x10] sm:$0xff]
  %v21 = vld [vmem:[%s1 + $0x18] sm:$0xff]
  %v22 = vld [vmem:[%s1 + $0x20] sm:$0xff]
  %v23 = vld [vmem:[%s1 + $0x28] sm:$0xff]
  %v24 = vld [vmem:[%s1 + $0x30] sm:$0xff]
  %v25 = vld [vmem:[%s1 + $0x38] sm:$0xff]
  %v26 = vld [vmem:[%s1 + $0x40] sm:$0xff]
  %vm27 = vcmask 588800
  %v29 = vsel %vm27, %v17, 0
  %31 = vmatprep.subr.mxu0 0.0
  %v32 = vand.u32 %v18, 4294901760
  %33 = vmatpush1.msra.mxu0 %v32
  %34 = vmatprep.subr.mxu0 0.0
  %v35 = vand.u32 %v19, 4294901760
  %36 = vmatpush1.msra.mxu0 %v35
  %37 = vmatprep.subr.mxu0 0.0
  %v38 = vand.u32 %v20, 4294901760
  %39 = vmatpush1.msra.mxu0 %v38
  %40 = vmatprep.subr.mxu0 0.0
  %v41 = vand.u32 %v21, 4294901760
  %42 = vmatpush1.msra.mxu0 %v41
  %43 = vmatprep.subr.mxu0 0.0
  %v44 = vand.u32 %v22, 4294901760
  %45 = vmatpush1.msra.mxu0 %v44
  %46 = vmatprep.subr.mxu0 0.0
  %v47 = vand.u32 %v23, 4294901760
  %48 = vmatpush1.msra.mxu0 %v47
  %49 = vmatprep.subr.mxu0 0.0
  %v50 = vand.u32 %v24, 4294901760
  %51 = vmatpush1.msra.mxu0 %v50
  %52 = vmatprep.subr.mxu0 0.0
  %v53 = vand.u32 %v25, 4294901760
  %54 = vmatpush1.msra.mxu0 %v53
  %55 = vmatprep.subr.mxu0 0.0
  %v56 = vand.u32 %v26, 4294901760
  %57 = vmatpush1.msra.mxu0 %v56
  %58 = vmatprep.subr.mxu0 0.0
  %59 = vmatpush1.msra.mxu0 0.0
  %60 = vmatprep.subr.mxu0 0.0
  %61 = vmatpush1.msra.mxu0 0.0
  %62 = vmatprep.subr.mxu0 0.0
  %63 = vmatpush1.msra.mxu0 0.0
  %64 = vmatprep.subr.mxu0 0.0
  %65 = vmatpush1.msra.mxu0 0.0
  %66 = vmatprep.subr.mxu0 0.0
  %67 = vmatpush1.msra.mxu0 0.0
  %68 = vmatprep.subr.mxu0 0.0
  %69 = vmatpush1.msra.mxu0 0.0
  %70 = vmatprep.subr.mxu0 0.0
  %71 = vmatpush1.msra.mxu0 0.0
  %72 = vmatprep.subr.mxu0 0.0
  %73 = vmatpush1.msra.mxu0 0.0
  %74 = vmatprep.subr.mxu0 0.0
  %75 = vmatpush1.msra.mxu0 0.0
  %76 = vmatprep.subr.mxu0 0.0
  %77 = vmatpush1.msra.mxu0 0.0
  %78 = vmatprep.subr.mxu0 0.0
  %79 = vmatpush1.msra.mxu0 0.0
  %80 = vmatprep.subr.mxu0 0.0
  %81 = vmatpush1.msra.mxu0 0.0
  %82 = vmatprep.subr.mxu0 0.0
  %83 = vmatpush1.msra.mxu0 0.0
  %84 = vmatprep.subr.mxu0 0.0
  %85 = vmatpush1.msra.mxu0 0.0
  %86 = vmatprep.subr.mxu0 0.0
  %87 = vmatpush1.msra.mxu0 0.0
  %88 = vmatprep.subr.mxu0 0.0
  %89 = vmatpush1.msra.mxu0 0.0
  %90 = vmatprep.subr.mxu0 0.0
  %91 = vmatpush1.msra.mxu0 0.0
  %92 = vmatprep.subr.mxu0 0.0
  %93 = vmatpush1.msra.mxu0 0.0
  %94 = vmatprep.subr.mxu0 0.0
  %95 = vmatpush1.msra.mxu0 0.0
  %96 = vmatprep.subr.mxu0 0.0
  %97 = vmatpush1.msra.mxu0 0.0
  %98 = vmatprep.subr.mxu0 0.0
  %99 = vmatpush1.msra.mxu0 0.0
  %100 = vmatprep.subr.mxu0 0.0
  %101 = vmatpush1.msra.mxu0 0.0
  %102 = vmatprep.subr.mxu0 0.0
  %103 = vmatpush1.msra.mxu0 0.0
  %104 = vmatprep.mubr.f32.mxu0 0.0
  %v105 = vand.u32 %v29, 4294901760
  %v106 = vsub.f32 %v29, %v105
  %v107 = vand.u32 %v106, 4294901760
  %v108 = vsub.f32 %v106, %v107
  %v109 = vand.u32 %v108, 4294901760
  %110 = vmatmul.mubr.f32.gmra.mrb[0].mxu0 %v109
  %v111 = vpop.f32.mrb[0].mxu0
  %v112 = vadd.f32 0.0, %v111
  %v113 = vpop.f32.mrb[0].mxu0
  %114 = vdwg.mxu0
  %115 = vmatprep.subr.mxu0 0.0
  %v116 = vand.u32 %v18, 4294901760
  %v117 = vsub.f32 %v18, %v116
  %v118 = vand.u32 %v117, 4294901760
  %v119 = vsub.f32 %v117, %v118
  %v120 = vand.u32 %v119, 4294901760
  %121 = vmatpush1.msra.mxu0 %v120
  %122 = vmatprep.subr.mxu0 0.0
  %v123 = vand.u32 %v19, 4294901760
  %v124 = vsub.f32 %v19, %v123
  %v125 = vand.u32 %v124, 4294901760
  %v126 = vsub.f32 %v124, %v125
  %v127 = vand.u32 %v126, 4294901760
  %128 = vmatpush1.msra.mxu0 %v127
  %129 = vmatprep.subr.mxu0 0.0
  %v130 = vand.u32 %v20, 4294901760
  %v131 = vsub.f32 %v20, %v130
  %v132 = vand.u32 %v131, 4294901760
  %v133 = vsub.f32 %v131, %v132
  %v134 = vand.u32 %v133, 4294901760
  %135 = vmatpush1.msra.mxu0 %v134
  %136 = vmatprep.subr.mxu0 0.0
  %v137 = vand.u32 %v21, 4294901760
  %v138 = vsub.f32 %v21, %v137
  %v139 = vand.u32 %v138, 4294901760
  %v140 = vsub.f32 %v138, %v139
  %v141 = vand.u32 %v140, 4294901760
  %142 = vmatpush1.msra.mxu0 %v141
  %143 = vmatprep.subr.mxu0 0.0
  %v144 = vand.u32 %v22, 4294901760
  %v145 = vsub.f32 %v22, %v144
  %v146 = vand.u32 %v145, 4294901760
  %v147 = vsub.f32 %v145, %v146
  %v148 = vand.u32 %v147, 4294901760
  %149 = vmatpush1.msra.mxu0 %v148
  %150 = vmatprep.subr.mxu0 0.0
  %v151 = vand.u32 %v23, 4294901760
  %v152 = vsub.f32 %v23, %v151
  %v153 = vand.u32 %v152, 4294901760
  %v154 = vsub.f32 %v152, %v153
  %v155 = vand.u32 %v154, 4294901760
  %156 = vmatpush1.msra.mxu0 %v155
  %157 = vmatprep.subr.mxu0 0.0
  %v158 = vand.u32 %v24, 4294901760
  %v159 = vsub.f32 %v24, %v158
  %v160 = vand.u32 %v159, 4294901760
  %v161 = vsub.f32 %v159, %v160
  %v162 = vand.u32 %v161, 4294901760
  %163 = vmatpush1.msra.mxu0 %v162
  %164 = vmatprep.subr.mxu0 0.0
  %v165 = vand.u32 %v25, 4294901760
  %v166 = vsub.f32 %v25, %v165
  %v167 = vand.u32 %v166, 4294901760
  %v168 = vsub.f32 %v166, %v167
  %v169 = vand.u32 %v168, 4294901760
  %170 = vmatpush1.msra.mxu0 %v169
  %171 = vmatprep.subr.mxu0 0.0
  %v172 = vand.u32 %v26, 4294901760
  %v173 = vsub.f32 %v26, %v172
  %v174 = vand.u32 %v173, 4294901760
  %v175 = vsub.f32 %v173, %v174
  %v176 = vand.u32 %v175, 4294901760
  %177 = vmatpush1.msra.mxu0 %v176
  %178 = vmatprep.subr.mxu0 0.0
  %179 = vmatpush1.msra.mxu0 0.0
  %180 = vmatprep.subr.mxu0 0.0
  %181 = vmatpush1.msra.mxu0 0.0
  %182 = vmatprep.subr.mxu0 0.0
  %183 = vmatpush1.msra.mxu0 0.0
  %184 = vmatprep.subr.mxu0 0.0
  %185 = vmatpush1.msra.mxu0 0.0
  %186 = vmatprep.subr.mxu0 0.0
  %187 = vmatpush1.msra.mxu0 0.0
  %188 = vmatprep.subr.mxu0 0.0
  %189 = vmatpush1.msra.mxu0 0.0
  %190 = vmatprep.subr.mxu0 0.0
  %191 = vmatpush1.msra.mxu0 0.0
  %192 = vmatprep.subr.mxu0 0.0
  %193 = vmatpush1.msra.mxu0 0.0
  %194 = vmatprep.subr.mxu0 0.0
  %195 = vmatpush1.msra.mxu0 0.0
  %196 = vmatprep.subr.mxu0 0.0
  %197 = vmatpush1.msra.mxu0 0.0
  %198 = vmatprep.subr.mxu0 0.0
  %199 = vmatpush1.msra.mxu0 0.0
  %200 = vmatprep.subr.mxu0 0.0
  %201 = vmatpush1.msra.mxu0 0.0
  %202 = vmatprep.subr.mxu0 0.0
  %203 = vmatpush1.msra.mxu0 0.0
  %204 = vmatprep.subr.mxu0 0.0
  %205 = vmatpush1.msra.mxu0 0.0
  %206 = vmatprep.subr.mxu0 0.0
  %207 = vmatpush1.msra.mxu0 0.0
  %208 = vmatprep.subr.mxu0 0.0
  %209 = vmatpush1.msra.mxu0 0.0
  %210 = vmatprep.subr.mxu0 0.0
  %211 = vmatpush1.msra.mxu0 0.0
  %212 = vmatprep.subr.mxu0 0.0
  %213 = vmatpush1.msra.mxu0 0.0
  %214 = vmatprep.subr.mxu0 0.0
  %215 = vmatpush1.msra.mxu0 0.0
  %216 = vmatprep.subr.mxu0 0.0
  %217 = vmatpush1.msra.mxu0 0.0
  %218 = vmatprep.subr.mxu0 0.0
  %219 = vmatpush1.msra.mxu0 0.0
  %220 = vmatprep.subr.mxu0 0.0
  %221 = vmatpush1.msra.mxu0 0.0
  %222 = vmatprep.subr.mxu0 0.0
  %223 = vmatpush1.msra.mxu0 0.0
  %224 = vmatprep.mubr.f32.mxu0 0.0
  %v225 = vand.u32 %v29, 4294901760
  %226 = vmatmul.mubr.f32.gmra.mrb[0].mxu0 %v225
  %v227 = vpop.f32.mrb[0].mxu0
  %v228 = vadd.f32 %v112, %v227
  %v229 = vpop.f32.mrb[0].mxu0
  %230 = vdwg.mxu0
  %231 = vmatprep.subr.mxu0 0.0
  %v232 = vand.u32 %v18, 4294901760
  %v233 = vsub.f32 %v18, %v232
  %234 = vmatpush1.msra.mxu0 %v233
  %235 = vmatprep.subr.mxu0 0.0
  %v236 = vand.u32 %v19, 4294901760
  %v237 = vsub.f32 %v19, %v236
  %238 = vmatpush1.msra.mxu0 %v237
  %239 = vmatprep.subr.mxu0 0.0
  %v240 = vand.u32 %v20, 4294901760
  %v241 = vsub.f32 %v20, %v240
  %242 = vmatpush1.msra.mxu0 %v241
  %243 = vmatprep.subr.mxu0 0.0
  %v244 = vand.u32 %v21, 4294901760
  %v245 = vsub.f32 %v21, %v244
  %246 = vmatpush1.msra.mxu0 %v245
  %247 = vmatprep.subr.mxu0 0.0
  %v248 = vand.u32 %v22, 4294901760
  %v249 = vsub.f32 %v22, %v248
  %250 = vmatpush1.msra.mxu0 %v249
  %251 = vmatprep.subr.mxu0 0.0
  %v252 = vand.u32 %v23, 4294901760
  %v253 = vsub.f32 %v23, %v252
  %254 = vmatpush1.msra.mxu0 %v253
  %255 = vmatprep.subr.mxu0 0.0
  %v256 = vand.u32 %v24, 4294901760
  %v257 = vsub.f32 %v24, %v256
  %258 = vmatpush1.msra.mxu0 %v257
  %259 = vmatprep.subr.mxu0 0.0
  %v260 = vand.u32 %v25, 4294901760
  %v261 = vsub.f32 %v25, %v260
  %262 = vmatpush1.msra.mxu0 %v261
  %263 = vmatprep.subr.mxu0 0.0
  %v264 = vand.u32 %v26, 4294901760
  %v265 = vsub.f32 %v26, %v264
  %266 = vmatpush1.msra.mxu0 %v265
  %267 = vmatprep.subr.mxu0 0.0
  %268 = vmatpush1.msra.mxu0 0.0
  %269 = vmatprep.subr.mxu0 0.0
  %270 = vmatpush1.msra.mxu0 0.0
  %271 = vmatprep.subr.mxu0 0.0
  %272 = vmatpush1.msra.mxu0 0.0
  %273 = vmatprep.subr.mxu0 0.0
  %274 = vmatpush1.msra.mxu0 0.0
  %275 = vmatprep.subr.mxu0 0.0
  %276 = vmatpush1.msra.mxu0 0.0
  %277 = vmatprep.subr.mxu0 0.0
  %278 = vmatpush1.msra.mxu0 0.0
  %279 = vmatprep.subr.mxu0 0.0
  %280 = vmatpush1.msra.mxu0 0.0
  %281 = vmatprep.subr.mxu0 0.0
  %282 = vmatpush1.msra.mxu0 0.0
  %283 = vmatprep.subr.mxu0 0.0
  %284 = vmatpush1.msra.mxu0 0.0
  %285 = vmatprep.subr.mxu0 0.0
  %286 = vmatpush1.msra.mxu0 0.0
  %287 = vmatprep.subr.mxu0 0.0
  %288 = vmatpush1.msra.mxu0 0.0
  %289 = vmatprep.subr.mxu0 0.0
  %290 = vmatpush1.msra.mxu0 0.0
  %291 = vmatprep.subr.mxu0 0.0
  %292 = vmatpush1.msra.mxu0 0.0
  %293 = vmatprep.subr.mxu0 0.0
  %294 = vmatpush1.msra.mxu0 0.0
  %295 = vmatprep.subr.mxu0 0.0
  %296 = vmatpush1.msra.mxu0 0.0
  %297 = vmatprep.subr.mxu0 0.0
  %298 = vmatpush1.msra.mxu0 0.0
  %299 = vmatprep.subr.mxu0 0.0
  %300 = vmatpush1.msra.mxu0 0.0
  %301 = vmatprep.subr.mxu0 0.0
  %302 = vmatpush1.msra.mxu0 0.0
  %303 = vmatprep.subr.mxu0 0.0
  %304 = vmatpush1.msra.mxu0 0.0
  %305 = vmatprep.subr.mxu0 0.0
  %306 = vmatpush1.msra.mxu0 0.0
  %307 = vmatprep.subr.mxu0 0.0
  %308 = vmatpush1.msra.mxu0 0.0
  %309 = vmatprep.subr.mxu0 0.0
  %310 = vmatpush1.msra.mxu0 0.0
  %311 = vmatprep.subr.mxu0 0.0
  %312 = vmatpush1.msra.mxu0 0.0
  %313 = vmatprep.mubr.f32.mxu0 0.0
  %v314 = vand.u32 %v29, 4294901760
  %v315 = vsub.f32 %v29, %v314
  %316 = vmatmul.mubr.f32.gmra.mrb[0].mxu0 %v315
  %v317 = vpop.f32.mrb[0].mxu0
  %v318 = vadd.f32 %v228, %v317
  %v319 = vpop.f32.mrb[0].mxu0
  %320 = vdwg.mxu0
  %321 = vmatprep.subr.mxu0 0.0
  %v322 = vand.u32 %v18, 4294901760
  %323 = vmatpush1.msra.mxu0 %v322
  %324 = vmatprep.subr.mxu0 0.0
  %v325 = vand.u32 %v19, 4294901760
  %326 = vmatpush1.msra.mxu0 %v325
  %327 = vmatprep.subr.mxu0 0.0
  %v328 = vand.u32 %v20, 4294901760
  %329 = vmatpush1.msra.mxu0 %v328
  %330 = vmatprep.subr.mxu0 0.0
  %v331 = vand.u32 %v21, 4294901760
  %332 = vmatpush1.msra.mxu0 %v331
  %333 = vmatprep.subr.mxu0 0.0
  %v334 = vand.u32 %v22, 4294901760
  %335 = vmatpush1.msra.mxu0 %v334
  %336 = vmatprep.subr.mxu0 0.0
  %v337 = vand.u32 %v23, 4294901760
  %338 = vmatpush1.msra.mxu0 %v337
  %339 = vmatprep.subr.mxu0 0.0
  %v340 = vand.u32 %v24, 4294901760
  %341 = vmatpush1.msra.mxu0 %v340
  %342 = vmatprep.subr.mxu0 0.0
  %v343 = vand.u32 %v25, 4294901760
  %344 = vmatpush1.msra.mxu0 %v343
  %345 = vmatprep.subr.mxu0 0.0
  %v346 = vand.u32 %v26, 4294901760
  %347 = vmatpush1.msra.mxu0 %v346
  %348 = vmatprep.subr.mxu0 0.0
  %349 = vmatpush1.msra.mxu0 0.0
  %350 = vmatprep.subr.mxu0 0.0
  %351 = vmatpush1.msra.mxu0 0.0
  %352 = vmatprep.subr.mxu0 0.0
  %353 = vmatpush1.msra.mxu0 0.0
  %354 = vmatprep.subr.mxu0 0.0
  %355 = vmatpush1.msra.mxu0 0.0
  %356 = vmatprep.subr.mxu0 0.0
  %357 = vmatpush1.msra.mxu0 0.0
  %358 = vmatprep.subr.mxu0 0.0
  %359 = vmatpush1.msra.mxu0 0.0
  %360 = vmatprep.subr.mxu0 0.0
  %361 = vmatpush1.msra.mxu0 0.0
  %362 = vmatprep.subr.mxu0 0.0
  %363 = vmatpush1.msra.mxu0 0.0
  %364 = vmatprep.subr.mxu0 0.0
  %365 = vmatpush1.msra.mxu0 0.0
  %366 = vmatprep.subr.mxu0 0.0
  %367 = vmatpush1.msra.mxu0 0.0
  %368 = vmatprep.subr.mxu0 0.0
  %369 = vmatpush1.msra.mxu0 0.0
  %370 = vmatprep.subr.mxu0 0.0
  %371 = vmatpush1.msra.mxu0 0.0
  %372 = vmatprep.subr.mxu0 0.0
  %373 = vmatpush1.msra.mxu0 0.0
  %374 = vmatprep.subr.mxu0 0.0
  %375 = vmatpush1.msra.mxu0 0.0
  %376 = vmatprep.subr.mxu0 0.0
  %377 = vmatpush1.msra.mxu0 0.0
  %378 = vmatprep.subr.mxu0 0.0
  %379 = vmatpush1.msra.mxu0 0.0
  %380 = vmatprep.subr.mxu0 0.0
  %381 = vmatpush1.msra.mxu0 0.0
  %382 = vmatprep.subr.mxu0 0.0
  %383 = vmatpush1.msra.mxu0 0.0
  %384 = vmatprep.subr.mxu0 0.0
  %385 = vmatpush1.msra.mxu0 0.0
  %386 = vmatprep.subr.mxu0 0.0
  %387 = vmatpush1.msra.mxu0 0.0
  %388 = vmatprep.subr.mxu0 0.0
  %389 = vmatpush1.msra.mxu0 0.0
  %390 = vmatprep.subr.mxu0 0.0
  %391 = vmatpush1.msra.mxu0 0.0
  %392 = vmatprep.subr.mxu0 0.0
  %393 = vmatpush1.msra.mxu0 0.0
  %394 = vmatprep.mubr.f32.mxu0 0.0
  %v395 = vand.u32 %v29, 4294901760
  %v396 = vsub.f32 %v29, %v395
  %v397 = vand.u32 %v396, 4294901760
  %398 = vmatmul.mubr.f32.gmra.mrb[0].mxu0 %v397
  %v399 = vpop.f32.mrb[0].mxu0
  %v400 = vadd.f32 %v318, %v399
  %v401 = vpop.f32.mrb[0].mxu0
  %402 = vdwg.mxu0
  %403 = vmatprep.subr.mxu0 0.0
  %v404 = vand.u32 %v18, 4294901760
  %v405 = vsub.f32 %v18, %v404
  %v406 = vand.u32 %v405, 4294901760
  %407 = vmatpush1.msra.mxu0 %v406
  %408 = vmatprep.subr.mxu0 0.0
  %v409 = vand.u32 %v19, 4294901760
  %v410 = vsub.f32 %v19, %v409
  %v411 = vand.u32 %v410, 4294901760
  %412 = vmatpush1.msra.mxu0 %v411
  %413 = vmatprep.subr.mxu0 0.0
  %v414 = vand.u32 %v20, 4294901760
  %v415 = vsub.f32 %v20, %v414
  %v416 = vand.u32 %v415, 4294901760
  %417 = vmatpush1.msra.mxu0 %v416
  %418 = vmatprep.subr.mxu0 0.0
  %v419 = vand.u32 %v21, 4294901760
  %v420 = vsub.f32 %v21, %v419
  %v421 = vand.u32 %v420, 4294901760
  %422 = vmatpush1.msra.mxu0 %v421
  %423 = vmatprep.subr.mxu0 0.0
  %v424 = vand.u32 %v22, 4294901760
  %v425 = vsub.f32 %v22, %v424
  %v426 = vand.u32 %v425, 4294901760
  %427 = vmatpush1.msra.mxu0 %v426
  %428 = vmatprep.subr.mxu0 0.0
  %v429 = vand.u32 %v23, 4294901760
  %v430 = vsub.f32 %v23, %v429
  %v431 = vand.u32 %v430, 4294901760
  %432 = vmatpush1.msra.mxu0 %v431
  %433 = vmatprep.subr.mxu0 0.0
  %v434 = vand.u32 %v24, 4294901760
  %v435 = vsub.f32 %v24, %v434
  %v436 = vand.u32 %v435, 4294901760
  %437 = vmatpush1.msra.mxu0 %v436
  %438 = vmatprep.subr.mxu0 0.0
  %v439 = vand.u32 %v25, 4294901760
  %v440 = vsub.f32 %v25, %v439
  %v441 = vand.u32 %v440, 4294901760
  %442 = vmatpush1.msra.mxu0 %v441
  %443 = vmatprep.subr.mxu0 0.0
  %v444 = vand.u32 %v26, 4294901760
  %v445 = vsub.f32 %v26, %v444
  %v446 = vand.u32 %v445, 4294901760
  %447 = vmatpush1.msra.mxu0 %v446
  %448 = vmatprep.subr.mxu0 0.0
  %449 = vmatpush1.msra.mxu0 0.0
  %450 = vmatprep.subr.mxu0 0.0
  %451 = vmatpush1.msra.mxu0 0.0
  %452 = vmatprep.subr.mxu0 0.0
  %453 = vmatpush1.msra.mxu0 0.0
  %454 = vmatprep.subr.mxu0 0.0
  %455 = vmatpush1.msra.mxu0 0.0
  %456 = vmatprep.subr.mxu0 0.0
  %457 = vmatpush1.msra.mxu0 0.0
  %458 = vmatprep.subr.mxu0 0.0
  %459 = vmatpush1.msra.mxu0 0.0
  %460 = vmatprep.subr.mxu0 0.0
  %461 = vmatpush1.msra.mxu0 0.0
  %462 = vmatprep.subr.mxu0 0.0
  %463 = vmatpush1.msra.mxu0 0.0
  %464 = vmatprep.subr.mxu0 0.0
  %465 = vmatpush1.msra.mxu0 0.0
  %466 = vmatprep.subr.mxu0 0.0
  %467 = vmatpush1.msra.mxu0 0.0
  %468 = vmatprep.subr.mxu0 0.0
  %469 = vmatpush1.msra.mxu0 0.0
  %470 = vmatprep.subr.mxu0 0.0
  %471 = vmatpush1.msra.mxu0 0.0
  %472 = vmatprep.subr.mxu0 0.0
  %473 = vmatpush1.msra.mxu0 0.0
  %474 = vmatprep.subr.mxu0 0.0
  %475 = vmatpush1.msra.mxu0 0.0
  %476 = vmatprep.subr.mxu0 0.0
  %477 = vmatpush1.msra.mxu0 0.0
  %478 = vmatprep.subr.mxu0 0.0
  %479 = vmatpush1.msra.mxu0 0.0
  %480 = vmatprep.subr.mxu0 0.0
  %481 = vmatpush1.msra.mxu0 0.0
  %482 = vmatprep.subr.mxu0 0.0
  %483 = vmatpush1.msra.mxu0 0.0
  %484 = vmatprep.subr.mxu0 0.0
  %485 = vmatpush1.msra.mxu0 0.0
  %486 = vmatprep.subr.mxu0 0.0
  %487 = vmatpush1.msra.mxu0 0.0
  %488 = vmatprep.subr.mxu0 0.0
  %489 = vmatpush1.msra.mxu0 0.0
  %490 = vmatprep.subr.mxu0 0.0
  %491 = vmatpush1.msra.mxu0 0.0
  %492 = vmatprep.subr.mxu0 0.0
  %493 = vmatpush1.msra.mxu0 0.0
  %494 = vmatprep.mubr.f32.mxu0 0.0
  %v495 = vand.u32 %v29, 4294901760
  %496 = vmatmul.mubr.f32.gmra.mrb[0].mxu0 %v495
  %v497 = vpop.f32.mrb[0].mxu0
  %v498 = vadd.f32 %v400, %v497
  %v499 = vpop.f32.mrb[0].mxu0
  %500 = vdwg.mxu0
  %501 = vmatprep.subr.mxu0 0.0
  %v502 = vand.u32 %v18, 4294901760
  %503 = vmatpush1.msra.mxu0 %v502
  %504 = vmatprep.subr.mxu0 0.0
  %v505 = vand.u32 %v19, 4294901760
  %506 = vmatpush1.msra.mxu0 %v505
  %507 = vmatprep.subr.mxu0 0.0
  %v508 = vand.u32 %v20, 4294901760
  %509 = vmatpush1.msra.mxu0 %v508
  %510 = vmatprep.subr.mxu0 0.0
  %v511 = vand.u32 %v21, 4294901760
  %512 = vmatpush1.msra.mxu0 %v511
  %513 = vmatprep.subr.mxu0 0.0
  %v514 = vand.u32 %v22, 4294901760
  %515 = vmatpush1.msra.mxu0 %v514
  %516 = vmatprep.subr.mxu0 0.0
  %v517 = vand.u32 %v23, 4294901760
  %518 = vmatpush1.msra.mxu0 %v517
  %519 = vmatprep.subr.mxu0 0.0
  %v520 = vand.u32 %v24, 4294901760
  %521 = vmatpush1.msra.mxu0 %v520
  %522 = vmatprep.subr.mxu0 0.0
  %v523 = vand.u32 %v25, 4294901760
  %524 = vmatpush1.msra.mxu0 %v523
  %525 = vmatprep.subr.mxu0 0.0
  %v526 = vand.u32 %v26, 4294901760
  %527 = vmatpush1.msra.mxu0 %v526
  %528 = vmatprep.subr.mxu0 0.0
  %529 = vmatpush1.msra.mxu0 0.0
  %530 = vmatprep.subr.mxu0 0.0
  %531 = vmatpush1.msra.mxu0 0.0
  %532 = vmatprep.subr.mxu0 0.0
  %533 = vmatpush1.msra.mxu0 0.0
  %534 = vmatprep.subr.mxu0 0.0
  %535 = vmatpush1.msra.mxu0 0.0
  %536 = vmatprep.subr.mxu0 0.0
  %537 = vmatpush1.msra.mxu0 0.0
  %538 = vmatprep.subr.mxu0 0.0
  %539 = vmatpush1.msra.mxu0 0.0
  %540 = vmatprep.subr.mxu0 0.0
  %541 = vmatpush1.msra.mxu0 0.0
  %542 = vmatprep.subr.mxu0 0.0
  %543 = vmatpush1.msra.mxu0 0.0
  %544 = vmatprep.subr.mxu0 0.0
  %545 = vmatpush1.msra.mxu0 0.0
  %546 = vmatprep.subr.mxu0 0.0
  %547 = vmatpush1.msra.mxu0 0.0
  %548 = vmatprep.subr.mxu0 0.0
  %549 = vmatpush1.msra.mxu0 0.0
  %550 = vmatprep.subr.mxu0 0.0
  %551 = vmatpush1.msra.mxu0 0.0
  %552 = vmatprep.subr.mxu0 0.0
  %553 = vmatpush1.msra.mxu0 0.0
  %554 = vmatprep.subr.mxu0 0.0
  %555 = vmatpush1.msra.mxu0 0.0
  %556 = vmatprep.subr.mxu0 0.0
  %557 = vmatpush1.msra.mxu0 0.0
  %558 = vmatprep.subr.mxu0 0.0
  %559 = vmatpush1.msra.mxu0 0.0
  %560 = vmatprep.subr.mxu0 0.0
  %561 = vmatpush1.msra.mxu0 0.0
  %562 = vmatprep.subr.mxu0 0.0
  %563 = vmatpush1.msra.mxu0 0.0
  %564 = vmatprep.subr.mxu0 0.0
  %565 = vmatpush1.msra.mxu0 0.0
  %566 = vmatprep.subr.mxu0 0.0
  %567 = vmatpush1.msra.mxu0 0.0
  %568 = vmatprep.subr.mxu0 0.0
  %569 = vmatpush1.msra.mxu0 0.0
  %570 = vmatprep.subr.mxu0 0.0
  %571 = vmatpush1.msra.mxu0 0.0
  %572 = vmatprep.subr.mxu0 0.0
  %573 = vmatpush1.msra.mxu0 0.0
  %574 = vmatprep.mubr.f32.mxu0 0.0
  %v575 = vand.u32 %v29, 4294901760
  %576 = vmatmul.mubr.f32.gmra.mrb[0].mxu0 %v575
  %v577 = vpop.f32.mrb[0].mxu0
  %v578 = vadd.f32 %v498, %v577
  %v579 = vpop.f32.mrb[0].mxu0
  %580 = vdwg.mxu0
  %581 = vadd.xlane.f32.xlu0 %v578
  %v582 = vpop.xlane.xlu0 %581
  %v583 = vmul.f32 %v578, %v578
  %584 = vadd.xlane.f32.xlu0 %v583
  %v585 = vpop.xlane.xlu0 %584
  %v586 = vmul.f32 %v582, 0.0078125
  %v587 = vmul.f32 %v585, 0.0078125
  %v588 = vmul.f32 %v586, %v586
  %v589 = vsub.f32 %v587, %v588
  %v590 = vld [vmem:[%s2] sm:$0xff]
  %v591 = vadd.f32 %v589, 1e-05
  %v592 = vrsqrt.pop %v591
  %v593 = vmul.f32 %v590, %v592
  %v594 = vld [vmem:[%s3] sm:$0xff]
  %v595 = vmul.f32 %v586, %v593
  %v596 = vsub.f32 %v594, %v595
  %598 = vset.pattern.permute.xlu0 0
  %599 = vperm.xlu0 %598, %v593
  %v600 = vpop.permute.xlu0 %599
  %v602 = vmul.f32 %v578, %v600
  %604 = vset.pattern.permute.xlu0 0
  %605 = vperm.xlu0 %604, %v596
  %v606 = vpop.permute.xlu0 %605
  %v608 = vadd.f32 %v602, %v606
  %v609 = vmax.f32 %v608, 0.0
  %610 = vst [vmem:[%s4] sm:$0xff] %v609
  // Predicated region
  $region18: #{baseline_unet_pallas.20} parent=0 // pred_check
    _
  $region19: #{baseline_unet_pallas.20} parent=0 // pred_check_branch
    %612 = sbr.rel (0) target = $region21
  $region20: #{baseline_unet_pallas.20} parent=0 // pred_region
    _
  $region21: #{baseline_unet_pallas.20} parent=0 // pred_fallthru
    _
  // Predicated region
  $region22: #{baseline_unet_pallas.20} parent=0 // pred_check
    _
  $region23: #{baseline_unet_pallas.20} parent=0 // pred_check_branch
    %614 = sbr.rel (0) target = $region25
  $region24: #{baseline_unet_pallas.20} parent=0 // pred_region
    _
  $region25: #{baseline_unet_pallas.20} parent=0 // pred_fallthru
    _

// kernel: baseline_unet_pallas.19
$region0: #{baseline_unet_pallas.19}
  #allocation0 [shape = 'u32[]', space=smem, size = 0x4, offset = 0x4, fixed_abs, tag = 'smem constant byte address 0x4 - core index']
  #allocation1 [shape = 'u32[144,128]{1,0:T(1,128)}', space=vmem, size = 0x12000, scoped, tag = 'internal scratch']
  %s0 = inlined_call_operand.vmem [shape: f32[8,432], index: 0, kind: input, shape index: {}]
  %s1 = inlined_call_operand.vmem [shape: f32[432,128], index: 1, kind: input, shape index: {}]
  %s2 = inlined_call_operand.vmem [shape: f32[8,1], index: 2, kind: input, shape index: {}]
  %s3 = inlined_call_operand.vmem [shape: f32[8,1], index: 3, kind: input, shape index: {}]
  %s4 = inlined_call_operand.vmem [shape: f32[8,128], index: 4, kind: output, shape index: {}]
  %s5 = sld [smem:[#allocation0]]
  $region26: #{baseline_unet_pallas.19} parent=0
    _
  %s7 = ssub.s32 1, %s5
  %s8 = scalar_select 0, %s7, %s5
  // Predicated region
  $region2: #{baseline_unet_pallas.19} parent=0 // pred_check
    _
  $region3: #{baseline_unet_pallas.19} parent=0 // pred_check_branch
    %10 = sbr.rel (0) target = $region5
  $region4: #{baseline_unet_pallas.19} parent=0 // pred_region
    _
  $region5: #{baseline_unet_pallas.19} parent=0 // pred_fallthru
    _
  // Predicated region
  $region6: #{baseline_unet_pallas.19} parent=0 // pred_check
    _
  $region7: #{baseline_unet_pallas.19} parent=0 // pred_check_branch
    %12 = sbr.rel (0) target = $region9
  $region8: #{baseline_unet_pallas.19} parent=0 // pred_region
    _
  $region9: #{baseline_unet_pallas.19} parent=0 // pred_fallthru
    _
  // Predicated region
  $region10: #{baseline_unet_pallas.19} parent=0 // pred_check
    _
  $region11: #{baseline_unet_pallas.19} parent=0 // pred_check_branch
    %14 = sbr.rel (0) target = $region13
  $region12: #{baseline_unet_pallas.19} parent=0 // pred_region
    _
  $region13: #{baseline_unet_pallas.19} parent=0 // pred_fallthru
    _
  // Predicated region
  $region14: #{baseline_unet_pallas.19} parent=0 // pred_check
    _
  $region15: #{baseline_unet_pallas.19} parent=0 // pred_check_branch
    %16 = sbr.rel (0) target = $region17
  $region16: #{baseline_unet_pallas.19} parent=0 // pred_region
    _
  $region17: #{baseline_unet_pallas.19} parent=0 // pred_fallthru
    _
  %v17 = vld [vmem:[%s0] sm:$0xff]
  %v18 = vld [vmem:[%s0 + $0x8] sm:$0xff]
  %v19 = vld [vmem:[%s0 + $0x10] sm:$0xff]
  %v20 = vld [vmem:[%s0 + $0x18] sm:$0xff]
  %v21 = vld [vmem:[%s1] sm:$0xff]
  %v22 = vld [vmem:[%s1 + $0x8] sm:$0xff]
  %v23 = vld [vmem:[%s1 + $0x10] sm:$0xff]
  %v24 = vld [vmem:[%s1 + $0x18] sm:$0xff]
  %v25 = vld [vmem:[%s1 + $0x20] sm:$0xff]
  %v26 = vld [vmem:[%s1 + $0x28] sm:$0xff]
  %v27 = vld [vmem:[%s1 + $0x30] sm:$0xff]
  %v28 = vld [vmem:[%s1 + $0x38] sm:$0xff]
  %v29 = vld [vmem:[%s1 + $0x40] sm:$0xff]
  %v30 = vld [vmem:[%s1 + $0x48] sm:$0xff]
  %v31 = vld [vmem:[%s1 + $0x50] sm:$0xff]
  %v32 = vld [vmem:[%s1 + $0x58] sm:$0xff]
  %v33 = vld [vmem:[%s1 + $0x60] sm:$0xff]
  %v34 = vld [vmem:[%s1 + $0x68] sm:$0xff]
  %v35 = vld [vmem:[%s1 + $0x70] sm:$0xff]
  %v36 = vld [vmem:[%s1 + $0x78] sm:$0xff]
  %v37 = vld [vmem:[%s1 + $0x80] sm:$0xff]
  %v38 = vld [vmem:[%s1 + $0x88] sm:$0xff]
  %v39 = vld [vmem:[%s1 + $0x90] sm:$0xff]
  %v40 = vld [vmem:[%s1 + $0x98] sm:$0xff]
  %v41 = vld [vmem:[%s1 + $0xa0] sm:$0xff]
  %v42 = vld [vmem:[%s1 + $0xa8] sm:$0xff]
  %v43 = vld [vmem:[%s1 + $0xb0] sm:$0xff]
  %v44 = vld [vmem:[%s1 + $0xb8] sm:$0xff]
  %v45 = vld [vmem:[%s1 + $0xc0] sm:$0xff]
  %v46 = vld [vmem:[%s1 + $0xc8] sm:$0xff]
  %v47 = vld [vmem:[%s1 + $0xd0] sm:$0xff]
  %v48 = vld [vmem:[%s1 + $0xd8] sm:$0xff]
  %v49 = vld [vmem:[%s1 + $0xe0] sm:$0xff]
  %v50 = vld [vmem:[%s1 + $0xe8] sm:$0xff]
  %v51 = vld [vmem:[%s1 + $0xf0] sm:$0xff]
  %v52 = vld [vmem:[%s1 + $0xf8] sm:$0xff]
  %v53 = vld [vmem:[%s1 + $0x100] sm:$0xff]
  %v54 = vld [vmem:[%s1 + $0x108] sm:$0xff]
  %v55 = vld [vmem:[%s1 + $0x110] sm:$0xff]
  %v56 = vld [vmem:[%s1 + $0x118] sm:$0xff]
  %v57 = vld [vmem:[%s1 + $0x120] sm:$0xff]
  %v58 = vld [vmem:[%s1 + $0x128] sm:$0xff]
  %v59 = vld [vmem:[%s1 + $0x130] sm:$0xff]
  %v60 = vld [vmem:[%s1 + $0x138] sm:$0xff]
  %v61 = vld [vmem:[%s1 + $0x140] sm:$0xff]
  %v62 = vld [vmem:[%s1 + $0x148] sm:$0xff]
  %v63 = vld [vmem:[%s1 + $0x150] sm:$0xff]
  %v64 = vld [vmem:[%s1 + $0x158] sm:$0xff]
  %v65 = vld [vmem:[%s1 + $0x160] sm:$0xff]
  %v66 = vld [vmem:[%s1 + $0x168] sm:$0xff]
  %v67 = vld [vmem:[%s1 + $0x170] sm:$0xff]
  %v68 = vld [vmem:[%s1 + $0x178] sm:$0xff]
  %v69 = vld [vmem:[%s1 + $0x180] sm:$0xff]
  %v70 = vld [vmem:[%s1 + $0x188] sm:$0xff]
  %v71 = vld [vmem:[%s1 + $0x190] sm:$0xff]
  %v72 = vld [vmem:[%s1 + $0x198] sm:$0xff]
  %v73 = vld [vmem:[%s1 + $0x1a0] sm:$0xff]
  %v74 = vld [vmem:[%s1 + $0x1a8] sm:$0xff]
  %vm75 = vcmask 392192
  %v77 = vsel %vm75, %v20, 0
  %79 = vmatprep.subr.mxu0 0.0
  %v80 = vand.u32 %v21, 4294901760
  %81 = vmatpush1.msra.mxu0 %v80
  %82 = vmatprep.subr.mxu0 0.0
  %v83 = vand.u32 %v22, 4294901760
  %84 = vmatpush1.msra.mxu0 %v83
  %85 = vmatprep.subr.mxu0 0.0
  %v86 = vand.u32 %v23, 4294901760
  %87 = vmatpush1.msra.mxu0 %v86
  %88 = vmatprep.subr.mxu0 0.0
  %v89 = vand.u32 %v24, 4294901760
  %90 = vmatpush1.msra.mxu0 %v89
  %91 = vmatprep.subr.mxu0 0.0
  %v92 = vand.u32 %v25, 4294901760
  %93 = vmatpush1.msra.mxu0 %v92
  %94 = vmatprep.subr.mxu0 0.0
  %v95 = vand.u32 %v26, 4294901760
  %96 = vmatpush1.msra.mxu0 %v95
  %97 = vmatprep.subr.mxu0 0.0
  %v98 = vand.u32 %v27, 4294901760
  %99 = vmatpush1.msra.mxu0 %v98
  %100 = vmatprep.subr.mxu0 0.0
  %v101 = vand.u32 %v28, 4294901760
  %102 = vmatpush1.msra.mxu0 %v101
  %103 = vmatprep.subr.mxu0 0.0
  %v104 = vand.u32 %v29, 4294901760
  %105 = vmatpush1.msra.mxu0 %v104
  %106 = vmatprep.subr.mxu0 0.0
  %v107 = vand.u32 %v30, 4294901760
  %108 = vmatpush1.msra.mxu0 %v107
  %109 = vmatprep.subr.mxu0 0.0
  %v110 = vand.u32 %v31, 4294901760
  %111 = vmatpush1.msra.mxu0 %v110
  %112 = vmatprep.subr.mxu0 0.0
  %v113 = vand.u32 %v32, 4294901760
  %114 = vmatpush1.msra.mxu0 %v113
  %115 = vmatprep.subr.mxu0 0.0
  %v116 = vand.u32 %v33, 4294901760
  %117 = vmatpush1.msra.mxu0 %v116
  %118 = vmatprep.subr.mxu0 0.0
  %v119 = vand.u32 %v34, 4294901760
  %120 = vmatpush1.msra.mxu0 %v119
  %121 = vmatprep.subr.mxu0 0.0
  %v122 = vand.u32 %v35, 4294901760
  %123 = vmatpush1.msra.mxu0 %v122
  %124 = vmatprep.subr.mxu0 0.0
  %v125 = vand.u32 %v36, 4294901760
  %126 = vmatpush1.msra.mxu0 %v125
  %127 = vmatprep.subr.mxu0 0.0
  %v128 = vand.u32 %v37, 4294901760
  %129 = vmatpush1.msra.mxu0 %v128
  %130 = vmatprep.subr.mxu0 0.0
  %v131 = vand.u32 %v38, 4294901760
  %132 = vmatpush1.msra.mxu0 %v131
  %133 = vmatprep.subr.mxu0 0.0
  %v134 = vand.u32 %v39, 4294901760
  %135 = vmatpush1.msra.mxu0 %v134
  %136 = vmatprep.subr.mxu0 0.0
  %v137 = vand.u32 %v40, 4294901760
  %138 = vmatpush1.msra.mxu0 %v137
  %139 = vmatprep.subr.mxu0 0.0
  %v140 = vand.u32 %v41, 4294901760
  %141 = vmatpush1.msra.mxu0 %v140
  %142 = vmatprep.subr.mxu0 0.0
  %v143 = vand.u32 %v42, 4294901760
  %144 = vmatpush1.msra.mxu0 %v143
  %145 = vmatprep.subr.mxu0 0.0
  %v146 = vand.u32 %v43, 4294901760
  %147 = vmatpush1.msra.mxu0 %v146
  %148 = vmatprep.subr.mxu0 0.0
  %v149 = vand.u32 %v44, 4294901760
  %150 = vmatpush1.msra.mxu0 %v149
  %151 = vmatprep.subr.mxu0 0.0
  %v152 = vand.u32 %v45, 4294901760
  %153 = vmatpush1.msra.mxu0 %v152
  %154 = vmatprep.subr.mxu0 0.0
  %v155 = vand.u32 %v46, 4294901760
  %156 = vmatpush1.msra.mxu0 %v155
  %157 = vmatprep.subr.mxu0 0.0
  %v158 = vand.u32 %v47, 4294901760
  %159 = vmatpush1.msra.mxu0 %v158
  %160 = vmatprep.subr.mxu0 0.0
  %v161 = vand.u32 %v48, 4294901760
  %162 = vmatpush1.msra.mxu0 %v161
  %163 = vmatprep.subr.mxu0 0.0
  %v164 = vand.u32 %v49, 4294901760
  %165 = vmatpush1.msra.mxu0 %v164
  %166 = vmatprep.subr.mxu0 0.0
  %v167 = vand.u32 %v50, 4294901760
  %168 = vmatpush1.msra.mxu0 %v167
  %169 = vmatprep.subr.mxu0 0.0
  %v170 = vand.u32 %v51, 4294901760
  %171 = vmatpush1.msra.mxu0 %v170
  %172 = vmatprep.subr.mxu0 0.0
  %v173 = vand.u32 %v52, 4294901760
  %174 = vmatpush1.msra.mxu0 %v173
  %v175 = vand.u32 %v18, 4294901760
  %v176 = vsub.f32 %v18, %v175
  %v177 = vand.u32 %v176, 4294901760
  %v178 = vsub.f32 %v176, %v177
  %v179 = vand.u32 %v178, 4294901760
  %180 = vmatprep.mubr.f32.mxu0 %v179
  %v181 = vand.u32 %v17, 4294901760
  %v182 = vsub.f32 %v17, %v181
  %v183 = vand.u32 %v182, 4294901760
  %v184 = vsub.f32 %v182, %v183
  %v185 = vand.u32 %v184, 4294901760
  %186 = vmatmul.mubr.f32.gmra.mrb[0].mxu0 %v185
  %v187 = vpop.f32.mrb[0].mxu0
  %v188 = vadd.f32 0.0, %v187
  %v189 = vpop.f32.mrb[0].mxu0
  %190 = vdwg.mxu0
  %191 = vmatprep.subr.mxu0 0.0
  %v192 = vand.u32 %v21, 4294901760
  %v193 = vsub.f32 %v21, %v192
  %v194 = vand.u32 %v193, 4294901760
  %v195 = vsub.f32 %v193, %v194
  %v196 = vand.u32 %v195, 4294901760
  %197 = vmatpush1.msra.mxu0 %v196
  %198 = vmatprep.subr.mxu0 0.0
  %v199 = vand.u32 %v22, 4294901760
  %v200 = vsub.f32 %v22, %v199
  %v201 = vand.u32 %v200, 4294901760
  %v202 = vsub.f32 %v200, %v201
  %v203 = vand.u32 %v202, 4294901760
  %204 = vmatpush1.msra.mxu0 %v203
  %205 = vmatprep.subr.mxu0 0.0
  %v206 = vand.u32 %v23, 4294901760
  %v207 = vsub.f32 %v23, %v206
  %v208 = vand.u32 %v207, 4294901760
  %v209 = vsub.f32 %v207, %v208
  %v210 = vand.u32 %v209, 4294901760
  %211 = vmatpush1.msra.mxu0 %v210
  %212 = vmatprep.subr.mxu0 0.0
  %v213 = vand.u32 %v24, 4294901760
  %v214 = vsub.f32 %v24, %v213
  %v215 = vand.u32 %v214, 4294901760
  %v216 = vsub.f32 %v214, %v215
  %v217 = vand.u32 %v216, 4294901760
  %218 = vmatpush1.msra.mxu0 %v217
  %219 = vmatprep.subr.mxu0 0.0
  %v220 = vand.u32 %v25, 4294901760
  %v221 = vsub.f32 %v25, %v220
  %v222 = vand.u32 %v221, 4294901760
  %v223 = vsub.f32 %v221, %v222
  %v224 = vand.u32 %v223, 4294901760
  %225 = vmatpush1.msra.mxu0 %v224
  %226 = vmatprep.subr.mxu0 0.0
  %v227 = vand.u32 %v26, 4294901760
  %v228 = vsub.f32 %v26, %v227
  %v229 = vand.u32 %v228, 4294901760
  %v230 = vsub.f32 %v228, %v229
  %v231 = vand.u32 %v230, 4294901760
  %232 = vmatpush1.msra.mxu0 %v231
  %233 = vmatprep.subr.mxu0 0.0
  %v234 = vand.u32 %v27, 4294901760
  %v235 = vsub.f32 %v27, %v234
  %v236 = vand.u32 %v235, 4294901760
  %v237 = vsub.f32 %v235, %v236
  %v238 = vand.u32 %v237, 4294901760
  %239 = vmatpush1.msra.mxu0 %v238
  %240 = vmatprep.subr.mxu0 0.0
  %v241 = vand.u32 %v28, 4294901760
  %v242 = vsub.f32 %v28, %v241
  %v243 = vand.u32 %v242, 4294901760
  %v244 = vsub.f32 %v242, %v243
  %v245 = vand.u32 %v244, 4294901760
  %246 = vmatpush1.msra.mxu0 %v245
  %247 = vmatprep.subr.mxu0 0.0
  %v248 = vand.u32 %v29, 4294901760
  %v249 = vsub.f32 %v29, %v248
  %v250 = vand.u32 %v249, 4294901760
  %v251 = vsub.f32 %v249, %v250
  %v252 = vand.u32 %v251, 4294901760
  %253 = vmatpush1.msra.mxu0 %v252
  %254 = vmatprep.subr.mxu0 0.0
  %v255 = vand.u32 %v30, 4294901760
  %v256 = vsub.f32 %v30, %v255
  %v257 = vand.u32 %v256, 4294901760
  %v258 = vsub.f32 %v256, %v257
  %v259 = vand.u32 %v258, 4294901760
  %260 = vmatpush1.msra.mxu0 %v259
  %261 = vmatprep.subr.mxu0 0.0
  %v262 = vand.u32 %v31, 4294901760
  %v263 = vsub.f32 %v31, %v262
  %v264 = vand.u32 %v263, 4294901760
  %v265 = vsub.f32 %v263, %v264
  %v266 = vand.u32 %v265, 4294901760
  %267 = vmatpush1.msra.mxu0 %v266
  %268 = vmatprep.subr.mxu0 0.0
  %v269 = vand.u32 %v32, 4294901760
  %v270 = vsub.f32 %v32, %v269
  %v271 = vand.u32 %v270, 4294901760
  %v272 = vsub.f32 %v270, %v271
  %v273 = vand.u32 %v272, 4294901760
  %274 = vmatpush1.msra.mxu0 %v273
  %275 = vmatprep.subr.mxu0 0.0
  %v276 = vand.u32 %v33, 4294901760
  %v277 = vsub.f32 %v33, %v276
  %v278 = vand.u32 %v277, 4294901760
  %v279 = vsub.f32 %v277, %v278
  %v280 = vand.u32 %v279, 4294901760
  %281 = vmatpush1.msra.mxu0 %v280
  %282 = vmatprep.subr.mxu0 0.0
  %v283 = vand.u32 %v34, 4294901760
  %v284 = vsub.f32 %v34, %v283
  %v285 = vand.u32 %v284, 4294901760
  %v286 = vsub.f32 %v284, %v285
  %v287 = vand.u32 %v286, 4294901760
  %288 = vmatpush1.msra.mxu0 %v287
  %289 = vmatprep.subr.mxu0 0.0
  %v290 = vand.u32 %v35, 4294901760
  %v291 = vsub.f32 %v35, %v290
  %v292 = vand.u32 %v291, 4294901760
  %v293 = vsub.f32 %v291, %v292
  %v294 = vand.u32 %v293, 4294901760
  %295 = vmatpush1.msra.mxu0 %v294
  %296 = vmatprep.subr.mxu0 0.0
  %v297 = vand.u32 %v36, 4294901760
  %v298 = vsub.f32 %v36, %v297
  %v299 = vand.u32 %v298, 4294901760
  %v300 = vsub.f32 %v298, %v299
  %v301 = vand.u32 %v300, 4294901760
  %302 = vmatpush1.msra.mxu0 %v301
  %303 = vmatprep.subr.mxu0 0.0
  %v304 = vand.u32 %v37, 4294901760
  %v305 = vsub.f32 %v37, %v304
  %v306 = vand.u32 %v305, 4294901760
  %v307 = vsub.f32 %v305, %v306
  %v308 = vand.u32 %v307, 4294901760
  %309 = vmatpush1.msra.mxu0 %v308
  %310 = vmatprep.subr.mxu0 0.0
  %v311 = vand.u32 %v38, 4294901760
  %v312 = vsub.f32 %v38, %v311
  %v313 = vand.u32 %v312, 4294901760
  %v314 = vsub.f32 %v312, %v313
  %v315 = vand.u32 %v314, 4294901760
  %316 = vmatpush1.msra.mxu0 %v315
  %317 = vmatprep.subr.mxu0 0.0
  %v318 = vand.u32 %v39, 4294901760
  %v319 = vsub.f32 %v39, %v318
  %v320 = vand.u32 %v319, 4294901760
  %v321 = vsub.f32 %v319, %v320
  %v322 = vand.u32 %v321, 4294901760
  %323 = vmatpush1.msra.mxu0 %v322
  %324 = vmatprep.subr.mxu0 0.0
  %v325 = vand.u32 %v40, 4294901760
  %v326 = vsub.f32 %v40, %v325
  %v327 = vand.u32 %v326, 4294901760
  %v328 = vsub.f32 %v326, %v327
  %v329 = vand.u32 %v328, 4294901760
  %330 = vmatpush1.msra.mxu0 %v329
  %331 = vmatprep.subr.mxu0 0.0
  %v332 = vand.u32 %v41, 4294901760
  %v333 = vsub.f32 %v41, %v332
  %v334 = vand.u32 %v333, 4294901760
  %v335 = vsub.f32 %v333, %v334
  %v336 = vand.u32 %v335, 4294901760
  %337 = vmatpush1.msra.mxu0 %v336
  %338 = vmatprep.subr.mxu0 0.0
  %v339 = vand.u32 %v42, 4294901760
  %v340 = vsub.f32 %v42, %v339
  %v341 = vand.u32 %v340, 4294901760
  %v342 = vsub.f32 %v340, %v341
  %v343 = vand.u32 %v342, 4294901760
  %344 = vmatpush1.msra.mxu0 %v343
  %345 = vmatprep.subr.mxu0 0.0
  %v346 = vand.u32 %v43, 4294901760
  %v347 = vsub.f32 %v43, %v346
  %v348 = vand.u32 %v347, 4294901760
  %v349 = vsub.f32 %v347, %v348
  %v350 = vand.u32 %v349, 4294901760
  %351 = vmatpush1.msra.mxu0 %v350
  %352 = vmatprep.subr.mxu0 0.0
  %v353 = vand.u32 %v44, 4294901760
  %v354 = vsub.f32 %v44, %v353
  %v355 = vand.u32 %v354, 4294901760
  %v356 = vsub.f32 %v354, %v355
  %v357 = vand.u32 %v356, 4294901760
  %358 = vmatpush1.msra.mxu0 %v357
  %359 = vmatprep.subr.mxu0 0.0
  %v360 = vand.u32 %v45, 4294901760
  %v361 = vsub.f32 %v45, %v360
  %v362 = vand.u32 %v361, 4294901760
  %v363 = vsub.f32 %v361, %v362
  %v364 = vand.u32 %v363, 4294901760
  %365 = vmatpush1.msra.mxu0 %v364
  %366 = vmatprep.subr.mxu0 0.0
  %v367 = vand.u32 %v46, 4294901760
  %v368 = vsub.f32 %v46, %v367
  %v369 = vand.u32 %v368, 4294901760
  %v370 = vsub.f32 %v368, %v369
  %v371 = vand.u32 %v370, 4294901760
  %372 = vmatpush1.msra.mxu0 %v371
  %373 = vmatprep.subr.mxu0 0.0
  %v374 = vand.u32 %v47, 4294901760
  %v375 = vsub.f32 %v47, %v374
  %v376 = vand.u32 %v375, 4294901760
  %v377 = vsub.f32 %v375, %v376
  %v378 = vand.u32 %v377, 4294901760
  %379 = vmatpush1.msra.mxu0 %v378
  %380 = vmatprep.subr.mxu0 0.0
  %v381 = vand.u32 %v48, 4294901760
  %v382 = vsub.f32 %v48, %v381
  %v383 = vand.u32 %v382, 4294901760
  %v384 = vsub.f32 %v382, %v383
  %v385 = vand.u32 %v384, 4294901760
  %386 = vmatpush1.msra.mxu0 %v385
  %387 = vmatprep.subr.mxu0 0.0
  %v388 = vand.u32 %v49, 4294901760
  %v389 = vsub.f32 %v49, %v388
  %v390 = vand.u32 %v389, 4294901760
  %v391 = vsub.f32 %v389, %v390
  %v392 = vand.u32 %v391, 4294901760
  %393 = vmatpush1.msra.mxu0 %v392
  %394 = vmatprep.subr.mxu0 0.0
  %v395 = vand.u32 %v50, 4294901760
  %v396 = vsub.f32 %v50, %v395
  %v397 = vand.u32 %v396, 4294901760
  %v398 = vsub.f32 %v396, %v397
  %v399 = vand.u32 %v398, 4294901760
  %400 = vmatpush1.msra.mxu0 %v399
  %401 = vmatprep.subr.mxu0 0.0
  %v402 = vand.u32 %v51, 4294901760
  %v403 = vsub.f32 %v51, %v402
  %v404 = vand.u32 %v403, 4294901760
  %v405 = vsub.f32 %v403, %v404
  %v406 = vand.u32 %v405, 4294901760
  %407 = vmatpush1.msra.mxu0 %v406
  %408 = vmatprep.subr.mxu0 0.0
  %v409 = vand.u32 %v52, 4294901760
  %v410 = vsub.f32 %v52, %v409
  %v411 = vand.u32 %v410, 4294901760
  %v412 = vsub.f32 %v410, %v411
  %v413 = vand.u32 %v412, 4294901760
  %414 = vmatpush1.msra.mxu0 %v413
  %v415 = vand.u32 %v18, 4294901760
  %416 = vmatprep.mubr.f32.mxu0 %v415
  %v417 = vand.u32 %v17, 4294901760
  %418 = vmatmul.mubr.f32.gmra.mrb[0].mxu0 %v417
  %v419 = vpop.f32.mrb[0].mxu0
  %v420 = vadd.f32 %v188, %v419
  %v421 = vpop.f32.mrb[0].mxu0
  %422 = vdwg.mxu0
  %423 = vmatprep.subr.mxu0 0.0
  %v424 = vand.u32 %v21, 4294901760
  %v425 = vsub.f32 %v21, %v424
  %426 = vmatpush1.msra.mxu0 %v425
  %427 = vmatprep.subr.mxu0 0.0
  %v428 = vand.u32 %v22, 4294901760
  %v429 = vsub.f32 %v22, %v428
  %430 = vmatpush1.msra.mxu0 %v429
  %431 = vmatprep.subr.mxu0 0.0
  %v432 = vand.u32 %v23, 4294901760
  %v433 = vsub.f32 %v23, %v432
  %434 = vmatpush1.msra.mxu0 %v433
  %435 = vmatprep.subr.mxu0 0.0
  %v436 = vand.u32 %v24, 4294901760
  %v437 = vsub.f32 %v24, %v436
  %438 = vmatpush1.msra.mxu0 %v437
  %439 = vmatprep.subr.mxu0 0.0
  %v440 = vand.u32 %v25, 4294901760
  %v441 = vsub.f32 %v25, %v440
  %442 = vmatpush1.msra.mxu0 %v441
  %443 = vmatprep.subr.mxu0 0.0
  %v444 = vand.u32 %v26, 4294901760
  %v445 = vsub.f32 %v26, %v444
  %446 = vmatpush1.msra.mxu0 %v445
  %447 = vmatprep.subr.mxu0 0.0
  %v448 = vand.u32 %v27, 4294901760
  %v449 = vsub.f32 %v27, %v448
  %450 = vmatpush1.msra.mxu0 %v449
  %451 = vmatprep.subr.mxu0 0.0
  %v452 = vand.u32 %v28, 4294901760
  %v453 = vsub.f32 %v28, %v452
  %454 = vmatpush1.msra.mxu0 %v453
  %455 = vmatprep.subr.mxu0 0.0
  %v456 = vand.u32 %v29, 4294901760
  %v457 = vsub.f32 %v29, %v456
  %458 = vmatpush1.msra.mxu0 %v457
  %459 = vmatprep.subr.mxu0 0.0
  %v460 = vand.u32 %v30, 4294901760
  %v461 = vsub.f32 %v30, %v460
  %462 = vmatpush1.msra.mxu0 %v461
  %463 = vmatprep.subr.mxu0 0.0
  %v464 = vand.u32 %v31, 4294901760
  %v465 = vsub.f32 %v31, %v464
  %466 = vmatpush1.msra.mxu0 %v465
  %467 = vmatprep.subr.mxu0 0.0
  %v468 = vand.u32 %v32, 4294901760
  %v469 = vsub.f32 %v32, %v468
  %470 = vmatpush1.msra.mxu0 %v469
  %471 = vmatprep.subr.mxu0 0.0
  %v472 = vand.u32 %v33, 4294901760
  %v473 = vsub.f32 %v33, %v472
  %474 = vmatpush1.msra.mxu0 %v473
  %475 = vmatprep.subr.mxu0 0.0
  %v476 = vand.u32 %v34, 4294901760
  %v477 = vsub.f32 %v34, %v476
  %478 = vmatpush1.msra.mxu0 %v477
  %479 = vmatprep.subr.mxu0 0.0
  %v480 = vand.u32 %v35, 4294901760
  %v481 = vsub.f32 %v35, %v480
  %482 = vmatpush1.msra.mxu0 %v481
  %483 = vmatprep.subr.mxu0 0.0
  %v484 = vand.u32 %v36, 4294901760
  %v485 = vsub.f32 %v36, %v484
  %486 = vmatpush1.msra.mxu0 %v485
  %487 = vmatprep.subr.mxu0 0.0
  %v488 = vand.u32 %v37, 4294901760
  %v489 = vsub.f32 %v37, %v488
  %490 = vmatpush1.msra.mxu0 %v489
  %491 = vmatprep.subr.mxu0 0.0
  %v492 = vand.u32 %v38, 4294901760
  %v493 = vsub.f32 %v38, %v492
  %494 = vmatpush1.msra.mxu0 %v493
  %495 = vmatprep.subr.mxu0 0.0
  %v496 = vand.u32 %v39, 4294901760
  %v497 = vsub.f32 %v39, %v496
  %498 = vmatpush1.msra.mxu0 %v497
  %499 = vmatprep.subr.mxu0 0.0
  %v500 = vand.u32 %v40, 4294901760
  %v501 = vsub.f32 %v40, %v500
  %502 = vmatpush1.msra.mxu0 %v501
  %503 = vmatprep.subr.mxu0 0.0
  %v504 = vand.u32 %v41, 4294901760
  %v505 = vsub.f32 %v41, %v504
  %506 = vmatpush1.msra.mxu0 %v505
  %507 = vmatprep.subr.mxu0 0.0
  %v508 = vand.u32 %v42, 4294901760
  %v509 = vsub.f32 %v42, %v508
  %510 = vmatpush1.msra.mxu0 %v509
  %511 = vmatprep.subr.mxu0 0.0
  %v512 = vand.u32 %v43, 4294901760
  %v513 = vsub.f32 %v43, %v512
  %514 = vmatpush1.msra.mxu0 %v513
  %515 = vmatprep.subr.mxu0 0.0
  %v516 = vand.u32 %v44, 4294901760
  %v517 = vsub.f32 %v44, %v516
  %518 = vmatpush1.msra.mxu0 %v517
  %519 = vmatprep.subr.mxu0 0.0
  %v520 = vand.u32 %v45, 4294901760
  %v521 = vsub.f32 %v45, %v520
  %522 = vmatpush1.msra.mxu0 %v521
  %523 = vmatprep.subr.mxu0 0.0
  %v524 = vand.u32 %v46, 4294901760
  %v525 = vsub.f32 %v46, %v524
  %526 = vmatpush1.msra.mxu0 %v525
  %527 = vmatprep.subr.mxu0 0.0
  %v528 = vand.u32 %v47, 4294901760
  %v529 = vsub.f32 %v47, %v528
  %530 = vmatpush1.msra.mxu0 %v529
  %531 = vmatprep.subr.mxu0 0.0
  %v532 = vand.u32 %v48, 4294901760
  %v533 = vsub.f32 %v48, %v532
  %534 = vmatpush1.msra.mxu0 %v533
  %535 = vmatprep.subr.mxu0 0.0
  %v536 = vand.u32 %v49, 4294901760
  %v537 = vsub.f32 %v49, %v536
  %538 = vmatpush1.msra.mxu0 %v537
  %539 = vmatprep.subr.mxu0 0.0
  %v540 = vand.u32 %v50, 4294901760
  %v541 = vsub.f32 %v50, %v540
  %542 = vmatpush1.msra.mxu0 %v541
  %543 = vmatprep.subr.mxu0 0.0
  %v544 = vand.u32 %v51, 4294901760
  %v545 = vsub.f32 %v51, %v544
  %546 = vmatpush1.msra.mxu0 %v545
  %547 = vmatprep.subr.mxu0 0.0
  %v548 = vand.u32 %v52, 4294901760
  %v549 = vsub.f32 %v52, %v548
  %550 = vmatpush1.msra.mxu0 %v549
  %v551 = vand.u32 %v18, 4294901760
  %v552 = vsub.f32 %v18, %v551
  %553 = vmatprep.mubr.f32.mxu0 %v552
  %v554 = vand.u32 %v17, 4294901760
  %v555 = vsub.f32 %v17, %v554
  %556 = vmatmul.mubr.f32.gmra.mrb[0].mxu0 %v555
  %v557 = vpop.f32.mrb[0].mxu0
  %v558 = vadd.f32 %v420, %v557
  %v559 = vpop.f32.mrb[0].mxu0
  %560 = vdwg.mxu0
  %561 = vmatprep.subr.mxu0 0.0
  %v562 = vand.u32 %v21, 4294901760
  %563 = vmatpush1.msra.mxu0 %v562
  %564 = vmatprep.subr.mxu0 0.0
  %v565 = vand.u32 %v22, 4294901760
  %566 = vmatpush1.msra.mxu0 %v565
  %567 = vmatprep.subr.mxu0 0.0
  %v568 = vand.u32 %v23, 4294901760
  %569 = vmatpush1.msra.mxu0 %v568
  %570 = vmatprep.subr.mxu0 0.0
  %v571 = vand.u32 %v24, 4294901760
  %572 = vmatpush1.msra.mxu0 %v571
  %573 = vmatprep.subr.mxu0 0.0
  %v574 = vand.u32 %v25, 4294901760
  %575 = vmatpush1.msra.mxu0 %v574
  %576 = vmatprep.subr.mxu0 0.0
  %v577 = vand.u32 %v26, 4294901760
  %578 = vmatpush1.msra.mxu0 %v577
  %579 = vmatprep.subr.mxu0 0.0
  %v580 = vand.u32 %v27, 4294901760
  %581 = vmatpush1.msra.mxu0 %v580
  %582 = vmatprep.subr.mxu0 0.0
  %v583 = vand.u32 %v28, 4294901760
  %584 = vmatpush1.msra.mxu0 %v583
  %585 = vmatprep.subr.mxu0 0.0
  %v586 = vand.u32 %v29, 4294901760
  %587 = vmatpush1.msra.mxu0 %v586
  %588 = vmatprep.subr.mxu0 0.0
  %v589 = vand.u32 %v30, 4294901760
  %590 = vmatpush1.msra.mxu0 %v589
  %591 = vmatprep.subr.mxu0 0.0
  %v592 = vand.u32 %v31, 4294901760
  %593 = vmatpush1.msra.mxu0 %v592
  %594 = vmatprep.subr.mxu0 0.0
  %v595 = vand.u32 %v32, 4294901760
  %596 = vmatpush1.msra.mxu0 %v595
  %597 = vmatprep.subr.mxu0 0.0
  %v598 = vand.u32 %v33, 4294901760
  %599 = vmatpush1.msra.mxu0 %v598
  %600 = vmatprep.subr.mxu0 0.0
  %v601 = vand.u32 %v34, 4294901760
  %602 = vmatpush1.msra.mxu0 %v601
  %603 = vmatprep.subr.mxu0 0.0
  %v604 = vand.u32 %v35, 4294901760
  %605 = vmatpush1.msra.mxu0 %v604
  %606 = vmatprep.subr.mxu0 0.0
  %v607 = vand.u32 %v36, 4294901760
  %608 = vmatpush1.msra.mxu0 %v607
  %609 = vmatprep.subr.mxu0 0.0
  %v610 = vand.u32 %v37, 4294901760
  %611 = vmatpush1.msra.mxu0 %v610
  %612 = vmatprep.subr.mxu0 0.0
  %v613 = vand.u32 %v38, 4294901760
  %614 = vmatpush1.msra.mxu0 %v613
  %615 = vmatprep.subr.mxu0 0.0
  %v616 = vand.u32 %v39, 4294901760
  %617 = vmatpush1.msra.mxu0 %v616
  %618 = vmatprep.subr.mxu0 0.0
  %v619 = vand.u32 %v40, 4294901760
  %620 = vmatpush1.msra.mxu0 %v619
  %621 = vmatprep.subr.mxu0 0.0
  %v622 = vand.u32 %v41, 4294901760
  %623 = vmatpush1.msra.mxu0 %v622
  %624 = vmatprep.subr.mxu0 0.0
  %v625 = vand.u32 %v42, 4294901760
  %626 = vmatpush1.msra.mxu0 %v625
  %627 = vmatprep.subr.mxu0 0.0
  %v628 = vand.u32 %v43, 4294901760
  %629 = vmatpush1.msra.mxu0 %v628
  %630 = vmatprep.subr.mxu0 0.0
  %v631 = vand.u32 %v44, 4294901760
  %632 = vmatpush1.msra.mxu0 %v631
  %633 = vmatprep.subr.mxu0 0.0
  %v634 = vand.u32 %v45, 4294901760
  %635 = vmatpush1.msra.mxu0 %v634
  %636 = vmatprep.subr.mxu0 0.0
  %v637 = vand.u32 %v46, 4294901760
  %638 = vmatpush1.msra.mxu0 %v637
  %639 = vmatprep.subr.mxu0 0.0
  %v640 = vand.u32 %v47, 4294901760
  %641 = vmatpush1.msra.mxu0 %v640
  %642 = vmatprep.subr.mxu0 0.0
  %v643 = vand.u32 %v48, 4294901760
  %644 = vmatpush1.msra.mxu0 %v643
  %645 = vmatprep.subr.mxu0 0.0
  %v646 = vand.u32 %v49, 4294901760
  %647 = vmatpush1.msra.mxu0 %v646
  %648 = vmatprep.subr.mxu0 0.0
  %v649 = vand.u32 %v50, 4294901760
  %650 = vmatpush1.msra.mxu0 %v649
  %651 = vmatprep.subr.mxu0 0.0
  %v652 = vand.u32 %v51, 4294901760
  %653 = vmatpush1.msra.mxu0 %v652
  %654 = vmatprep.subr.mxu0 0.0
  %v655 = vand.u32 %v52, 4294901760
  %656 = vmatpush1.msra.mxu0 %v655
  %v657 = vand.u32 %v18, 4294901760
  %v658 = vsub.f32 %v18, %v657
  %v659 = vand.u32 %v658, 4294901760
  %660 = vmatprep.mubr.f32.mxu0 %v659
  %v661 = vand.u32 %v17, 4294901760
  %v662 = vsub.f32 %v17, %v661
  %v663 = vand.u32 %v662, 4294901760
  %664 = vmatmul.mubr.f32.gmra.mrb[0].mxu0 %v663
  %v665 = vpop.f32.mrb[0].mxu0
  %v666 = vadd.f32 %v558, %v665
  %v667 = vpop.f32.mrb[0].mxu0
  %668 = vdwg.mxu0
  %669 = vmatprep.subr.mxu0 0.0
  %v670 = vand.u32 %v21, 4294901760
  %v671 = vsub.f32 %v21, %v670
  %v672 = vand.u32 %v671, 4294901760
  %673 = vmatpush1.msra.mxu0 %v672
  %674 = vmatprep.subr.mxu0 0.0
  %v675 = vand.u32 %v22, 4294901760
  %v676 = vsub.f32 %v22, %v675
  %v677 = vand.u32 %v676, 4294901760
  %678 = vmatpush1.msra.mxu0 %v677
  %679 = vmatprep.subr.mxu0 0.0
  %v680 = vand.u32 %v23, 4294901760
  %v681 = vsub.f32 %v23, %v680
  %v682 = vand.u32 %v681, 4294901760
  %683 = vmatpush1.msra.mxu0 %v682
  %684 = vmatprep.subr.mxu0 0.0
  %v685 = vand.u32 %v24, 4294901760
  %v686 = vsub.f32 %v24, %v685
  %v687 = vand.u32 %v686, 4294901760
  %688 = vmatpush1.msra.mxu0 %v687
  %689 = vmatprep.subr.mxu0 0.0
  %v690 = vand.u32 %v25, 4294901760
  %v691 = vsub.f32 %v25, %v690
  %v692 = vand.u32 %v691, 4294901760
  %693 = vmatpush1.msra.mxu0 %v692
  %694 = vmatprep.subr.mxu0 0.0
  %v695 = vand.u32 %v26, 4294901760
  %v696 = vsub.f32 %v26, %v695
  %v697 = vand.u32 %v696, 4294901760
  %698 = vmatpush1.msra.mxu0 %v697
  %699 = vmatprep.subr.mxu0 0.0
  %v700 = vand.u32 %v27, 4294901760
  %v701 = vsub.f32 %v27, %v700
  %v702 = vand.u32 %v701, 4294901760
  %703 = vmatpush1.msra.mxu0 %v702
  %704 = vmatprep.subr.mxu0 0.0
  %v705 = vand.u32 %v28, 4294901760
  %v706 = vsub.f32 %v28, %v705
  %v707 = vand.u32 %v706, 4294901760
  %708 = vmatpush1.msra.mxu0 %v707
  %709 = vmatprep.subr.mxu0 0.0
  %v710 = vand.u32 %v29, 4294901760
  %v711 = vsub.f32 %v29, %v710
  %v712 = vand.u32 %v711, 4294901760
  %713 = vmatpush1.msra.mxu0 %v712
  %714 = vmatprep.subr.mxu0 0.0
  %v715 = vand.u32 %v30, 4294901760
  %v716 = vsub.f32 %v30, %v715
  %v717 = vand.u32 %v716, 4294901760
  %718 = vmatpush1.msra.mxu0 %v717
  %719 = vmatprep.subr.mxu0 0.0
  %v720 = vand.u32 %v31, 4294901760
  %v721 = vsub.f32 %v31, %v720
  %v722 = vand.u32 %v721, 4294901760
  %723 = vmatpush1.msra.mxu0 %v722
  %724 = vmatprep.subr.mxu0 0.0
  %v725 = vand.u32 %v32, 4294901760
  %v726 = vsub.f32 %v32, %v725
  %v727 = vand.u32 %v726, 4294901760
  %728 = vmatpush1.msra.mxu0 %v727
  %729 = vmatprep.subr.mxu0 0.0
  %v730 = vand.u32 %v33, 4294901760
  %v731 = vsub.f32 %v33, %v730
  %v732 = vand.u32 %v731, 4294901760
  %733 = vmatpush1.msra.mxu0 %v732
  %734 = vmatprep.subr.mxu0 0.0
  %v735 = vand.u32 %v34, 4294901760
  %v736 = vsub.f32 %v34, %v735
  %v737 = vand.u32 %v736, 4294901760
  %738 = vmatpush1.msra.mxu0 %v737
  %739 = vmatprep.subr.mxu0 0.0
  %v740 = vand.u32 %v35, 4294901760
  %v741 = vsub.f32 %v35, %v740
  %v742 = vand.u32 %v741, 4294901760
  %743 = vmatpush1.msra.mxu0 %v742
  %744 = vmatprep.subr.mxu0 0.0
  %v745 = vand.u32 %v36, 4294901760
  %v746 = vsub.f32 %v36, %v745
  %v747 = vand.u32 %v746, 4294901760
  %748 = vmatpush1.msra.mxu0 %v747
  %749 = vmatprep.subr.mxu0 0.0
  %v750 = vand.u32 %v37, 4294901760
  %v751 = vsub.f32 %v37, %v750
  %v752 = vand.u32 %v751, 4294901760
  %753 = vmatpush1.msra.mxu0 %v752
  %754 = vmatprep.subr.mxu0 0.0
  %v755 = vand.u32 %v38, 4294901760
  %v756 = vsub.f32 %v38, %v755
  %v757 = vand.u32 %v756, 4294901760
  %758 = vmatpush1.msra.mxu0 %v757
  %759 = vmatprep.subr.mxu0 0.0
  %v760 = vand.u32 %v39, 4294901760
  %v761 = vsub.f32 %v39, %v760
  %v762 = vand.u32 %v761, 4294901760
  %763 = vmatpush1.msra.mxu0 %v762
  %764 = vmatprep.subr.mxu0 0.0
  %v765 = vand.u32 %v40, 4294901760
  %v766 = vsub.f32 %v40, %v765
  %v767 = vand.u32 %v766, 4294901760
  %768 = vmatpush1.msra.mxu0 %v767
  %769 = vmatprep.subr.mxu0 0.0
  %v770 = vand.u32 %v41, 4294901760
  %v771 = vsub.f32 %v41, %v770
  %v772 = vand.u32 %v771, 4294901760
  %773 = vmatpush1.msra.mxu0 %v772
  %774 = vmatprep.subr.mxu0 0.0
  %v775 = vand.u32 %v42, 4294901760
  %v776 = vsub.f32 %v42, %v775
  %v777 = vand.u32 %v776, 4294901760
  %778 = vmatpush1.msra.mxu0 %v777
  %779 = vmatprep.subr.mxu0 0.0
  %v780 = vand.u32 %v43, 4294901760
  %v781 = vsub.f32 %v43, %v780
  %v782 = vand.u32 %v781, 4294901760
  %783 = vmatpush1.msra.mxu0 %v782
  %784 = vmatprep.subr.mxu0 0.0
  %v785 = vand.u32 %v44, 4294901760
  %v786 = vsub.f32 %v44, %v785
  %v787 = vand.u32 %v786, 4294901760
  %788 = vmatpush1.msra.mxu0 %v787
  %789 = vmatprep.subr.mxu0 0.0
  %v790 = vand.u32 %v45, 4294901760
  %v791 = vsub.f32 %v45, %v790
  %v792 = vand.u32 %v791, 4294901760
  %793 = vmatpush1.msra.mxu0 %v792
  %794 = vmatprep.subr.mxu0 0.0
  %v795 = vand.u32 %v46, 4294901760
  %v796 = vsub.f32 %v46, %v795
  %v797 = vand.u32 %v796, 4294901760
  %798 = vmatpush1.msra.mxu0 %v797
  %799 = vmatprep.subr.mxu0 0.0
  %v800 = vand.u32 %v47, 4294901760
  %v801 = vsub.f32 %v47, %v800
  %v802 = vand.u32 %v801, 4294901760
  %803 = vmatpush1.msra.mxu0 %v802
  %804 = vmatprep.subr.mxu0 0.0
  %v805 = vand.u32 %v48, 4294901760
  %v806 = vsub.f32 %v48, %v805
  %v807 = vand.u32 %v806, 4294901760
  %808 = vmatpush1.msra.mxu0 %v807
  %809 = vmatprep.subr.mxu0 0.0
  %v810 = vand.u32 %v49, 4294901760
  %v811 = vsub.f32 %v49, %v810
  %v812 = vand.u32 %v811, 4294901760
  %813 = vmatpush1.msra.mxu0 %v812
  %814 = vmatprep.subr.mxu0 0.0
  %v815 = vand.u32 %v50, 4294901760
  %v816 = vsub.f32 %v50, %v815
  %v817 = vand.u32 %v816, 4294901760
  %818 = vmatpush1.msra.mxu0 %v817
  %819 = vmatprep.subr.mxu0 0.0
  %v820 = vand.u32 %v51, 4294901760
  %v821 = vsub.f32 %v51, %v820
  %v822 = vand.u32 %v821, 4294901760
  %823 = vmatpush1.msra.mxu0 %v822
  %824 = vmatprep.subr.mxu0 0.0
  %v825 = vand.u32 %v52, 4294901760
  %v826 = vsub.f32 %v52, %v825
  %v827 = vand.u32 %v826, 4294901760
  %828 = vmatpush1.msra.mxu0 %v827
  %v829 = vand.u32 %v18, 4294901760
  %830 = vmatprep.mubr.f32.mxu0 %v829
  %v831 = vand.u32 %v17, 4294901760
  %832 = vmatmul.mubr.f32.gmra.mrb[0].mxu0 %v831
  %v833 = vpop.f32.mrb[0].mxu0
  %v834 = vadd.f32 %v666, %v833
  %v835 = vpop.f32.mrb[0].mxu0
  %836 = vdwg.mxu0
  %837 = vmatprep.subr.mxu0 0.0
  %v838 = vand.u32 %v21, 4294901760
  %839 = vmatpush1.msra.mxu0 %v838
  %840 = vmatprep.subr.mxu0 0.0
  %v841 = vand.u32 %v22, 4294901760
  %842 = vmatpush1.msra.mxu0 %v841
  %843 = vmatprep.subr.mxu0 0.0
  %v844 = vand.u32 %v23, 4294901760
  %845 = vmatpush1.msra.mxu0 %v844
  %846 = vmatprep.subr.mxu0 0.0
  %v847 = vand.u32 %v24, 4294901760
  %848 = vmatpush1.msra.mxu0 %v847
  %849 = vmatprep.subr.mxu0 0.0
  %v850 = vand.u32 %v25, 4294901760
  %851 = vmatpush1.msra.mxu0 %v850
  %852 = vmatprep.subr.mxu0 0.0
  %v853 = vand.u32 %v26, 4294901760
  %854 = vmatpush1.msra.mxu0 %v853
  %855 = vmatprep.subr.mxu0 0.0
  %v856 = vand.u32 %v27, 4294901760
  %857 = vmatpush1.msra.mxu0 %v856
  %858 = vmatprep.subr.mxu0 0.0
  %v859 = vand.u32 %v28, 4294901760
  %860 = vmatpush1.msra.mxu0 %v859
  %861 = vmatprep.subr.mxu0 0.0
  %v862 = vand.u32 %v29, 4294901760
  %863 = vmatpush1.msra.mxu0 %v862
  %864 = vmatprep.subr.mxu0 0.0
  %v865 = vand.u32 %v30, 4294901760
  %866 = vmatpush1.msra.mxu0 %v865
  %867 = vmatprep.subr.mxu0 0.0
  %v868 = vand.u32 %v31, 4294901760
  %869 = vmatpush1.msra.mxu0 %v868
  %870 = vmatprep.subr.mxu0 0.0
  %v871 = vand.u32 %v32, 4294901760
  %872 = vmatpush1.msra.mxu0 %v871
  %873 = vmatprep.subr.mxu0 0.0
  %v874 = vand.u32 %v33, 4294901760
  %875 = vmatpush1.msra.mxu0 %v874
  %876 = vmatprep.subr.mxu0 0.0
  %v877 = vand.u32 %v34, 4294901760
  %878 = vmatpush1.msra.mxu0 %v877
  %879 = vmatprep.subr.mxu0 0.0
  %v880 = vand.u32 %v35, 4294901760
  %881 = vmatpush1.msra.mxu0 %v880
  %882 = vmatprep.subr.mxu0 0.0
  %v883 = vand.u32 %v36, 4294901760
  %884 = vmatpush1.msra.mxu0 %v883
  %885 = vmatprep.subr.mxu0 0.0
  %v886 = vand.u32 %v37, 4294901760
  %887 = vmatpush1.msra.mxu0 %v886
  %888 = vmatprep.subr.mxu0 0.0
  %v889 = vand.u32 %v38, 4294901760
  %890 = vmatpush1.msra.mxu0 %v889
  %891 = vmatprep.subr.mxu0 0.0
  %v892 = vand.u32 %v39, 4294901760
  %893 = vmatpush1.msra.mxu0 %v892
  %894 = vmatprep.subr.mxu0 0.0
  %v895 = vand.u32 %v40, 4294901760
  %896 = vmatpush1.msra.mxu0 %v895
  %897 = vmatprep.subr.mxu0 0.0
  %v898 = vand.u32 %v41, 4294901760
  %899 = vmatpush1.msra.mxu0 %v898
  %900 = vmatprep.subr.mxu0 0.0
  %v901 = vand.u32 %v42, 4294901760
  %902 = vmatpush1.msra.mxu0 %v901
  %903 = vmatprep.subr.mxu0 0.0
  %v904 = vand.u32 %v43, 4294901760
  %905 = vmatpush1.msra.mxu0 %v904
  %906 = vmatprep.subr.mxu0 0.0
  %v907 = vand.u32 %v44, 4294901760
  %908 = vmatpush1.msra.mxu0 %v907
  %909 = vmatprep.subr.mxu0 0.0
  %v910 = vand.u32 %v45, 4294901760
  %911 = vmatpush1.msra.mxu0 %v910
  %912 = vmatprep.subr.mxu0 0.0
  %v913 = vand.u32 %v46, 4294901760
  %914 = vmatpush1.msra.mxu0 %v913
  %915 = vmatprep.subr.mxu0 0.0
  %v916 = vand.u32 %v47, 4294901760
  %917 = vmatpush1.msra.mxu0 %v916
  %918 = vmatprep.subr.mxu0 0.0
  %v919 = vand.u32 %v48, 4294901760
  %920 = vmatpush1.msra.mxu0 %v919
  %921 = vmatprep.subr.mxu0 0.0
  %v922 = vand.u32 %v49, 4294901760
  %923 = vmatpush1.msra.mxu0 %v922
  %924 = vmatprep.subr.mxu0 0.0
  %v925 = vand.u32 %v50, 4294901760
  %926 = vmatpush1.msra.mxu0 %v925
  %927 = vmatprep.subr.mxu0 0.0
  %v928 = vand.u32 %v51, 4294901760
  %929 = vmatpush1.msra.mxu0 %v928
  %930 = vmatprep.subr.mxu0 0.0
  %v931 = vand.u32 %v52, 4294901760
  %932 = vmatpush1.msra.mxu0 %v931
  %v933 = vand.u32 %v18, 4294901760
  %934 = vmatprep.mubr.f32.mxu0 %v933
  %v935 = vand.u32 %v17, 4294901760
  %936 = vmatmul.mubr.f32.gmra.mrb[0].mxu0 %v935
  %v937 = vpop.f32.mrb[0].mxu0
  %v938 = vadd.f32 %v834, %v937
  %v939 = vpop.f32.mrb[0].mxu0
  %940 = vdwg.mxu0
  %941 = vmatprep.subr.mxu0 0.0
  %v942 = vand.u32 %v53, 4294901760
  %943 = vmatpush1.msra.mxu0 %v942
  %944 = vmatprep.subr.mxu0 0.0
  %v945 = vand.u32 %v54, 4294901760
  %946 = vmatpush1.msra.mxu0 %v945
  %947 = vmatprep.subr.mxu0 0.0
  %v948 = vand.u32 %v55, 4294901760
  %949 = vmatpush1.msra.mxu0 %v948
  %950 = vmatprep.subr.mxu0 0.0
  %v951 = vand.u32 %v56, 4294901760
  %952 = vmatpush1.msra.mxu0 %v951
  %953 = vmatprep.subr.mxu0 0.0
  %v954 = vand.u32 %v57, 4294901760
  %955 = vmatpush1.msra.mxu0 %v954
  %956 = vmatprep.subr.mxu0 0.0
  %v957 = vand.u32 %v58, 4294901760
  %958 = vmatpush1.msra.mxu0 %v957
  %959 = vmatprep.subr.mxu0 0.0
  %v960 = vand.u32 %v59, 4294901760
  %961 = vmatpush1.msra.mxu0 %v960
  %962 = vmatprep.subr.mxu0 0.0
  %v963 = vand.u32 %v60, 4294901760
  %964 = vmatpush1.msra.mxu0 %v963
  %965 = vmatprep.subr.mxu0 0.0
  %v966 = vand.u32 %v61, 4294901760
  %967 = vmatpush1.msra.mxu0 %v966
  %968 = vmatprep.subr.mxu0 0.0
  %v969 = vand.u32 %v62, 4294901760
  %970 = vmatpush1.msra.mxu0 %v969
  %971 = vmatprep.subr.mxu0 0.0
  %v972 = vand.u32 %v63, 4294901760
  %973 = vmatpush1.msra.mxu0 %v972
  %974 = vmatprep.subr.mxu0 0.0
  %v975 = vand.u32 %v64, 4294901760
  %976 = vmatpush1.msra.mxu0 %v975
  %977 = vmatprep.subr.mxu0 0.0
  %v978 = vand.u32 %v65, 4294901760
  %979 = vmatpush1.msra.mxu0 %v978
  %980 = vmatprep.subr.mxu0 0.0
  %v981 = vand.u32 %v66, 4294901760
  %982 = vmatpush1.msra.mxu0 %v981
  %983 = vmatprep.subr.mxu0 0.0
  %v984 = vand.u32 %v67, 4294901760
  %985 = vmatpush1.msra.mxu0 %v984
  %986 = vmatprep.subr.mxu0 0.0
  %v987 = vand.u32 %v68, 4294901760
  %988 = vmatpush1.msra.mxu0 %v987
  %989 = vmatprep.subr.mxu0 0.0
  %v990 = vand.u32 %v69, 4294901760
  %991 = vmatpush1.msra.mxu0 %v990
  %992 = vmatprep.subr.mxu0 0.0
  %v993 = vand.u32 %v70, 4294901760
  %994 = vmatpush1.msra.mxu0 %v993
  %995 = vmatprep.subr.mxu0 0.0
  %v996 = vand.u32 %v71, 4294901760
  %997 = vmatpush1.msra.mxu0 %v996
  %998 = vmatprep.subr.mxu0 0.0
  %v999 = vand.u32 %v72, 4294901760
  %1000 = vmatpush1.msra.mxu0 %v999
  %1001 = vmatprep.subr.mxu0 0.0
  %v1002 = vand.u32 %v73, 4294901760
  %1003 = vmatpush1.msra.mxu0 %v1002
  %1004 = vmatprep.subr.mxu0 0.0
  %v1005 = vand.u32 %v74, 4294901760
  %1006 = vmatpush1.msra.mxu0 %v1005
  %1007 = vmatprep.subr.mxu0 0.0
  %1008 = vmatpush1.msra.mxu0 0.0
  %1009 = vmatprep.subr.mxu0 0.0
  %1010 = vmatpush1.msra.mxu0 0.0
  %1011 = vmatprep.subr.mxu0 0.0
  %1012 = vmatpush1.msra.mxu0 0.0
  %1013 = vmatprep.subr.mxu0 0.0
  %1014 = vmatpush1.msra.mxu0 0.0
  %1015 = vmatprep.subr.mxu0 0.0
  %1016 = vmatpush1.msra.mxu0 0.0
  %1017 = vmatprep.subr.mxu0 0.0
  %1018 = vmatpush1.msra.mxu0 0.0
  %1019 = vmatprep.subr.mxu0 0.0
  %1020 = vmatpush1.msra.mxu0 0.0
  %1021 = vmatprep.subr.mxu0 0.0
  %1022 = vmatpush1.msra.mxu0 0.0
  %1023 = vmatprep.subr.mxu0 0.0
  %1024 = vmatpush1.msra.mxu0 0.0
  %1025 = vmatprep.subr.mxu0 0.0
  %1026 = vmatpush1.msra.mxu0 0.0
  %v1027 = vand.u32 %v77, 4294901760
  %v1028 = vsub.f32 %v77, %v1027
  %v1029 = vand.u32 %v1028, 4294901760
  %v1030 = vsub.f32 %v1028, %v1029
  %v1031 = vand.u32 %v1030, 4294901760
  %1032 = vmatprep.mubr.f32.mxu0 %v1031
  %v1033 = vand.u32 %v19, 4294901760
  %v1034 = vsub.f32 %v19, %v1033
  %v1035 = vand.u32 %v1034, 4294901760
  %v1036 = vsub.f32 %v1034, %v1035
  %v1037 = vand.u32 %v1036, 4294901760
  %1038 = vmatmul.mubr.f32.gmra.mrb[0].mxu0 %v1037
  %v1039 = vpop.f32.mrb[0].mxu0
  %v1040 = vadd.f32 %v938, %v1039
  %v1041 = vpop.f32.mrb[0].mxu0
  %1042 = vdwg.mxu0
  %1043 = vmatprep.subr.mxu0 0.0
  %v1044 = vand.u32 %v53, 4294901760
  %v1045 = vsub.f32 %v53, %v1044
  %v1046 = vand.u32 %v1045, 4294901760
  %v1047 = vsub.f32 %v1045, %v1046
  %v1048 = vand.u32 %v1047, 4294901760
  %1049 = vmatpush1.msra.mxu0 %v1048
  %1050 = vmatprep.subr.mxu0 0.0
  %v1051 = vand.u32 %v54, 4294901760
  %v1052 = vsub.f32 %v54, %v1051
  %v1053 = vand.u32 %v1052, 4294901760
  %v1054 = vsub.f32 %v1052, %v1053
  %v1055 = vand.u32 %v1054, 4294901760
  %1056 = vmatpush1.msra.mxu0 %v1055
  %1057 = vmatprep.subr.mxu0 0.0
  %v1058 = vand.u32 %v55, 4294901760
  %v1059 = vsub.f32 %v55, %v1058
  %v1060 = vand.u32 %v1059, 4294901760
  %v1061 = vsub.f32 %v1059, %v1060
  %v1062 = vand.u32 %v1061, 4294901760
  %1063 = vmatpush1.msra.mxu0 %v1062
  %1064 = vmatprep.subr.mxu0 0.0
  %v1065 = vand.u32 %v56, 4294901760
  %v1066 = vsub.f32 %v56, %v1065
  %v1067 = vand.u32 %v1066, 4294901760
  %v1068 = vsub.f32 %v1066, %v1067
  %v1069 = vand.u32 %v1068, 4294901760
  %1070 = vmatpush1.msra.mxu0 %v1069
  %1071 = vmatprep.subr.mxu0 0.0
  %v1072 = vand.u32 %v57, 4294901760
  %v1073 = vsub.f32 %v57, %v1072
  %v1074 = vand.u32 %v1073, 4294901760
  %v1075 = vsub.f32 %v1073, %v1074
  %v1076 = vand.u32 %v1075, 4294901760
  %1077 = vmatpush1.msra.mxu0 %v1076
  %1078 = vmatprep.subr.mxu0 0.0
  %v1079 = vand.u32 %v58, 4294901760
  %v1080 = vsub.f32 %v58, %v1079
  %v1081 = vand.u32 %v1080, 4294901760
  %v1082 = vsub.f32 %v1080, %v1081
  %v1083 = vand.u32 %v1082, 4294901760
  %1084 = vmatpush1.msra.mxu0 %v1083
  %1085 = vmatprep.subr.mxu0 0.0
  %v1086 = vand.u32 %v59, 4294901760
  %v1087 = vsub.f32 %v59, %v1086
  %v1088 = vand.u32 %v1087, 4294901760
  %v1089 = vsub.f32 %v1087, %v1088
  %v1090 = vand.u32 %v1089, 4294901760
  %1091 = vmatpush1.msra.mxu0 %v1090
  %1092 = vmatprep.subr.mxu0 0.0
  %v1093 = vand.u32 %v60, 4294901760
  %v1094 = vsub.f32 %v60, %v1093
  %v1095 = vand.u32 %v1094, 4294901760
  %v1096 = vsub.f32 %v1094, %v1095
  %v1097 = vand.u32 %v1096, 4294901760
  %1098 = vmatpush1.msra.mxu0 %v1097
  %1099 = vmatprep.subr.mxu0 0.0
  %v1100 = vand.u32 %v61, 4294901760
  %v1101 = vsub.f32 %v61, %v1100
  %v1102 = vand.u32 %v1101, 4294901760
  %v1103 = vsub.f32 %v1101, %v1102
  %v1104 = vand.u32 %v1103, 4294901760
  %1105 = vmatpush1.msra.mxu0 %v1104
  %1106 = vmatprep.subr.mxu0 0.0
  %v1107 = vand.u32 %v62, 4294901760
  %v1108 = vsub.f32 %v62, %v1107
  %v1109 = vand.u32 %v1108, 4294901760
  %v1110 = vsub.f32 %v1108, %v1109
  %v1111 = vand.u32 %v1110, 4294901760
  %1112 = vmatpush1.msra.mxu0 %v1111
  %1113 = vmatprep.subr.mxu0 0.0
  %v1114 = vand.u32 %v63, 4294901760
  %v1115 = vsub.f32 %v63, %v1114
  %v1116 = vand.u32 %v1115, 4294901760
  %v1117 = vsub.f32 %v1115, %v1116
  %v1118 = vand.u32 %v1117, 4294901760
  %1119 = vmatpush1.msra.mxu0 %v1118
  %1120 = vmatprep.subr.mxu0 0.0
  %v1121 = vand.u32 %v64, 4294901760
  %v1122 = vsub.f32 %v64, %v1121
  %v1123 = vand.u32 %v1122, 4294901760
  %v1124 = vsub.f32 %v1122, %v1123
  %v1125 = vand.u32 %v1124, 4294901760
  %1126 = vmatpush1.msra.mxu0 %v1125
  %1127 = vmatprep.subr.mxu0 0.0
  %v1128 = vand.u32 %v65, 4294901760
  %v1129 = vsub.f32 %v65, %v1128
  %v1130 = vand.u32 %v1129, 4294901760
  %v1131 = vsub.f32 %v1129, %v1130
  %v1132 = vand.u32 %v1131, 4294901760
  %1133 = vmatpush1.msra.mxu0 %v1132
  %1134 = vmatprep.subr.mxu0 0.0
  %v1135 = vand.u32 %v66, 4294901760
  %v1136 = vsub.f32 %v66, %v1135
  %v1137 = vand.u32 %v1136, 4294901760
  %v1138 = vsub.f32 %v1136, %v1137
  %v1139 = vand.u32 %v1138, 4294901760
  %1140 = vmatpush1.msra.mxu0 %v1139
  %1141 = vmatprep.subr.mxu0 0.0
  %v1142 = vand.u32 %v67, 4294901760
  %v1143 = vsub.f32 %v67, %v1142
  %v1144 = vand.u32 %v1143, 4294901760
  %v1145 = vsub.f32 %v1143, %v1144
  %v1146 = vand.u32 %v1145, 4294901760
  %1147 = vmatpush1.msra.mxu0 %v1146
  %1148 = vmatprep.subr.mxu0 0.0
  %v1149 = vand.u32 %v68, 4294901760
  %v1150 = vsub.f32 %v68, %v1149
  %v1151 = vand.u32 %v1150, 4294901760
  %v1152 = vsub.f32 %v1150, %v1151
  %v1153 = vand.u32 %v1152, 4294901760
  %1154 = vmatpush1.msra.mxu0 %v1153
  %1155 = vmatprep.subr.mxu0 0.0
  %v1156 = vand.u32 %v69, 4294901760
  %v1157 = vsub.f32 %v69, %v1156
  %v1158 = vand.u32 %v1157, 4294901760
  %v1159 = vsub.f32 %v1157, %v1158
  %v1160 = vand.u32 %v1159, 4294901760
  %1161 = vmatpush1.msra.mxu0 %v1160
  %1162 = vmatprep.subr.mxu0 0.0
  %v1163 = vand.u32 %v70, 4294901760
  %v1164 = vsub.f32 %v70, %v1163
  %v1165 = vand.u32 %v1164, 4294901760
  %v1166 = vsub.f32 %v1164, %v1165
  %v1167 = vand.u32 %v1166, 4294901760
  %1168 = vmatpush1.msra.mxu0 %v1167
  %1169 = vmatprep.subr.mxu0 0.0
  %v1170 = vand.u32 %v71, 4294901760
  %v1171 = vsub.f32 %v71, %v1170
  %v1172 = vand.u32 %v1171, 4294901760
  %v1173 = vsub.f32 %v1171, %v1172
  %v1174 = vand.u32 %v1173, 4294901760
  %1175 = vmatpush1.msra.mxu0 %v1174
  %1176 = vmatprep.subr.mxu0 0.0
  %v1177 = vand.u32 %v72, 4294901760
  %v1178 = vsub.f32 %v72, %v1177
  %v1179 = vand.u32 %v1178, 4294901760
  %v1180 = vsub.f32 %v1178, %v1179
  %v1181 = vand.u32 %v1180, 4294901760
  %1182 = vmatpush1.msra.mxu0 %v1181
  %1183 = vmatprep.subr.mxu0 0.0
  %v1184 = vand.u32 %v73, 4294901760
  %v1185 = vsub.f32 %v73, %v1184
  %v1186 = vand.u32 %v1185, 4294901760
  %v1187 = vsub.f32 %v1185, %v1186
  %v1188 = vand.u32 %v1187, 4294901760
  %1189 = vmatpush1.msra.mxu0 %v1188
  %1190 = vmatprep.subr.mxu0 0.0
  %v1191 = vand.u32 %v74, 4294901760
  %v1192 = vsub.f32 %v74, %v1191
  %v1193 = vand.u32 %v1192, 4294901760
  %v1194 = vsub.f32 %v1192, %v1193
  %v1195 = vand.u32 %v1194, 4294901760
  %1196 = vmatpush1.msra.mxu0 %v1195
  %1197 = vmatprep.subr.mxu0 0.0
  %1198 = vmatpush1.msra.mxu0 0.0
  %1199 = vmatprep.subr.mxu0 0.0
  %1200 = vmatpush1.msra.mxu0 0.0
  %1201 = vmatprep.subr.mxu0 0.0
  %1202 = vmatpush1.msra.mxu0 0.0
  %1203 = vmatprep.subr.mxu0 0.0
  %1204 = vmatpush1.msra.mxu0 0.0
  %1205 = vmatprep.subr.mxu0 0.0
  %1206 = vmatpush1.msra.mxu0 0.0
  %1207 = vmatprep.subr.mxu0 0.0
  %1208 = vmatpush1.msra.mxu0 0.0
  %1209 = vmatprep.subr.mxu0 0.0
  %1210 = vmatpush1.msra.mxu0 0.0
  %1211 = vmatprep.subr.mxu0 0.0
  %1212 = vmatpush1.msra.mxu0 0.0
  %1213 = vmatprep.subr.mxu0 0.0
  %1214 = vmatpush1.msra.mxu0 0.0
  %1215 = vmatprep.subr.mxu0 0.0
  %1216 = vmatpush1.msra.mxu0 0.0
  %v1217 = vand.u32 %v77, 4294901760
  %1218 = vmatprep.mubr.f32.mxu0 %v1217
  %v1219 = vand.u32 %v19, 4294901760
  %1220 = vmatmul.mubr.f32.gmra.mrb[0].mxu0 %v1219
  %v1221 = vpop.f32.mrb[0].mxu0
  %v1222 = vadd.f32 %v1040, %v1221
  %v1223 = vpop.f32.mrb[0].mxu0
  %1224 = vdwg.mxu0
  %1225 = vmatprep.subr.mxu0 0.0
  %v1226 = vand.u32 %v53, 4294901760
  %v1227 = vsub.f32 %v53, %v1226
  %1228 = vmatpush1.msra.mxu0 %v1227
  %1229 = vmatprep.subr.mxu0 0.0
  %v1230 = vand.u32 %v54, 4294901760
  %v1231 = vsub.f32 %v54, %v1230
  %1232 = vmatpush1.msra.mxu0 %v1231
  %1233 = vmatprep.subr.mxu0 0.0
  %v1234 = vand.u32 %v55, 4294901760
  %v1235 = vsub.f32 %v55, %v1234
  %1236 = vmatpush1.msra.mxu0 %v1235
  %1237 = vmatprep.subr.mxu0 0.0
  %v1238 = vand.u32 %v56, 4294901760
  %v1239 = vsub.f32 %v56, %v1238
  %1240 = vmatpush1.msra.mxu0 %v1239
  %1241 = vmatprep.subr.mxu0 0.0
  %v1242 = vand.u32 %v57, 4294901760
  %v1243 = vsub.f32 %v57, %v1242
  %1244 = vmatpush1.msra.mxu0 %v1243
  %1245 = vmatprep.subr.mxu0 0.0
  %v1246 = vand.u32 %v58, 4294901760
  %v1247 = vsub.f32 %v58, %v1246
  %1248 = vmatpush1.msra.mxu0 %v1247
  %1249 = vmatprep.subr.mxu0 0.0
  %v1250 = vand.u32 %v59, 4294901760
  %v1251 = vsub.f32 %v59, %v1250
  %1252 = vmatpush1.msra.mxu0 %v1251
  %1253 = vmatprep.subr.mxu0 0.0
  %v1254 = vand.u32 %v60, 4294901760
  %v1255 = vsub.f32 %v60, %v1254
  %1256 = vmatpush1.msra.mxu0 %v1255
  %1257 = vmatprep.subr.mxu0 0.0
  %v1258 = vand.u32 %v61, 4294901760
  %v1259 = vsub.f32 %v61, %v1258
  %1260 = vmatpush1.msra.mxu0 %v1259
  %1261 = vmatprep.subr.mxu0 0.0
  %v1262 = vand.u32 %v62, 4294901760
  %v1263 = vsub.f32 %v62, %v1262
  %1264 = vmatpush1.msra.mxu0 %v1263
  %1265 = vmatprep.subr.mxu0 0.0
  %v1266 = vand.u32 %v63, 4294901760
  %v1267 = vsub.f32 %v63, %v1266
  %1268 = vmatpush1.msra.mxu0 %v1267
  %1269 = vmatprep.subr.mxu0 0.0
  %v1270 = vand.u32 %v64, 4294901760
  %v1271 = vsub.f32 %v64, %v1270
  %1272 = vmatpush1.msra.mxu0 %v1271
  %1273 = vmatprep.subr.mxu0 0.0
  %v1274 = vand.u32 %v65, 4294901760
  %v1275 = vsub.f32 %v65, %v1274
  %1276 = vmatpush1.msra.mxu0 %v1275
  %1277 = vmatprep.subr.mxu0 0.0
  %v1278 = vand.u32 %v66, 4294901760
  %v1279 = vsub.f32 %v66, %v1278
  %1280 = vmatpush1.msra.mxu0 %v1279
  %1281 = vmatprep.subr.mxu0 0.0
  %v1282 = vand.u32 %v67, 4294901760
  %v1283 = vsub.f32 %v67, %v1282
  %1284 = vmatpush1.msra.mxu0 %v1283
  %1285 = vmatprep.subr.mxu0 0.0
  %v1286 = vand.u32 %v68, 4294901760
  %v1287 = vsub.f32 %v68, %v1286
  %1288 = vmatpush1.msra.mxu0 %v1287
  %1289 = vmatprep.subr.mxu0 0.0
  %v1290 = vand.u32 %v69, 4294901760
  %v1291 = vsub.f32 %v69, %v1290
  %1292 = vmatpush1.msra.mxu0 %v1291
  %1293 = vmatprep.subr.mxu0 0.0
  %v1294 = vand.u32 %v70, 4294901760
  %v1295 = vsub.f32 %v70, %v1294
  %1296 = vmatpush1.msra.mxu0 %v1295
  %1297 = vmatprep.subr.mxu0 0.0
  %v1298 = vand.u32 %v71, 4294901760
  %v1299 = vsub.f32 %v71, %v1298
  %1300 = vmatpush1.msra.mxu0 %v1299
  %1301 = vmatprep.subr.mxu0 0.0
  %v1302 = vand.u32 %v72, 4294901760
  %v1303 = vsub.f32 %v72, %v1302
  %1304 = vmatpush1.msra.mxu0 %v1303
  %1305 = vmatprep.subr.mxu0 0.0
  %v1306 = vand.u32 %v73, 4294901760
  %v1307 = vsub.f32 %v73, %v1306
  %1308 = vmatpush1.msra.mxu0 %v1307
  %1309 = vmatprep.subr.mxu0 0.0
  %v1310 = vand.u32 %v74, 4294901760
  %v1311 = vsub.f32 %v74, %v1310
  %1312 = vmatpush1.msra.mxu0 %v1311
  %1313 = vmatprep.subr.mxu0 0.0
  %1314 = vmatpush1.msra.mxu0 0.0
  %1315 = vmatprep.subr.mxu0 0.0
  %1316 = vmatpush1.msra.mxu0 0.0
  %1317 = vmatprep.subr.mxu0 0.0
  %1318 = vmatpush1.msra.mxu0 0.0
  %1319 = vmatprep.subr.mxu0 0.0
  %1320 = vmatpush1.msra.mxu0 0.0
  %1321 = vmatprep.subr.mxu0 0.0
  %1322 = vmatpush1.msra.mxu0 0.0
  %1323 = vmatprep.subr.mxu0 0.0
  %1324 = vmatpush1.msra.mxu0 0.0
  %1325 = vmatprep.subr.mxu0 0.0
  %1326 = vmatpush1.msra.mxu0 0.0
  %1327 = vmatprep.subr.mxu0 0.0
  %1328 = vmatpush1.msra.mxu0 0.0
  %1329 = vmatprep.subr.mxu0 0.0
  %1330 = vmatpush1.msra.mxu0 0.0
  %1331 = vmatprep.subr.mxu0 0.0
  %1332 = vmatpush1.msra.mxu0 0.0
  %v1333 = vand.u32 %v77, 4294901760
  %v1334 = vsub.f32 %v77, %v1333
  %1335 = vmatprep.mubr.f32.mxu0 %v1334
  %v1336 = vand.u32 %v19, 4294901760
  %v1337 = vsub.f32 %v19, %v1336
  %1338 = vmatmul.mubr.f32.gmra.mrb[0].mxu0 %v1337
  %v1339 = vpop.f32.mrb[0].mxu0
  %v1340 = vadd.f32 %v1222, %v1339
  %v1341 = vpop.f32.mrb[0].mxu0
  %1342 = vdwg.mxu0
  %1343 = vmatprep.subr.mxu0 0.0
  %v1344 = vand.u32 %v53, 4294901760
  %1345 = vmatpush1.msra.mxu0 %v1344
  %1346 = vmatprep.subr.mxu0 0.0
  %v1347 = vand.u32 %v54, 4294901760
  %1348 = vmatpush1.msra.mxu0 %v1347
  %1349 = vmatprep.subr.mxu0 0.0
  %v1350 = vand.u32 %v55, 4294901760
  %1351 = vmatpush1.msra.mxu0 %v1350
  %1352 = vmatprep.subr.mxu0 0.0
  %v1353 = vand.u32 %v56, 4294901760
  %1354 = vmatpush1.msra.mxu0 %v1353
  %1355 = vmatprep.subr.mxu0 0.0
  %v1356 = vand.u32 %v57, 4294901760
  %1357 = vmatpush1.msra.mxu0 %v1356
  %1358 = vmatprep.subr.mxu0 0.0
  %v1359 = vand.u32 %v58, 4294901760
  %1360 = vmatpush1.msra.mxu0 %v1359
  %1361 = vmatprep.subr.mxu0 0.0
  %v1362 = vand.u32 %v59, 4294901760
  %1363 = vmatpush1.msra.mxu0 %v1362
  %1364 = vmatprep.subr.mxu0 0.0
  %v1365 = vand.u32 %v60, 4294901760
  %1366 = vmatpush1.msra.mxu0 %v1365
  %1367 = vmatprep.subr.mxu0 0.0
  %v1368 = vand.u32 %v61, 4294901760
  %1369 = vmatpush1.msra.mxu0 %v1368
  %1370 = vmatprep.subr.mxu0 0.0
  %v1371 = vand.u32 %v62, 4294901760
  %1372 = vmatpush1.msra.mxu0 %v1371
  %1373 = vmatprep.subr.mxu0 0.0
  %v1374 = vand.u32 %v63, 4294901760
  %1375 = vmatpush1.msra.mxu0 %v1374
  %1376 = vmatprep.subr.mxu0 0.0
  %v1377 = vand.u32 %v64, 4294901760
  %1378 = vmatpush1.msra.mxu0 %v1377
  %1379 = vmatprep.subr.mxu0 0.0
  %v1380 = vand.u32 %v65, 4294901760
  %1381 = vmatpush1.msra.mxu0 %v1380
  %1382 = vmatprep.subr.mxu0 0.0
  %v1383 = vand.u32 %v66, 4294901760
  %1384 = vmatpush1.msra.mxu0 %v1383
  %1385 = vmatprep.subr.mxu0 0.0
  %v1386 = vand.u32 %v67, 4294901760
  %1387 = vmatpush1.msra.mxu0 %v1386
  %1388 = vmatprep.subr.mxu0 0.0
  %v1389 = vand.u32 %v68, 4294901760
  %1390 = vmatpush1.msra.mxu0 %v1389
  %1391 = vmatprep.subr.mxu0 0.0
  %v1392 = vand.u32 %v69, 4294901760
  %1393 = vmatpush1.msra.mxu0 %v1392
  %1394 = vmatprep.subr.mxu0 0.0
  %v1395 = vand.u32 %v70, 4294901760
  %1396 = vmatpush1.msra.mxu0 %v1395
  %1397 = vmatprep.subr.mxu0 0.0
  %v1398 = vand.u32 %v71, 4294901760
  %1399 = vmatpush1.msra.mxu0 %v1398
  %1400 = vmatprep.subr.mxu0 0.0
  %v1401 = vand.u32 %v72, 4294901760
  %1402 = vmatpush1.msra.mxu0 %v1401
  %1403 = vmatprep.subr.mxu0 0.0
  %v1404 = vand.u32 %v73, 4294901760
  %1405 = vmatpush1.msra.mxu0 %v1404
  %1406 = vmatprep.subr.mxu0 0.0
  %v1407 = vand.u32 %v74, 4294901760
  %1408 = vmatpush1.msra.mxu0 %v1407
  %1409 = vmatprep.subr.mxu0 0.0
  %1410 = vmatpush1.msra.mxu0 0.0
  %1411 = vmatprep.subr.mxu0 0.0
  %1412 = vmatpush1.msra.mxu0 0.0
  %1413 = vmatprep.subr.mxu0 0.0
  %1414 = vmatpush1.msra.mxu0 0.0
  %1415 = vmatprep.subr.mxu0 0.0
  %1416 = vmatpush1.msra.mxu0 0.0
  %1417 = vmatprep.subr.mxu0 0.0
  %1418 = vmatpush1.msra.mxu0 0.0
  %1419 = vmatprep.subr.mxu0 0.0
  %1420 = vmatpush1.msra.mxu0 0.0
  %1421 = vmatprep.subr.mxu0 0.0
  %1422 = vmatpush1.msra.mxu0 0.0
  %1423 = vmatprep.subr.mxu0 0.0
  %1424 = vmatpush1.msra.mxu0 0.0
  %1425 = vmatprep.subr.mxu0 0.0
  %1426 = vmatpush1.msra.mxu0 0.0
  %1427 = vmatprep.subr.mxu0 0.0
  %1428 = vmatpush1.msra.mxu0 0.0
  %v1429 = vand.u32 %v77, 4294901760
  %v1430 = vsub.f32 %v77, %v1429
  %v1431 = vand.u32 %v1430, 4294901760
  %1432 = vmatprep.mubr.f32.mxu0 %v1431
  %v1433 = vand.u32 %v19, 4294901760
  %v1434 = vsub.f32 %v19, %v1433
  %v1435 = vand.u32 %v1434, 4294901760
  %1436 = vmatmul.mubr.f32.gmra.mrb[0].mxu0 %v1435
  %v1437 = vpop.f32.mrb[0].mxu0
  %v1438 = vadd.f32 %v1340, %v1437
  %v1439 = vpop.f32.mrb[0].mxu0
  %1440 = vdwg.mxu0
  %1441 = vmatprep.subr.mxu0 0.0
  %v1442 = vand.u32 %v53, 4294901760
  %v1443 = vsub.f32 %v53, %v1442
  %v1444 = vand.u32 %v1443, 4294901760
  %1445 = vmatpush1.msra.mxu0 %v1444
  %1446 = vmatprep.subr.mxu0 0.0
  %v1447 = vand.u32 %v54, 4294901760
  %v1448 = vsub.f32 %v54, %v1447
  %v1449 = vand.u32 %v1448, 4294901760
  %1450 = vmatpush1.msra.mxu0 %v1449
  %1451 = vmatprep.subr.mxu0 0.0
  %v1452 = vand.u32 %v55, 4294901760
  %v1453 = vsub.f32 %v55, %v1452
  %v1454 = vand.u32 %v1453, 4294901760
  %1455 = vmatpush1.msra.mxu0 %v1454
  %1456 = vmatprep.subr.mxu0 0.0
  %v1457 = vand.u32 %v56, 4294901760
  %v1458 = vsub.f32 %v56, %v1457
  %v1459 = vand.u32 %v1458, 4294901760
  %1460 = vmatpush1.msra.mxu0 %v1459
  %1461 = vmatprep.subr.mxu0 0.0
  %v1462 = vand.u32 %v57, 4294901760
  %v1463 = vsub.f32 %v57, %v1462
  %v1464 = vand.u32 %v1463, 4294901760
  %1465 = vmatpush1.msra.mxu0 %v1464
  %1466 = vmatprep.subr.mxu0 0.0
  %v1467 = vand.u32 %v58, 4294901760
  %v1468 = vsub.f32 %v58, %v1467
  %v1469 = vand.u32 %v1468, 4294901760
  %1470 = vmatpush1.msra.mxu0 %v1469
  %1471 = vmatprep.subr.mxu0 0.0
  %v1472 = vand.u32 %v59, 4294901760
  %v1473 = vsub.f32 %v59, %v1472
  %v1474 = vand.u32 %v1473, 4294901760
  %1475 = vmatpush1.msra.mxu0 %v1474
  %1476 = vmatprep.subr.mxu0 0.0
  %v1477 = vand.u32 %v60, 4294901760
  %v1478 = vsub.f32 %v60, %v1477
  %v1479 = vand.u32 %v1478, 4294901760
  %1480 = vmatpush1.msra.mxu0 %v1479
  %1481 = vmatprep.subr.mxu0 0.0
  %v1482 = vand.u32 %v61, 4294901760
  %v1483 = vsub.f32 %v61, %v1482
  %v1484 = vand.u32 %v1483, 4294901760
  %1485 = vmatpush1.msra.mxu0 %v1484
  %1486 = vmatprep.subr.mxu0 0.0
  %v1487 = vand.u32 %v62, 4294901760
  %v1488 = vsub.f32 %v62, %v1487
  %v1489 = vand.u32 %v1488, 4294901760
  %1490 = vmatpush1.msra.mxu0 %v1489
  %1491 = vmatprep.subr.mxu0 0.0
  %v1492 = vand.u32 %v63, 4294901760
  %v1493 = vsub.f32 %v63, %v1492
  %v1494 = vand.u32 %v1493, 4294901760
  %1495 = vmatpush1.msra.mxu0 %v1494
  %1496 = vmatprep.subr.mxu0 0.0
  %v1497 = vand.u32 %v64, 4294901760
  %v1498 = vsub.f32 %v64, %v1497
  %v1499 = vand.u32 %v1498, 4294901760
  %1500 = vmatpush1.msra.mxu0 %v1499
  %1501 = vmatprep.subr.mxu0 0.0
  %v1502 = vand.u32 %v65, 4294901760
  %v1503 = vsub.f32 %v65, %v1502
  %v1504 = vand.u32 %v1503, 4294901760
  %1505 = vmatpush1.msra.mxu0 %v1504
  %1506 = vmatprep.subr.mxu0 0.0
  %v1507 = vand.u32 %v66, 4294901760
  %v1508 = vsub.f32 %v66, %v1507
  %v1509 = vand.u32 %v1508, 4294901760
  %1510 = vmatpush1.msra.mxu0 %v1509
  %1511 = vmatprep.subr.mxu0 0.0
  %v1512 = vand.u32 %v67, 4294901760
  %v1513 = vsub.f32 %v67, %v1512
  %v1514 = vand.u32 %v1513, 4294901760
  %1515 = vmatpush1.msra.mxu0 %v1514
  %1516 = vmatprep.subr.mxu0 0.0
  %v1517 = vand.u32 %v68, 4294901760
  %v1518 = vsub.f32 %v68, %v1517
  %v1519 = vand.u32 %v1518, 4294901760
  %1520 = vmatpush1.msra.mxu0 %v1519
  %1521 = vmatprep.subr.mxu0 0.0
  %v1522 = vand.u32 %v69, 4294901760
  %v1523 = vsub.f32 %v69, %v1522
  %v1524 = vand.u32 %v1523, 4294901760
  %1525 = vmatpush1.msra.mxu0 %v1524
  %1526 = vmatprep.subr.mxu0 0.0
  %v1527 = vand.u32 %v70, 4294901760
  %v1528 = vsub.f32 %v70, %v1527
  %v1529 = vand.u32 %v1528, 4294901760
  %1530 = vmatpush1.msra.mxu0 %v1529
  %1531 = vmatprep.subr.mxu0 0.0
  %v1532 = vand.u32 %v71, 4294901760
  %v1533 = vsub.f32 %v71, %v1532
  %v1534 = vand.u32 %v1533, 4294901760
  %1535 = vmatpush1.msra.mxu0 %v1534
  %1536 = vmatprep.subr.mxu0 0.0
  %v1537 = vand.u32 %v72, 4294901760
  %v1538 = vsub.f32 %v72, %v1537
  %v1539 = vand.u32 %v1538, 4294901760
  %1540 = vmatpush1.msra.mxu0 %v1539
  %1541 = vmatprep.subr.mxu0 0.0
  %v1542 = vand.u32 %v73, 4294901760
  %v1543 = vsub.f32 %v73, %v1542
  %v1544 = vand.u32 %v1543, 4294901760
  %1545 = vmatpush1.msra.mxu0 %v1544
  %1546 = vmatprep.subr.mxu0 0.0
  %v1547 = vand.u32 %v74, 4294901760
  %v1548 = vsub.f32 %v74, %v1547
  %v1549 = vand.u32 %v1548, 4294901760
  %1550 = vmatpush1.msra.mxu0 %v1549
  %1551 = vmatprep.subr.mxu0 0.0
  %1552 = vmatpush1.msra.mxu0 0.0
  %1553 = vmatprep.subr.mxu0 0.0
  %1554 = vmatpush1.msra.mxu0 0.0
  %1555 = vmatprep.subr.mxu0 0.0
  %1556 = vmatpush1.msra.mxu0 0.0
  %1557 = vmatprep.subr.mxu0 0.0
  %1558 = vmatpush1.msra.mxu0 0.0
  %1559 = vmatprep.subr.mxu0 0.0
  %1560 = vmatpush1.msra.mxu0 0.0
  %1561 = vmatprep.subr.mxu0 0.0
  %1562 = vmatpush1.msra.mxu0 0.0
  %1563 = vmatprep.subr.mxu0 0.0
  %1564 = vmatpush1.msra.mxu0 0.0
  %1565 = vmatprep.subr.mxu0 0.0
  %1566 = vmatpush1.msra.mxu0 0.0
  %1567 = vmatprep.subr.mxu0 0.0
  %1568 = vmatpush1.msra.mxu0 0.0
  %1569 = vmatprep.subr.mxu0 0.0
  %1570 = vmatpush1.msra.mxu0 0.0
  %v1571 = vand.u32 %v77, 4294901760
  %1572 = vmatprep.mubr.f32.mxu0 %v1571
  %v1573 = vand.u32 %v19, 4294901760
  %1574 = vmatmul.mubr.f32.gmra.mrb[0].mxu0 %v1573
  %v1575 = vpop.f32.mrb[0].mxu0
  %v1576 = vadd.f32 %v1438, %v1575
  %v1577 = vpop.f32.mrb[0].mxu0
  %1578 = vdwg.mxu0
  %1579 = vmatprep.subr.mxu0 0.0
  %v1580 = vand.u32 %v53, 4294901760
  %1581 = vmatpush1.msra.mxu0 %v1580
  %1582 = vmatprep.subr.mxu0 0.0
  %v1583 = vand.u32 %v54, 4294901760
  %1584 = vmatpush1.msra.mxu0 %v1583
  %1585 = vmatprep.subr.mxu0 0.0
  %v1586 = vand.u32 %v55, 4294901760
  %1587 = vmatpush1.msra.mxu0 %v1586
  %1588 = vmatprep.subr.mxu0 0.0
  %v1589 = vand.u32 %v56, 4294901760
  %1590 = vmatpush1.msra.mxu0 %v1589
  %1591 = vmatprep.subr.mxu0 0.0
  %v1592 = vand.u32 %v57, 4294901760
  %1593 = vmatpush1.msra.mxu0 %v1592
  %1594 = vmatprep.subr.mxu0 0.0
  %v1595 = vand.u32 %v58, 4294901760
  %1596 = vmatpush1.msra.mxu0 %v1595
  %1597 = vmatprep.subr.mxu0 0.0
  %v1598 = vand.u32 %v59, 4294901760
  %1599 = vmatpush1.msra.mxu0 %v1598
  %1600 = vmatprep.subr.mxu0 0.0
  %v1601 = vand.u32 %v60, 4294901760
  %1602 = vmatpush1.msra.mxu0 %v1601
  %1603 = vmatprep.subr.mxu0 0.0
  %v1604 = vand.u32 %v61, 4294901760
  %1605 = vmatpush1.msra.mxu0 %v1604
  %1606 = vmatprep.subr.mxu0 0.0
  %v1607 = vand.u32 %v62, 4294901760
  %1608 = vmatpush1.msra.mxu0 %v1607
  %1609 = vmatprep.subr.mxu0 0.0
  %v1610 = vand.u32 %v63, 4294901760
  %1611 = vmatpush1.msra.mxu0 %v1610
  %1612 = vmatprep.subr.mxu0 0.0
  %v1613 = vand.u32 %v64, 4294901760
  %1614 = vmatpush1.msra.mxu0 %v1613
  %1615 = vmatprep.subr.mxu0 0.0
  %v1616 = vand.u32 %v65, 4294901760
  %1617 = vmatpush1.msra.mxu0 %v1616
  %1618 = vmatprep.subr.mxu0 0.0
  %v1619 = vand.u32 %v66, 4294901760
  %1620 = vmatpush1.msra.mxu0 %v1619
  %1621 = vmatprep.subr.mxu0 0.0
  %v1622 = vand.u32 %v67, 4294901760
  %1623 = vmatpush1.msra.mxu0 %v1622
  %1624 = vmatprep.subr.mxu0 0.0
  %v1625 = vand.u32 %v68, 4294901760
  %1626 = vmatpush1.msra.mxu0 %v1625
  %1627 = vmatprep.subr.mxu0 0.0
  %v1628 = vand.u32 %v69, 4294901760
  %1629 = vmatpush1.msra.mxu0 %v1628
  %1630 = vmatprep.subr.mxu0 0.0
  %v1631 = vand.u32 %v70, 4294901760
  %1632 = vmatpush1.msra.mxu0 %v1631
  %1633 = vmatprep.subr.mxu0 0.0
  %v1634 = vand.u32 %v71, 4294901760
  %1635 = vmatpush1.msra.mxu0 %v1634
  %1636 = vmatprep.subr.mxu0 0.0
  %v1637 = vand.u32 %v72, 4294901760
  %1638 = vmatpush1.msra.mxu0 %v1637
  %1639 = vmatprep.subr.mxu0 0.0
  %v1640 = vand.u32 %v73, 4294901760
  %1641 = vmatpush1.msra.mxu0 %v1640
  %1642 = vmatprep.subr.mxu0 0.0
  %v1643 = vand.u32 %v74, 4294901760
  %1644 = vmatpush1.msra.mxu0 %v1643
  %1645 = vmatprep.subr.mxu0 0.0
  %1646 = vmatpush1.msra.mxu0 0.0
  %1647 = vmatprep.subr.mxu0 0.0
  %1648 = vmatpush1.msra.mxu0 0.0
  %1649 = vmatprep.subr.mxu0 0.0
  %1650 = vmatpush1.msra.mxu0 0.0
  %1651 = vmatprep.subr.mxu0 0.0
  %1652 = vmatpush1.msra.mxu0 0.0
  %1653 = vmatprep.subr.mxu0 0.0
  %1654 = vmatpush1.msra.mxu0 0.0
  %1655 = vmatprep.subr.mxu0 0.0
  %1656 = vmatpush1.msra.mxu0 0.0
  %1657 = vmatprep.subr.mxu0 0.0
  %1658 = vmatpush1.msra.mxu0 0.0
  %1659 = vmatprep.subr.mxu0 0.0
  %1660 = vmatpush1.msra.mxu0 0.0
  %1661 = vmatprep.subr.mxu0 0.0
  %1662 = vmatpush1.msra.mxu0 0.0
  %1663 = vmatprep.subr.mxu0 0.0
  %1664 = vmatpush1.msra.mxu0 0.0
  %v1665 = vand.u32 %v77, 4294901760
  %1666 = vmatprep.mubr.f32.mxu0 %v1665
  %v1667 = vand.u32 %v19, 4294901760
  %1668 = vmatmul.mubr.f32.gmra.mrb[0].mxu0 %v1667
  %v1669 = vpop.f32.mrb[0].mxu0
  %v1670 = vadd.f32 %v1576, %v1669
  %v1671 = vpop.f32.mrb[0].mxu0
  %1672 = vdwg.mxu0
  %1673 = vadd.xlane.f32.xlu0 %v1670
  %v1674 = vpop.xlane.xlu0 %1673
  %v1675 = vmul.f32 %v1670, %v1670
  %1676 = vadd.xlane.f32.xlu0 %v1675
  %v1677 = vpop.xlane.xlu0 %1676
  %v1678 = vmul.f32 %v1674, 0.0078125
  %v1679 = vmul.f32 %v1677, 0.0078125
  %v1680 = vmul.f32 %v1678, %v1678
  %v1681 = vsub.f32 %v1679, %v1680
  %v1682 = vld [vmem:[%s2] sm:$0xff]
  %v1683 = vadd.f32 %v1681, 1e-05
  %v1684 = vrsqrt.pop %v1683
  %v1685 = vmul.f32 %v1682, %v1684
  %v1686 = vld [vmem:[%s3] sm:$0xff]
  %v1687 = vmul.f32 %v1678, %v1685
  %v1688 = vsub.f32 %v1686, %v1687
  %1690 = vset.pattern.permute.xlu0 0
  %1691 = vperm.xlu0 %1690, %v1685
  %v1692 = vpop.permute.xlu0 %1691
  %v1694 = vmul.f32 %v1670, %v1692
  %1696 = vset.pattern.permute.xlu0 0
  %1697 = vperm.xlu0 %1696, %v1688
  %v1698 = vpop.permute.xlu0 %1697
  %v1700 = vadd.f32 %v1694, %v1698
  %v1701 = vmax.f32 %v1700, 0.0
  %1702 = vst [vmem:[%s4] sm:$0xff] %v1701
  // Predicated region
  $region18: #{baseline_unet_pallas.19} parent=0 // pred_check
    _
  $region19: #{baseline_unet_pallas.19} parent=0 // pred_check_branch
    %1704 = sbr.rel (0) target = $region21
  $region20: #{baseline_unet_pallas.19} parent=0 // pred_region
    _
  $region21: #{baseline_unet_pallas.19} parent=0 // pred_fallthru
    _
  // Predicated region
  $region22: #{baseline_unet_pallas.19} parent=0 // pred_check
    _
  $region23: #{baseline_unet_pallas.19} parent=0 // pred_check_branch
    %1706 = sbr.rel (0) target = $region25
  $region24: #{baseline_unet_pallas.19} parent=0 // pred_region
    _
  $region25: #{baseline_unet_pallas.19} parent=0 // pred_fallthru
    _

// kernel: baseline_unet_pallas.21
$region0: #{baseline_unet_pallas.21}
  #allocation0 [shape = 'u32[]', space=smem, size = 0x4, offset = 0x4, fixed_abs, tag = 'smem constant byte address 0x4 - core index']
  #allocation1 [shape = 'u32[144,128]{1,0:T(1,128)}', space=vmem, size = 0x12000, scoped, tag = 'internal scratch']
  %s0 = inlined_call_operand.vmem [shape: f32[10,8], index: 0, kind: input, shape index: {}]
  %s1 = inlined_call_operand.vmem [shape: f32[8,128], index: 1, kind: input, shape index: {}]
  %s2 = inlined_call_operand.vmem [shape: f32[10,1], index: 2, kind: input, shape index: {}]
  %s3 = inlined_call_operand.vmem [shape: f32[10,128], index: 3, kind: output, shape index: {}]
  %s4 = sld [smem:[#allocation0]]
  $region22: #{baseline_unet_pallas.21} parent=0
    _
  %s6 = ssub.s32 1, %s4
  %s7 = scalar_select 0, %s6, %s4
  // Predicated region
  $region2: #{baseline_unet_pallas.21} parent=0 // pred_check
    _
  $region3: #{baseline_unet_pallas.21} parent=0 // pred_check_branch
    %9 = sbr.rel (0) target = $region5
  $region4: #{baseline_unet_pallas.21} parent=0 // pred_region
    _
  $region5: #{baseline_unet_pallas.21} parent=0 // pred_fallthru
    _
  // Predicated region
  $region6: #{baseline_unet_pallas.21} parent=0 // pred_check
    _
  $region7: #{baseline_unet_pallas.21} parent=0 // pred_check_branch
    %11 = sbr.rel (0) target = $region9
  $region8: #{baseline_unet_pallas.21} parent=0 // pred_region
    _
  $region9: #{baseline_unet_pallas.21} parent=0 // pred_fallthru
    _
  // Predicated region
  $region10: #{baseline_unet_pallas.21} parent=0 // pred_check
    _
  $region11: #{baseline_unet_pallas.21} parent=0 // pred_check_branch
    %13 = sbr.rel (0) target = $region13
  $region12: #{baseline_unet_pallas.21} parent=0 // pred_region
    _
  $region13: #{baseline_unet_pallas.21} parent=0 // pred_fallthru
    _
  %v14 = vld [vmem:[%s0] sm:$0xff]
  %v15 = vld [vmem:[%s0 + $0x8] sm:$0x3]
  %v16 = vld [vmem:[%s1] sm:$0xff]
  %v17 = vld [vmem:[%s2] sm:$0xff]
  %v18 = vld [vmem:[%s2 + $0x8] sm:$0x3]
  %20 = vset.pattern.permute.xlu0 0
  %21 = vperm.xlu0 %20, %v17
  %v22 = vpop.permute.xlu0 %21
  %25 = vset.pattern.permute.xlu0 0
  %26 = vperm.xlu0 %25, %v18
  %v27 = vpop.permute.xlu0 %26
  %vm29 = vcmask 64512
  %v31 = vsel %vm29, %v14, 0
  %v34 = vsel %vm29, %v15, 0
  %36 = vmatprep.subr.mxu0 0.0
  %v37 = vand.u32 %v16, 4294901760
  %38 = vmatpush1.msra.mxu0 %v37
  %39 = vmatprep.subr.mxu0 0.0
  %40 = vmatpush1.msra.mxu0 0.0
  %41 = vmatprep.subr.mxu0 0.0
  %42 = vmatpush1.msra.mxu0 0.0
  %43 = vmatprep.subr.mxu0 0.0
  %44 = vmatpush1.msra.mxu0 0.0
  %45 = vmatprep.subr.mxu0 0.0
  %46 = vmatpush1.msra.mxu0 0.0
  %47 = vmatprep.subr.mxu0 0.0
  %48 = vmatpush1.msra.mxu0 0.0
  %49 = vmatprep.subr.mxu0 0.0
  %50 = vmatpush1.msra.mxu0 0.0
  %51 = vmatprep.subr.mxu0 0.0
  %52 = vmatpush1.msra.mxu0 0.0
  %53 = vmatprep.subr.mxu0 0.0
  %54 = vmatpush1.msra.mxu0 0.0
  %55 = vmatprep.subr.mxu0 0.0
  %56 = vmatpush1.msra.mxu0 0.0
  %57 = vmatprep.subr.mxu0 0.0
  %58 = vmatpush1.msra.mxu0 0.0
  %59 = vmatprep.subr.mxu0 0.0
  %60 = vmatpush1.msra.mxu0 0.0
  %61 = vmatprep.subr.mxu0 0.0
  %62 = vmatpush1.msra.mxu0 0.0
  %63 = vmatprep.subr.mxu0 0.0
  %64 = vmatpush1.msra.mxu0 0.0
  %65 = vmatprep.subr.mxu0 0.0
  %66 = vmatpush1.msra.mxu0 0.0
  %67 = vmatprep.subr.mxu0 0.0
  %68 = vmatpush1.msra.mxu0 0.0
  %69 = vmatprep.subr.mxu0 0.0
  %70 = vmatpush1.msra.mxu0 0.0
  %71 = vmatprep.subr.mxu0 0.0
  %72 = vmatpush1.msra.mxu0 0.0
  %73 = vmatprep.subr.mxu0 0.0
  %74 = vmatpush1.msra.mxu0 0.0
  %75 = vmatprep.subr.mxu0 0.0
  %76 = vmatpush1.msra.mxu0 0.0
  %77 = vmatprep.subr.mxu0 0.0
  %78 = vmatpush1.msra.mxu0 0.0
  %79 = vmatprep.subr.mxu0 0.0
  %80 = vmatpush1.msra.mxu0 0.0
  %81 = vmatprep.subr.mxu0 0.0
  %82 = vmatpush1.msra.mxu0 0.0
  %83 = vmatprep.subr.mxu0 0.0
  %84 = vmatpush1.msra.mxu0 0.0
  %85 = vmatprep.subr.mxu0 0.0
  %86 = vmatpush1.msra.mxu0 0.0
  %87 = vmatprep.subr.mxu0 0.0
  %88 = vmatpush1.msra.mxu0 0.0
  %89 = vmatprep.subr.mxu0 0.0
  %90 = vmatpush1.msra.mxu0 0.0
  %91 = vmatprep.subr.mxu0 0.0
  %92 = vmatpush1.msra.mxu0 0.0
  %93 = vmatprep.subr.mxu0 0.0
  %94 = vmatpush1.msra.mxu0 0.0
  %95 = vmatprep.subr.mxu0 0.0
  %96 = vmatpush1.msra.mxu0 0.0
  %97 = vmatprep.subr.mxu0 0.0
  %98 = vmatpush1.msra.mxu0 0.0
  %99 = vmatprep.subr.mxu0 0.0
  %100 = vmatpush1.msra.mxu0 0.0
  %101 = vmatprep.mubr.f32.mxu0 0.0
  %v102 = vand.u32 %v31, 4294901760
  %v103 = vsub.f32 %v31, %v102
  %v104 = vand.u32 %v103, 4294901760
  %v105 = vsub.f32 %v103, %v104
  %v106 = vand.u32 %v105, 4294901760
  %107 = vmatmul.mubr.f32.gmra.mrb[0].mxu0 %v106
  %v108 = vpop.f32.mrb[0].mxu0
  %v109 = vadd.f32 %v22, %v108
  %v110 = vpop.f32.mrb[0].mxu0
  %111 = vmatprep.mubr.f32.mxu0 0.0
  %v112 = vand.u32 %v34, 4294901760
  %v113 = vsub.f32 %v34, %v112
  %v114 = vand.u32 %v113, 4294901760
  %v115 = vsub.f32 %v113, %v114
  %v116 = vand.u32 %v115, 4294901760
  %117 = vmatmul.mubr.f32.gmra.mrb[0].mxu0 %v116
  %v118 = vpop.f32.mrb[0].mxu0
  %v119 = vadd.f32 %v27, %v118
  %v120 = vpop.f32.mrb[0].mxu0
  %121 = vdwg.mxu0
  %122 = vmatprep.subr.mxu0 0.0
  %v123 = vand.u32 %v16, 4294901760
  %v124 = vsub.f32 %v16, %v123
  %v125 = vand.u32 %v124, 4294901760
  %v126 = vsub.f32 %v124, %v125
  %v127 = vand.u32 %v126, 4294901760
  %128 = vmatpush1.msra.mxu0 %v127
  %129 = vmatprep.subr.mxu0 0.0
  %130 = vmatpush1.msra.mxu0 0.0
  %131 = vmatprep.subr.mxu0 0.0
  %132 = vmatpush1.msra.mxu0 0.0
  %133 = vmatprep.subr.mxu0 0.0
  %134 = vmatpush1.msra.mxu0 0.0
  %135 = vmatprep.subr.mxu0 0.0
  %136 = vmatpush1.msra.mxu0 0.0
  %137 = vmatprep.subr.mxu0 0.0
  %138 = vmatpush1.msra.mxu0 0.0
  %139 = vmatprep.subr.mxu0 0.0
  %140 = vmatpush1.msra.mxu0 0.0
  %141 = vmatprep.subr.mxu0 0.0
  %142 = vmatpush1.msra.mxu0 0.0
  %143 = vmatprep.subr.mxu0 0.0
  %144 = vmatpush1.msra.mxu0 0.0
  %145 = vmatprep.subr.mxu0 0.0
  %146 = vmatpush1.msra.mxu0 0.0
  %147 = vmatprep.subr.mxu0 0.0
  %148 = vmatpush1.msra.mxu0 0.0
  %149 = vmatprep.subr.mxu0 0.0
  %150 = vmatpush1.msra.mxu0 0.0
  %151 = vmatprep.subr.mxu0 0.0
  %152 = vmatpush1.msra.mxu0 0.0
  %153 = vmatprep.subr.mxu0 0.0
  %154 = vmatpush1.msra.mxu0 0.0
  %155 = vmatprep.subr.mxu0 0.0
  %156 = vmatpush1.msra.mxu0 0.0
  %157 = vmatprep.subr.mxu0 0.0
  %158 = vmatpush1.msra.mxu0 0.0
  %159 = vmatprep.subr.mxu0 0.0
  %160 = vmatpush1.msra.mxu0 0.0
  %161 = vmatprep.subr.mxu0 0.0
  %162 = vmatpush1.msra.mxu0 0.0
  %163 = vmatprep.subr.mxu0 0.0
  %164 = vmatpush1.msra.mxu0 0.0
  %165 = vmatprep.subr.mxu0 0.0
  %166 = vmatpush1.msra.mxu0 0.0
  %167 = vmatprep.subr.mxu0 0.0
  %168 = vmatpush1.msra.mxu0 0.0
  %169 = vmatprep.subr.mxu0 0.0
  %170 = vmatpush1.msra.mxu0 0.0
  %171 = vmatprep.subr.mxu0 0.0
  %172 = vmatpush1.msra.mxu0 0.0
  %173 = vmatprep.subr.mxu0 0.0
  %174 = vmatpush1.msra.mxu0 0.0
  %175 = vmatprep.subr.mxu0 0.0
  %176 = vmatpush1.msra.mxu0 0.0
  %177 = vmatprep.subr.mxu0 0.0
  %178 = vmatpush1.msra.mxu0 0.0
  %179 = vmatprep.subr.mxu0 0.0
  %180 = vmatpush1.msra.mxu0 0.0
  %181 = vmatprep.subr.mxu0 0.0
  %182 = vmatpush1.msra.mxu0 0.0
  %183 = vmatprep.subr.mxu0 0.0
  %184 = vmatpush1.msra.mxu0 0.0
  %185 = vmatprep.subr.mxu0 0.0
  %186 = vmatpush1.msra.mxu0 0.0
  %187 = vmatprep.subr.mxu0 0.0
  %188 = vmatpush1.msra.mxu0 0.0
  %189 = vmatprep.subr.mxu0 0.0
  %190 = vmatpush1.msra.mxu0 0.0
  %191 = vmatprep.mubr.f32.mxu0 0.0
  %v192 = vand.u32 %v31, 4294901760
  %193 = vmatmul.mubr.f32.gmra.mrb[0].mxu0 %v192
  %v194 = vpop.f32.mrb[0].mxu0
  %v195 = vadd.f32 %v109, %v194
  %v196 = vpop.f32.mrb[0].mxu0
  %197 = vmatprep.mubr.f32.mxu0 0.0
  %v198 = vand.u32 %v34, 4294901760
  %199 = vmatmul.mubr.f32.gmra.mrb[0].mxu0 %v198
  %v200 = vpop.f32.mrb[0].mxu0
  %v201 = vadd.f32 %v119, %v200
  %v202 = vpop.f32.mrb[0].mxu0
  %203 = vdwg.mxu0
  %204 = vmatprep.subr.mxu0 0.0
  %v205 = vand.u32 %v16, 4294901760
  %v206 = vsub.f32 %v16, %v205
  %207 = vmatpush1.msra.mxu0 %v206
  %208 = vmatprep.subr.mxu0 0.0
  %209 = vmatpush1.msra.mxu0 0.0
  %210 = vmatprep.subr.mxu0 0.0
  %211 = vmatpush1.msra.mxu0 0.0
  %212 = vmatprep.subr.mxu0 0.0
  %213 = vmatpush1.msra.mxu0 0.0
  %214 = vmatprep.subr.mxu0 0.0
  %215 = vmatpush1.msra.mxu0 0.0
  %216 = vmatprep.subr.mxu0 0.0
  %217 = vmatpush1.msra.mxu0 0.0
  %218 = vmatprep.subr.mxu0 0.0
  %219 = vmatpush1.msra.mxu0 0.0
  %220 = vmatprep.subr.mxu0 0.0
  %221 = vmatpush1.msra.mxu0 0.0
  %222 = vmatprep.subr.mxu0 0.0
  %223 = vmatpush1.msra.mxu0 0.0
  %224 = vmatprep.subr.mxu0 0.0
  %225 = vmatpush1.msra.mxu0 0.0
  %226 = vmatprep.subr.mxu0 0.0
  %227 = vmatpush1.msra.mxu0 0.0
  %228 = vmatprep.subr.mxu0 0.0
  %229 = vmatpush1.msra.mxu0 0.0
  %230 = vmatprep.subr.mxu0 0.0
  %231 = vmatpush1.msra.mxu0 0.0
  %232 = vmatprep.subr.mxu0 0.0
  %233 = vmatpush1.msra.mxu0 0.0
  %234 = vmatprep.subr.mxu0 0.0
  %235 = vmatpush1.msra.mxu0 0.0
  %236 = vmatprep.subr.mxu0 0.0
  %237 = vmatpush1.msra.mxu0 0.0
  %238 = vmatprep.subr.mxu0 0.0
  %239 = vmatpush1.msra.mxu0 0.0
  %240 = vmatprep.subr.mxu0 0.0
  %241 = vmatpush1.msra.mxu0 0.0
  %242 = vmatprep.subr.mxu0 0.0
  %243 = vmatpush1.msra.mxu0 0.0
  %244 = vmatprep.subr.mxu0 0.0
  %245 = vmatpush1.msra.mxu0 0.0
  %246 = vmatprep.subr.mxu0 0.0
  %247 = vmatpush1.msra.mxu0 0.0
  %248 = vmatprep.subr.mxu0 0.0
  %249 = vmatpush1.msra.mxu0 0.0
  %250 = vmatprep.subr.mxu0 0.0
  %251 = vmatpush1.msra.mxu0 0.0
  %252 = vmatprep.subr.mxu0 0.0
  %253 = vmatpush1.msra.mxu0 0.0
  %254 = vmatprep.subr.mxu0 0.0
  %255 = vmatpush1.msra.mxu0 0.0
  %256 = vmatprep.subr.mxu0 0.0
  %257 = vmatpush1.msra.mxu0 0.0
  %258 = vmatprep.subr.mxu0 0.0
  %259 = vmatpush1.msra.mxu0 0.0
  %260 = vmatprep.subr.mxu0 0.0
  %261 = vmatpush1.msra.mxu0 0.0
  %262 = vmatprep.subr.mxu0 0.0
  %263 = vmatpush1.msra.mxu0 0.0
  %264 = vmatprep.subr.mxu0 0.0
  %265 = vmatpush1.msra.mxu0 0.0
  %266 = vmatprep.subr.mxu0 0.0
  %267 = vmatpush1.msra.mxu0 0.0
  %268 = vmatprep.subr.mxu0 0.0
  %269 = vmatpush1.msra.mxu0 0.0
  %270 = vmatprep.mubr.f32.mxu0 0.0
  %v271 = vand.u32 %v31, 4294901760
  %v272 = vsub.f32 %v31, %v271
  %273 = vmatmul.mubr.f32.gmra.mrb[0].mxu0 %v272
  %v274 = vpop.f32.mrb[0].mxu0
  %v275 = vadd.f32 %v195, %v274
  %v276 = vpop.f32.mrb[0].mxu0
  %277 = vmatprep.mubr.f32.mxu0 0.0
  %v278 = vand.u32 %v34, 4294901760
  %v279 = vsub.f32 %v34, %v278
  %280 = vmatmul.mubr.f32.gmra.mrb[0].mxu0 %v279
  %v281 = vpop.f32.mrb[0].mxu0
  %v282 = vadd.f32 %v201, %v281
  %v283 = vpop.f32.mrb[0].mxu0
  %284 = vdwg.mxu0
  %285 = vmatprep.subr.mxu0 0.0
  %v286 = vand.u32 %v16, 4294901760
  %287 = vmatpush1.msra.mxu0 %v286
  %288 = vmatprep.subr.mxu0 0.0
  %289 = vmatpush1.msra.mxu0 0.0
  %290 = vmatprep.subr.mxu0 0.0
  %291 = vmatpush1.msra.mxu0 0.0
  %292 = vmatprep.subr.mxu0 0.0
  %293 = vmatpush1.msra.mxu0 0.0
  %294 = vmatprep.subr.mxu0 0.0
  %295 = vmatpush1.msra.mxu0 0.0
  %296 = vmatprep.subr.mxu0 0.0
  %297 = vmatpush1.msra.mxu0 0.0
  %298 = vmatprep.subr.mxu0 0.0
  %299 = vmatpush1.msra.mxu0 0.0
  %300 = vmatprep.subr.mxu0 0.0
  %301 = vmatpush1.msra.mxu0 0.0
  %302 = vmatprep.subr.mxu0 0.0
  %303 = vmatpush1.msra.mxu0 0.0
  %304 = vmatprep.subr.mxu0 0.0
  %305 = vmatpush1.msra.mxu0 0.0
  %306 = vmatprep.subr.mxu0 0.0
  %307 = vmatpush1.msra.mxu0 0.0
  %308 = vmatprep.subr.mxu0 0.0
  %309 = vmatpush1.msra.mxu0 0.0
  %310 = vmatprep.subr.mxu0 0.0
  %311 = vmatpush1.msra.mxu0 0.0
  %312 = vmatprep.subr.mxu0 0.0
  %313 = vmatpush1.msra.mxu0 0.0
  %314 = vmatprep.subr.mxu0 0.0
  %315 = vmatpush1.msra.mxu0 0.0
  %316 = vmatprep.subr.mxu0 0.0
  %317 = vmatpush1.msra.mxu0 0.0
  %318 = vmatprep.subr.mxu0 0.0
  %319 = vmatpush1.msra.mxu0 0.0
  %320 = vmatprep.subr.mxu0 0.0
  %321 = vmatpush1.msra.mxu0 0.0
  %322 = vmatprep.subr.mxu0 0.0
  %323 = vmatpush1.msra.mxu0 0.0
  %324 = vmatprep.subr.mxu0 0.0
  %325 = vmatpush1.msra.mxu0 0.0
  %326 = vmatprep.subr.mxu0 0.0
  %327 = vmatpush1.msra.mxu0 0.0
  %328 = vmatprep.subr.mxu0 0.0
  %329 = vmatpush1.msra.mxu0 0.0
  %330 = vmatprep.subr.mxu0 0.0
  %331 = vmatpush1.msra.mxu0 0.0
  %332 = vmatprep.subr.mxu0 0.0
  %333 = vmatpush1.msra.mxu0 0.0
  %334 = vmatprep.subr.mxu0 0.0
  %335 = vmatpush1.msra.mxu0 0.0
  %336 = vmatprep.subr.mxu0 0.0
  %337 = vmatpush1.msra.mxu0 0.0
  %338 = vmatprep.subr.mxu0 0.0
  %339 = vmatpush1.msra.mxu0 0.0
  %340 = vmatprep.subr.mxu0 0.0
  %341 = vmatpush1.msra.mxu0 0.0
  %342 = vmatprep.subr.mxu0 0.0
  %343 = vmatpush1.msra.mxu0 0.0
  %344 = vmatprep.subr.mxu0 0.0
  %345 = vmatpush1.msra.mxu0 0.0
  %346 = vmatprep.subr.mxu0 0.0
  %347 = vmatpush1.msra.mxu0 0.0
  %348 = vmatprep.subr.mxu0 0.0
  %349 = vmatpush1.msra.mxu0 0.0
  %350 = vmatprep.mubr.f32.mxu0 0.0
  %v351 = vand.u32 %v31, 4294901760
  %v352 = vsub.f32 %v31, %v351
  %v353 = vand.u32 %v352, 4294901760
  %354 = vmatmul.mubr.f32.gmra.mrb[0].mxu0 %v353
  %v355 = vpop.f32.mrb[0].mxu0
  %v356 = vadd.f32 %v275, %v355
  %v357 = vpop.f32.mrb[0].mxu0
  %358 = vmatprep.mubr.f32.mxu0 0.0
  %v359 = vand.u32 %v34, 4294901760
  %v360 = vsub.f32 %v34, %v359
  %v361 = vand.u32 %v360, 4294901760
  %362 = vmatmul.mubr.f32.gmra.mrb[0].mxu0 %v361
  %v363 = vpop.f32.mrb[0].mxu0
  %v364 = vadd.f32 %v282, %v363
  %v365 = vpop.f32.mrb[0].mxu0
  %366 = vdwg.mxu0
  %367 = vmatprep.subr.mxu0 0.0
  %v368 = vand.u32 %v16, 4294901760
  %v369 = vsub.f32 %v16, %v368
  %v370 = vand.u32 %v369, 4294901760
  %371 = vmatpush1.msra.mxu0 %v370
  %372 = vmatprep.subr.mxu0 0.0
  %373 = vmatpush1.msra.mxu0 0.0
  %374 = vmatprep.subr.mxu0 0.0
  %375 = vmatpush1.msra.mxu0 0.0
  %376 = vmatprep.subr.mxu0 0.0
  %377 = vmatpush1.msra.mxu0 0.0
  %378 = vmatprep.subr.mxu0 0.0
  %379 = vmatpush1.msra.mxu0 0.0
  %380 = vmatprep.subr.mxu0 0.0
  %381 = vmatpush1.msra.mxu0 0.0
  %382 = vmatprep.subr.mxu0 0.0
  %383 = vmatpush1.msra.mxu0 0.0
  %384 = vmatprep.subr.mxu0 0.0
  %385 = vmatpush1.msra.mxu0 0.0
  %386 = vmatprep.subr.mxu0 0.0
  %387 = vmatpush1.msra.mxu0 0.0
  %388 = vmatprep.subr.mxu0 0.0
  %389 = vmatpush1.msra.mxu0 0.0
  %390 = vmatprep.subr.mxu0 0.0
  %391 = vmatpush1.msra.mxu0 0.0
  %392 = vmatprep.subr.mxu0 0.0
  %393 = vmatpush1.msra.mxu0 0.0
  %394 = vmatprep.subr.mxu0 0.0
  %395 = vmatpush1.msra.mxu0 0.0
  %396 = vmatprep.subr.mxu0 0.0
  %397 = vmatpush1.msra.mxu0 0.0
  %398 = vmatprep.subr.mxu0 0.0
  %399 = vmatpush1.msra.mxu0 0.0
  %400 = vmatprep.subr.mxu0 0.0
  %401 = vmatpush1.msra.mxu0 0.0
  %402 = vmatprep.subr.mxu0 0.0
  %403 = vmatpush1.msra.mxu0 0.0
  %404 = vmatprep.subr.mxu0 0.0
  %405 = vmatpush1.msra.mxu0 0.0
  %406 = vmatprep.subr.mxu0 0.0
  %407 = vmatpush1.msra.mxu0 0.0
  %408 = vmatprep.subr.mxu0 0.0
  %409 = vmatpush1.msra.mxu0 0.0
  %410 = vmatprep.subr.mxu0 0.0
  %411 = vmatpush1.msra.mxu0 0.0
  %412 = vmatprep.subr.mxu0 0.0
  %413 = vmatpush1.msra.mxu0 0.0
  %414 = vmatprep.subr.mxu0 0.0
  %415 = vmatpush1.msra.mxu0 0.0
  %416 = vmatprep.subr.mxu0 0.0
  %417 = vmatpush1.msra.mxu0 0.0
  %418 = vmatprep.subr.mxu0 0.0
  %419 = vmatpush1.msra.mxu0 0.0
  %420 = vmatprep.subr.mxu0 0.0
  %421 = vmatpush1.msra.mxu0 0.0
  %422 = vmatprep.subr.mxu0 0.0
  %423 = vmatpush1.msra.mxu0 0.0
  %424 = vmatprep.subr.mxu0 0.0
  %425 = vmatpush1.msra.mxu0 0.0
  %426 = vmatprep.subr.mxu0 0.0
  %427 = vmatpush1.msra.mxu0 0.0
  %428 = vmatprep.subr.mxu0 0.0
  %429 = vmatpush1.msra.mxu0 0.0
  %430 = vmatprep.subr.mxu0 0.0
  %431 = vmatpush1.msra.mxu0 0.0
  %432 = vmatprep.subr.mxu0 0.0
  %433 = vmatpush1.msra.mxu0 0.0
  %434 = vmatprep.mubr.f32.mxu0 0.0
  %v435 = vand.u32 %v31, 4294901760
  %436 = vmatmul.mubr.f32.gmra.mrb[0].mxu0 %v435
  %v437 = vpop.f32.mrb[0].mxu0
  %v438 = vadd.f32 %v356, %v437
  %v439 = vpop.f32.mrb[0].mxu0
  %440 = vmatprep.mubr.f32.mxu0 0.0
  %v441 = vand.u32 %v34, 4294901760
  %442 = vmatmul.mubr.f32.gmra.mrb[0].mxu0 %v441
  %v443 = vpop.f32.mrb[0].mxu0
  %v444 = vadd.f32 %v364, %v443
  %v445 = vpop.f32.mrb[0].mxu0
  %446 = vdwg.mxu0
  %447 = vmatprep.subr.mxu0 0.0
  %v448 = vand.u32 %v16, 4294901760
  %449 = vmatpush1.msra.mxu0 %v448
  %450 = vmatprep.subr.mxu0 0.0
  %451 = vmatpush1.msra.mxu0 0.0
  %452 = vmatprep.subr.mxu0 0.0
  %453 = vmatpush1.msra.mxu0 0.0
  %454 = vmatprep.subr.mxu0 0.0
  %455 = vmatpush1.msra.mxu0 0.0
  %456 = vmatprep.subr.mxu0 0.0
  %457 = vmatpush1.msra.mxu0 0.0
  %458 = vmatprep.subr.mxu0 0.0
  %459 = vmatpush1.msra.mxu0 0.0
  %460 = vmatprep.subr.mxu0 0.0
  %461 = vmatpush1.msra.mxu0 0.0
  %462 = vmatprep.subr.mxu0 0.0
  %463 = vmatpush1.msra.mxu0 0.0
  %464 = vmatprep.subr.mxu0 0.0
  %465 = vmatpush1.msra.mxu0 0.0
  %466 = vmatprep.subr.mxu0 0.0
  %467 = vmatpush1.msra.mxu0 0.0
  %468 = vmatprep.subr.mxu0 0.0
  %469 = vmatpush1.msra.mxu0 0.0
  %470 = vmatprep.subr.mxu0 0.0
  %471 = vmatpush1.msra.mxu0 0.0
  %472 = vmatprep.subr.mxu0 0.0
  %473 = vmatpush1.msra.mxu0 0.0
  %474 = vmatprep.subr.mxu0 0.0
  %475 = vmatpush1.msra.mxu0 0.0
  %476 = vmatprep.subr.mxu0 0.0
  %477 = vmatpush1.msra.mxu0 0.0
  %478 = vmatprep.subr.mxu0 0.0
  %479 = vmatpush1.msra.mxu0 0.0
  %480 = vmatprep.subr.mxu0 0.0
  %481 = vmatpush1.msra.mxu0 0.0
  %482 = vmatprep.subr.mxu0 0.0
  %483 = vmatpush1.msra.mxu0 0.0
  %484 = vmatprep.subr.mxu0 0.0
  %485 = vmatpush1.msra.mxu0 0.0
  %486 = vmatprep.subr.mxu0 0.0
  %487 = vmatpush1.msra.mxu0 0.0
  %488 = vmatprep.subr.mxu0 0.0
  %489 = vmatpush1.msra.mxu0 0.0
  %490 = vmatprep.subr.mxu0 0.0
  %491 = vmatpush1.msra.mxu0 0.0
  %492 = vmatprep.subr.mxu0 0.0
  %493 = vmatpush1.msra.mxu0 0.0
  %494 = vmatprep.subr.mxu0 0.0
  %495 = vmatpush1.msra.mxu0 0.0
  %496 = vmatprep.subr.mxu0 0.0
  %497 = vmatpush1.msra.mxu0 0.0
  %498 = vmatprep.subr.mxu0 0.0
  %499 = vmatpush1.msra.mxu0 0.0
  %500 = vmatprep.subr.mxu0 0.0
  %501 = vmatpush1.msra.mxu0 0.0
  %502 = vmatprep.subr.mxu0 0.0
  %503 = vmatpush1.msra.mxu0 0.0
  %504 = vmatprep.subr.mxu0 0.0
  %505 = vmatpush1.msra.mxu0 0.0
  %506 = vmatprep.subr.mxu0 0.0
  %507 = vmatpush1.msra.mxu0 0.0
  %508 = vmatprep.subr.mxu0 0.0
  %509 = vmatpush1.msra.mxu0 0.0
  %510 = vmatprep.subr.mxu0 0.0
  %511 = vmatpush1.msra.mxu0 0.0
  %512 = vmatprep.mubr.f32.mxu0 0.0
  %v513 = vand.u32 %v31, 4294901760
  %514 = vmatmul.mubr.f32.gmra.mrb[0].mxu0 %v513
  %v515 = vpop.f32.mrb[0].mxu0
  %v516 = vadd.f32 %v438, %v515
  %v517 = vpop.f32.mrb[0].mxu0
  %518 = vmatprep.mubr.f32.mxu0 0.0
  %v519 = vand.u32 %v34, 4294901760
  %520 = vmatmul.mubr.f32.gmra.mrb[0].mxu0 %v519
  %v521 = vpop.f32.mrb[0].mxu0
  %v522 = vadd.f32 %v444, %v521
  %v523 = vpop.f32.mrb[0].mxu0
  %524 = vdwg.mxu0
  %525 = vst [vmem:[%s3] sm:$0xff] %v516
  %526 = vst [vmem:[%s3 + $0x8] sm:$0x3] %v522
  // Predicated region
  $region14: #{baseline_unet_pallas.21} parent=0 // pred_check
    _
  $region15: #{baseline_unet_pallas.21} parent=0 // pred_check_branch
    %528 = sbr.rel (0) target = $region17
  $region16: #{baseline_unet_pallas.21} parent=0 // pred_region
    _
  $region17: #{baseline_unet_pallas.21} parent=0 // pred_fallthru
    _
  // Predicated region
  $region18: #{baseline_unet_pallas.21} parent=0 // pred_check
    _
  $region19: #{baseline_unet_pallas.21} parent=0 // pred_check_branch
    %530 = sbr.rel (0) target = $region21
  $region20: #{baseline_unet_pallas.21} parent=0 // pred_region
    _
  $region21: #{baseline_unet_pallas.21} parent=0 // pred_fallthru
    _

</llo_original>
